<compile_context>
chip_gen: v7x
topology: tpu7x:2x2x1
jax: 0.10.0
libtpu: 0.0.40
codegen_flags: <defaults>
</compile_context>

<pallas_src>
import functools

import jax
import jax.numpy as jnp
from jax import lax
from jax.experimental import pallas as pl
from jax.experimental.pallas import tpu as pltpu


def _pick_row_chunk(h, w, target_m=256):
    """Largest RH dividing h with RH*w <= ~256 (feeds the MXU M>=256 dots)."""
    best = 1
    for rh in range(1, h + 1):
        if h % rh == 0 and rh * w <= max(target_m, w):
            best = rh
    return best


# ----------------------------------------------------------------------------
# Fused BasicBlock kernel: relu(conv2(relu(conv1(x)+b1)) + b2 + x)
# (BN scales already folded into w1/w2 in the wrapper.)
# ----------------------------------------------------------------------------
def _basic_block_kernel(H, W, C, RH, PADL, WP,
                        x_hbm, w1_ref, w2_ref, b1_ref, b2_ref,
                        out_ref, xpad_ref, mid_ref, dma_sem):
    n = pl.program_id(0)
    nimg = pl.num_programs(0)
    slot = n % 2
    dt = xpad_ref.dtype

    def x_dma(img, slot_):
        # HBM image `img` -> interior window of padded slot `slot_`.
        return pltpu.make_async_copy(
            x_hbm.at[img],
            xpad_ref.at[slot_, 1:H + 1, PADL:PADL + W, :],
            dma_sem.at[slot_])

    # One-time init: zero ONLY the halo cells (never written afterwards; the
    # interiors are fully overwritten every step), then start image 0's DMA.
    @pl.when(n == 0)
    def _init():
        zrow = jnp.zeros((1, WP, C), dt)
        zlft = jnp.zeros((H, PADL, C), dt)
        zrgt = jnp.zeros((H, WP - PADL - W, C), dt)
        for s in range(2):
            xpad_ref[s, 0:1, :, :] = zrow
            xpad_ref[s, H + 1:H + 2, :, :] = zrow
            xpad_ref[s, 1:H + 1, 0:PADL, :] = zlft
            xpad_ref[s, 1:H + 1, PADL + W:WP, :] = zrgt
        mid_ref[0:1, :, :] = zrow
        mid_ref[H + 1:H + 2, :, :] = zrow
        mid_ref[1:H + 1, 0:PADL, :] = zlft
        mid_ref[1:H + 1, PADL + W:WP, :] = zrgt
        x_dma(0, 0).start()

    # Prefetch image n+1 into the other slot while image n is computed.
    @pl.when(n + 1 < nimg)
    def _prefetch():
        x_dma(n + 1, 1 - slot).start()

    # Wait for this image's DMA (issued at the previous step, or in _init).
    x_dma(n, slot).wait()

    xcur = xpad_ref.at[slot]          # (H+2, WP, C) padded input (current image)
    b1 = b1_ref[...]                  # (1, C) f32, hoisted out of the loops
    b2 = b2_ref[...]

    def conv3x3(src, w_ref, r0):
        """RH output rows of a SAME 3x3 conv as 9 (RH*W, C) x (C, C) MXU dots."""
        acc = jnp.zeros((RH * W, C), jnp.float32)
        for ky in range(3):
            for kx in range(3):
                lhs = src[r0 + ky:r0 + ky + RH,
                          PADL - 1 + kx:PADL - 1 + kx + W, :]     # (RH, W, C)
                acc = acc + jnp.dot(lhs.reshape(RH * W, C), w_ref[ky, kx],
                                    preferred_element_type=jnp.float32)
        return acc

    # TODO(synk): at real stage sizes (many row chunks, e.g. 56x56) convert
    # these Python loops to lax.fori_loop(unroll=True) + pl.ds row offsets to
    # bound vreg live ranges; at the demo size each loop has a single chunk.

    # conv1 (+bn1 folded) + relu -> interior of padded `mid` (stays in VMEM).
    for r0 in range(0, H, RH):
        y = jnp.maximum(conv3x3(xcur, w1_ref, r0) + b1, 0.0)
        mid_ref[r0 + 1:r0 + 1 + RH, PADL:PADL + W, :] = (
            y.reshape(RH, W, C).astype(dt))

    # conv2 (+bn2 folded) + residual add + relu -> output tile.
    for r0 in range(0, H, RH):
        y = conv3x3(mid_ref, w2_ref, r0)
        res = xcur[r0 + 1:r0 + 1 + RH, PADL:PADL + W, :].reshape(RH * W, C)
        y = jnp.maximum(y + b2 + res.astype(jnp.float32), 0.0)
        out_ref[0, r0:r0 + RH, :, :] = y.reshape(RH, W, C).astype(out_ref.dtype)


# ----------------------------------------------------------------------------
# Wrapper
# ----------------------------------------------------------------------------
def basic_block_forward(x_nchw, params, eps=1e-5):
    # TODO(synk): only the stride-1 / no-downsample BasicBlock of the ResNet is
    # implemented as a Pallas kernel; the stem conv (1->64), the stride-2
    # blocks with their 1x1 downsample, and fc5 are not covered here.
    # TODO(synk): BatchNorm uses eval-mode (running-stats) semantics folded
    # into the conv weights + a per-channel bias; training-mode batch
    # statistics are not computed.
    x = jnp.transpose(x_nchw, (0, 2, 3, 1))            # NCHW -> NHWC
    N, H, W, C = x.shape
    RH = _pick_row_chunk(H, W)
    PADL = 8                                            # sublane-tile-aligned halo
    WP = PADL + W + 8                                   # padded width

    # Fold BN (eval mode) scale into HWIO conv weights; keep the bias in f32.
    def fold_w(w_oihw, gamma, var):
        s = gamma / jnp.sqrt(var + eps)                 # (Cout,)
        w = jnp.transpose(w_oihw, (2, 3, 1, 0))         # (3, 3, Cin, Cout)
        return (w * s).astype(x.dtype)

    def fold_b(gamma, beta, mean, var):
        s = gamma / jnp.sqrt(var + eps)
        return (beta - mean * s).astype(jnp.float32).reshape(1, C)

    w1 = fold_w(params["w1"], params["gamma1"], params["var1"])
    w2 = fold_w(params["w2"], params["gamma2"], params["var2"])
    b1 = fold_b(params["gamma1"], params["beta1"], params["mean1"], params["var1"])
    b2 = fold_b(params["gamma2"], params["beta2"], params["mean2"], params["var2"])

    # VMEM budget derived from the actual footprint (works for 64 MiB parts).
    itemsize = x.dtype.itemsize
    footprint = (
        3 * (H + 2) * WP * C * itemsize        # 2 padded-x slots + padded mid
        + 2 * 2 * 9 * C * C * itemsize         # w1, w2 (double-buffered blocks)
        + 2 * H * W * C * itemsize             # output block (double-buffered)
        + 4 * RH * W * C * 4                   # f32 accumulator + dot temps
    )
    vmem_limit = int(min(max(2 * footprint, 16 * 2**20), 48 * 2**20))

    chan_spec = pl.BlockSpec((1, C), lambda n: (0, 0))
    kernel = functools.partial(_basic_block_kernel, H, W, C, RH, PADL, WP)
    out_nhwc = pl.pallas_call(
        kernel,
        out_shape=jax.ShapeDtypeStruct((N, H, W, C), x.dtype),
        grid=(N,),
        in_specs=[
            pl.BlockSpec(memory_space=pl.ANY),                    # x stays in HBM
            pl.BlockSpec((3, 3, C, C), lambda n: (0, 0, 0, 0)),   # w1 (scale folded)
            pl.BlockSpec((3, 3, C, C), lambda n: (0, 0, 0, 0)),   # w2 (scale folded)
            chan_spec, chan_spec,                                 # b1, b2 (f32)
        ],
        out_specs=pl.BlockSpec((1, H, W, C), lambda n: (n, 0, 0, 0)),
        scratch_shapes=[
            pltpu.VMEM((2, H + 2, WP, C), x.dtype),   # double-buffered padded x
            pltpu.VMEM((H + 2, WP, C), x.dtype),      # padded conv1 output
            pltpu.SemaphoreType.DMA((2,)),            # per-slot input DMA sems
        ],
        compiler_params=pltpu.CompilerParams(
            # Manual cross-step DMA prefetch + one-time halo init require a
            # sequential batch axis (see megacore TODO at top of file).
            dimension_semantics=("arbitrary",),
            vmem_limit_bytes=vmem_limit),
    )(x, w1, w2, b1, b2)
    return jnp.transpose(out_nhwc, (0, 3, 1, 2))       # NHWC -> NCHW


# ----------------------------------------------------------------------------
# Synthetic parameters (PyTorch-style layouts, independent PRNG keys)
# ----------------------------------------------------------------------------
def init_basic_block_params(key, planes):
    ks = jax.random.split(key, 10)
    std = (2.0 / (9 * planes)) ** 0.5                  # kaiming fan_out / relu
    return {
        # OIHW conv weights (Cout, Cin, KH, KW), no bias.
        "w1": std * jax.random.normal(ks[0], (planes, planes, 3, 3), jnp.float32),
        "w2": std * jax.random.normal(ks[1], (planes, planes, 3, 3), jnp.float32),
        # BatchNorm affine + running stats (eval-mode semantics).
        "gamma1": 1.0 + 0.1 * jax.random.normal(ks[2], (planes,), jnp.float32),
        "beta1": 0.05 * jax.random.normal(ks[3], (planes,), jnp.float32),
        "mean1": 0.1 * jax.random.normal(ks[4], (planes,), jnp.float32),
        "var1": jnp.abs(1.0 + 0.1 * jax.random.normal(ks[5], (planes,), jnp.float32)),
        "gamma2": 1.0 + 0.1 * jax.random.normal(ks[6], (planes,), jnp.float32),
        "beta2": 0.05 * jax.random.normal(ks[7], (planes,), jnp.float32),
        "mean2": 0.1 * jax.random.normal(ks[8], (planes,), jnp.float32),
        "var2": jnp.abs(1.0 + 0.1 * jax.random.normal(ks[9], (planes,), jnp.float32)),
    }


# ----------------------------------------------------------------------------
# Pure-JAX reference (same BN-scale folding / dtype flow as the kernel; the
# convs use precision=HIGHEST, so the f32 path differs from the kernel's
# default-precision MXU dots within the documented tolerance below).
# ----------------------------------------------------------------------------
def reference_forward(x_nchw, params, eps=1e-5):
    x = jnp.transpose(x_nchw, (0, 2, 3, 1))
    cdt = x.dtype

    def fold_w(w_oihw, gamma, var):
        s = gamma / jnp.sqrt(var + eps)
        return (jnp.transpose(w_oihw, (2, 3, 1, 0)) * s).astype(cdt)

    def fold_b(gamma, beta, mean, var):
        s = gamma / jnp.sqrt(var + eps)
        return beta - mean * s

    w1 = fold_w(params["w1"], params["gamma1"], params["var1"])
    w2 = fold_w(params["w2"], params["gamma2"], params["var2"])
    b1 = fold_b(params["gamma1"], params["beta1"], params["mean1"], params["var1"])
    b2 = fold_b(params["gamma2"], params["beta2"], params["mean2"], params["var2"])

    dn = lax.conv_dimension_numbers(x.shape, w1.shape, ("NHWC", "HWIO", "NHWC"))
    o = lax.conv_general_dilated(x, w1, (1, 1), "SAME", dimension_numbers=dn,
                                 preferred_element_type=jnp.float32,
                                 precision=lax.Precision.HIGHEST)
    o = jnp.maximum(o + b1, 0.0).astype(cdt)           # intermediate stored at cdt
    o = lax.conv_general_dilated(o, w2, (1, 1), "SAME", dimension_numbers=dn,
                                 preferred_element_type=jnp.float32,
                                 precision=lax.Precision.HIGHEST)
    o = jnp.maximum(o + b2 + x.astype(jnp.float32), 0.0)
    return jnp.transpose(o.astype(cdt), (0, 3, 1, 2))


if __name__ == "__main__":
    key = jax.random.PRNGKey(0)
    kx, kp = jax.random.split(key)

    # ResNet-like: 128 channels (layer2 planes) keeps the channel / lane dim
    # dense; 16x16 spatial; batch 4 gives the manual DMA pipeline several
    # steps to overlap.
    N, C, H, W = 4, 128, 16, 16
    x = jax.random.normal(kx, (N, C, H, W), jnp.float32)
    params = init_basic_block_params(kp, C)

    fwd = jax.jit(basic_block_forward)

    # float32 path (kernel uses default MXU precision; reference uses HIGHEST).
    out = jax.block_until_ready(fwd(x, params))
    ref = reference_forward(x, params)
    assert out.shape == (N, C, H, W)
    err = float(jnp.max(jnp.abs(out - ref)))
    assert jnp.allclose(out, ref, atol=3e-2, rtol=2e-2), f"f32 max abs err {err}"

    # bfloat16 path: activations/weights feed the MXU as bf16, f32 accumulation.
    xb = x.astype(jnp.bfloat16)
    outb = jax.block_until_ready(fwd(xb, params))
    refb = reference_forward(xb, params)
    assert outb.dtype == jnp.bfloat16
    errb = float(jnp.max(jnp.abs(outb.astype(jnp.float32) -
                                 refb.astype(jnp.float32))))
    assert jnp.allclose(outb.astype(jnp.float32), refb.astype(jnp.float32),
                        atol=5e-2, rtol=5e-2), f"bf16 max abs err {errb}"

    print("KERNEL_OK")
</pallas_src>

<mosaic_0001>
module attributes {stable_mosaic.version = 11 : i64} {
  func.func @_basic_block_kernel(%arg0: i32, %arg1: memref<4x16x16x128xf32, #tpu.memory_space<any>>, %arg2: memref<3x3x128x128xf32, #tpu.memory_space<vmem>>, %arg3: memref<3x3x128x128xf32, #tpu.memory_space<vmem>>, %arg4: memref<1x128xf32, #tpu.memory_space<vmem>>, %arg5: memref<1x128xf32, #tpu.memory_space<vmem>>, %arg6: memref<1x16x16x128xf32, #tpu.memory_space<vmem>>, %arg7: memref<2x18x32x128xf32, #tpu.memory_space<vmem>>, %arg8: memref<18x32x128xf32, #tpu.memory_space<vmem>>, %arg9: memref<2x!tpu.dma_semaphore, #tpu.memory_space<semaphore_mem>>) attributes {dimension_semantics = [#tpu.dimension_semantics<arbitrary>], iteration_bounds = array<i64: 4>, scalar_prefetch = 0 : i64, scratch_operands = 3 : i64, tpu.core_type = #tpu.core_type<tc>, window_params = [{}, {pipeline_mode = #tpu.pipeline_mode<synchronous>, transform_indices = @transform_1, window_bounds = array<i64: 3, 3, 128, 128>}, {pipeline_mode = #tpu.pipeline_mode<synchronous>, transform_indices = @transform_2, window_bounds = array<i64: 3, 3, 128, 128>}, {pipeline_mode = #tpu.pipeline_mode<synchronous>, transform_indices = @transform_3, window_bounds = array<i64: 1, 128>}, {pipeline_mode = #tpu.pipeline_mode<synchronous>, transform_indices = @transform_4, window_bounds = array<i64: 1, 128>}, {transform_indices = @transform_5, window_bounds = array<i64: 1, 16, 16, 128>}]} {
    %c2_i32 = arith.constant 2 : i32
    %c0_i32 = arith.constant 0 : i32
    %0 = arith.cmpi eq, %c2_i32, %c0_i32 : i32
    %c1_i32 = arith.constant 1 : i32
    %1 = arith.select %0, %c1_i32, %c2_i32 : i32
    %2 = arith.remsi %arg0, %1 : i32
    %c0_i32_0 = arith.constant 0 : i32
    %3 = arith.cmpi ne, %2, %c0_i32_0 : i32
    %c0_i32_1 = arith.constant 0 : i32
    %4 = arith.cmpi slt, %2, %c0_i32_1 : i32
    %c0_i32_2 = arith.constant 0 : i32
    %5 = arith.cmpi slt, %1, %c0_i32_2 : i32
    %6 = arith.xori %4, %5 : i1
    %7 = arith.andi %6, %3 : i1
    %8 = arith.addi %2, %1 : i32
    %9 = arith.select %7, %8, %2 : i32
    %c0_i32_3 = arith.constant 0 : i32
    %10 = arith.cmpi eq, %arg0, %c0_i32_3 : i32
    %11 = arith.extui %10 : i1 to i32
    %c0_i32_4 = arith.constant 0 : i32
    %12 = arith.cmpi ne, %11, %c0_i32_4 : i32
    scf.if %12 {
      %cst_197 = arith.constant 0.000000e+00 : f32
      %172 = vector.broadcast %cst_197 : f32 to vector<1x32x128xf32>
      %cst_198 = arith.constant 0.000000e+00 : f32
      %173 = vector.broadcast %cst_198 : f32 to vector<16x8x128xf32>
      %cst_199 = arith.constant 0.000000e+00 : f32
      %174 = vector.broadcast %cst_199 : f32 to vector<16x8x128xf32>
      %c0_200 = arith.constant 0 : index
      %c0_201 = arith.constant 0 : index
      %c0_202 = arith.constant 0 : index
      %c0_203 = arith.constant 0 : index
      %175 = vector.load %arg7[%c0_200, %c0_201, %c0_202, %c0_203] : memref<2x18x32x128xf32, #tpu.memory_space<vmem>>, vector<1x1x32x128xf32>
      %176 = vector.shape_cast %175 : vector<1x1x32x128xf32> to vector<1x32x128xf32>
      %177 = vector.shape_cast %172 : vector<1x32x128xf32> to vector<1x1x32x128xf32>
      tpu.vector_store %arg7[%c0_200, %c0_201, %c0_202, %c0_203], %177 {strides = array<i32>} : memref<2x18x32x128xf32, #tpu.memory_space<vmem>>, vector<1x1x32x128xf32>,
      %c0_204 = arith.constant 0 : index
      %c17 = arith.constant 17 : index
      %c0_205 = arith.constant 0 : index
      %c0_206 = arith.constant 0 : index
      %178 = vector.load %arg7[%c0_204, %c17, %c0_205, %c0_206] : memref<2x18x32x128xf32, #tpu.memory_space<vmem>>, vector<1x1x32x128xf32>
      %179 = vector.shape_cast %178 : vector<1x1x32x128xf32> to vector<1x32x128xf32>
      %180 = vector.shape_cast %172 : vector<1x32x128xf32> to vector<1x1x32x128xf32>
      tpu.vector_store %arg7[%c0_204, %c17, %c0_205, %c0_206], %180 {strides = array<i32>} : memref<2x18x32x128xf32, #tpu.memory_space<vmem>>, vector<1x1x32x128xf32>,
      %c0_207 = arith.constant 0 : index
      %c1_208 = arith.constant 1 : index
      %c0_209 = arith.constant 0 : index
      %c0_210 = arith.constant 0 : index
      %181 = vector.load %arg7[%c0_207, %c1_208, %c0_209, %c0_210] : memref<2x18x32x128xf32, #tpu.memory_space<vmem>>, vector<1x16x8x128xf32>
      %182 = vector.shape_cast %181 : vector<1x16x8x128xf32> to vector<16x8x128xf32>
      %183 = vector.shape_cast %173 : vector<16x8x128xf32> to vector<1x16x8x128xf32>
      tpu.vector_store %arg7[%c0_207, %c1_208, %c0_209, %c0_210], %183 {strides = array<i32>} : memref<2x18x32x128xf32, #tpu.memory_space<vmem>>, vector<1x16x8x128xf32>,
      %c0_211 = arith.constant 0 : index
      %c1_212 = arith.constant 1 : index
      %c24 = arith.constant 24 : index
      %c0_213 = arith.constant 0 : index
      %184 = vector.load %arg7[%c0_211, %c1_212, %c24, %c0_213] : memref<2x18x32x128xf32, #tpu.memory_space<vmem>>, vector<1x16x8x128xf32>
      %185 = vector.shape_cast %184 : vector<1x16x8x128xf32> to vector<16x8x128xf32>
      %186 = vector.shape_cast %174 : vector<16x8x128xf32> to vector<1x16x8x128xf32>
      tpu.vector_store %arg7[%c0_211, %c1_212, %c24, %c0_213], %186 {strides = array<i32>} : memref<2x18x32x128xf32, #tpu.memory_space<vmem>>, vector<1x16x8x128xf32>,
      %c1_214 = arith.constant 1 : index
      %c0_215 = arith.constant 0 : index
      %c0_216 = arith.constant 0 : index
      %c0_217 = arith.constant 0 : index
      %187 = vector.load %arg7[%c1_214, %c0_215, %c0_216, %c0_217] : memref<2x18x32x128xf32, #tpu.memory_space<vmem>>, vector<1x1x32x128xf32>
      %188 = vector.shape_cast %187 : vector<1x1x32x128xf32> to vector<1x32x128xf32>
      %189 = vector.shape_cast %172 : vector<1x32x128xf32> to vector<1x1x32x128xf32>
      tpu.vector_store %arg7[%c1_214, %c0_215, %c0_216, %c0_217], %189 {strides = array<i32>} : memref<2x18x32x128xf32, #tpu.memory_space<vmem>>, vector<1x1x32x128xf32>,
      %c1_218 = arith.constant 1 : index
      %c17_219 = arith.constant 17 : index
      %c0_220 = arith.constant 0 : index
      %c0_221 = arith.constant 0 : index
      %190 = vector.load %arg7[%c1_218, %c17_219, %c0_220, %c0_221] : memref<2x18x32x128xf32, #tpu.memory_space<vmem>>, vector<1x1x32x128xf32>
      %191 = vector.shape_cast %190 : vector<1x1x32x128xf32> to vector<1x32x128xf32>
      %192 = vector.shape_cast %172 : vector<1x32x128xf32> to vector<1x1x32x128xf32>
      tpu.vector_store %arg7[%c1_218, %c17_219, %c0_220, %c0_221], %192 {strides = array<i32>} : memref<2x18x32x128xf32, #tpu.memory_space<vmem>>, vector<1x1x32x128xf32>,
      %c1_222 = arith.constant 1 : index
      %c1_223 = arith.constant 1 : index
      %c0_224 = arith.constant 0 : index
      %c0_225 = arith.constant 0 : index
      %193 = vector.load %arg7[%c1_222, %c1_223, %c0_224, %c0_225] : memref<2x18x32x128xf32, #tpu.memory_space<vmem>>, vector<1x16x8x128xf32>
      %194 = vector.shape_cast %193 : vector<1x16x8x128xf32> to vector<16x8x128xf32>
      %195 = vector.shape_cast %173 : vector<16x8x128xf32> to vector<1x16x8x128xf32>
      tpu.vector_store %arg7[%c1_222, %c1_223, %c0_224, %c0_225], %195 {strides = array<i32>} : memref<2x18x32x128xf32, #tpu.memory_space<vmem>>, vector<1x16x8x128xf32>,
      %c1_226 = arith.constant 1 : index
      %c1_227 = arith.constant 1 : index
      %c24_228 = arith.constant 24 : index
      %c0_229 = arith.constant 0 : index
      %196 = vector.load %arg7[%c1_226, %c1_227, %c24_228, %c0_229] : memref<2x18x32x128xf32, #tpu.memory_space<vmem>>, vector<1x16x8x128xf32>
      %197 = vector.shape_cast %196 : vector<1x16x8x128xf32> to vector<16x8x128xf32>
      %198 = vector.shape_cast %174 : vector<16x8x128xf32> to vector<1x16x8x128xf32>
      tpu.vector_store %arg7[%c1_226, %c1_227, %c24_228, %c0_229], %198 {strides = array<i32>} : memref<2x18x32x128xf32, #tpu.memory_space<vmem>>, vector<1x16x8x128xf32>,
      %c0_230 = arith.constant 0 : index
      %c0_231 = arith.constant 0 : index
      %c0_232 = arith.constant 0 : index
      %199 = vector.load %arg8[%c0_230, %c0_231, %c0_232] : memref<18x32x128xf32, #tpu.memory_space<vmem>>, vector<1x32x128xf32>
      tpu.vector_store %arg8[%c0_230, %c0_231, %c0_232], %172 {strides = array<i32>} : memref<18x32x128xf32, #tpu.memory_space<vmem>>, vector<1x32x128xf32>,
      %c17_233 = arith.constant 17 : index
      %c0_234 = arith.constant 0 : index
      %c0_235 = arith.constant 0 : index
      %200 = vector.load %arg8[%c17_233, %c0_234, %c0_235] : memref<18x32x128xf32, #tpu.memory_space<vmem>>, vector<1x32x128xf32>
      tpu.vector_store %arg8[%c17_233, %c0_234, %c0_235], %172 {strides = array<i32>} : memref<18x32x128xf32, #tpu.memory_space<vmem>>, vector<1x32x128xf32>,
      %c1_236 = arith.constant 1 : index
      %c0_237 = arith.constant 0 : index
      %c0_238 = arith.constant 0 : index
      %201 = vector.load %arg8[%c1_236, %c0_237, %c0_238] : memref<18x32x128xf32, #tpu.memory_space<vmem>>, vector<16x8x128xf32>
      tpu.vector_store %arg8[%c1_236, %c0_237, %c0_238], %173 {strides = array<i32>} : memref<18x32x128xf32, #tpu.memory_space<vmem>>, vector<16x8x128xf32>,
      %c1_239 = arith.constant 1 : index
      %c24_240 = arith.constant 24 : index
      %c0_241 = arith.constant 0 : index
      %202 = vector.load %arg8[%c1_239, %c24_240, %c0_241] : memref<18x32x128xf32, #tpu.memory_space<vmem>>, vector<16x8x128xf32>
      tpu.vector_store %arg8[%c1_239, %c24_240, %c0_241], %174 {strides = array<i32>} : memref<18x32x128xf32, #tpu.memory_space<vmem>>, vector<16x8x128xf32>,
      %c0_i32_242 = arith.constant 0 : i32
      %c0_i32_243 = arith.constant 0 : i32
      %c0_i32_244 = arith.constant 0 : i32
      %c0_i32_245 = arith.constant 0 : i32
      %c0_i32_246 = arith.constant 0 : i32
      %c0_i32_247 = arith.constant 0 : i32
      %203 = tpu.memref_slice %arg1[%c0_i32_242, %c0_i32_245, %c0_i32_246, %c0_i32_247] : memref<4x16x16x128xf32, #tpu.memory_space<any>> -> memref<1x16x16x128xf32, #tpu.memory_space<any>>
      %204 = tpu.memref_squeeze %203 : memref<1x16x16x128xf32, #tpu.memory_space<any>> -> memref<16x16x128xf32, #tpu.memory_space<any>>
      %c1_i32_248 = arith.constant 1 : i32
      %c8_i32_249 = arith.constant 8 : i32
      %c0_i32_250 = arith.constant 0 : i32
      %205 = tpu.memref_slice %arg7[%c0_i32_243, %c1_i32_248, %c8_i32_249, %c0_i32_250] : memref<2x18x32x128xf32, #tpu.memory_space<vmem>> -> memref<1x16x16x128xf32, #tpu.memory_space<vmem>>
      %206 = tpu.memref_squeeze %205 : memref<1x16x16x128xf32, #tpu.memory_space<vmem>> -> memref<16x16x128xf32, #tpu.memory_space<vmem>>
      %207 = tpu.memref_slice %arg9[%c0_i32_244] : memref<2x!tpu.dma_semaphore, #tpu.memory_space<semaphore_mem>> -> memref<1x!tpu.dma_semaphore, #tpu.memory_space<semaphore_mem>>
      %208 = tpu.memref_squeeze %207 : memref<1x!tpu.dma_semaphore, #tpu.memory_space<semaphore_mem>> -> memref<!tpu.dma_semaphore, #tpu.memory_space<semaphore_mem>>
      tpu.enqueue_dma source(%204 : memref<16x16x128xf32, #tpu.memory_space<any>>) target(%206 : memref<16x16x128xf32, #tpu.memory_space<vmem>>) target_semaphore(%208 : memref<!tpu.dma_semaphore, #tpu.memory_space<semaphore_mem>>)
    } else {
    }
    %c1_i32_5 = arith.constant 1 : i32
    %13 = arith.addi %arg0, %c1_i32_5 : i32
    %c4_i32 = arith.constant 4 : i32
    %14 = arith.cmpi slt, %13, %c4_i32 : i32
    %15 = arith.extui %14 : i1 to i32
    %c0_i32_6 = arith.constant 0 : i32
    %16 = arith.cmpi ne, %15, %c0_i32_6 : i32
    scf.if %16 {
      %c1_i32_197 = arith.constant 1 : i32
      %172 = arith.addi %arg0, %c1_i32_197 : i32
      %c1_i32_198 = arith.constant 1 : i32
      %173 = arith.subi %c1_i32_198, %9 : i32
      %c0_i32_199 = arith.constant 0 : i32
      %c0_i32_200 = arith.constant 0 : i32
      %c0_i32_201 = arith.constant 0 : i32
      %174 = tpu.memref_slice %arg1[%172, %c0_i32_199, %c0_i32_200, %c0_i32_201] : memref<4x16x16x128xf32, #tpu.memory_space<any>> -> memref<1x16x16x128xf32, #tpu.memory_space<any>>
      %175 = tpu.memref_squeeze %174 : memref<1x16x16x128xf32, #tpu.memory_space<any>> -> memref<16x16x128xf32, #tpu.memory_space<any>>
      %c1_i32_202 = arith.constant 1 : i32
      %c8_i32_203 = arith.constant 8 : i32
      %c0_i32_204 = arith.constant 0 : i32
      %176 = tpu.memref_slice %arg7[%173, %c1_i32_202, %c8_i32_203, %c0_i32_204] : memref<2x18x32x128xf32, #tpu.memory_space<vmem>> -> memref<1x16x16x128xf32, #tpu.memory_space<vmem>>
      %177 = tpu.memref_squeeze %176 : memref<1x16x16x128xf32, #tpu.memory_space<vmem>> -> memref<16x16x128xf32, #tpu.memory_space<vmem>>
      %178 = tpu.memref_slice %arg9[%173] : memref<2x!tpu.dma_semaphore, #tpu.memory_space<semaphore_mem>> -> memref<1x!tpu.dma_semaphore, #tpu.memory_space<semaphore_mem>>
      %179 = tpu.memref_squeeze %178 : memref<1x!tpu.dma_semaphore, #tpu.memory_space<semaphore_mem>> -> memref<!tpu.dma_semaphore, #tpu.memory_space<semaphore_mem>>
      tpu.enqueue_dma source(%175 : memref<16x16x128xf32, #tpu.memory_space<any>>) target(%177 : memref<16x16x128xf32, #tpu.memory_space<vmem>>) target_semaphore(%179 : memref<!tpu.dma_semaphore, #tpu.memory_space<semaphore_mem>>)
    } else {
    }
    %c0_i32_7 = arith.constant 0 : i32
    %c0_i32_8 = arith.constant 0 : i32
    %c0_i32_9 = arith.constant 0 : i32
    %17 = tpu.memref_slice %arg1[%arg0, %c0_i32_7, %c0_i32_8, %c0_i32_9] : memref<4x16x16x128xf32, #tpu.memory_space<any>> -> memref<1x16x16x128xf32, #tpu.memory_space<any>>
    %18 = tpu.memref_squeeze %17 : memref<1x16x16x128xf32, #tpu.memory_space<any>> -> memref<16x16x128xf32, #tpu.memory_space<any>>
    %c1_i32_10 = arith.constant 1 : i32
    %c8_i32 = arith.constant 8 : i32
    %c0_i32_11 = arith.constant 0 : i32
    %19 = tpu.memref_slice %arg7[%9, %c1_i32_10, %c8_i32, %c0_i32_11] : memref<2x18x32x128xf32, #tpu.memory_space<vmem>> -> memref<1x16x16x128xf32, #tpu.memory_space<vmem>>
    %20 = tpu.memref_squeeze %19 : memref<1x16x16x128xf32, #tpu.memory_space<vmem>> -> memref<16x16x128xf32, #tpu.memory_space<vmem>>
    %21 = tpu.memref_slice %arg9[%9] : memref<2x!tpu.dma_semaphore, #tpu.memory_space<semaphore_mem>> -> memref<1x!tpu.dma_semaphore, #tpu.memory_space<semaphore_mem>>
    %22 = tpu.memref_squeeze %21 : memref<1x!tpu.dma_semaphore, #tpu.memory_space<semaphore_mem>> -> memref<!tpu.dma_semaphore, #tpu.memory_space<semaphore_mem>>
    tpu.wait_dma2 semaphore(%22 : memref<!tpu.dma_semaphore, #tpu.memory_space<semaphore_mem>>) src(%18 : memref<16x16x128xf32, #tpu.memory_space<any>>) dst(%20 : memref<16x16x128xf32, #tpu.memory_space<vmem>>)
    %c0 = arith.constant 0 : index
    %c0_12 = arith.constant 0 : index
    %23 = vector.load %arg4[%c0, %c0_12] : memref<1x128xf32, #tpu.memory_space<vmem>>, vector<1x128xf32>
    %c0_13 = arith.constant 0 : index
    %c0_14 = arith.constant 0 : index
    %24 = vector.load %arg5[%c0_13, %c0_14] : memref<1x128xf32, #tpu.memory_space<vmem>>, vector<1x128xf32>
    %cst = arith.constant 0.000000e+00 : f32
    %25 = vector.broadcast %cst : f32 to vector<256x128xf32>
    %c0_i32_15 = arith.constant 0 : i32
    %c0_i32_16 = arith.constant 0 : i32
    %c0_i32_17 = arith.constant 0 : i32
    %26 = tpu.memref_slice %arg7[%9, %c0_i32_15, %c0_i32_16, %c0_i32_17] : memref<2x18x32x128xf32, #tpu.memory_space<vmem>> -> memref<1x18x32x128xf32, #tpu.memory_space<vmem>>
    %27 = tpu.memref_squeeze %26 : memref<1x18x32x128xf32, #tpu.memory_space<vmem>> -> memref<18x32x128xf32, #tpu.memory_space<vmem>>
    %c0_18 = arith.constant 0 : index
    %c7 = arith.constant 7 : index
    %c0_19 = arith.constant 0 : index
    %28 = vector.load %27[%c0_18, %c7, %c0_19] : memref<18x32x128xf32, #tpu.memory_space<vmem>>, vector<16x16x128xf32>
    %29 = vector.shape_cast %28 : vector<16x16x128xf32> to vector<256x128xf32>
    %c0_20 = arith.constant 0 : index
    %c0_21 = arith.constant 0 : index
    %c0_22 = arith.constant 0 : index
    %c0_23 = arith.constant 0 : index
    %30 = vector.load %arg2[%c0_20, %c0_21, %c0_22, %c0_23] : memref<3x3x128x128xf32, #tpu.memory_space<vmem>>, vector<1x1x128x128xf32>
    %31 = vector.shape_cast %30 : vector<1x1x128x128xf32> to vector<128x128xf32>
    %cst_24 = arith.constant dense<0.000000e+00> : vector<256x128xf32>
    %32 = tpu.matmul %29, %31, %cst_24 {dimension_numbers = #tpu.dot_dimension_numbers<[1], [0], [0], [1], [0, 0, 1, 1], [], []>} : vector<256x128xf32>, vector<128x128xf32>, vector<256x128xf32> -> vector<256x128xf32>
    %33 = arith.addf %25, %32 : vector<256x128xf32>
    %c0_i32_25 = arith.constant 0 : i32
    %c0_i32_26 = arith.constant 0 : i32
    %c0_i32_27 = arith.constant 0 : i32
    %34 = tpu.memref_slice %arg7[%9, %c0_i32_25, %c0_i32_26, %c0_i32_27] : memref<2x18x32x128xf32, #tpu.memory_space<vmem>> -> memref<1x18x32x128xf32, #tpu.memory_space<vmem>>
    %35 = tpu.memref_squeeze %34 : memref<1x18x32x128xf32, #tpu.memory_space<vmem>> -> memref<18x32x128xf32, #tpu.memory_space<vmem>>
    %c0_28 = arith.constant 0 : index
    %c8 = arith.constant 8 : index
    %c0_29 = arith.constant 0 : index
    %36 = vector.load %35[%c0_28, %c8, %c0_29] : memref<18x32x128xf32, #tpu.memory_space<vmem>>, vector<16x16x128xf32>
    %37 = vector.shape_cast %36 : vector<16x16x128xf32> to vector<256x128xf32>
    %c0_30 = arith.constant 0 : index
    %c1 = arith.constant 1 : index
    %c0_31 = arith.constant 0 : index
    %c0_32 = arith.constant 0 : index
    %38 = vector.load %arg2[%c0_30, %c1, %c0_31, %c0_32] : memref<3x3x128x128xf32, #tpu.memory_space<vmem>>, vector<1x1x128x128xf32>
    %39 = vector.shape_cast %38 : vector<1x1x128x128xf32> to vector<128x128xf32>
    %cst_33 = arith.constant dense<0.000000e+00> : vector<256x128xf32>
    %40 = tpu.matmul %37, %39, %cst_33 {dimension_numbers = #tpu.dot_dimension_numbers<[1], [0], [0], [1], [0, 0, 1, 1], [], []>} : vector<256x128xf32>, vector<128x128xf32>, vector<256x128xf32> -> vector<256x128xf32>
    %41 = arith.addf %33, %40 : vector<256x128xf32>
    %c0_i32_34 = arith.constant 0 : i32
    %c0_i32_35 = arith.constant 0 : i32
    %c0_i32_36 = arith.constant 0 : i32
    %42 = tpu.memref_slice %arg7[%9, %c0_i32_34, %c0_i32_35, %c0_i32_36] : memref<2x18x32x128xf32, #tpu.memory_space<vmem>> -> memref<1x18x32x128xf32, #tpu.memory_space<vmem>>
    %43 = tpu.memref_squeeze %42 : memref<1x18x32x128xf32, #tpu.memory_space<vmem>> -> memref<18x32x128xf32, #tpu.memory_space<vmem>>
    %c0_37 = arith.constant 0 : index
    %c9 = arith.constant 9 : index
    %c0_38 = arith.constant 0 : index
    %44 = vector.load %43[%c0_37, %c9, %c0_38] : memref<18x32x128xf32, #tpu.memory_space<vmem>>, vector<16x16x128xf32>
    %45 = vector.shape_cast %44 : vector<16x16x128xf32> to vector<256x128xf32>
    %c0_39 = arith.constant 0 : index
    %c2 = arith.constant 2 : index
    %c0_40 = arith.constant 0 : index
    %c0_41 = arith.constant 0 : index
    %46 = vector.load %arg2[%c0_39, %c2, %c0_40, %c0_41] : memref<3x3x128x128xf32, #tpu.memory_space<vmem>>, vector<1x1x128x128xf32>
    %47 = vector.shape_cast %46 : vector<1x1x128x128xf32> to vector<128x128xf32>
    %cst_42 = arith.constant dense<0.000000e+00> : vector<256x128xf32>
    %48 = tpu.matmul %45, %47, %cst_42 {dimension_numbers = #tpu.dot_dimension_numbers<[1], [0], [0], [1], [0, 0, 1, 1], [], []>} : vector<256x128xf32>, vector<128x128xf32>, vector<256x128xf32> -> vector<256x128xf32>
    %49 = arith.addf %41, %48 : vector<256x128xf32>
    %c0_i32_43 = arith.constant 0 : i32
    %c0_i32_44 = arith.constant 0 : i32
    %c0_i32_45 = arith.constant 0 : i32
    %50 = tpu.memref_slice %arg7[%9, %c0_i32_43, %c0_i32_44, %c0_i32_45] : memref<2x18x32x128xf32, #tpu.memory_space<vmem>> -> memref<1x18x32x128xf32, #tpu.memory_space<vmem>>
    %51 = tpu.memref_squeeze %50 : memref<1x18x32x128xf32, #tpu.memory_space<vmem>> -> memref<18x32x128xf32, #tpu.memory_space<vmem>>
    %c1_46 = arith.constant 1 : index
    %c7_47 = arith.constant 7 : index
    %c0_48 = arith.constant 0 : index
    %52 = vector.load %51[%c1_46, %c7_47, %c0_48] : memref<18x32x128xf32, #tpu.memory_space<vmem>>, vector<16x16x128xf32>
    %53 = vector.shape_cast %52 : vector<16x16x128xf32> to vector<256x128xf32>
    %c1_49 = arith.constant 1 : index
    %c0_50 = arith.constant 0 : index
    %c0_51 = arith.constant 0 : index
    %c0_52 = arith.constant 0 : index
    %54 = vector.load %arg2[%c1_49, %c0_50, %c0_51, %c0_52] : memref<3x3x128x128xf32, #tpu.memory_space<vmem>>, vector<1x1x128x128xf32>
    %55 = vector.shape_cast %54 : vector<1x1x128x128xf32> to vector<128x128xf32>
    %cst_53 = arith.constant dense<0.000000e+00> : vector<256x128xf32>
    %56 = tpu.matmul %53, %55, %cst_53 {dimension_numbers = #tpu.dot_dimension_numbers<[1], [0], [0], [1], [0, 0, 1, 1], [], []>} : vector<256x128xf32>, vector<128x128xf32>, vector<256x128xf32> -> vector<256x128xf32>
    %57 = arith.addf %49, %56 : vector<256x128xf32>
    %c0_i32_54 = arith.constant 0 : i32
    %c0_i32_55 = arith.constant 0 : i32
    %c0_i32_56 = arith.constant 0 : i32
    %58 = tpu.memref_slice %arg7[%9, %c0_i32_54, %c0_i32_55, %c0_i32_56] : memref<2x18x32x128xf32, #tpu.memory_space<vmem>> -> memref<1x18x32x128xf32, #tpu.memory_space<vmem>>
    %59 = tpu.memref_squeeze %58 : memref<1x18x32x128xf32, #tpu.memory_space<vmem>> -> memref<18x32x128xf32, #tpu.memory_space<vmem>>
    %c1_57 = arith.constant 1 : index
    %c8_58 = arith.constant 8 : index
    %c0_59 = arith.constant 0 : index
    %60 = vector.load %59[%c1_57, %c8_58, %c0_59] : memref<18x32x128xf32, #tpu.memory_space<vmem>>, vector<16x16x128xf32>
    %61 = vector.shape_cast %60 : vector<16x16x128xf32> to vector<256x128xf32>
    %c1_60 = arith.constant 1 : index
    %c1_61 = arith.constant 1 : index
    %c0_62 = arith.constant 0 : index
    %c0_63 = arith.constant 0 : index
    %62 = vector.load %arg2[%c1_60, %c1_61, %c0_62, %c0_63] : memref<3x3x128x128xf32, #tpu.memory_space<vmem>>, vector<1x1x128x128xf32>
    %63 = vector.shape_cast %62 : vector<1x1x128x128xf32> to vector<128x128xf32>
    %cst_64 = arith.constant dense<0.000000e+00> : vector<256x128xf32>
    %64 = tpu.matmul %61, %63, %cst_64 {dimension_numbers = #tpu.dot_dimension_numbers<[1], [0], [0], [1], [0, 0, 1, 1], [], []>} : vector<256x128xf32>, vector<128x128xf32>, vector<256x128xf32> -> vector<256x128xf32>
    %65 = arith.addf %57, %64 : vector<256x128xf32>
    %c0_i32_65 = arith.constant 0 : i32
    %c0_i32_66 = arith.constant 0 : i32
    %c0_i32_67 = arith.constant 0 : i32
    %66 = tpu.memref_slice %arg7[%9, %c0_i32_65, %c0_i32_66, %c0_i32_67] : memref<2x18x32x128xf32, #tpu.memory_space<vmem>> -> memref<1x18x32x128xf32, #tpu.memory_space<vmem>>
    %67 = tpu.memref_squeeze %66 : memref<1x18x32x128xf32, #tpu.memory_space<vmem>> -> memref<18x32x128xf32, #tpu.memory_space<vmem>>
    %c1_68 = arith.constant 1 : index
    %c9_69 = arith.constant 9 : index
    %c0_70 = arith.constant 0 : index
    %68 = vector.load %67[%c1_68, %c9_69, %c0_70] : memref<18x32x128xf32, #tpu.memory_space<vmem>>, vector<16x16x128xf32>
    %69 = vector.shape_cast %68 : vector<16x16x128xf32> to vector<256x128xf32>
    %c1_71 = arith.constant 1 : index
    %c2_72 = arith.constant 2 : index
    %c0_73 = arith.constant 0 : index
    %c0_74 = arith.constant 0 : index
    %70 = vector.load %arg2[%c1_71, %c2_72, %c0_73, %c0_74] : memref<3x3x128x128xf32, #tpu.memory_space<vmem>>, vector<1x1x128x128xf32>
    %71 = vector.shape_cast %70 : vector<1x1x128x128xf32> to vector<128x128xf32>
    %cst_75 = arith.constant dense<0.000000e+00> : vector<256x128xf32>
    %72 = tpu.matmul %69, %71, %cst_75 {dimension_numbers = #tpu.dot_dimension_numbers<[1], [0], [0], [1], [0, 0, 1, 1], [], []>} : vector<256x128xf32>, vector<128x128xf32>, vector<256x128xf32> -> vector<256x128xf32>
    %73 = arith.addf %65, %72 : vector<256x128xf32>
    %c0_i32_76 = arith.constant 0 : i32
    %c0_i32_77 = arith.constant 0 : i32
    %c0_i32_78 = arith.constant 0 : i32
    %74 = tpu.memref_slice %arg7[%9, %c0_i32_76, %c0_i32_77, %c0_i32_78] : memref<2x18x32x128xf32, #tpu.memory_space<vmem>> -> memref<1x18x32x128xf32, #tpu.memory_space<vmem>>
    %75 = tpu.memref_squeeze %74 : memref<1x18x32x128xf32, #tpu.memory_space<vmem>> -> memref<18x32x128xf32, #tpu.memory_space<vmem>>
    %c2_79 = arith.constant 2 : index
    %c7_80 = arith.constant 7 : index
    %c0_81 = arith.constant 0 : index
    %76 = vector.load %75[%c2_79, %c7_80, %c0_81] : memref<18x32x128xf32, #tpu.memory_space<vmem>>, vector<16x16x128xf32>
    %77 = vector.shape_cast %76 : vector<16x16x128xf32> to vector<256x128xf32>
    %c2_82 = arith.constant 2 : index
    %c0_83 = arith.constant 0 : index
    %c0_84 = arith.constant 0 : index
    %c0_85 = arith.constant 0 : index
    %78 = vector.load %arg2[%c2_82, %c0_83, %c0_84, %c0_85] : memref<3x3x128x128xf32, #tpu.memory_space<vmem>>, vector<1x1x128x128xf32>
    %79 = vector.shape_cast %78 : vector<1x1x128x128xf32> to vector<128x128xf32>
    %cst_86 = arith.constant dense<0.000000e+00> : vector<256x128xf32>
    %80 = tpu.matmul %77, %79, %cst_86 {dimension_numbers = #tpu.dot_dimension_numbers<[1], [0], [0], [1], [0, 0, 1, 1], [], []>} : vector<256x128xf32>, vector<128x128xf32>, vector<256x128xf32> -> vector<256x128xf32>
    %81 = arith.addf %73, %80 : vector<256x128xf32>
    %c0_i32_87 = arith.constant 0 : i32
    %c0_i32_88 = arith.constant 0 : i32
    %c0_i32_89 = arith.constant 0 : i32
    %82 = tpu.memref_slice %arg7[%9, %c0_i32_87, %c0_i32_88, %c0_i32_89] : memref<2x18x32x128xf32, #tpu.memory_space<vmem>> -> memref<1x18x32x128xf32, #tpu.memory_space<vmem>>
    %83 = tpu.memref_squeeze %82 : memref<1x18x32x128xf32, #tpu.memory_space<vmem>> -> memref<18x32x128xf32, #tpu.memory_space<vmem>>
    %c2_90 = arith.constant 2 : index
    %c8_91 = arith.constant 8 : index
    %c0_92 = arith.constant 0 : index
    %84 = vector.load %83[%c2_90, %c8_91, %c0_92] : memref<18x32x128xf32, #tpu.memory_space<vmem>>, vector<16x16x128xf32>
    %85 = vector.shape_cast %84 : vector<16x16x128xf32> to vector<256x128xf32>
    %c2_93 = arith.constant 2 : index
    %c1_94 = arith.constant 1 : index
    %c0_95 = arith.constant 0 : index
    %c0_96 = arith.constant 0 : index
    %86 = vector.load %arg2[%c2_93, %c1_94, %c0_95, %c0_96] : memref<3x3x128x128xf32, #tpu.memory_space<vmem>>, vector<1x1x128x128xf32>
    %87 = vector.shape_cast %86 : vector<1x1x128x128xf32> to vector<128x128xf32>
    %cst_97 = arith.constant dense<0.000000e+00> : vector<256x128xf32>
    %88 = tpu.matmul %85, %87, %cst_97 {dimension_numbers = #tpu.dot_dimension_numbers<[1], [0], [0], [1], [0, 0, 1, 1], [], []>} : vector<256x128xf32>, vector<128x128xf32>, vector<256x128xf32> -> vector<256x128xf32>
    %89 = arith.addf %81, %88 : vector<256x128xf32>
    %c0_i32_98 = arith.constant 0 : i32
    %c0_i32_99 = arith.constant 0 : i32
    %c0_i32_100 = arith.constant 0 : i32
    %90 = tpu.memref_slice %arg7[%9, %c0_i32_98, %c0_i32_99, %c0_i32_100] : memref<2x18x32x128xf32, #tpu.memory_space<vmem>> -> memref<1x18x32x128xf32, #tpu.memory_space<vmem>>
    %91 = tpu.memref_squeeze %90 : memref<1x18x32x128xf32, #tpu.memory_space<vmem>> -> memref<18x32x128xf32, #tpu.memory_space<vmem>>
    %c2_101 = arith.constant 2 : index
    %c9_102 = arith.constant 9 : index
    %c0_103 = arith.constant 0 : index
    %92 = vector.load %91[%c2_101, %c9_102, %c0_103] : memref<18x32x128xf32, #tpu.memory_space<vmem>>, vector<16x16x128xf32>
    %93 = vector.shape_cast %92 : vector<16x16x128xf32> to vector<256x128xf32>
    %c2_104 = arith.constant 2 : index
    %c2_105 = arith.constant 2 : index
    %c0_106 = arith.constant 0 : index
    %c0_107 = arith.constant 0 : index
    %94 = vector.load %arg2[%c2_104, %c2_105, %c0_106, %c0_107] : memref<3x3x128x128xf32, #tpu.memory_space<vmem>>, vector<1x1x128x128xf32>
    %95 = vector.shape_cast %94 : vector<1x1x128x128xf32> to vector<128x128xf32>
    %cst_108 = arith.constant dense<0.000000e+00> : vector<256x128xf32>
    %96 = tpu.matmul %93, %95, %cst_108 {dimension_numbers = #tpu.dot_dimension_numbers<[1], [0], [0], [1], [0, 0, 1, 1], [], []>} : vector<256x128xf32>, vector<128x128xf32>, vector<256x128xf32> -> vector<256x128xf32>
    %97 = arith.addf %89, %96 : vector<256x128xf32>
    %98 = vector.broadcast %23 : vector<1x128xf32> to vector<256x128xf32>
    %99 = arith.addf %97, %98 : vector<256x128xf32>
    %cst_109 = arith.constant 0.000000e+00 : f32
    %100 = vector.broadcast %cst_109 : f32 to vector<256x128xf32>
    %101 = arith.maximumf %99, %100 : vector<256x128xf32>
    %102 = vector.shape_cast %101 : vector<256x128xf32> to vector<16x16x128xf32>
    %c1_110 = arith.constant 1 : index
    %c8_111 = arith.constant 8 : index
    %c0_112 = arith.constant 0 : index
    %103 = vector.load %arg8[%c1_110, %c8_111, %c0_112] : memref<18x32x128xf32, #tpu.memory_space<vmem>>, vector<16x16x128xf32>
    tpu.vector_store %arg8[%c1_110, %c8_111, %c0_112], %102 {strides = array<i32>} : memref<18x32x128xf32, #tpu.memory_space<vmem>>, vector<16x16x128xf32>,
    %cst_113 = arith.constant 0.000000e+00 : f32
    %104 = vector.broadcast %cst_113 : f32 to vector<256x128xf32>
    %c0_114 = arith.constant 0 : index
    %c7_115 = arith.constant 7 : index
    %c0_116 = arith.constant 0 : index
    %105 = vector.load %arg8[%c0_114, %c7_115, %c0_116] : memref<18x32x128xf32, #tpu.memory_space<vmem>>, vector<16x16x128xf32>
    %106 = vector.shape_cast %105 : vector<16x16x128xf32> to vector<256x128xf32>
    %c0_117 = arith.constant 0 : index
    %c0_118 = arith.constant 0 : index
    %c0_119 = arith.constant 0 : index
    %c0_120 = arith.constant 0 : index
    %107 = vector.load %arg3[%c0_117, %c0_118, %c0_119, %c0_120] : memref<3x3x128x128xf32, #tpu.memory_space<vmem>>, vector<1x1x128x128xf32>
    %108 = vector.shape_cast %107 : vector<1x1x128x128xf32> to vector<128x128xf32>
    %cst_121 = arith.constant dense<0.000000e+00> : vector<256x128xf32>
    %109 = tpu.matmul %106, %108, %cst_121 {dimension_numbers = #tpu.dot_dimension_numbers<[1], [0], [0], [1], [0, 0, 1, 1], [], []>} : vector<256x128xf32>, vector<128x128xf32>, vector<256x128xf32> -> vector<256x128xf32>
    %110 = arith.addf %104, %109 : vector<256x128xf32>
    %c0_122 = arith.constant 0 : index
    %c8_123 = arith.constant 8 : index
    %c0_124 = arith.constant 0 : index
    %111 = vector.load %arg8[%c0_122, %c8_123, %c0_124] : memref<18x32x128xf32, #tpu.memory_space<vmem>>, vector<16x16x128xf32>
    %112 = vector.shape_cast %111 : vector<16x16x128xf32> to vector<256x128xf32>
    %c0_125 = arith.constant 0 : index
    %c1_126 = arith.constant 1 : index
    %c0_127 = arith.constant 0 : index
    %c0_128 = arith.constant 0 : index
    %113 = vector.load %arg3[%c0_125, %c1_126, %c0_127, %c0_128] : memref<3x3x128x128xf32, #tpu.memory_space<vmem>>, vector<1x1x128x128xf32>
    %114 = vector.shape_cast %113 : vector<1x1x128x128xf32> to vector<128x128xf32>
    %cst_129 = arith.constant dense<0.000000e+00> : vector<256x128xf32>
    %115 = tpu.matmul %112, %114, %cst_129 {dimension_numbers = #tpu.dot_dimension_numbers<[1], [0], [0], [1], [0, 0, 1, 1], [], []>} : vector<256x128xf32>, vector<128x128xf32>, vector<256x128xf32> -> vector<256x128xf32>
    %116 = arith.addf %110, %115 : vector<256x128xf32>
    %c0_130 = arith.constant 0 : index
    %c9_131 = arith.constant 9 : index
    %c0_132 = arith.constant 0 : index
    %117 = vector.load %arg8[%c0_130, %c9_131, %c0_132] : memref<18x32x128xf32, #tpu.memory_space<vmem>>, vector<16x16x128xf32>
    %118 = vector.shape_cast %117 : vector<16x16x128xf32> to vector<256x128xf32>
    %c0_133 = arith.constant 0 : index
    %c2_134 = arith.constant 2 : index
    %c0_135 = arith.constant 0 : index
    %c0_136 = arith.constant 0 : index
    %119 = vector.load %arg3[%c0_133, %c2_134, %c0_135, %c0_136] : memref<3x3x128x128xf32, #tpu.memory_space<vmem>>, vector<1x1x128x128xf32>
    %120 = vector.shape_cast %119 : vector<1x1x128x128xf32> to vector<128x128xf32>
    %cst_137 = arith.constant dense<0.000000e+00> : vector<256x128xf32>
    %121 = tpu.matmul %118, %120, %cst_137 {dimension_numbers = #tpu.dot_dimension_numbers<[1], [0], [0], [1], [0, 0, 1, 1], [], []>} : vector<256x128xf32>, vector<128x128xf32>, vector<256x128xf32> -> vector<256x128xf32>
    %122 = arith.addf %116, %121 : vector<256x128xf32>
    %c1_138 = arith.constant 1 : index
    %c7_139 = arith.constant 7 : index
    %c0_140 = arith.constant 0 : index
    %123 = vector.load %arg8[%c1_138, %c7_139, %c0_140] : memref<18x32x128xf32, #tpu.memory_space<vmem>>, vector<16x16x128xf32>
    %124 = vector.shape_cast %123 : vector<16x16x128xf32> to vector<256x128xf32>
    %c1_141 = arith.constant 1 : index
    %c0_142 = arith.constant 0 : index
    %c0_143 = arith.constant 0 : index
    %c0_144 = arith.constant 0 : index
    %125 = vector.load %arg3[%c1_141, %c0_142, %c0_143, %c0_144] : memref<3x3x128x128xf32, #tpu.memory_space<vmem>>, vector<1x1x128x128xf32>
    %126 = vector.shape_cast %125 : vector<1x1x128x128xf32> to vector<128x128xf32>
    %cst_145 = arith.constant dense<0.000000e+00> : vector<256x128xf32>
    %127 = tpu.matmul %124, %126, %cst_145 {dimension_numbers = #tpu.dot_dimension_numbers<[1], [0], [0], [1], [0, 0, 1, 1], [], []>} : vector<256x128xf32>, vector<128x128xf32>, vector<256x128xf32> -> vector<256x128xf32>
    %128 = arith.addf %122, %127 : vector<256x128xf32>
    %c1_146 = arith.constant 1 : index
    %c8_147 = arith.constant 8 : index
    %c0_148 = arith.constant 0 : index
    %129 = vector.load %arg8[%c1_146, %c8_147, %c0_148] : memref<18x32x128xf32, #tpu.memory_space<vmem>>, vector<16x16x128xf32>
    %130 = vector.shape_cast %129 : vector<16x16x128xf32> to vector<256x128xf32>
    %c1_149 = arith.constant 1 : index
    %c1_150 = arith.constant 1 : index
    %c0_151 = arith.constant 0 : index
    %c0_152 = arith.constant 0 : index
    %131 = vector.load %arg3[%c1_149, %c1_150, %c0_151, %c0_152] : memref<3x3x128x128xf32, #tpu.memory_space<vmem>>, vector<1x1x128x128xf32>
    %132 = vector.shape_cast %131 : vector<1x1x128x128xf32> to vector<128x128xf32>
    %cst_153 = arith.constant dense<0.000000e+00> : vector<256x128xf32>
    %133 = tpu.matmul %130, %132, %cst_153 {dimension_numbers = #tpu.dot_dimension_numbers<[1], [0], [0], [1], [0, 0, 1, 1], [], []>} : vector<256x128xf32>, vector<128x128xf32>, vector<256x128xf32> -> vector<256x128xf32>
    %134 = arith.addf %128, %133 : vector<256x128xf32>
    %c1_154 = arith.constant 1 : index
    %c9_155 = arith.constant 9 : index
    %c0_156 = arith.constant 0 : index
    %135 = vector.load %arg8[%c1_154, %c9_155, %c0_156] : memref<18x32x128xf32, #tpu.memory_space<vmem>>, vector<16x16x128xf32>
    %136 = vector.shape_cast %135 : vector<16x16x128xf32> to vector<256x128xf32>
    %c1_157 = arith.constant 1 : index
    %c2_158 = arith.constant 2 : index
    %c0_159 = arith.constant 0 : index
    %c0_160 = arith.constant 0 : index
    %137 = vector.load %arg3[%c1_157, %c2_158, %c0_159, %c0_160] : memref<3x3x128x128xf32, #tpu.memory_space<vmem>>, vector<1x1x128x128xf32>
    %138 = vector.shape_cast %137 : vector<1x1x128x128xf32> to vector<128x128xf32>
    %cst_161 = arith.constant dense<0.000000e+00> : vector<256x128xf32>
    %139 = tpu.matmul %136, %138, %cst_161 {dimension_numbers = #tpu.dot_dimension_numbers<[1], [0], [0], [1], [0, 0, 1, 1], [], []>} : vector<256x128xf32>, vector<128x128xf32>, vector<256x128xf32> -> vector<256x128xf32>
    %140 = arith.addf %134, %139 : vector<256x128xf32>
    %c2_162 = arith.constant 2 : index
    %c7_163 = arith.constant 7 : index
    %c0_164 = arith.constant 0 : index
    %141 = vector.load %arg8[%c2_162, %c7_163, %c0_164] : memref<18x32x128xf32, #tpu.memory_space<vmem>>, vector<16x16x128xf32>
    %142 = vector.shape_cast %141 : vector<16x16x128xf32> to vector<256x128xf32>
    %c2_165 = arith.constant 2 : index
    %c0_166 = arith.constant 0 : index
    %c0_167 = arith.constant 0 : index
    %c0_168 = arith.constant 0 : index
    %143 = vector.load %arg3[%c2_165, %c0_166, %c0_167, %c0_168] : memref<3x3x128x128xf32, #tpu.memory_space<vmem>>, vector<1x1x128x128xf32>
    %144 = vector.shape_cast %143 : vector<1x1x128x128xf32> to vector<128x128xf32>
    %cst_169 = arith.constant dense<0.000000e+00> : vector<256x128xf32>
    %145 = tpu.matmul %142, %144, %cst_169 {dimension_numbers = #tpu.dot_dimension_numbers<[1], [0], [0], [1], [0, 0, 1, 1], [], []>} : vector<256x128xf32>, vector<128x128xf32>, vector<256x128xf32> -> vector<256x128xf32>
    %146 = arith.addf %140, %145 : vector<256x128xf32>
    %c2_170 = arith.constant 2 : index
    %c8_171 = arith.constant 8 : index
    %c0_172 = arith.constant 0 : index
    %147 = vector.load %arg8[%c2_170, %c8_171, %c0_172] : memref<18x32x128xf32, #tpu.memory_space<vmem>>, vector<16x16x128xf32>
    %148 = vector.shape_cast %147 : vector<16x16x128xf32> to vector<256x128xf32>
    %c2_173 = arith.constant 2 : index
    %c1_174 = arith.constant 1 : index
    %c0_175 = arith.constant 0 : index
    %c0_176 = arith.constant 0 : index
    %149 = vector.load %arg3[%c2_173, %c1_174, %c0_175, %c0_176] : memref<3x3x128x128xf32, #tpu.memory_space<vmem>>, vector<1x1x128x128xf32>
    %150 = vector.shape_cast %149 : vector<1x1x128x128xf32> to vector<128x128xf32>
    %cst_177 = arith.constant dense<0.000000e+00> : vector<256x128xf32>
    %151 = tpu.matmul %148, %150, %cst_177 {dimension_numbers = #tpu.dot_dimension_numbers<[1], [0], [0], [1], [0, 0, 1, 1], [], []>} : vector<256x128xf32>, vector<128x128xf32>, vector<256x128xf32> -> vector<256x128xf32>
    %152 = arith.addf %146, %151 : vector<256x128xf32>
    %c2_178 = arith.constant 2 : index
    %c9_179 = arith.constant 9 : index
    %c0_180 = arith.constant 0 : index
    %153 = vector.load %arg8[%c2_178, %c9_179, %c0_180] : memref<18x32x128xf32, #tpu.memory_space<vmem>>, vector<16x16x128xf32>
    %154 = vector.shape_cast %153 : vector<16x16x128xf32> to vector<256x128xf32>
    %c2_181 = arith.constant 2 : index
    %c2_182 = arith.constant 2 : index
    %c0_183 = arith.constant 0 : index
    %c0_184 = arith.constant 0 : index
    %155 = vector.load %arg3[%c2_181, %c2_182, %c0_183, %c0_184] : memref<3x3x128x128xf32, #tpu.memory_space<vmem>>, vector<1x1x128x128xf32>
    %156 = vector.shape_cast %155 : vector<1x1x128x128xf32> to vector<128x128xf32>
    %cst_185 = arith.constant dense<0.000000e+00> : vector<256x128xf32>
    %157 = tpu.matmul %154, %156, %cst_185 {dimension_numbers = #tpu.dot_dimension_numbers<[1], [0], [0], [1], [0, 0, 1, 1], [], []>} : vector<256x128xf32>, vector<128x128xf32>, vector<256x128xf32> -> vector<256x128xf32>
    %158 = arith.addf %152, %157 : vector<256x128xf32>
    %c0_i32_186 = arith.constant 0 : i32
    %c0_i32_187 = arith.constant 0 : i32
    %c0_i32_188 = arith.constant 0 : i32
    %159 = tpu.memref_slice %arg7[%9, %c0_i32_186, %c0_i32_187, %c0_i32_188] : memref<2x18x32x128xf32, #tpu.memory_space<vmem>> -> memref<1x18x32x128xf32, #tpu.memory_space<vmem>>
    %160 = tpu.memref_squeeze %159 : memref<1x18x32x128xf32, #tpu.memory_space<vmem>> -> memref<18x32x128xf32, #tpu.memory_space<vmem>>
    %c1_189 = arith.constant 1 : index
    %c8_190 = arith.constant 8 : index
    %c0_191 = arith.constant 0 : index
    %161 = vector.load %160[%c1_189, %c8_190, %c0_191] : memref<18x32x128xf32, #tpu.memory_space<vmem>>, vector<16x16x128xf32>
    %162 = vector.shape_cast %161 : vector<16x16x128xf32> to vector<256x128xf32>
    %163 = vector.broadcast %24 : vector<1x128xf32> to vector<256x128xf32>
    %164 = arith.addf %158, %163 : vector<256x128xf32>
    %165 = arith.addf %164, %162 : vector<256x128xf32>
    %cst_192 = arith.constant 0.000000e+00 : f32
    %166 = vector.broadcast %cst_192 : f32 to vector<256x128xf32>
    %167 = arith.maximumf %165, %166 : vector<256x128xf32>
    %168 = vector.shape_cast %167 : vector<256x128xf32> to vector<16x16x128xf32>
    %c0_193 = arith.constant 0 : index
    %c0_194 = arith.constant 0 : index
    %c0_195 = arith.constant 0 : index
    %c0_196 = arith.constant 0 : index
    %169 = vector.load %arg6[%c0_193, %c0_194, %c0_195, %c0_196] : memref<1x16x16x128xf32, #tpu.memory_space<vmem>>, vector<1x16x16x128xf32>
    %170 = vector.shape_cast %169 : vector<1x16x16x128xf32> to vector<16x16x128xf32>
    %171 = vector.shape_cast %168 : vector<16x16x128xf32> to vector<1x16x16x128xf32>
    tpu.vector_store %arg6[%c0_193, %c0_194, %c0_195, %c0_196], %171 {strides = array<i32>} : memref<1x16x16x128xf32, #tpu.memory_space<vmem>>, vector<1x16x16x128xf32>,
    return
  }
  func.func @transform_1(%arg0: i32) -> (i32, i32, i32, i32) {
    %c0_i32 = arith.constant 0 : i32
    %c0_i32_0 = arith.constant 0 : i32
    %c0_i32_1 = arith.constant 0 : i32
    %c0_i32_2 = arith.constant 0 : i32
    %c0_i32_3 = arith.constant 0 : i32
    return %c0_i32, %c0_i32_0, %c0_i32_1, %c0_i32_2 : i32, i32, i32, i32
  }
  func.func @transform_2(%arg0: i32) -> (i32, i32, i32, i32) {
    %c0_i32 = arith.constant 0 : i32
    %c0_i32_0 = arith.constant 0 : i32
    %c0_i32_1 = arith.constant 0 : i32
    %c0_i32_2 = arith.constant 0 : i32
    %c0_i32_3 = arith.constant 0 : i32
    return %c0_i32, %c0_i32_0, %c0_i32_1, %c0_i32_2 : i32, i32, i32, i32
  }
  func.func @transform_3(%arg0: i32) -> (i32, i32) {
    %c0_i32 = arith.constant 0 : i32
    %c0_i32_0 = arith.constant 0 : i32
    %c0_i32_1 = arith.constant 0 : i32
    return %c0_i32, %c0_i32_0 : i32, i32
  }
  func.func @transform_4(%arg0: i32) -> (i32, i32) {
    %c0_i32 = arith.constant 0 : i32
    %c0_i32_0 = arith.constant 0 : i32
    %c0_i32_1 = arith.constant 0 : i32
    return %c0_i32, %c0_i32_0 : i32, i32
  }
  func.func @transform_5(%arg0: i32) -> (i32, i32, i32, i32) {
    %c0_i32 = arith.constant 0 : i32
    %c0_i32_0 = arith.constant 0 : i32
    %c0_i32_1 = arith.constant 0 : i32
    %c0_i32_2 = arith.constant 0 : i32
    return %arg0, %c0_i32, %c0_i32_0, %c0_i32_1 : i32, i32, i32, i32
  }
}

</mosaic_0001>

<llo_original>
// kernel: basic_block_forward.1
$region0: #{basic_block_forward.1}
  #allocation0 [shape = 'u32[]', space=smem, size = 0x4, offset = 0x4, fixed_abs, tag = 'smem constant byte address 0x4 - core index']
  #allocation1 [shape = 'u32[144,128]{1,0:T(1,128)}', space=vmem, size = 0x12000, scoped, tag = 'internal scratch']
  #allocation2 [shape = 'f32[2,18,32,128]{3,2,1,0:T(8,128)}', space=vmem, size = 0x90000, scoped, tag = 'scratch operand']
  #allocation3 [shape = 'f32[18,32,128]{2,1,0:T(8,128)}', space=vmem, size = 0x48000, scoped, tag = 'scratch operand']
  #allocation4 [shape = 's32[2]{0}', space=sflag, size = 0x8, scoped, tag = 'scratch operand']
  #allocation7 [shape = 's32[]', space=sflag, size = 0x4, offset = 0, fixed_abs, tag = 'sflag constant byte address 0x0 - dummy sync flag']
  #allocation8 [shape = 's32[]', space=sflag, size = 0x4, offset = 0, fixed_abs, tag = 'sflag constant byte address 0x0 - dummy sync flag']
  %s0 = inlined_call_operand.vmem [shape: f32[4,16,16,128], index: 0, kind: input, shape index: {}]
  %s1 = inlined_call_operand.vmem [shape: f32[3,3,128,128], index: 1, kind: input, shape index: {}]
  %s2 = inlined_call_operand.vmem [shape: f32[3,3,128,128], index: 2, kind: input, shape index: {}]
  %s3 = inlined_call_operand.vmem [shape: f32[1,128], index: 3, kind: input, shape index: {}]
  %s4 = inlined_call_operand.vmem [shape: f32[1,128], index: 4, kind: input, shape index: {}]
  %s5 = inlined_call_operand.hbm [shape: f32[4,16,16,128], index: 5, kind: output, shape index: {}]
  %s6 = sld [smem:[#allocation0]]
  $region125: #{basic_block_forward.1} parent=0
    _
  %s8 = ssub.s32 1, %s6
  %s9 = scalar_select 0, %s8, %s6
  $region1: #{basic_block_forward.1} parent=0
    #allocation5 [shape = 'u8[262144]{0}', space=vmem, size = 0x40000, scoped, tag = 'output window, operand 0']
    #allocation6 [shape = 's32[2]{0}', space=sflag, size = 0x8, scoped, tag = 'scoped memory for basic_block_forward.1']
    %10 = vsyncpa [#allocation6], 0
    %s11 = scalar_lea.sflag [#allocation6], 1
    %12 = vsyncpa %s11, 0
    loop: start=0, step=1, limit=6
    $region2: #{basic_block_forward.1} parent=1 // loop_pre_header
      _
    $region3: #{basic_block_forward.1} parent=1 // loop_header
      %s14 = sphi 0, %s18
      %p15 = scmp.ge.s32.totalorder %s14, 6
      %s22 = sphi 0, %s22
      %s24 = sphi 0, %s22
      %s25 = sphi 0, %s24
      %s39 = sphi 0, %s25
      %s43 = sphi 0, %s43
      %s45 = sphi 0, %s43
      %s46 = sphi 0, %s45
      %s60 = sphi 0, %s46
      %s64 = sphi 0, %s64
      %s66 = sphi 0, %s64
      %s67 = sphi 0, %s66
      %s81 = sphi 0, %s67
      %s85 = sphi 0, %s85
      %s87 = sphi 0, %s85
      %s88 = sphi 0, %s87
      %s102 = sphi 0, %s88
      %s108 = sphi 0, %s110
      %s111 = sphi 0, %s108
      %s112 = sphi 0, %s111
      %s128 = sphi 0, %s112
    $region4: #{basic_block_forward.1} parent=1 // loop_header_branch
      %17 = sbr.rel (%p15) target = $region8
    $region5: #{basic_block_forward.1} parent=1 // loop_body
      %s19 = ssub.s32 %s14, 1
      %s20 = ssub.s32 %s14, 2
      %s21 = sadd.s32 %s14, 1
      %s23 = sadd.s32 %s22, 1
      %p26 = scmp.eq.s32.totalorder %s14, 3
      %p27 = scmp.ne.s32.totalorder %s22, %s24
      %p28 = scmp.eq.s32.totalorder %s14, 0
      %p29 = por %p27, %p28
      %p30 = scmp.ne.s32.totalorder %s22, %s24
      %p31 = scmp.eq.s32.totalorder %s19, 3
      %p32 = por %p30, %p31
      %p33 = scmp.ne.s32.totalorder %s24, %s25
      %p34 = scmp.eq.s32.totalorder %s19, 0
      %p35 = por %p33, %p34
      %p36 = scmp.ne.s32.totalorder %s24, %s25
      %p37 = scmp.eq.s32.totalorder %s20, 3
      %p38 = por %p36, %p37
      %p40 = scmp.ne.s32.totalorder %s25, %s39
      %p41 = scmp.eq.s32.totalorder %s20, 0
      %p42 = por %p40, %p41
      %s44 = sadd.s32 %s43, 1
      %p47 = scmp.eq.s32.totalorder %s14, 3
      %p48 = scmp.ne.s32.totalorder %s43, %s45
      %p49 = scmp.eq.s32.totalorder %s14, 0
      %p50 = por %p48, %p49
      %p51 = scmp.ne.s32.totalorder %s43, %s45
      %p52 = scmp.eq.s32.totalorder %s19, 3
      %p53 = por %p51, %p52
      %p54 = scmp.ne.s32.totalorder %s45, %s46
      %p55 = scmp.eq.s32.totalorder %s19, 0
      %p56 = por %p54, %p55
      %p57 = scmp.ne.s32.totalorder %s45, %s46
      %p58 = scmp.eq.s32.totalorder %s20, 3
      %p59 = por %p57, %p58
      %p61 = scmp.ne.s32.totalorder %s46, %s60
      %p62 = scmp.eq.s32.totalorder %s20, 0
      %p63 = por %p61, %p62
      %s65 = sadd.s32 %s64, 1
      %p68 = scmp.eq.s32.totalorder %s14, 3
      %p69 = scmp.ne.s32.totalorder %s64, %s66
      %p70 = scmp.eq.s32.totalorder %s14, 0
      %p71 = por %p69, %p70
      %p72 = scmp.ne.s32.totalorder %s64, %s66
      %p73 = scmp.eq.s32.totalorder %s19, 3
      %p74 = por %p72, %p73
      %p75 = scmp.ne.s32.totalorder %s66, %s67
      %p76 = scmp.eq.s32.totalorder %s19, 0
      %p77 = por %p75, %p76
      %p78 = scmp.ne.s32.totalorder %s66, %s67
      %p79 = scmp.eq.s32.totalorder %s20, 3
      %p80 = por %p78, %p79
      %p82 = scmp.ne.s32.totalorder %s67, %s81
      %p83 = scmp.eq.s32.totalorder %s20, 0
      %p84 = por %p82, %p83
      %s86 = sadd.s32 %s85, 1
      %p89 = scmp.eq.s32.totalorder %s14, 3
      %p90 = scmp.ne.s32.totalorder %s85, %s87
      %p91 = scmp.eq.s32.totalorder %s14, 0
      %p92 = por %p90, %p91
      %p93 = scmp.ne.s32.totalorder %s85, %s87
      %p94 = scmp.eq.s32.totalorder %s19, 3
      %p95 = por %p93, %p94
      %p96 = scmp.ne.s32.totalorder %s87, %s88
      %p97 = scmp.eq.s32.totalorder %s19, 0
      %p98 = por %p96, %p97
      %p99 = scmp.ne.s32.totalorder %s87, %s88
      %p100 = scmp.eq.s32.totalorder %s20, 3
      %p101 = por %p99, %p100
      %p103 = scmp.ne.s32.totalorder %s88, %s102
      %p104 = scmp.eq.s32.totalorder %s20, 0
      %p105 = por %p103, %p104
      %s106 = ssub.s32 %s14, %s21
      %p107 = scmp.eq.s32.totalorder %s106, 0
      %s109 = sadd.s32 %s108, 1
      %s110 = scalar_select %p107, %s108, %s109
      %p113 = pneg %p107
      %p114 = scmp.eq.s32.totalorder %s14, 3
      %p115 = por %p113, %p114
      %p116 = scmp.ne.s32.totalorder %s108, %s111
      %p117 = scmp.eq.s32.totalorder %s14, 0
      %p118 = por %p116, %p117
      %p119 = scmp.ne.s32.totalorder %s108, %s111
      %p120 = scmp.eq.s32.totalorder %s19, 3
      %p121 = por %p119, %p120
      %p122 = scmp.ne.s32.totalorder %s111, %s112
      %p123 = scmp.eq.s32.totalorder %s19, 0
      %p124 = por %p122, %p123
      %p125 = scmp.ne.s32.totalorder %s111, %s112
      %p126 = scmp.eq.s32.totalorder %s20, 3
      %p127 = por %p125, %p126
      %p129 = scmp.ne.s32.totalorder %s112, %s128
      %p130 = scmp.eq.s32.totalorder %s20, 0
      %p131 = por %p129, %p130
      %p132 = scmp.le.s32.totalorder 1, %s14
      %p133 = scmp.lt.s32.totalorder %s14, 5
      %p134 = pnand %p132, %p133
      %p135 = pneg %p134
      // Predicated region
      $region9: #{basic_block_forward.1} parent=5 // pred_check
        _
      $region10: #{basic_block_forward.1} parent=5 // pred_check_branch
        %137 = sbr.rel (%p134) target = $region12
      $region11: #{basic_block_forward.1} parent=5 // pred_region
        %s138 = ssub.s32 %s14, 1
        // Predicated region
        $region13: #{basic_block_forward.1} parent=11 // pred_check
          %p139 = pneg %p35
        $region14: #{basic_block_forward.1} parent=11 // pred_check_branch
          %141 = sbr.rel (%p139) target = $region16
        $region15: #{basic_block_forward.1} parent=11 // pred_region
          _
        $region16: #{basic_block_forward.1} parent=11 // pred_fallthru
          _
        // Predicated region
        $region17: #{basic_block_forward.1} parent=11 // pred_check
          %p142 = pneg %p56
        $region18: #{basic_block_forward.1} parent=11 // pred_check_branch
          %144 = sbr.rel (%p142) target = $region20
        $region19: #{basic_block_forward.1} parent=11 // pred_region
          _
        $region20: #{basic_block_forward.1} parent=11 // pred_fallthru
          _
        // Predicated region
        $region21: #{basic_block_forward.1} parent=11 // pred_check
          %p145 = pneg %p77
        $region22: #{basic_block_forward.1} parent=11 // pred_check_branch
          %147 = sbr.rel (%p145) target = $region24
        $region23: #{basic_block_forward.1} parent=11 // pred_region
          _
        $region24: #{basic_block_forward.1} parent=11 // pred_fallthru
          _
        // Predicated region
        $region25: #{basic_block_forward.1} parent=11 // pred_check
          %p148 = pneg %p98
        $region26: #{basic_block_forward.1} parent=11 // pred_check_branch
          %150 = sbr.rel (%p148) target = $region28
        $region27: #{basic_block_forward.1} parent=11 // pred_region
          _
        $region28: #{basic_block_forward.1} parent=11 // pred_fallthru
          _
      $region12: #{basic_block_forward.1} parent=5 // pred_fallthru
        _
      %p151 = scmp.lt.s32.totalorder %s14, 4
      // Predicated region
      $region29: #{basic_block_forward.1} parent=5 // pred_check
        %p152 = pneg %p151
      $region30: #{basic_block_forward.1} parent=5 // pred_check_branch
        %154 = sbr.rel (%p152) target = $region32
      $region31: #{basic_block_forward.1} parent=5 // pred_region
        _
      $region32: #{basic_block_forward.1} parent=5 // pred_fallthru
        _
      %p155 = scmp.le.s32.totalorder 1, %s14
      %p156 = scmp.lt.s32.totalorder %s14, 5
      %p157 = pnand %p155, %p156
      %p158 = pneg %p157
      // Predicated region
      $region33: #{basic_block_forward.1} parent=5 // pred_check
        _
      $region34: #{basic_block_forward.1} parent=5 // pred_check_branch
        %160 = sbr.rel (%p157) target = $region36
      $region35: #{basic_block_forward.1} parent=5 // pred_region
        %s161 = ssub.s32 %s14, 1
        %p162 = pneg %p35
        %p163 = pneg %p32
        %p164 = pneg %p56
        %p165 = pneg %p53
        %p166 = pneg %p77
        %p167 = pneg %p74
        %p168 = pneg %p98
        %p169 = pneg %p95
        %p170 = pneg %p124
        %p171 = pneg %p121
        %s172 = sand.u32 %s111, 1
        %s173 = scalar_lea.sflag [#allocation6], %s172
        %s174 = sand.u32 %s111, 1
        %s175 = smul.addr %s174, 256
        %s176 = scalar_lea.vmem [#allocation5], %s175
        %p177 = scmp.lt.s32.totalorder %s19, 0
        %s178 = ssub.s32 0, %s19
        %s179 = scalar_select %p177, %s178, %s19
        %s180 = sand.u32 %s179, 1
        %s181 = ssub.s32 0, %s180
        %s182 = scalar_select %p177, %s181, %s180
        %p183 = scmp.ne.s32.totalorder %s182, 0
        %p184 = scmp.lt.s32.totalorder %s182, 0
        %p185 = pnand %p184, %p183
        %p186 = pneg %p185
        %s187 = sadd.s32 %s182, 2
        %s188 = scalar_select %p186, %s187, %s182
        %p189 = scmp.eq.s32.totalorder %s19, 0
        // Predicated region
        $region37: #{basic_block_forward.1} parent=35 // pred_check
          %p190 = pneg %p189
        $region38: #{basic_block_forward.1} parent=35 // pred_check_branch
          %192 = sbr.rel (%p190) target = $region40
        $region39: #{basic_block_forward.1} parent=35 // pred_region
          %193 = vst [vmem:[#allocation2] sm:$0xff] 0.0
          %194 = vst [vmem:[#allocation2 + $0x8] sm:$0xff] 0.0
          %195 = vst [vmem:[#allocation2 + $0x10] sm:$0xff] 0.0
          %196 = vst [vmem:[#allocation2 + $0x18] sm:$0xff] 0.0
          %s197 = scalar_lea.vmem [#allocation2], 544
          %198 = vst [vmem:[%s197] sm:$0xff] 0.0
          %199 = vst [vmem:[%s197 + $0x8] sm:$0xff] 0.0
          %200 = vst [vmem:[%s197 + $0x10] sm:$0xff] 0.0
          %201 = vst [vmem:[%s197 + $0x18] sm:$0xff] 0.0
          %s202 = scalar_lea.vmem [#allocation2], 32
          %203 = vst [vmem:[%s202] sm:$0xff] 0.0
          %204 = vst [vmem:[%s202 + $0x20] sm:$0xff] 0.0
          %205 = vst [vmem:[%s202 + $0x40] sm:$0xff] 0.0
          %206 = vst [vmem:[%s202 + $0x60] sm:$0xff] 0.0
          %207 = vst [vmem:[%s202 + $0x80] sm:$0xff] 0.0
          %208 = vst [vmem:[%s202 + $0xa0] sm:$0xff] 0.0
          %209 = vst [vmem:[%s202 + $0xc0] sm:$0xff] 0.0
          %210 = vst [vmem:[%s202 + $0xe0] sm:$0xff] 0.0
          %211 = vst [vmem:[%s202 + $0x100] sm:$0xff] 0.0
          %212 = vst [vmem:[%s202 + $0x120] sm:$0xff] 0.0
          %213 = vst [vmem:[%s202 + $0x140] sm:$0xff] 0.0
          %214 = vst [vmem:[%s202 + $0x160] sm:$0xff] 0.0
          %215 = vst [vmem:[%s202 + $0x180] sm:$0xff] 0.0
          %216 = vst [vmem:[%s202 + $0x1a0] sm:$0xff] 0.0
          %217 = vst [vmem:[%s202 + $0x1c0] sm:$0xff] 0.0
          %218 = vst [vmem:[%s202 + $0x1e0] sm:$0xff] 0.0
          %219 = vst [vmem:[%s202 + $0x18] sm:$0xff] 0.0
          %220 = vst [vmem:[%s202 + $0x38] sm:$0xff] 0.0
          %221 = vst [vmem:[%s202 + $0x58] sm:$0xff] 0.0
          %222 = vst [vmem:[%s202 + $0x78] sm:$0xff] 0.0
          %223 = vst [vmem:[%s202 + $0x98] sm:$0xff] 0.0
          %224 = vst [vmem:[%s202 + $0xb8] sm:$0xff] 0.0
          %225 = vst [vmem:[%s202 + $0xd8] sm:$0xff] 0.0
          %226 = vst [vmem:[%s202 + $0xf8] sm:$0xff] 0.0
          %227 = vst [vmem:[%s202 + $0x118] sm:$0xff] 0.0
          %228 = vst [vmem:[%s202 + $0x138] sm:$0xff] 0.0
          %229 = vst [vmem:[%s202 + $0x158] sm:$0xff] 0.0
          %230 = vst [vmem:[%s202 + $0x178] sm:$0xff] 0.0
          %231 = vst [vmem:[%s202 + $0x198] sm:$0xff] 0.0
          %232 = vst [vmem:[%s202 + $0x1b8] sm:$0xff] 0.0
          %233 = vst [vmem:[%s202 + $0x1d8] sm:$0xff] 0.0
          %234 = vst [vmem:[%s202 + $0x1f8] sm:$0xff] 0.0
          %s235 = scalar_lea.vmem [#allocation2], 576
          %236 = vst [vmem:[%s235] sm:$0xff] 0.0
          %237 = vst [vmem:[%s235 + $0x8] sm:$0xff] 0.0
          %238 = vst [vmem:[%s235 + $0x10] sm:$0xff] 0.0
          %239 = vst [vmem:[%s235 + $0x18] sm:$0xff] 0.0
          %s240 = scalar_lea.vmem [#allocation2], 1120
          %241 = vst [vmem:[%s240] sm:$0xff] 0.0
          %242 = vst [vmem:[%s240 + $0x8] sm:$0xff] 0.0
          %243 = vst [vmem:[%s240 + $0x10] sm:$0xff] 0.0
          %244 = vst [vmem:[%s240 + $0x18] sm:$0xff] 0.0
          %s245 = scalar_lea.vmem [#allocation2], 608
          %246 = vst [vmem:[%s245] sm:$0xff] 0.0
          %247 = vst [vmem:[%s245 + $0x20] sm:$0xff] 0.0
          %248 = vst [vmem:[%s245 + $0x40] sm:$0xff] 0.0
          %249 = vst [vmem:[%s245 + $0x60] sm:$0xff] 0.0
          %250 = vst [vmem:[%s245 + $0x80] sm:$0xff] 0.0
          %251 = vst [vmem:[%s245 + $0xa0] sm:$0xff] 0.0
          %252 = vst [vmem:[%s245 + $0xc0] sm:$0xff] 0.0
          %253 = vst [vmem:[%s245 + $0xe0] sm:$0xff] 0.0
          %254 = vst [vmem:[%s245 + $0x100] sm:$0xff] 0.0
          %255 = vst [vmem:[%s245 + $0x120] sm:$0xff] 0.0
          %256 = vst [vmem:[%s245 + $0x140] sm:$0xff] 0.0
          %257 = vst [vmem:[%s245 + $0x160] sm:$0xff] 0.0
          %258 = vst [vmem:[%s245 + $0x180] sm:$0xff] 0.0
          %259 = vst [vmem:[%s245 + $0x1a0] sm:$0xff] 0.0
          %260 = vst [vmem:[%s245 + $0x1c0] sm:$0xff] 0.0
          %261 = vst [vmem:[%s245 + $0x1e0] sm:$0xff] 0.0
          %262 = vst [vmem:[%s245 + $0x18] sm:$0xff] 0.0
          %263 = vst [vmem:[%s245 + $0x38] sm:$0xff] 0.0
          %264 = vst [vmem:[%s245 + $0x58] sm:$0xff] 0.0
          %265 = vst [vmem:[%s245 + $0x78] sm:$0xff] 0.0
          %266 = vst [vmem:[%s245 + $0x98] sm:$0xff] 0.0
          %267 = vst [vmem:[%s245 + $0xb8] sm:$0xff] 0.0
          %268 = vst [vmem:[%s245 + $0xd8] sm:$0xff] 0.0
          %269 = vst [vmem:[%s245 + $0xf8] sm:$0xff] 0.0
          %270 = vst [vmem:[%s245 + $0x118] sm:$0xff] 0.0
          %271 = vst [vmem:[%s245 + $0x138] sm:$0xff] 0.0
          %272 = vst [vmem:[%s245 + $0x158] sm:$0xff] 0.0
          %273 = vst [vmem:[%s245 + $0x178] sm:$0xff] 0.0
          %274 = vst [vmem:[%s245 + $0x198] sm:$0xff] 0.0
          %275 = vst [vmem:[%s245 + $0x1b8] sm:$0xff] 0.0
          %276 = vst [vmem:[%s245 + $0x1d8] sm:$0xff] 0.0
          %277 = vst [vmem:[%s245 + $0x1f8] sm:$0xff] 0.0
          %278 = vst [vmem:[#allocation3] sm:$0xff] 0.0
          %279 = vst [vmem:[#allocation3 + $0x8] sm:$0xff] 0.0
          %280 = vst [vmem:[#allocation3 + $0x10] sm:$0xff] 0.0
          %281 = vst [vmem:[#allocation3 + $0x18] sm:$0xff] 0.0
          %s282 = scalar_lea.vmem [#allocation3], 544
          %283 = vst [vmem:[%s282] sm:$0xff] 0.0
          %284 = vst [vmem:[%s282 + $0x8] sm:$0xff] 0.0
          %285 = vst [vmem:[%s282 + $0x10] sm:$0xff] 0.0
          %286 = vst [vmem:[%s282 + $0x18] sm:$0xff] 0.0
          %s287 = scalar_lea.vmem [#allocation3], 32
          %288 = vst [vmem:[%s287] sm:$0xff] 0.0
          %289 = vst [vmem:[%s287 + $0x20] sm:$0xff] 0.0
          %290 = vst [vmem:[%s287 + $0x40] sm:$0xff] 0.0
          %291 = vst [vmem:[%s287 + $0x60] sm:$0xff] 0.0
          %292 = vst [vmem:[%s287 + $0x80] sm:$0xff] 0.0
          %293 = vst [vmem:[%s287 + $0xa0] sm:$0xff] 0.0
          %294 = vst [vmem:[%s287 + $0xc0] sm:$0xff] 0.0
          %295 = vst [vmem:[%s287 + $0xe0] sm:$0xff] 0.0
          %296 = vst [vmem:[%s287 + $0x100] sm:$0xff] 0.0
          %297 = vst [vmem:[%s287 + $0x120] sm:$0xff] 0.0
          %298 = vst [vmem:[%s287 + $0x140] sm:$0xff] 0.0
          %299 = vst [vmem:[%s287 + $0x160] sm:$0xff] 0.0
          %300 = vst [vmem:[%s287 + $0x180] sm:$0xff] 0.0
          %301 = vst [vmem:[%s287 + $0x1a0] sm:$0xff] 0.0
          %302 = vst [vmem:[%s287 + $0x1c0] sm:$0xff] 0.0
          %303 = vst [vmem:[%s287 + $0x1e0] sm:$0xff] 0.0
          %304 = vst [vmem:[%s287 + $0x18] sm:$0xff] 0.0
          %305 = vst [vmem:[%s287 + $0x38] sm:$0xff] 0.0
          %306 = vst [vmem:[%s287 + $0x58] sm:$0xff] 0.0
          %307 = vst [vmem:[%s287 + $0x78] sm:$0xff] 0.0
          %308 = vst [vmem:[%s287 + $0x98] sm:$0xff] 0.0
          %309 = vst [vmem:[%s287 + $0xb8] sm:$0xff] 0.0
          %310 = vst [vmem:[%s287 + $0xd8] sm:$0xff] 0.0
          %311 = vst [vmem:[%s287 + $0xf8] sm:$0xff] 0.0
          %312 = vst [vmem:[%s287 + $0x118] sm:$0xff] 0.0
          %313 = vst [vmem:[%s287 + $0x138] sm:$0xff] 0.0
          %314 = vst [vmem:[%s287 + $0x158] sm:$0xff] 0.0
          %315 = vst [vmem:[%s287 + $0x178] sm:$0xff] 0.0
          %316 = vst [vmem:[%s287 + $0x198] sm:$0xff] 0.0
          %317 = vst [vmem:[%s287 + $0x1b8] sm:$0xff] 0.0
          %318 = vst [vmem:[%s287 + $0x1d8] sm:$0xff] 0.0
          %319 = vst [vmem:[%s287 + $0x1f8] sm:$0xff] 0.0
          %s320 = scalar_lea.vmem [#allocation2], 40
          %p322 = scmp.lt.u32.totalorder 16, 8
          %p323 = pneg %p322
          // Predicated region
          $region41: #{basic_block_forward.1} parent=39 // pred_check
            _
          $region42: #{basic_block_forward.1} parent=39 // pred_check_branch
            %325 = sbr.rel (%p322) target = $region44
          $region43: #{basic_block_forward.1} parent=39 // pred_region
            %s370 = sand.u32 16, 7
            %p371 = scmp.eq.s32.totalorder %s370, 0
            // Predicated region
            $region56: #{basic_block_forward.1} parent=43 // pred_check
              %p372 = pneg %p371
            $region57: #{basic_block_forward.1} parent=43 // pred_check_branch
              %374 = sbr.rel (%p372) target = $region59
            $region58: #{basic_block_forward.1} parent=43 // pred_region
              loop: start=0, step=1, limit=1
              $region60: #{basic_block_forward.1} parent=58 // loop_pre_header
                _
              $region61: #{basic_block_forward.1} parent=58 // loop_header
                %s376 = sphi 0, %s380
                %p377 = scmp.ge.s32.totalorder %s376, 1
                %s381 = sphi %s0, %s0
                %s382 = sphi %s320, %s320
              $region62: #{basic_block_forward.1} parent=58 // loop_header_branch
                %379 = sbr.rel (%p377) target = $region66
              $region63: #{basic_block_forward.1} parent=58 // loop_body
                %v383 = vld [vmem:[%s381] sm:$0xff]
                %384 = vst [vmem:[%s382] sm:$0xff] %v383
                %v385 = vld [vmem:[%s381 + $0x8] sm:$0xff]
                %386 = vst [vmem:[%s382 + $0x8] sm:$0xff] %v385
                %v387 = vld [vmem:[%s381 + $0x10] sm:$0xff]
                %388 = vst [vmem:[%s382 + $0x20] sm:$0xff] %v387
                %v389 = vld [vmem:[%s381 + $0x18] sm:$0xff]
                %390 = vst [vmem:[%s382 + $0x28] sm:$0xff] %v389
                %v391 = vld [vmem:[%s381 + $0x20] sm:$0xff]
                %392 = vst [vmem:[%s382 + $0x40] sm:$0xff] %v391
                %v393 = vld [vmem:[%s381 + $0x28] sm:$0xff]
                %394 = vst [vmem:[%s382 + $0x48] sm:$0xff] %v393
                %v395 = vld [vmem:[%s381 + $0x30] sm:$0xff]
                %396 = vst [vmem:[%s382 + $0x60] sm:$0xff] %v395
                %v397 = vld [vmem:[%s381 + $0x38] sm:$0xff]
                %398 = vst [vmem:[%s382 + $0x68] sm:$0xff] %v397
                %v399 = vld [vmem:[%s381 + $0x40] sm:$0xff]
                %400 = vst [vmem:[%s382 + $0x80] sm:$0xff] %v399
                %v401 = vld [vmem:[%s381 + $0x48] sm:$0xff]
                %402 = vst [vmem:[%s382 + $0x88] sm:$0xff] %v401
                %v403 = vld [vmem:[%s381 + $0x50] sm:$0xff]
                %404 = vst [vmem:[%s382 + $0xa0] sm:$0xff] %v403
                %v405 = vld [vmem:[%s381 + $0x58] sm:$0xff]
                %406 = vst [vmem:[%s382 + $0xa8] sm:$0xff] %v405
                %v407 = vld [vmem:[%s381 + $0x60] sm:$0xff]
                %408 = vst [vmem:[%s382 + $0xc0] sm:$0xff] %v407
                %v409 = vld [vmem:[%s381 + $0x68] sm:$0xff]
                %410 = vst [vmem:[%s382 + $0xc8] sm:$0xff] %v409
                %v411 = vld [vmem:[%s381 + $0x70] sm:$0xff]
                %412 = vst [vmem:[%s382 + $0xe0] sm:$0xff] %v411
                %v413 = vld [vmem:[%s381 + $0x78] sm:$0xff]
                %414 = vst [vmem:[%s382 + $0xe8] sm:$0xff] %v413
                %v415 = vld [vmem:[%s381 + $0x80] sm:$0xff]
                %416 = vst [vmem:[%s382 + $0x100] sm:$0xff] %v415
                %v417 = vld [vmem:[%s381 + $0x88] sm:$0xff]
                %418 = vst [vmem:[%s382 + $0x108] sm:$0xff] %v417
                %v419 = vld [vmem:[%s381 + $0x90] sm:$0xff]
                %420 = vst [vmem:[%s382 + $0x120] sm:$0xff] %v419
                %v421 = vld [vmem:[%s381 + $0x98] sm:$0xff]
                %422 = vst [vmem:[%s382 + $0x128] sm:$0xff] %v421
                %v423 = vld [vmem:[%s381 + $0xa0] sm:$0xff]
                %424 = vst [vmem:[%s382 + $0x140] sm:$0xff] %v423
                %v425 = vld [vmem:[%s381 + $0xa8] sm:$0xff]
                %426 = vst [vmem:[%s382 + $0x148] sm:$0xff] %v425
                %v427 = vld [vmem:[%s381 + $0xb0] sm:$0xff]
                %428 = vst [vmem:[%s382 + $0x160] sm:$0xff] %v427
                %v429 = vld [vmem:[%s381 + $0xb8] sm:$0xff]
                %430 = vst [vmem:[%s382 + $0x168] sm:$0xff] %v429
                %v431 = vld [vmem:[%s381 + $0xc0] sm:$0xff]
                %432 = vst [vmem:[%s382 + $0x180] sm:$0xff] %v431
                %v433 = vld [vmem:[%s381 + $0xc8] sm:$0xff]
                %434 = vst [vmem:[%s382 + $0x188] sm:$0xff] %v433
                %v435 = vld [vmem:[%s381 + $0xd0] sm:$0xff]
                %436 = vst [vmem:[%s382 + $0x1a0] sm:$0xff] %v435
                %v437 = vld [vmem:[%s381 + $0xd8] sm:$0xff]
                %438 = vst [vmem:[%s382 + $0x1a8] sm:$0xff] %v437
                %v439 = vld [vmem:[%s381 + $0xe0] sm:$0xff]
                %440 = vst [vmem:[%s382 + $0x1c0] sm:$0xff] %v439
                %v441 = vld [vmem:[%s381 + $0xe8] sm:$0xff]
                %442 = vst [vmem:[%s382 + $0x1c8] sm:$0xff] %v441
                %v443 = vld [vmem:[%s381 + $0xf0] sm:$0xff]
                %444 = vst [vmem:[%s382 + $0x1e0] sm:$0xff] %v443
                %v445 = vld [vmem:[%s381 + $0xf8] sm:$0xff]
                %446 = vst [vmem:[%s382 + $0x1e8] sm:$0xff] %v445
              $region64: #{basic_block_forward.1} parent=58 // loop_footer
                %s380 = sadd.s32 1, %s376
              $region65: #{basic_block_forward.1} parent=58 // loop_footer_branch
                %375 = sbr.rel target = $region61
              $region66: #{basic_block_forward.1} parent=58 // loop_exit
                _
            $region59: #{basic_block_forward.1} parent=43 // pred_fallthru
              _
            %p447 = pneg %p371
            // Predicated region
            $region67: #{basic_block_forward.1} parent=43 // pred_check
              _
            $region68: #{basic_block_forward.1} parent=43 // pred_check_branch
              %449 = sbr.rel (%p371) target = $region70
            $region69: #{basic_block_forward.1} parent=43 // pred_region
              %s450 = sand.u32 16, 7
            $region70: #{basic_block_forward.1} parent=43 // pred_fallthru
              _
          $region44: #{basic_block_forward.1} parent=39 // pred_fallthru
            _
          // Predicated region
          $region45: #{basic_block_forward.1} parent=39 // pred_check
            %p326 = pneg %p322
          $region46: #{basic_block_forward.1} parent=39 // pred_check_branch
            %328 = sbr.rel (%p326) target = $region48
          $region47: #{basic_block_forward.1} parent=39 // pred_region
            %s329 = sshllo.u32 0, 16
            loop: start=0, step=1, limit=1
            $region49: #{basic_block_forward.1} parent=47 // loop_pre_header
              _
            $region50: #{basic_block_forward.1} parent=47 // loop_header
              %s331 = sphi 0, %s335
              %p332 = scmp.ge.s32.totalorder %s331, 1
              %s336 = sphi %s0, %s0
              %s337 = sphi %s320, %s320
            $region51: #{basic_block_forward.1} parent=47 // loop_header_branch
              %334 = sbr.rel (%p332) target = $region55
            $region52: #{basic_block_forward.1} parent=47 // loop_body
              %v338 = vld [vmem:[%s336] sm:%s329]
              %339 = vst [vmem:[%s337] sm:%s329] %v338
              %v340 = vld [vmem:[%s336 + $0x10] sm:%s329]
              %341 = vst [vmem:[%s337 + $0x20] sm:%s329] %v340
              %v342 = vld [vmem:[%s336 + $0x20] sm:%s329]
              %343 = vst [vmem:[%s337 + $0x40] sm:%s329] %v342
              %v344 = vld [vmem:[%s336 + $0x30] sm:%s329]
              %345 = vst [vmem:[%s337 + $0x60] sm:%s329] %v344
              %v346 = vld [vmem:[%s336 + $0x40] sm:%s329]
              %347 = vst [vmem:[%s337 + $0x80] sm:%s329] %v346
              %v348 = vld [vmem:[%s336 + $0x50] sm:%s329]
              %349 = vst [vmem:[%s337 + $0xa0] sm:%s329] %v348
              %v350 = vld [vmem:[%s336 + $0x60] sm:%s329]
              %351 = vst [vmem:[%s337 + $0xc0] sm:%s329] %v350
              %v352 = vld [vmem:[%s336 + $0x70] sm:%s329]
              %353 = vst [vmem:[%s337 + $0xe0] sm:%s329] %v352
              %v354 = vld [vmem:[%s336 + $0x80] sm:%s329]
              %355 = vst [vmem:[%s337 + $0x100] sm:%s329] %v354
              %v356 = vld [vmem:[%s336 + $0x90] sm:%s329]
              %357 = vst [vmem:[%s337 + $0x120] sm:%s329] %v356
              %v358 = vld [vmem:[%s336 + $0xa0] sm:%s329]
              %359 = vst [vmem:[%s337 + $0x140] sm:%s329] %v358
              %v360 = vld [vmem:[%s336 + $0xb0] sm:%s329]
              %361 = vst [vmem:[%s337 + $0x160] sm:%s329] %v360
              %v362 = vld [vmem:[%s336 + $0xc0] sm:%s329]
              %363 = vst [vmem:[%s337 + $0x180] sm:%s329] %v362
              %v364 = vld [vmem:[%s336 + $0xd0] sm:%s329]
              %365 = vst [vmem:[%s337 + $0x1a0] sm:%s329] %v364
              %v366 = vld [vmem:[%s336 + $0xe0] sm:%s329]
              %367 = vst [vmem:[%s337 + $0x1c0] sm:%s329] %v366
              %v368 = vld [vmem:[%s336 + $0xf0] sm:%s329]
              %369 = vst [vmem:[%s337 + $0x1e0] sm:%s329] %v368
            $region53: #{basic_block_forward.1} parent=47 // loop_footer
              %s335 = sadd.s32 1, %s331
            $region54: #{basic_block_forward.1} parent=47 // loop_footer_branch
              %330 = sbr.rel target = $region50
            $region55: #{basic_block_forward.1} parent=47 // loop_exit
              _
          $region48: #{basic_block_forward.1} parent=39 // pred_fallthru
            _
          // Predicated region
          $region71: #{basic_block_forward.1} parent=39 // pred_check
            _
          $region72: #{basic_block_forward.1} parent=39 // pred_check_branch
            %453 = sbr.rel (0) target = $region74
          $region73: #{basic_block_forward.1} parent=39 // pred_region
            %454 = vsyncadd [#allocation4], 4096
          $region74: #{basic_block_forward.1} parent=39 // pred_fallthru
            _
        $region40: #{basic_block_forward.1} parent=35 // pred_fallthru
          _
        %s455 = sadd.s32 %s19, 1
        %p456 = scmp.lt.s32.totalorder %s455, 4
        // Predicated region
        $region75: #{basic_block_forward.1} parent=35 // pred_check
          %p457 = pneg %p456
        $region76: #{basic_block_forward.1} parent=35 // pred_check_branch
          %459 = sbr.rel (%p457) target = $region78
        $region77: #{basic_block_forward.1} parent=35 // pred_region
          %s460 = ssub.s32 1, %s188
          %s461 = smul.u32 %s455, 256
          %s462 = scalar_lea.vmem %s0, %s461
          %s463 = smul.u32 %s460, 576
          %s464 = sadd.s32 40, %s463
          %s465 = scalar_lea.vmem [#allocation2], %s464
          %s466 = scalar_lea.sflag [#allocation4], %s460
          %p468 = scmp.lt.u32.totalorder 16, 8
          %p469 = pneg %p468
          // Predicated region
          $region79: #{basic_block_forward.1} parent=77 // pred_check
            _
          $region80: #{basic_block_forward.1} parent=77 // pred_check_branch
            %471 = sbr.rel (%p468) target = $region82
          $region81: #{basic_block_forward.1} parent=77 // pred_region
            %s516 = sand.u32 16, 7
            %p517 = scmp.eq.s32.totalorder %s516, 0
            // Predicated region
            $region94: #{basic_block_forward.1} parent=81 // pred_check
              %p518 = pneg %p517
            $region95: #{basic_block_forward.1} parent=81 // pred_check_branch
              %520 = sbr.rel (%p518) target = $region97
            $region96: #{basic_block_forward.1} parent=81 // pred_region
              loop: start=0, step=1, limit=1
              $region98: #{basic_block_forward.1} parent=96 // loop_pre_header
                _
              $region99: #{basic_block_forward.1} parent=96 // loop_header
                %s522 = sphi 0, %s526
                %p523 = scmp.ge.s32.totalorder %s522, 1
                %s527 = sphi %s462, %s462
                %s528 = sphi %s465, %s465
              $region100: #{basic_block_forward.1} parent=96 // loop_header_branch
                %525 = sbr.rel (%p523) target = $region104
              $region101: #{basic_block_forward.1} parent=96 // loop_body
                %v529 = vld [vmem:[%s527] sm:$0xff]
                %530 = vst [vmem:[%s528] sm:$0xff] %v529
                %v531 = vld [vmem:[%s527 + $0x8] sm:$0xff]
                %532 = vst [vmem:[%s528 + $0x8] sm:$0xff] %v531
                %v533 = vld [vmem:[%s527 + $0x10] sm:$0xff]
                %534 = vst [vmem:[%s528 + $0x20] sm:$0xff] %v533
                %v535 = vld [vmem:[%s527 + $0x18] sm:$0xff]
                %536 = vst [vmem:[%s528 + $0x28] sm:$0xff] %v535
                %v537 = vld [vmem:[%s527 + $0x20] sm:$0xff]
                %538 = vst [vmem:[%s528 + $0x40] sm:$0xff] %v537
                %v539 = vld [vmem:[%s527 + $0x28] sm:$0xff]
                %540 = vst [vmem:[%s528 + $0x48] sm:$0xff] %v539
                %v541 = vld [vmem:[%s527 + $0x30] sm:$0xff]
                %542 = vst [vmem:[%s528 + $0x60] sm:$0xff] %v541
                %v543 = vld [vmem:[%s527 + $0x38] sm:$0xff]
                %544 = vst [vmem:[%s528 + $0x68] sm:$0xff] %v543
                %v545 = vld [vmem:[%s527 + $0x40] sm:$0xff]
                %546 = vst [vmem:[%s528 + $0x80] sm:$0xff] %v545
                %v547 = vld [vmem:[%s527 + $0x48] sm:$0xff]
                %548 = vst [vmem:[%s528 + $0x88] sm:$0xff] %v547
                %v549 = vld [vmem:[%s527 + $0x50] sm:$0xff]
                %550 = vst [vmem:[%s528 + $0xa0] sm:$0xff] %v549
                %v551 = vld [vmem:[%s527 + $0x58] sm:$0xff]
                %552 = vst [vmem:[%s528 + $0xa8] sm:$0xff] %v551
                %v553 = vld [vmem:[%s527 + $0x60] sm:$0xff]
                %554 = vst [vmem:[%s528 + $0xc0] sm:$0xff] %v553
                %v555 = vld [vmem:[%s527 + $0x68] sm:$0xff]
                %556 = vst [vmem:[%s528 + $0xc8] sm:$0xff] %v555
                %v557 = vld [vmem:[%s527 + $0x70] sm:$0xff]
                %558 = vst [vmem:[%s528 + $0xe0] sm:$0xff] %v557
                %v559 = vld [vmem:[%s527 + $0x78] sm:$0xff]
                %560 = vst [vmem:[%s528 + $0xe8] sm:$0xff] %v559
                %v561 = vld [vmem:[%s527 + $0x80] sm:$0xff]
                %562 = vst [vmem:[%s528 + $0x100] sm:$0xff] %v561
                %v563 = vld [vmem:[%s527 + $0x88] sm:$0xff]
                %564 = vst [vmem:[%s528 + $0x108] sm:$0xff] %v563
                %v565 = vld [vmem:[%s527 + $0x90] sm:$0xff]
                %566 = vst [vmem:[%s528 + $0x120] sm:$0xff] %v565
                %v567 = vld [vmem:[%s527 + $0x98] sm:$0xff]
                %568 = vst [vmem:[%s528 + $0x128] sm:$0xff] %v567
                %v569 = vld [vmem:[%s527 + $0xa0] sm:$0xff]
                %570 = vst [vmem:[%s528 + $0x140] sm:$0xff] %v569
                %v571 = vld [vmem:[%s527 + $0xa8] sm:$0xff]
                %572 = vst [vmem:[%s528 + $0x148] sm:$0xff] %v571
                %v573 = vld [vmem:[%s527 + $0xb0] sm:$0xff]
                %574 = vst [vmem:[%s528 + $0x160] sm:$0xff] %v573
                %v575 = vld [vmem:[%s527 + $0xb8] sm:$0xff]
                %576 = vst [vmem:[%s528 + $0x168] sm:$0xff] %v575
                %v577 = vld [vmem:[%s527 + $0xc0] sm:$0xff]
                %578 = vst [vmem:[%s528 + $0x180] sm:$0xff] %v577
                %v579 = vld [vmem:[%s527 + $0xc8] sm:$0xff]
                %580 = vst [vmem:[%s528 + $0x188] sm:$0xff] %v579
                %v581 = vld [vmem:[%s527 + $0xd0] sm:$0xff]
                %582 = vst [vmem:[%s528 + $0x1a0] sm:$0xff] %v581
                %v583 = vld [vmem:[%s527 + $0xd8] sm:$0xff]
                %584 = vst [vmem:[%s528 + $0x1a8] sm:$0xff] %v583
                %v585 = vld [vmem:[%s527 + $0xe0] sm:$0xff]
                %586 = vst [vmem:[%s528 + $0x1c0] sm:$0xff] %v585
                %v587 = vld [vmem:[%s527 + $0xe8] sm:$0xff]
                %588 = vst [vmem:[%s528 + $0x1c8] sm:$0xff] %v587
                %v589 = vld [vmem:[%s527 + $0xf0] sm:$0xff]
                %590 = vst [vmem:[%s528 + $0x1e0] sm:$0xff] %v589
                %v591 = vld [vmem:[%s527 + $0xf8] sm:$0xff]
                %592 = vst [vmem:[%s528 + $0x1e8] sm:$0xff] %v591
              $region102: #{basic_block_forward.1} parent=96 // loop_footer
                %s526 = sadd.s32 1, %s522
              $region103: #{basic_block_forward.1} parent=96 // loop_footer_branch
                %521 = sbr.rel target = $region99
              $region104: #{basic_block_forward.1} parent=96 // loop_exit
                _
            $region97: #{basic_block_forward.1} parent=81 // pred_fallthru
              _
            %p593 = pneg %p517
            // Predicated region
            $region105: #{basic_block_forward.1} parent=81 // pred_check
              _
            $region106: #{basic_block_forward.1} parent=81 // pred_check_branch
              %595 = sbr.rel (%p517) target = $region108
            $region107: #{basic_block_forward.1} parent=81 // pred_region
              %s596 = sand.u32 16, 7
            $region108: #{basic_block_forward.1} parent=81 // pred_fallthru
              _
          $region82: #{basic_block_forward.1} parent=77 // pred_fallthru
            _
          // Predicated region
          $region83: #{basic_block_forward.1} parent=77 // pred_check
            %p472 = pneg %p468
          $region84: #{basic_block_forward.1} parent=77 // pred_check_branch
            %474 = sbr.rel (%p472) target = $region86
          $region85: #{basic_block_forward.1} parent=77 // pred_region
            %s475 = sshllo.u32 0, 16
            loop: start=0, step=1, limit=1
            $region87: #{basic_block_forward.1} parent=85 // loop_pre_header
              _
            $region88: #{basic_block_forward.1} parent=85 // loop_header
              %s477 = sphi 0, %s481
              %p478 = scmp.ge.s32.totalorder %s477, 1
              %s482 = sphi %s462, %s462
              %s483 = sphi %s465, %s465
            $region89: #{basic_block_forward.1} parent=85 // loop_header_branch
              %480 = sbr.rel (%p478) target = $region93
            $region90: #{basic_block_forward.1} parent=85 // loop_body
              %v484 = vld [vmem:[%s482] sm:%s475]
              %485 = vst [vmem:[%s483] sm:%s475] %v484
              %v486 = vld [vmem:[%s482 + $0x10] sm:%s475]
              %487 = vst [vmem:[%s483 + $0x20] sm:%s475] %v486
              %v488 = vld [vmem:[%s482 + $0x20] sm:%s475]
              %489 = vst [vmem:[%s483 + $0x40] sm:%s475] %v488
              %v490 = vld [vmem:[%s482 + $0x30] sm:%s475]
              %491 = vst [vmem:[%s483 + $0x60] sm:%s475] %v490
              %v492 = vld [vmem:[%s482 + $0x40] sm:%s475]
              %493 = vst [vmem:[%s483 + $0x80] sm:%s475] %v492
              %v494 = vld [vmem:[%s482 + $0x50] sm:%s475]
              %495 = vst [vmem:[%s483 + $0xa0] sm:%s475] %v494
              %v496 = vld [vmem:[%s482 + $0x60] sm:%s475]
              %497 = vst [vmem:[%s483 + $0xc0] sm:%s475] %v496
              %v498 = vld [vmem:[%s482 + $0x70] sm:%s475]
              %499 = vst [vmem:[%s483 + $0xe0] sm:%s475] %v498
              %v500 = vld [vmem:[%s482 + $0x80] sm:%s475]
              %501 = vst [vmem:[%s483 + $0x100] sm:%s475] %v500
              %v502 = vld [vmem:[%s482 + $0x90] sm:%s475]
              %503 = vst [vmem:[%s483 + $0x120] sm:%s475] %v502
              %v504 = vld [vmem:[%s482 + $0xa0] sm:%s475]
              %505 = vst [vmem:[%s483 + $0x140] sm:%s475] %v504
              %v506 = vld [vmem:[%s482 + $0xb0] sm:%s475]
              %507 = vst [vmem:[%s483 + $0x160] sm:%s475] %v506
              %v508 = vld [vmem:[%s482 + $0xc0] sm:%s475]
              %509 = vst [vmem:[%s483 + $0x180] sm:%s475] %v508
              %v510 = vld [vmem:[%s482 + $0xd0] sm:%s475]
              %511 = vst [vmem:[%s483 + $0x1a0] sm:%s475] %v510
              %v512 = vld [vmem:[%s482 + $0xe0] sm:%s475]
              %513 = vst [vmem:[%s483 + $0x1c0] sm:%s475] %v512
              %v514 = vld [vmem:[%s482 + $0xf0] sm:%s475]
              %515 = vst [vmem:[%s483 + $0x1e0] sm:%s475] %v514
            $region91: #{basic_block_forward.1} parent=85 // loop_footer
              %s481 = sadd.s32 1, %s477
            $region92: #{basic_block_forward.1} parent=85 // loop_footer_branch
              %476 = sbr.rel target = $region88
            $region93: #{basic_block_forward.1} parent=85 // loop_exit
              _
          $region86: #{basic_block_forward.1} parent=77 // pred_fallthru
            _
          // Predicated region
          $region109: #{basic_block_forward.1} parent=77 // pred_check
            _
          $region110: #{basic_block_forward.1} parent=77 // pred_check_branch
            %599 = sbr.rel (0) target = $region112
          $region111: #{basic_block_forward.1} parent=77 // pred_region
            %600 = vsyncadd %s466, 4096
          $region112: #{basic_block_forward.1} parent=77 // pred_fallthru
            _
        $region78: #{basic_block_forward.1} parent=35 // pred_fallthru
          _
        %s601 = scalar_lea.sflag [#allocation4], %s188
        %s602 = smul.u32 16, 16
        %s603 = smul.u32 %s602, 1
        %s604 = sshll.u32 %s603, 4
        %605 = dma.done %s601, %s604
        %v606 = vld [vmem:[%s3] sm:$0x1]
        %v607 = vld [vmem:[%s4] sm:$0x1]
        %s608 = smul.u32 %s188, 576
        %s609 = scalar_lea.vmem [#allocation2], %s608
        %v610 = vld [vmem:[%s609 + $0x7] sm:$0xff]
        %v611 = vld [vmem:[%s609 + $0xf] sm:$0xff]
        %v612 = vld [vmem:[%s609 + $0x27] sm:$0xff]
        %v613 = vld [vmem:[%s609 + $0x2f] sm:$0xff]
        %v614 = vld [vmem:[%s609 + $0x47] sm:$0xff]
        %v615 = vld [vmem:[%s609 + $0x4f] sm:$0xff]
        %v616 = vld [vmem:[%s609 + $0x67] sm:$0xff]
        %v617 = vld [vmem:[%s609 + $0x6f] sm:$0xff]
        %v618 = vld [vmem:[%s609 + $0x87] sm:$0xff]
        %v619 = vld [vmem:[%s609 + $0x8f] sm:$0xff]
        %v620 = vld [vmem:[%s609 + $0xa7] sm:$0xff]
        %v621 = vld [vmem:[%s609 + $0xaf] sm:$0xff]
        %v622 = vld [vmem:[%s609 + $0xc7] sm:$0xff]
        %v623 = vld [vmem:[%s609 + $0xcf] sm:$0xff]
        %v624 = vld [vmem:[%s609 + $0xe7] sm:$0xff]
        %v625 = vld [vmem:[%s609 + $0xef] sm:$0xff]
        %v626 = vld [vmem:[%s609 + $0x107] sm:$0xff]
        %v627 = vld [vmem:[%s609 + $0x10f] sm:$0xff]
        %v628 = vld [vmem:[%s609 + $0x127] sm:$0xff]
        %v629 = vld [vmem:[%s609 + $0x12f] sm:$0xff]
        %v630 = vld [vmem:[%s609 + $0x147] sm:$0xff]
        %v631 = vld [vmem:[%s609 + $0x14f] sm:$0xff]
        %v632 = vld [vmem:[%s609 + $0x167] sm:$0xff]
        %v633 = vld [vmem:[%s609 + $0x16f] sm:$0xff]
        %v634 = vld [vmem:[%s609 + $0x187] sm:$0xff]
        %v635 = vld [vmem:[%s609 + $0x18f] sm:$0xff]
        %v636 = vld [vmem:[%s609 + $0x1a7] sm:$0xff]
        %v637 = vld [vmem:[%s609 + $0x1af] sm:$0xff]
        %v638 = vld [vmem:[%s609 + $0x1c7] sm:$0xff]
        %v639 = vld [vmem:[%s609 + $0x1cf] sm:$0xff]
        %v640 = vld [vmem:[%s609 + $0x1e7] sm:$0xff]
        %v641 = vld [vmem:[%s609 + $0x1ef] sm:$0xff]
        %v642 = vld [vmem:[%s1] sm:$0xff]
        %v643 = vld [vmem:[%s1 + $0x8] sm:$0xff]
        %v644 = vld [vmem:[%s1 + $0x10] sm:$0xff]
        %v645 = vld [vmem:[%s1 + $0x18] sm:$0xff]
        %v646 = vld [vmem:[%s1 + $0x20] sm:$0xff]
        %v647 = vld [vmem:[%s1 + $0x28] sm:$0xff]
        %v648 = vld [vmem:[%s1 + $0x30] sm:$0xff]
        %v649 = vld [vmem:[%s1 + $0x38] sm:$0xff]
        %v650 = vld [vmem:[%s1 + $0x40] sm:$0xff]
        %v651 = vld [vmem:[%s1 + $0x48] sm:$0xff]
        %v652 = vld [vmem:[%s1 + $0x50] sm:$0xff]
        %v653 = vld [vmem:[%s1 + $0x58] sm:$0xff]
        %v654 = vld [vmem:[%s1 + $0x60] sm:$0xff]
        %v655 = vld [vmem:[%s1 + $0x68] sm:$0xff]
        %v656 = vld [vmem:[%s1 + $0x70] sm:$0xff]
        %v657 = vld [vmem:[%s1 + $0x78] sm:$0xff]
        %v658 = vld [vmem:[%s609 + $0x8] sm:$0xff]
        %v659 = vld [vmem:[%s609 + $0x10] sm:$0xff]
        %v660 = vld [vmem:[%s609 + $0x28] sm:$0xff]
        %v661 = vld [vmem:[%s609 + $0x30] sm:$0xff]
        %v662 = vld [vmem:[%s609 + $0x48] sm:$0xff]
        %v663 = vld [vmem:[%s609 + $0x50] sm:$0xff]
        %v664 = vld [vmem:[%s609 + $0x68] sm:$0xff]
        %v665 = vld [vmem:[%s609 + $0x70] sm:$0xff]
        %v666 = vld [vmem:[%s609 + $0x88] sm:$0xff]
        %v667 = vld [vmem:[%s609 + $0x90] sm:$0xff]
        %v668 = vld [vmem:[%s609 + $0xa8] sm:$0xff]
        %v669 = vld [vmem:[%s609 + $0xb0] sm:$0xff]
        %v670 = vld [vmem:[%s609 + $0xc8] sm:$0xff]
        %v671 = vld [vmem:[%s609 + $0xd0] sm:$0xff]
        %v672 = vld [vmem:[%s609 + $0xe8] sm:$0xff]
        %v673 = vld [vmem:[%s609 + $0xf0] sm:$0xff]
        %v674 = vld [vmem:[%s609 + $0x108] sm:$0xff]
        %v675 = vld [vmem:[%s609 + $0x110] sm:$0xff]
        %v676 = vld [vmem:[%s609 + $0x128] sm:$0xff]
        %v677 = vld [vmem:[%s609 + $0x130] sm:$0xff]
        %v678 = vld [vmem:[%s609 + $0x148] sm:$0xff]
        %v679 = vld [vmem:[%s609 + $0x150] sm:$0xff]
        %v680 = vld [vmem:[%s609 + $0x168] sm:$0xff]
        %v681 = vld [vmem:[%s609 + $0x170] sm:$0xff]
        %v682 = vld [vmem:[%s609 + $0x188] sm:$0xff]
        %v683 = vld [vmem:[%s609 + $0x190] sm:$0xff]
        %v684 = vld [vmem:[%s609 + $0x1a8] sm:$0xff]
        %v685 = vld [vmem:[%s609 + $0x1b0] sm:$0xff]
        %v686 = vld [vmem:[%s609 + $0x1c8] sm:$0xff]
        %v687 = vld [vmem:[%s609 + $0x1d0] sm:$0xff]
        %v688 = vld [vmem:[%s609 + $0x1e8] sm:$0xff]
        %v689 = vld [vmem:[%s609 + $0x1f0] sm:$0xff]
        %s690 = scalar_lea.vmem %s1, 128
        %v691 = vld [vmem:[%s690] sm:$0xff]
        %v692 = vld [vmem:[%s690 + $0x8] sm:$0xff]
        %v693 = vld [vmem:[%s690 + $0x10] sm:$0xff]
        %v694 = vld [vmem:[%s690 + $0x18] sm:$0xff]
        %v695 = vld [vmem:[%s690 + $0x20] sm:$0xff]
        %v696 = vld [vmem:[%s690 + $0x28] sm:$0xff]
        %v697 = vld [vmem:[%s690 + $0x30] sm:$0xff]
        %v698 = vld [vmem:[%s690 + $0x38] sm:$0xff]
        %v699 = vld [vmem:[%s690 + $0x40] sm:$0xff]
        %v700 = vld [vmem:[%s690 + $0x48] sm:$0xff]
        %v701 = vld [vmem:[%s690 + $0x50] sm:$0xff]
        %v702 = vld [vmem:[%s690 + $0x58] sm:$0xff]
        %v703 = vld [vmem:[%s690 + $0x60] sm:$0xff]
        %v704 = vld [vmem:[%s690 + $0x68] sm:$0xff]
        %v705 = vld [vmem:[%s690 + $0x70] sm:$0xff]
        %v706 = vld [vmem:[%s690 + $0x78] sm:$0xff]
        %707 = vmatprep.subr.mxu0 0.0
        %708 = vmatpush1.msra.mxu0 %v691
        %709 = vmatprep.subr.mxu0 0.0
        %710 = vmatpush1.msra.mxu0 %v692
        %711 = vmatprep.subr.mxu0 0.0
        %712 = vmatpush1.msra.mxu0 %v693
        %713 = vmatprep.subr.mxu0 0.0
        %714 = vmatpush1.msra.mxu0 %v694
        %715 = vmatprep.subr.mxu0 0.0
        %716 = vmatpush1.msra.mxu0 %v695
        %717 = vmatprep.subr.mxu0 0.0
        %718 = vmatpush1.msra.mxu0 %v696
        %719 = vmatprep.subr.mxu0 0.0
        %720 = vmatpush1.msra.mxu0 %v697
        %721 = vmatprep.subr.mxu0 0.0
        %722 = vmatpush1.msra.mxu0 %v698
        %723 = vmatprep.subr.mxu0 0.0
        %724 = vmatpush1.msra.mxu0 %v699
        %725 = vmatprep.subr.mxu0 0.0
        %726 = vmatpush1.msra.mxu0 %v700
        %727 = vmatprep.subr.mxu0 0.0
        %728 = vmatpush1.msra.mxu0 %v701
        %729 = vmatprep.subr.mxu0 0.0
        %730 = vmatpush1.msra.mxu0 %v702
        %731 = vmatprep.subr.mxu0 0.0
        %732 = vmatpush1.msra.mxu0 %v703
        %733 = vmatprep.subr.mxu0 0.0
        %734 = vmatpush1.msra.mxu0 %v704
        %735 = vmatprep.subr.mxu0 0.0
        %736 = vmatpush1.msra.mxu0 %v705
        %737 = vmatprep.subr.mxu0 0.0
        %738 = vmatpush1.msra.mxu0 %v706
        %739 = vmatprep.subr.mxu0 0.0
        %740 = vmatpush1.msra.mxu0 0.0
        %741 = vmatprep.subr.mxu0 0.0
        %742 = vmatpush1.msra.mxu0 0.0
        %743 = vmatprep.subr.mxu0 0.0
        %744 = vmatpush1.msra.mxu0 0.0
        %745 = vmatprep.subr.mxu0 0.0
        %746 = vmatpush1.msra.mxu0 0.0
        %747 = vmatprep.subr.mxu0 0.0
        %748 = vmatpush1.msra.mxu0 0.0
        %749 = vmatprep.subr.mxu0 0.0
        %750 = vmatpush1.msra.mxu0 0.0
        %751 = vmatprep.subr.mxu0 0.0
        %752 = vmatpush1.msra.mxu0 0.0
        %753 = vmatprep.subr.mxu0 0.0
        %754 = vmatpush1.msra.mxu0 0.0
        %755 = vmatprep.subr.mxu0 0.0
        %756 = vmatpush1.msra.mxu0 0.0
        %757 = vmatprep.subr.mxu0 0.0
        %758 = vmatpush1.msra.mxu0 0.0
        %759 = vmatprep.subr.mxu0 0.0
        %760 = vmatpush1.msra.mxu0 0.0
        %761 = vmatprep.subr.mxu0 0.0
        %762 = vmatpush1.msra.mxu0 0.0
        %763 = vmatprep.subr.mxu0 0.0
        %764 = vmatpush1.msra.mxu0 0.0
        %765 = vmatprep.subr.mxu0 0.0
        %766 = vmatpush1.msra.mxu0 0.0
        %767 = vmatprep.subr.mxu0 0.0
        %768 = vmatpush1.msra.mxu0 0.0
        %769 = vmatprep.subr.mxu0 0.0
        %770 = vmatpush1.msra.mxu0 0.0
        %771 = vmatprep.mubr.f32.mxu0 0.0
        %772 = vmatmul.mubr.f32.gmra.mrb[0].mxu0 %v658
        %v773 = vpop.f32.mrb[0].mxu0
        %v774 = vadd.f32 0.0, %v773
        %v775 = vpop.f32.mrb[0].mxu0
        %776 = vmatprep.mubr.f32.mxu0 0.0
        %777 = vmatmul.mubr.f32.gmra.mrb[0].mxu0 %v659
        %v778 = vpop.f32.mrb[0].mxu0
        %v779 = vadd.f32 0.0, %v778
        %v780 = vpop.f32.mrb[0].mxu0
        %781 = vmatprep.mubr.f32.mxu0 0.0
        %782 = vmatmul.mubr.f32.gmra.mrb[0].mxu0 %v660
        %v783 = vpop.f32.mrb[0].mxu0
        %v784 = vadd.f32 0.0, %v783
        %v785 = vpop.f32.mrb[0].mxu0
        %786 = vmatprep.mubr.f32.mxu0 0.0
        %787 = vmatmul.mubr.f32.gmra.mrb[0].mxu0 %v661
        %v788 = vpop.f32.mrb[0].mxu0
        %v789 = vadd.f32 0.0, %v788
        %v790 = vpop.f32.mrb[0].mxu0
        %791 = vmatprep.mubr.f32.mxu0 0.0
        %792 = vmatmul.mubr.f32.gmra.mrb[0].mxu0 %v662
        %v793 = vpop.f32.mrb[0].mxu0
        %v794 = vadd.f32 0.0, %v793
        %v795 = vpop.f32.mrb[0].mxu0
        %796 = vmatprep.mubr.f32.mxu0 0.0
        %797 = vmatmul.mubr.f32.gmra.mrb[0].mxu0 %v663
        %v798 = vpop.f32.mrb[0].mxu0
        %v799 = vadd.f32 0.0, %v798
        %v800 = vpop.f32.mrb[0].mxu0
        %801 = vmatprep.mubr.f32.mxu0 0.0
        %802 = vmatmul.mubr.f32.gmra.mrb[0].mxu0 %v664
        %v803 = vpop.f32.mrb[0].mxu0
        %v804 = vadd.f32 0.0, %v803
        %v805 = vpop.f32.mrb[0].mxu0
        %806 = vmatprep.mubr.f32.mxu0 0.0
        %807 = vmatmul.mubr.f32.gmra.mrb[0].mxu0 %v665
        %v808 = vpop.f32.mrb[0].mxu0
        %v809 = vadd.f32 0.0, %v808
        %v810 = vpop.f32.mrb[0].mxu0
        %811 = vmatprep.mubr.f32.mxu0 0.0
        %812 = vmatmul.mubr.f32.gmra.mrb[0].mxu0 %v666
        %v813 = vpop.f32.mrb[0].mxu0
        %v814 = vadd.f32 0.0, %v813
        %v815 = vpop.f32.mrb[0].mxu0
        %816 = vmatprep.mubr.f32.mxu0 0.0
        %817 = vmatmul.mubr.f32.gmra.mrb[0].mxu0 %v667
        %v818 = vpop.f32.mrb[0].mxu0
        %v819 = vadd.f32 0.0, %v818
        %v820 = vpop.f32.mrb[0].mxu0
        %821 = vmatprep.mubr.f32.mxu0 0.0
        %822 = vmatmul.mubr.f32.gmra.mrb[0].mxu0 %v668
        %v823 = vpop.f32.mrb[0].mxu0
        %v824 = vadd.f32 0.0, %v823
        %v825 = vpop.f32.mrb[0].mxu0
        %826 = vmatprep.mubr.f32.mxu0 0.0
        %827 = vmatmul.mubr.f32.gmra.mrb[0].mxu0 %v669
        %v828 = vpop.f32.mrb[0].mxu0
        %v829 = vadd.f32 0.0, %v828
        %v830 = vpop.f32.mrb[0].mxu0
        %831 = vmatprep.mubr.f32.mxu0 0.0
        %832 = vmatmul.mubr.f32.gmra.mrb[0].mxu0 %v670
        %v833 = vpop.f32.mrb[0].mxu0
        %v834 = vadd.f32 0.0, %v833
        %v835 = vpop.f32.mrb[0].mxu0
        %836 = vmatprep.mubr.f32.mxu0 0.0
        %837 = vmatmul.mubr.f32.gmra.mrb[0].mxu0 %v671
        %v838 = vpop.f32.mrb[0].mxu0
        %v839 = vadd.f32 0.0, %v838
        %v840 = vpop.f32.mrb[0].mxu0
        %841 = vmatprep.mubr.f32.mxu0 0.0
        %842 = vmatmul.mubr.f32.gmra.mrb[0].mxu0 %v672
        %v843 = vpop.f32.mrb[0].mxu0
        %v844 = vadd.f32 0.0, %v843
        %v845 = vpop.f32.mrb[0].mxu0
        %846 = vmatprep.mubr.f32.mxu0 0.0
        %847 = vmatmul.mubr.f32.gmra.mrb[0].mxu0 %v673
        %v848 = vpop.f32.mrb[0].mxu0
        %v849 = vadd.f32 0.0, %v848
        %v850 = vpop.f32.mrb[0].mxu0
        %851 = vmatprep.mubr.f32.mxu0 0.0
        %852 = vmatmul.mubr.f32.gmra.mrb[0].mxu0 %v674
        %v853 = vpop.f32.mrb[0].mxu0
        %v854 = vadd.f32 0.0, %v853
        %v855 = vpop.f32.mrb[0].mxu0
        %856 = vmatprep.mubr.f32.mxu0 0.0
        %857 = vmatmul.mubr.f32.gmra.mrb[0].mxu0 %v675
        %v858 = vpop.f32.mrb[0].mxu0
        %v859 = vadd.f32 0.0, %v858
        %v860 = vpop.f32.mrb[0].mxu0
        %861 = vmatprep.mubr.f32.mxu0 0.0
        %862 = vmatmul.mubr.f32.gmra.mrb[0].mxu0 %v676
        %v863 = vpop.f32.mrb[0].mxu0
        %v864 = vadd.f32 0.0, %v863
        %v865 = vpop.f32.mrb[0].mxu0
        %866 = vmatprep.mubr.f32.mxu0 0.0
        %867 = vmatmul.mubr.f32.gmra.mrb[0].mxu0 %v677
        %v868 = vpop.f32.mrb[0].mxu0
        %v869 = vadd.f32 0.0, %v868
        %v870 = vpop.f32.mrb[0].mxu0
        %871 = vmatprep.mubr.f32.mxu0 0.0
        %872 = vmatmul.mubr.f32.gmra.mrb[0].mxu0 %v678
        %v873 = vpop.f32.mrb[0].mxu0
        %v874 = vadd.f32 0.0, %v873
        %v875 = vpop.f32.mrb[0].mxu0
        %876 = vmatprep.mubr.f32.mxu0 0.0
        %877 = vmatmul.mubr.f32.gmra.mrb[0].mxu0 %v679
        %v878 = vpop.f32.mrb[0].mxu0
        %v879 = vadd.f32 0.0, %v878
        %v880 = vpop.f32.mrb[0].mxu0
        %881 = vmatprep.mubr.f32.mxu0 0.0
        %882 = vmatmul.mubr.f32.gmra.mrb[0].mxu0 %v680
        %v883 = vpop.f32.mrb[0].mxu0
        %v884 = vadd.f32 0.0, %v883
        %v885 = vpop.f32.mrb[0].mxu0
        %886 = vmatprep.mubr.f32.mxu0 0.0
        %887 = vmatmul.mubr.f32.gmra.mrb[0].mxu0 %v681
        %v888 = vpop.f32.mrb[0].mxu0
        %v889 = vadd.f32 0.0, %v888
        %v890 = vpop.f32.mrb[0].mxu0
        %891 = vmatprep.mubr.f32.mxu0 0.0
        %892 = vmatmul.mubr.f32.gmra.mrb[0].mxu0 %v682
        %v893 = vpop.f32.mrb[0].mxu0
        %v894 = vadd.f32 0.0, %v893
        %v895 = vpop.f32.mrb[0].mxu0
        %896 = vmatprep.mubr.f32.mxu0 0.0
        %897 = vmatmul.mubr.f32.gmra.mrb[0].mxu0 %v683
        %v898 = vpop.f32.mrb[0].mxu0
        %v899 = vadd.f32 0.0, %v898
        %v900 = vpop.f32.mrb[0].mxu0
        %901 = vmatprep.mubr.f32.mxu0 0.0
        %902 = vmatmul.mubr.f32.gmra.mrb[0].mxu0 %v684
        %v903 = vpop.f32.mrb[0].mxu0
        %v904 = vadd.f32 0.0, %v903
        %v905 = vpop.f32.mrb[0].mxu0
        %906 = vmatprep.mubr.f32.mxu0 0.0
        %907 = vmatmul.mubr.f32.gmra.mrb[0].mxu0 %v685
        %v908 = vpop.f32.mrb[0].mxu0
        %v909 = vadd.f32 0.0, %v908
        %v910 = vpop.f32.mrb[0].mxu0
        %911 = vmatprep.mubr.f32.mxu0 0.0
        %912 = vmatmul.mubr.f32.gmra.mrb[0].mxu0 %v686
        %v913 = vpop.f32.mrb[0].mxu0
        %v914 = vadd.f32 0.0, %v913
        %v915 = vpop.f32.mrb[0].mxu0
        %916 = vmatprep.mubr.f32.mxu0 0.0
        %917 = vmatmul.mubr.f32.gmra.mrb[0].mxu0 %v687
        %v918 = vpop.f32.mrb[0].mxu0
        %v919 = vadd.f32 0.0, %v918
        %v920 = vpop.f32.mrb[0].mxu0
        %921 = vmatprep.mubr.f32.mxu0 0.0
        %922 = vmatmul.mubr.f32.gmra.mrb[0].mxu0 %v688
        %v923 = vpop.f32.mrb[0].mxu0
        %v924 = vadd.f32 0.0, %v923
        %v925 = vpop.f32.mrb[0].mxu0
        %926 = vmatprep.mubr.f32.mxu0 0.0
        %927 = vmatmul.mubr.f32.gmra.mrb[0].mxu0 %v689
        %v928 = vpop.f32.mrb[0].mxu0
        %v929 = vadd.f32 0.0, %v928
        %v930 = vpop.f32.mrb[0].mxu0
        %931 = vdwg.mxu0
        %932 = vmatprep.subr.mxu0 0.0
        %933 = vmatpush1.msra.mxu0 %v642
        %934 = vmatprep.subr.mxu0 0.0
        %935 = vmatpush1.msra.mxu0 %v643
        %936 = vmatprep.subr.mxu0 0.0
        %937 = vmatpush1.msra.mxu0 %v644
        %938 = vmatprep.subr.mxu0 0.0
        %939 = vmatpush1.msra.mxu0 %v645
        %940 = vmatprep.subr.mxu0 0.0
        %941 = vmatpush1.msra.mxu0 %v646
        %942 = vmatprep.subr.mxu0 0.0
        %943 = vmatpush1.msra.mxu0 %v647
        %944 = vmatprep.subr.mxu0 0.0
        %945 = vmatpush1.msra.mxu0 %v648
        %946 = vmatprep.subr.mxu0 0.0
        %947 = vmatpush1.msra.mxu0 %v649
        %948 = vmatprep.subr.mxu0 0.0
        %949 = vmatpush1.msra.mxu0 %v650
        %950 = vmatprep.subr.mxu0 0.0
        %951 = vmatpush1.msra.mxu0 %v651
        %952 = vmatprep.subr.mxu0 0.0
        %953 = vmatpush1.msra.mxu0 %v652
        %954 = vmatprep.subr.mxu0 0.0
        %955 = vmatpush1.msra.mxu0 %v653
        %956 = vmatprep.subr.mxu0 0.0
        %957 = vmatpush1.msra.mxu0 %v654
        %958 = vmatprep.subr.mxu0 0.0
        %959 = vmatpush1.msra.mxu0 %v655
        %960 = vmatprep.subr.mxu0 0.0
        %961 = vmatpush1.msra.mxu0 %v656
        %962 = vmatprep.subr.mxu0 0.0
        %963 = vmatpush1.msra.mxu0 %v657
        %964 = vmatprep.subr.mxu0 0.0
        %965 = vmatpush1.msra.mxu0 0.0
        %966 = vmatprep.subr.mxu0 0.0
        %967 = vmatpush1.msra.mxu0 0.0
        %968 = vmatprep.subr.mxu0 0.0
        %969 = vmatpush1.msra.mxu0 0.0
        %970 = vmatprep.subr.mxu0 0.0
        %971 = vmatpush1.msra.mxu0 0.0
        %972 = vmatprep.subr.mxu0 0.0
        %973 = vmatpush1.msra.mxu0 0.0
        %974 = vmatprep.subr.mxu0 0.0
        %975 = vmatpush1.msra.mxu0 0.0
        %976 = vmatprep.subr.mxu0 0.0
        %977 = vmatpush1.msra.mxu0 0.0
        %978 = vmatprep.subr.mxu0 0.0
        %979 = vmatpush1.msra.mxu0 0.0
        %980 = vmatprep.subr.mxu0 0.0
        %981 = vmatpush1.msra.mxu0 0.0
        %982 = vmatprep.subr.mxu0 0.0
        %983 = vmatpush1.msra.mxu0 0.0
        %984 = vmatprep.subr.mxu0 0.0
        %985 = vmatpush1.msra.mxu0 0.0
        %986 = vmatprep.subr.mxu0 0.0
        %987 = vmatpush1.msra.mxu0 0.0
        %988 = vmatprep.subr.mxu0 0.0
        %989 = vmatpush1.msra.mxu0 0.0
        %990 = vmatprep.subr.mxu0 0.0
        %991 = vmatpush1.msra.mxu0 0.0
        %992 = vmatprep.subr.mxu0 0.0
        %993 = vmatpush1.msra.mxu0 0.0
        %994 = vmatprep.subr.mxu0 0.0
        %995 = vmatpush1.msra.mxu0 0.0
        %996 = vmatprep.mubr.f32.mxu0 0.0
        %997 = vmatmul.mubr.f32.gmra.mrb[0].mxu0 %v610
        %v998 = vpop.f32.mrb[0].mxu0
        %v999 = vadd.f32 %v774, %v998
        %v1000 = vpop.f32.mrb[0].mxu0
        %1001 = vmatprep.mubr.f32.mxu0 0.0
        %1002 = vmatmul.mubr.f32.gmra.mrb[0].mxu0 %v611
        %v1003 = vpop.f32.mrb[0].mxu0
        %v1004 = vadd.f32 %v779, %v1003
        %v1005 = vpop.f32.mrb[0].mxu0
        %1006 = vmatprep.mubr.f32.mxu0 0.0
        %1007 = vmatmul.mubr.f32.gmra.mrb[0].mxu0 %v612
        %v1008 = vpop.f32.mrb[0].mxu0
        %v1009 = vadd.f32 %v784, %v1008
        %v1010 = vpop.f32.mrb[0].mxu0
        %1011 = vmatprep.mubr.f32.mxu0 0.0
        %1012 = vmatmul.mubr.f32.gmra.mrb[0].mxu0 %v613
        %v1013 = vpop.f32.mrb[0].mxu0
        %v1014 = vadd.f32 %v789, %v1013
        %v1015 = vpop.f32.mrb[0].mxu0
        %1016 = vmatprep.mubr.f32.mxu0 0.0
        %1017 = vmatmul.mubr.f32.gmra.mrb[0].mxu0 %v614
        %v1018 = vpop.f32.mrb[0].mxu0
        %v1019 = vadd.f32 %v794, %v1018
        %v1020 = vpop.f32.mrb[0].mxu0
        %1021 = vmatprep.mubr.f32.mxu0 0.0
        %1022 = vmatmul.mubr.f32.gmra.mrb[0].mxu0 %v615
        %v1023 = vpop.f32.mrb[0].mxu0
        %v1024 = vadd.f32 %v799, %v1023
        %v1025 = vpop.f32.mrb[0].mxu0
        %1026 = vmatprep.mubr.f32.mxu0 0.0
        %1027 = vmatmul.mubr.f32.gmra.mrb[0].mxu0 %v616
        %v1028 = vpop.f32.mrb[0].mxu0
        %v1029 = vadd.f32 %v804, %v1028
        %v1030 = vpop.f32.mrb[0].mxu0
        %1031 = vmatprep.mubr.f32.mxu0 0.0
        %1032 = vmatmul.mubr.f32.gmra.mrb[0].mxu0 %v617
        %v1033 = vpop.f32.mrb[0].mxu0
        %v1034 = vadd.f32 %v809, %v1033
        %v1035 = vpop.f32.mrb[0].mxu0
        %1036 = vmatprep.mubr.f32.mxu0 0.0
        %1037 = vmatmul.mubr.f32.gmra.mrb[0].mxu0 %v618
        %v1038 = vpop.f32.mrb[0].mxu0
        %v1039 = vadd.f32 %v814, %v1038
        %v1040 = vpop.f32.mrb[0].mxu0
        %1041 = vmatprep.mubr.f32.mxu0 0.0
        %1042 = vmatmul.mubr.f32.gmra.mrb[0].mxu0 %v619
        %v1043 = vpop.f32.mrb[0].mxu0
        %v1044 = vadd.f32 %v819, %v1043
        %v1045 = vpop.f32.mrb[0].mxu0
        %1046 = vmatprep.mubr.f32.mxu0 0.0
        %1047 = vmatmul.mubr.f32.gmra.mrb[0].mxu0 %v620
        %v1048 = vpop.f32.mrb[0].mxu0
        %v1049 = vadd.f32 %v824, %v1048
        %v1050 = vpop.f32.mrb[0].mxu0
        %1051 = vmatprep.mubr.f32.mxu0 0.0
        %1052 = vmatmul.mubr.f32.gmra.mrb[0].mxu0 %v621
        %v1053 = vpop.f32.mrb[0].mxu0
        %v1054 = vadd.f32 %v829, %v1053
        %v1055 = vpop.f32.mrb[0].mxu0
        %1056 = vmatprep.mubr.f32.mxu0 0.0
        %1057 = vmatmul.mubr.f32.gmra.mrb[0].mxu0 %v622
        %v1058 = vpop.f32.mrb[0].mxu0
        %v1059 = vadd.f32 %v834, %v1058
        %v1060 = vpop.f32.mrb[0].mxu0
        %1061 = vmatprep.mubr.f32.mxu0 0.0
        %1062 = vmatmul.mubr.f32.gmra.mrb[0].mxu0 %v623
        %v1063 = vpop.f32.mrb[0].mxu0
        %v1064 = vadd.f32 %v839, %v1063
        %v1065 = vpop.f32.mrb[0].mxu0
        %1066 = vmatprep.mubr.f32.mxu0 0.0
        %1067 = vmatmul.mubr.f32.gmra.mrb[0].mxu0 %v624
        %v1068 = vpop.f32.mrb[0].mxu0
        %v1069 = vadd.f32 %v844, %v1068
        %v1070 = vpop.f32.mrb[0].mxu0
        %1071 = vmatprep.mubr.f32.mxu0 0.0
        %1072 = vmatmul.mubr.f32.gmra.mrb[0].mxu0 %v625
        %v1073 = vpop.f32.mrb[0].mxu0
        %v1074 = vadd.f32 %v849, %v1073
        %v1075 = vpop.f32.mrb[0].mxu0
        %1076 = vmatprep.mubr.f32.mxu0 0.0
        %1077 = vmatmul.mubr.f32.gmra.mrb[0].mxu0 %v626
        %v1078 = vpop.f32.mrb[0].mxu0
        %v1079 = vadd.f32 %v854, %v1078
        %v1080 = vpop.f32.mrb[0].mxu0
        %1081 = vmatprep.mubr.f32.mxu0 0.0
        %1082 = vmatmul.mubr.f32.gmra.mrb[0].mxu0 %v627
        %v1083 = vpop.f32.mrb[0].mxu0
        %v1084 = vadd.f32 %v859, %v1083
        %v1085 = vpop.f32.mrb[0].mxu0
        %1086 = vmatprep.mubr.f32.mxu0 0.0
        %1087 = vmatmul.mubr.f32.gmra.mrb[0].mxu0 %v628
        %v1088 = vpop.f32.mrb[0].mxu0
        %v1089 = vadd.f32 %v864, %v1088
        %v1090 = vpop.f32.mrb[0].mxu0
        %1091 = vmatprep.mubr.f32.mxu0 0.0
        %1092 = vmatmul.mubr.f32.gmra.mrb[0].mxu0 %v629
        %v1093 = vpop.f32.mrb[0].mxu0
        %v1094 = vadd.f32 %v869, %v1093
        %v1095 = vpop.f32.mrb[0].mxu0
        %1096 = vmatprep.mubr.f32.mxu0 0.0
        %1097 = vmatmul.mubr.f32.gmra.mrb[0].mxu0 %v630
        %v1098 = vpop.f32.mrb[0].mxu0
        %v1099 = vadd.f32 %v874, %v1098
        %v1100 = vpop.f32.mrb[0].mxu0
        %1101 = vmatprep.mubr.f32.mxu0 0.0
        %1102 = vmatmul.mubr.f32.gmra.mrb[0].mxu0 %v631
        %v1103 = vpop.f32.mrb[0].mxu0
        %v1104 = vadd.f32 %v879, %v1103
        %v1105 = vpop.f32.mrb[0].mxu0
        %1106 = vmatprep.mubr.f32.mxu0 0.0
        %1107 = vmatmul.mubr.f32.gmra.mrb[0].mxu0 %v632
        %v1108 = vpop.f32.mrb[0].mxu0
        %v1109 = vadd.f32 %v884, %v1108
        %v1110 = vpop.f32.mrb[0].mxu0
        %1111 = vmatprep.mubr.f32.mxu0 0.0
        %1112 = vmatmul.mubr.f32.gmra.mrb[0].mxu0 %v633
        %v1113 = vpop.f32.mrb[0].mxu0
        %v1114 = vadd.f32 %v889, %v1113
        %v1115 = vpop.f32.mrb[0].mxu0
        %1116 = vmatprep.mubr.f32.mxu0 0.0
        %1117 = vmatmul.mubr.f32.gmra.mrb[0].mxu0 %v634
        %v1118 = vpop.f32.mrb[0].mxu0
        %v1119 = vadd.f32 %v894, %v1118
        %v1120 = vpop.f32.mrb[0].mxu0
        %1121 = vmatprep.mubr.f32.mxu0 0.0
        %1122 = vmatmul.mubr.f32.gmra.mrb[0].mxu0 %v635
        %v1123 = vpop.f32.mrb[0].mxu0
        %v1124 = vadd.f32 %v899, %v1123
        %v1125 = vpop.f32.mrb[0].mxu0
        %1126 = vmatprep.mubr.f32.mxu0 0.0
        %1127 = vmatmul.mubr.f32.gmra.mrb[0].mxu0 %v636
        %v1128 = vpop.f32.mrb[0].mxu0
        %v1129 = vadd.f32 %v904, %v1128
        %v1130 = vpop.f32.mrb[0].mxu0
        %1131 = vmatprep.mubr.f32.mxu0 0.0
        %1132 = vmatmul.mubr.f32.gmra.mrb[0].mxu0 %v637
        %v1133 = vpop.f32.mrb[0].mxu0
        %v1134 = vadd.f32 %v909, %v1133
        %v1135 = vpop.f32.mrb[0].mxu0
        %1136 = vmatprep.mubr.f32.mxu0 0.0
        %1137 = vmatmul.mubr.f32.gmra.mrb[0].mxu0 %v638
        %v1138 = vpop.f32.mrb[0].mxu0
        %v1139 = vadd.f32 %v914, %v1138
        %v1140 = vpop.f32.mrb[0].mxu0
        %1141 = vmatprep.mubr.f32.mxu0 0.0
        %1142 = vmatmul.mubr.f32.gmra.mrb[0].mxu0 %v639
        %v1143 = vpop.f32.mrb[0].mxu0
        %v1144 = vadd.f32 %v919, %v1143
        %v1145 = vpop.f32.mrb[0].mxu0
        %1146 = vmatprep.mubr.f32.mxu0 0.0
        %1147 = vmatmul.mubr.f32.gmra.mrb[0].mxu0 %v640
        %v1148 = vpop.f32.mrb[0].mxu0
        %v1149 = vadd.f32 %v924, %v1148
        %v1150 = vpop.f32.mrb[0].mxu0
        %1151 = vmatprep.mubr.f32.mxu0 0.0
        %1152 = vmatmul.mubr.f32.gmra.mrb[0].mxu0 %v641
        %v1153 = vpop.f32.mrb[0].mxu0
        %v1154 = vadd.f32 %v929, %v1153
        %v1155 = vpop.f32.mrb[0].mxu0
        %1156 = vdwg.mxu0
        %v1157 = vld [vmem:[%s609 + $0x9] sm:$0xff]
        %v1158 = vld [vmem:[%s609 + $0x11] sm:$0xff]
        %v1159 = vld [vmem:[%s609 + $0x29] sm:$0xff]
        %v1160 = vld [vmem:[%s609 + $0x31] sm:$0xff]
        %v1161 = vld [vmem:[%s609 + $0x49] sm:$0xff]
        %v1162 = vld [vmem:[%s609 + $0x51] sm:$0xff]
        %v1163 = vld [vmem:[%s609 + $0x69] sm:$0xff]
        %v1164 = vld [vmem:[%s609 + $0x71] sm:$0xff]
        %v1165 = vld [vmem:[%s609 + $0x89] sm:$0xff]
        %v1166 = vld [vmem:[%s609 + $0x91] sm:$0xff]
        %v1167 = vld [vmem:[%s609 + $0xa9] sm:$0xff]
        %v1168 = vld [vmem:[%s609 + $0xb1] sm:$0xff]
        %v1169 = vld [vmem:[%s609 + $0xc9] sm:$0xff]
        %v1170 = vld [vmem:[%s609 + $0xd1] sm:$0xff]
        %v1171 = vld [vmem:[%s609 + $0xe9] sm:$0xff]
        %v1172 = vld [vmem:[%s609 + $0xf1] sm:$0xff]
        %v1173 = vld [vmem:[%s609 + $0x109] sm:$0xff]
        %v1174 = vld [vmem:[%s609 + $0x111] sm:$0xff]
        %v1175 = vld [vmem:[%s609 + $0x129] sm:$0xff]
        %v1176 = vld [vmem:[%s609 + $0x131] sm:$0xff]
        %v1177 = vld [vmem:[%s609 + $0x149] sm:$0xff]
        %v1178 = vld [vmem:[%s609 + $0x151] sm:$0xff]
        %v1179 = vld [vmem:[%s609 + $0x169] sm:$0xff]
        %v1180 = vld [vmem:[%s609 + $0x171] sm:$0xff]
        %v1181 = vld [vmem:[%s609 + $0x189] sm:$0xff]
        %v1182 = vld [vmem:[%s609 + $0x191] sm:$0xff]
        %v1183 = vld [vmem:[%s609 + $0x1a9] sm:$0xff]
        %v1184 = vld [vmem:[%s609 + $0x1b1] sm:$0xff]
        %v1185 = vld [vmem:[%s609 + $0x1c9] sm:$0xff]
        %v1186 = vld [vmem:[%s609 + $0x1d1] sm:$0xff]
        %v1187 = vld [vmem:[%s609 + $0x1e9] sm:$0xff]
        %v1188 = vld [vmem:[%s609 + $0x1f1] sm:$0xff]
        %s1189 = scalar_lea.vmem %s1, 256
        %v1190 = vld [vmem:[%s1189] sm:$0xff]
        %v1191 = vld [vmem:[%s1189 + $0x8] sm:$0xff]
        %v1192 = vld [vmem:[%s1189 + $0x10] sm:$0xff]
        %v1193 = vld [vmem:[%s1189 + $0x18] sm:$0xff]
        %v1194 = vld [vmem:[%s1189 + $0x20] sm:$0xff]
        %v1195 = vld [vmem:[%s1189 + $0x28] sm:$0xff]
        %v1196 = vld [vmem:[%s1189 + $0x30] sm:$0xff]
        %v1197 = vld [vmem:[%s1189 + $0x38] sm:$0xff]
        %v1198 = vld [vmem:[%s1189 + $0x40] sm:$0xff]
        %v1199 = vld [vmem:[%s1189 + $0x48] sm:$0xff]
        %v1200 = vld [vmem:[%s1189 + $0x50] sm:$0xff]
        %v1201 = vld [vmem:[%s1189 + $0x58] sm:$0xff]
        %v1202 = vld [vmem:[%s1189 + $0x60] sm:$0xff]
        %v1203 = vld [vmem:[%s1189 + $0x68] sm:$0xff]
        %v1204 = vld [vmem:[%s1189 + $0x70] sm:$0xff]
        %v1205 = vld [vmem:[%s1189 + $0x78] sm:$0xff]
        %1206 = vmatprep.subr.mxu0 0.0
        %1207 = vmatpush1.msra.mxu0 %v1190
        %1208 = vmatprep.subr.mxu0 0.0
        %1209 = vmatpush1.msra.mxu0 %v1191
        %1210 = vmatprep.subr.mxu0 0.0
        %1211 = vmatpush1.msra.mxu0 %v1192
        %1212 = vmatprep.subr.mxu0 0.0
        %1213 = vmatpush1.msra.mxu0 %v1193
        %1214 = vmatprep.subr.mxu0 0.0
        %1215 = vmatpush1.msra.mxu0 %v1194
        %1216 = vmatprep.subr.mxu0 0.0
        %1217 = vmatpush1.msra.mxu0 %v1195
        %1218 = vmatprep.subr.mxu0 0.0
        %1219 = vmatpush1.msra.mxu0 %v1196
        %1220 = vmatprep.subr.mxu0 0.0
        %1221 = vmatpush1.msra.mxu0 %v1197
        %1222 = vmatprep.subr.mxu0 0.0
        %1223 = vmatpush1.msra.mxu0 %v1198
        %1224 = vmatprep.subr.mxu0 0.0
        %1225 = vmatpush1.msra.mxu0 %v1199
        %1226 = vmatprep.subr.mxu0 0.0
        %1227 = vmatpush1.msra.mxu0 %v1200
        %1228 = vmatprep.subr.mxu0 0.0
        %1229 = vmatpush1.msra.mxu0 %v1201
        %1230 = vmatprep.subr.mxu0 0.0
        %1231 = vmatpush1.msra.mxu0 %v1202
        %1232 = vmatprep.subr.mxu0 0.0
        %1233 = vmatpush1.msra.mxu0 %v1203
        %1234 = vmatprep.subr.mxu0 0.0
        %1235 = vmatpush1.msra.mxu0 %v1204
        %1236 = vmatprep.subr.mxu0 0.0
        %1237 = vmatpush1.msra.mxu0 %v1205
        %1238 = vmatprep.subr.mxu0 0.0
        %1239 = vmatpush1.msra.mxu0 0.0
        %1240 = vmatprep.subr.mxu0 0.0
        %1241 = vmatpush1.msra.mxu0 0.0
        %1242 = vmatprep.subr.mxu0 0.0
        %1243 = vmatpush1.msra.mxu0 0.0
        %1244 = vmatprep.subr.mxu0 0.0
        %1245 = vmatpush1.msra.mxu0 0.0
        %1246 = vmatprep.subr.mxu0 0.0
        %1247 = vmatpush1.msra.mxu0 0.0
        %1248 = vmatprep.subr.mxu0 0.0
        %1249 = vmatpush1.msra.mxu0 0.0
        %1250 = vmatprep.subr.mxu0 0.0
        %1251 = vmatpush1.msra.mxu0 0.0
        %1252 = vmatprep.subr.mxu0 0.0
        %1253 = vmatpush1.msra.mxu0 0.0
        %1254 = vmatprep.subr.mxu0 0.0
        %1255 = vmatpush1.msra.mxu0 0.0
        %1256 = vmatprep.subr.mxu0 0.0
        %1257 = vmatpush1.msra.mxu0 0.0
        %1258 = vmatprep.subr.mxu0 0.0
        %1259 = vmatpush1.msra.mxu0 0.0
        %1260 = vmatprep.subr.mxu0 0.0
        %1261 = vmatpush1.msra.mxu0 0.0
        %1262 = vmatprep.subr.mxu0 0.0
        %1263 = vmatpush1.msra.mxu0 0.0
        %1264 = vmatprep.subr.mxu0 0.0
        %1265 = vmatpush1.msra.mxu0 0.0
        %1266 = vmatprep.subr.mxu0 0.0
        %1267 = vmatpush1.msra.mxu0 0.0
        %1268 = vmatprep.subr.mxu0 0.0
        %1269 = vmatpush1.msra.mxu0 0.0
        %1270 = vmatprep.mubr.f32.mxu0 0.0
        %1271 = vmatmul.mubr.f32.gmra.mrb[0].mxu0 %v1157
        %v1272 = vpop.f32.mrb[0].mxu0
        %v1273 = vadd.f32 0.0, %v1272
        %v1274 = vpop.f32.mrb[0].mxu0
        %1275 = vmatprep.mubr.f32.mxu0 0.0
        %1276 = vmatmul.mubr.f32.gmra.mrb[0].mxu0 %v1158
        %v1277 = vpop.f32.mrb[0].mxu0
        %v1278 = vadd.f32 0.0, %v1277
        %v1279 = vpop.f32.mrb[0].mxu0
        %1280 = vmatprep.mubr.f32.mxu0 0.0
        %1281 = vmatmul.mubr.f32.gmra.mrb[0].mxu0 %v1159
        %v1282 = vpop.f32.mrb[0].mxu0
        %v1283 = vadd.f32 0.0, %v1282
        %v1284 = vpop.f32.mrb[0].mxu0
        %1285 = vmatprep.mubr.f32.mxu0 0.0
        %1286 = vmatmul.mubr.f32.gmra.mrb[0].mxu0 %v1160
        %v1287 = vpop.f32.mrb[0].mxu0
        %v1288 = vadd.f32 0.0, %v1287
        %v1289 = vpop.f32.mrb[0].mxu0
        %1290 = vmatprep.mubr.f32.mxu0 0.0
        %1291 = vmatmul.mubr.f32.gmra.mrb[0].mxu0 %v1161
        %v1292 = vpop.f32.mrb[0].mxu0
        %v1293 = vadd.f32 0.0, %v1292
        %v1294 = vpop.f32.mrb[0].mxu0
        %1295 = vmatprep.mubr.f32.mxu0 0.0
        %1296 = vmatmul.mubr.f32.gmra.mrb[0].mxu0 %v1162
        %v1297 = vpop.f32.mrb[0].mxu0
        %v1298 = vadd.f32 0.0, %v1297
        %v1299 = vpop.f32.mrb[0].mxu0
        %1300 = vmatprep.mubr.f32.mxu0 0.0
        %1301 = vmatmul.mubr.f32.gmra.mrb[0].mxu0 %v1163
        %v1302 = vpop.f32.mrb[0].mxu0
        %v1303 = vadd.f32 0.0, %v1302
        %v1304 = vpop.f32.mrb[0].mxu0
        %1305 = vmatprep.mubr.f32.mxu0 0.0
        %1306 = vmatmul.mubr.f32.gmra.mrb[0].mxu0 %v1164
        %v1307 = vpop.f32.mrb[0].mxu0
        %v1308 = vadd.f32 0.0, %v1307
        %v1309 = vpop.f32.mrb[0].mxu0
        %1310 = vmatprep.mubr.f32.mxu0 0.0
        %1311 = vmatmul.mubr.f32.gmra.mrb[0].mxu0 %v1165
        %v1312 = vpop.f32.mrb[0].mxu0
        %v1313 = vadd.f32 0.0, %v1312
        %v1314 = vpop.f32.mrb[0].mxu0
        %1315 = vmatprep.mubr.f32.mxu0 0.0
        %1316 = vmatmul.mubr.f32.gmra.mrb[0].mxu0 %v1166
        %v1317 = vpop.f32.mrb[0].mxu0
        %v1318 = vadd.f32 0.0, %v1317
        %v1319 = vpop.f32.mrb[0].mxu0
        %1320 = vmatprep.mubr.f32.mxu0 0.0
        %1321 = vmatmul.mubr.f32.gmra.mrb[0].mxu0 %v1167
        %v1322 = vpop.f32.mrb[0].mxu0
        %v1323 = vadd.f32 0.0, %v1322
        %v1324 = vpop.f32.mrb[0].mxu0
        %1325 = vmatprep.mubr.f32.mxu0 0.0
        %1326 = vmatmul.mubr.f32.gmra.mrb[0].mxu0 %v1168
        %v1327 = vpop.f32.mrb[0].mxu0
        %v1328 = vadd.f32 0.0, %v1327
        %v1329 = vpop.f32.mrb[0].mxu0
        %1330 = vmatprep.mubr.f32.mxu0 0.0
        %1331 = vmatmul.mubr.f32.gmra.mrb[0].mxu0 %v1169
        %v1332 = vpop.f32.mrb[0].mxu0
        %v1333 = vadd.f32 0.0, %v1332
        %v1334 = vpop.f32.mrb[0].mxu0
        %1335 = vmatprep.mubr.f32.mxu0 0.0
        %1336 = vmatmul.mubr.f32.gmra.mrb[0].mxu0 %v1170
        %v1337 = vpop.f32.mrb[0].mxu0
        %v1338 = vadd.f32 0.0, %v1337
        %v1339 = vpop.f32.mrb[0].mxu0
        %1340 = vmatprep.mubr.f32.mxu0 0.0
        %1341 = vmatmul.mubr.f32.gmra.mrb[0].mxu0 %v1171
        %v1342 = vpop.f32.mrb[0].mxu0
        %v1343 = vadd.f32 0.0, %v1342
        %v1344 = vpop.f32.mrb[0].mxu0
        %1345 = vmatprep.mubr.f32.mxu0 0.0
        %1346 = vmatmul.mubr.f32.gmra.mrb[0].mxu0 %v1172
        %v1347 = vpop.f32.mrb[0].mxu0
        %v1348 = vadd.f32 0.0, %v1347
        %v1349 = vpop.f32.mrb[0].mxu0
        %1350 = vmatprep.mubr.f32.mxu0 0.0
        %1351 = vmatmul.mubr.f32.gmra.mrb[0].mxu0 %v1173
        %v1352 = vpop.f32.mrb[0].mxu0
        %v1353 = vadd.f32 0.0, %v1352
        %v1354 = vpop.f32.mrb[0].mxu0
        %1355 = vmatprep.mubr.f32.mxu0 0.0
        %1356 = vmatmul.mubr.f32.gmra.mrb[0].mxu0 %v1174
        %v1357 = vpop.f32.mrb[0].mxu0
        %v1358 = vadd.f32 0.0, %v1357
        %v1359 = vpop.f32.mrb[0].mxu0
        %1360 = vmatprep.mubr.f32.mxu0 0.0
        %1361 = vmatmul.mubr.f32.gmra.mrb[0].mxu0 %v1175
        %v1362 = vpop.f32.mrb[0].mxu0
        %v1363 = vadd.f32 0.0, %v1362
        %v1364 = vpop.f32.mrb[0].mxu0
        %1365 = vmatprep.mubr.f32.mxu0 0.0
        %1366 = vmatmul.mubr.f32.gmra.mrb[0].mxu0 %v1176
        %v1367 = vpop.f32.mrb[0].mxu0
        %v1368 = vadd.f32 0.0, %v1367
        %v1369 = vpop.f32.mrb[0].mxu0
        %1370 = vmatprep.mubr.f32.mxu0 0.0
        %1371 = vmatmul.mubr.f32.gmra.mrb[0].mxu0 %v1177
        %v1372 = vpop.f32.mrb[0].mxu0
        %v1373 = vadd.f32 0.0, %v1372
        %v1374 = vpop.f32.mrb[0].mxu0
        %1375 = vmatprep.mubr.f32.mxu0 0.0
        %1376 = vmatmul.mubr.f32.gmra.mrb[0].mxu0 %v1178
        %v1377 = vpop.f32.mrb[0].mxu0
        %v1378 = vadd.f32 0.0, %v1377
        %v1379 = vpop.f32.mrb[0].mxu0
        %1380 = vmatprep.mubr.f32.mxu0 0.0
        %1381 = vmatmul.mubr.f32.gmra.mrb[0].mxu0 %v1179
        %v1382 = vpop.f32.mrb[0].mxu0
        %v1383 = vadd.f32 0.0, %v1382
        %v1384 = vpop.f32.mrb[0].mxu0
        %1385 = vmatprep.mubr.f32.mxu0 0.0
        %1386 = vmatmul.mubr.f32.gmra.mrb[0].mxu0 %v1180
        %v1387 = vpop.f32.mrb[0].mxu0
        %v1388 = vadd.f32 0.0, %v1387
        %v1389 = vpop.f32.mrb[0].mxu0
        %1390 = vmatprep.mubr.f32.mxu0 0.0
        %1391 = vmatmul.mubr.f32.gmra.mrb[0].mxu0 %v1181
        %v1392 = vpop.f32.mrb[0].mxu0
        %v1393 = vadd.f32 0.0, %v1392
        %v1394 = vpop.f32.mrb[0].mxu0
        %1395 = vmatprep.mubr.f32.mxu0 0.0
        %1396 = vmatmul.mubr.f32.gmra.mrb[0].mxu0 %v1182
        %v1397 = vpop.f32.mrb[0].mxu0
        %v1398 = vadd.f32 0.0, %v1397
        %v1399 = vpop.f32.mrb[0].mxu0
        %1400 = vmatprep.mubr.f32.mxu0 0.0
        %1401 = vmatmul.mubr.f32.gmra.mrb[0].mxu0 %v1183
        %v1402 = vpop.f32.mrb[0].mxu0
        %v1403 = vadd.f32 0.0, %v1402
        %v1404 = vpop.f32.mrb[0].mxu0
        %1405 = vmatprep.mubr.f32.mxu0 0.0
        %1406 = vmatmul.mubr.f32.gmra.mrb[0].mxu0 %v1184
        %v1407 = vpop.f32.mrb[0].mxu0
        %v1408 = vadd.f32 0.0, %v1407
        %v1409 = vpop.f32.mrb[0].mxu0
        %1410 = vmatprep.mubr.f32.mxu0 0.0
        %1411 = vmatmul.mubr.f32.gmra.mrb[0].mxu0 %v1185
        %v1412 = vpop.f32.mrb[0].mxu0
        %v1413 = vadd.f32 0.0, %v1412
        %v1414 = vpop.f32.mrb[0].mxu0
        %1415 = vmatprep.mubr.f32.mxu0 0.0
        %1416 = vmatmul.mubr.f32.gmra.mrb[0].mxu0 %v1186
        %v1417 = vpop.f32.mrb[0].mxu0
        %v1418 = vadd.f32 0.0, %v1417
        %v1419 = vpop.f32.mrb[0].mxu0
        %1420 = vmatprep.mubr.f32.mxu0 0.0
        %1421 = vmatmul.mubr.f32.gmra.mrb[0].mxu0 %v1187
        %v1422 = vpop.f32.mrb[0].mxu0
        %v1423 = vadd.f32 0.0, %v1422
        %v1424 = vpop.f32.mrb[0].mxu0
        %1425 = vmatprep.mubr.f32.mxu0 0.0
        %1426 = vmatmul.mubr.f32.gmra.mrb[0].mxu0 %v1188
        %v1427 = vpop.f32.mrb[0].mxu0
        %v1428 = vadd.f32 0.0, %v1427
        %v1429 = vpop.f32.mrb[0].mxu0
        %1430 = vdwg.mxu0
        %v1431 = vadd.f32 %v999, %v1273
        %v1432 = vadd.f32 %v1004, %v1278
        %v1433 = vadd.f32 %v1009, %v1283
        %v1434 = vadd.f32 %v1014, %v1288
        %v1435 = vadd.f32 %v1019, %v1293
        %v1436 = vadd.f32 %v1024, %v1298
        %v1437 = vadd.f32 %v1029, %v1303
        %v1438 = vadd.f32 %v1034, %v1308
        %v1439 = vadd.f32 %v1039, %v1313
        %v1440 = vadd.f32 %v1044, %v1318
        %v1441 = vadd.f32 %v1049, %v1323
        %v1442 = vadd.f32 %v1054, %v1328
        %v1443 = vadd.f32 %v1059, %v1333
        %v1444 = vadd.f32 %v1064, %v1338
        %v1445 = vadd.f32 %v1069, %v1343
        %v1446 = vadd.f32 %v1074, %v1348
        %v1447 = vadd.f32 %v1079, %v1353
        %v1448 = vadd.f32 %v1084, %v1358
        %v1449 = vadd.f32 %v1089, %v1363
        %v1450 = vadd.f32 %v1094, %v1368
        %v1451 = vadd.f32 %v1099, %v1373
        %v1452 = vadd.f32 %v1104, %v1378
        %v1453 = vadd.f32 %v1109, %v1383
        %v1454 = vadd.f32 %v1114, %v1388
        %v1455 = vadd.f32 %v1119, %v1393
        %v1456 = vadd.f32 %v1124, %v1398
        %v1457 = vadd.f32 %v1129, %v1403
        %v1458 = vadd.f32 %v1134, %v1408
        %v1459 = vadd.f32 %v1139, %v1413
        %v1460 = vadd.f32 %v1144, %v1418
        %v1461 = vadd.f32 %v1149, %v1423
        %v1462 = vadd.f32 %v1154, %v1428
        %s1463 = scalar_lea.vmem %s609, 32 [#allocation2]
        %v1464 = vld [vmem:[%s1463 + $0x7] sm:$0xff]
        %v1465 = vld [vmem:[%s1463 + $0xf] sm:$0xff]
        %v1466 = vld [vmem:[%s1463 + $0x27] sm:$0xff]
        %v1467 = vld [vmem:[%s1463 + $0x2f] sm:$0xff]
        %v1468 = vld [vmem:[%s1463 + $0x47] sm:$0xff]
        %v1469 = vld [vmem:[%s1463 + $0x4f] sm:$0xff]
        %v1470 = vld [vmem:[%s1463 + $0x67] sm:$0xff]
        %v1471 = vld [vmem:[%s1463 + $0x6f] sm:$0xff]
        %v1472 = vld [vmem:[%s1463 + $0x87] sm:$0xff]
        %v1473 = vld [vmem:[%s1463 + $0x8f] sm:$0xff]
        %v1474 = vld [vmem:[%s1463 + $0xa7] sm:$0xff]
        %v1475 = vld [vmem:[%s1463 + $0xaf] sm:$0xff]
        %v1476 = vld [vmem:[%s1463 + $0xc7] sm:$0xff]
        %v1477 = vld [vmem:[%s1463 + $0xcf] sm:$0xff]
        %v1478 = vld [vmem:[%s1463 + $0xe7] sm:$0xff]
        %v1479 = vld [vmem:[%s1463 + $0xef] sm:$0xff]
        %v1480 = vld [vmem:[%s1463 + $0x107] sm:$0xff]
        %v1481 = vld [vmem:[%s1463 + $0x10f] sm:$0xff]
        %v1482 = vld [vmem:[%s1463 + $0x127] sm:$0xff]
        %v1483 = vld [vmem:[%s1463 + $0x12f] sm:$0xff]
        %v1484 = vld [vmem:[%s1463 + $0x147] sm:$0xff]
        %v1485 = vld [vmem:[%s1463 + $0x14f] sm:$0xff]
        %v1486 = vld [vmem:[%s1463 + $0x167] sm:$0xff]
        %v1487 = vld [vmem:[%s1463 + $0x16f] sm:$0xff]
        %v1488 = vld [vmem:[%s1463 + $0x187] sm:$0xff]
        %v1489 = vld [vmem:[%s1463 + $0x18f] sm:$0xff]
        %v1490 = vld [vmem:[%s1463 + $0x1a7] sm:$0xff]
        %v1491 = vld [vmem:[%s1463 + $0x1af] sm:$0xff]
        %v1492 = vld [vmem:[%s1463 + $0x1c7] sm:$0xff]
        %v1493 = vld [vmem:[%s1463 + $0x1cf] sm:$0xff]
        %v1494 = vld [vmem:[%s1463 + $0x1e7] sm:$0xff]
        %v1495 = vld [vmem:[%s1463 + $0x1ef] sm:$0xff]
        %s1496 = scalar_lea.vmem %s1, 384
        %v1497 = vld [vmem:[%s1496] sm:$0xff]
        %v1498 = vld [vmem:[%s1496 + $0x8] sm:$0xff]
        %v1499 = vld [vmem:[%s1496 + $0x10] sm:$0xff]
        %v1500 = vld [vmem:[%s1496 + $0x18] sm:$0xff]
        %v1501 = vld [vmem:[%s1496 + $0x20] sm:$0xff]
        %v1502 = vld [vmem:[%s1496 + $0x28] sm:$0xff]
        %v1503 = vld [vmem:[%s1496 + $0x30] sm:$0xff]
        %v1504 = vld [vmem:[%s1496 + $0x38] sm:$0xff]
        %v1505 = vld [vmem:[%s1496 + $0x40] sm:$0xff]
        %v1506 = vld [vmem:[%s1496 + $0x48] sm:$0xff]
        %v1507 = vld [vmem:[%s1496 + $0x50] sm:$0xff]
        %v1508 = vld [vmem:[%s1496 + $0x58] sm:$0xff]
        %v1509 = vld [vmem:[%s1496 + $0x60] sm:$0xff]
        %v1510 = vld [vmem:[%s1496 + $0x68] sm:$0xff]
        %v1511 = vld [vmem:[%s1496 + $0x70] sm:$0xff]
        %v1512 = vld [vmem:[%s1496 + $0x78] sm:$0xff]
        %1513 = vmatprep.subr.mxu0 0.0
        %1514 = vmatpush1.msra.mxu0 %v1497
        %1515 = vmatprep.subr.mxu0 0.0
        %1516 = vmatpush1.msra.mxu0 %v1498
        %1517 = vmatprep.subr.mxu0 0.0
        %1518 = vmatpush1.msra.mxu0 %v1499
        %1519 = vmatprep.subr.mxu0 0.0
        %1520 = vmatpush1.msra.mxu0 %v1500
        %1521 = vmatprep.subr.mxu0 0.0
        %1522 = vmatpush1.msra.mxu0 %v1501
        %1523 = vmatprep.subr.mxu0 0.0
        %1524 = vmatpush1.msra.mxu0 %v1502
        %1525 = vmatprep.subr.mxu0 0.0
        %1526 = vmatpush1.msra.mxu0 %v1503
        %1527 = vmatprep.subr.mxu0 0.0
        %1528 = vmatpush1.msra.mxu0 %v1504
        %1529 = vmatprep.subr.mxu0 0.0
        %1530 = vmatpush1.msra.mxu0 %v1505
        %1531 = vmatprep.subr.mxu0 0.0
        %1532 = vmatpush1.msra.mxu0 %v1506
        %1533 = vmatprep.subr.mxu0 0.0
        %1534 = vmatpush1.msra.mxu0 %v1507
        %1535 = vmatprep.subr.mxu0 0.0
        %1536 = vmatpush1.msra.mxu0 %v1508
        %1537 = vmatprep.subr.mxu0 0.0
        %1538 = vmatpush1.msra.mxu0 %v1509
        %1539 = vmatprep.subr.mxu0 0.0
        %1540 = vmatpush1.msra.mxu0 %v1510
        %1541 = vmatprep.subr.mxu0 0.0
        %1542 = vmatpush1.msra.mxu0 %v1511
        %1543 = vmatprep.subr.mxu0 0.0
        %1544 = vmatpush1.msra.mxu0 %v1512
        %1545 = vmatprep.subr.mxu0 0.0
        %1546 = vmatpush1.msra.mxu0 0.0
        %1547 = vmatprep.subr.mxu0 0.0
        %1548 = vmatpush1.msra.mxu0 0.0
        %1549 = vmatprep.subr.mxu0 0.0
        %1550 = vmatpush1.msra.mxu0 0.0
        %1551 = vmatprep.subr.mxu0 0.0
        %1552 = vmatpush1.msra.mxu0 0.0
        %1553 = vmatprep.subr.mxu0 0.0
        %1554 = vmatpush1.msra.mxu0 0.0
        %1555 = vmatprep.subr.mxu0 0.0
        %1556 = vmatpush1.msra.mxu0 0.0
        %1557 = vmatprep.subr.mxu0 0.0
        %1558 = vmatpush1.msra.mxu0 0.0
        %1559 = vmatprep.subr.mxu0 0.0
        %1560 = vmatpush1.msra.mxu0 0.0
        %1561 = vmatprep.subr.mxu0 0.0
        %1562 = vmatpush1.msra.mxu0 0.0
        %1563 = vmatprep.subr.mxu0 0.0
        %1564 = vmatpush1.msra.mxu0 0.0
        %1565 = vmatprep.subr.mxu0 0.0
        %1566 = vmatpush1.msra.mxu0 0.0
        %1567 = vmatprep.subr.mxu0 0.0
        %1568 = vmatpush1.msra.mxu0 0.0
        %1569 = vmatprep.subr.mxu0 0.0
        %1570 = vmatpush1.msra.mxu0 0.0
        %1571 = vmatprep.subr.mxu0 0.0
        %1572 = vmatpush1.msra.mxu0 0.0
        %1573 = vmatprep.subr.mxu0 0.0
        %1574 = vmatpush1.msra.mxu0 0.0
        %1575 = vmatprep.subr.mxu0 0.0
        %1576 = vmatpush1.msra.mxu0 0.0
        %1577 = vmatprep.mubr.f32.mxu0 0.0
        %1578 = vmatmul.mubr.f32.gmra.mrb[0].mxu0 %v1464
        %v1579 = vpop.f32.mrb[0].mxu0
        %v1580 = vadd.f32 0.0, %v1579
        %v1581 = vpop.f32.mrb[0].mxu0
        %1582 = vmatprep.mubr.f32.mxu0 0.0
        %1583 = vmatmul.mubr.f32.gmra.mrb[0].mxu0 %v1465
        %v1584 = vpop.f32.mrb[0].mxu0
        %v1585 = vadd.f32 0.0, %v1584
        %v1586 = vpop.f32.mrb[0].mxu0
        %1587 = vmatprep.mubr.f32.mxu0 0.0
        %1588 = vmatmul.mubr.f32.gmra.mrb[0].mxu0 %v1466
        %v1589 = vpop.f32.mrb[0].mxu0
        %v1590 = vadd.f32 0.0, %v1589
        %v1591 = vpop.f32.mrb[0].mxu0
        %1592 = vmatprep.mubr.f32.mxu0 0.0
        %1593 = vmatmul.mubr.f32.gmra.mrb[0].mxu0 %v1467
        %v1594 = vpop.f32.mrb[0].mxu0
        %v1595 = vadd.f32 0.0, %v1594
        %v1596 = vpop.f32.mrb[0].mxu0
        %1597 = vmatprep.mubr.f32.mxu0 0.0
        %1598 = vmatmul.mubr.f32.gmra.mrb[0].mxu0 %v1468
        %v1599 = vpop.f32.mrb[0].mxu0
        %v1600 = vadd.f32 0.0, %v1599
        %v1601 = vpop.f32.mrb[0].mxu0
        %1602 = vmatprep.mubr.f32.mxu0 0.0
        %1603 = vmatmul.mubr.f32.gmra.mrb[0].mxu0 %v1469
        %v1604 = vpop.f32.mrb[0].mxu0
        %v1605 = vadd.f32 0.0, %v1604
        %v1606 = vpop.f32.mrb[0].mxu0
        %1607 = vmatprep.mubr.f32.mxu0 0.0
        %1608 = vmatmul.mubr.f32.gmra.mrb[0].mxu0 %v1470
        %v1609 = vpop.f32.mrb[0].mxu0
        %v1610 = vadd.f32 0.0, %v1609
        %v1611 = vpop.f32.mrb[0].mxu0
        %1612 = vmatprep.mubr.f32.mxu0 0.0
        %1613 = vmatmul.mubr.f32.gmra.mrb[0].mxu0 %v1471
        %v1614 = vpop.f32.mrb[0].mxu0
        %v1615 = vadd.f32 0.0, %v1614
        %v1616 = vpop.f32.mrb[0].mxu0
        %1617 = vmatprep.mubr.f32.mxu0 0.0
        %1618 = vmatmul.mubr.f32.gmra.mrb[0].mxu0 %v1472
        %v1619 = vpop.f32.mrb[0].mxu0
        %v1620 = vadd.f32 0.0, %v1619
        %v1621 = vpop.f32.mrb[0].mxu0
        %1622 = vmatprep.mubr.f32.mxu0 0.0
        %1623 = vmatmul.mubr.f32.gmra.mrb[0].mxu0 %v1473
        %v1624 = vpop.f32.mrb[0].mxu0
        %v1625 = vadd.f32 0.0, %v1624
        %v1626 = vpop.f32.mrb[0].mxu0
        %1627 = vmatprep.mubr.f32.mxu0 0.0
        %1628 = vmatmul.mubr.f32.gmra.mrb[0].mxu0 %v1474
        %v1629 = vpop.f32.mrb[0].mxu0
        %v1630 = vadd.f32 0.0, %v1629
        %v1631 = vpop.f32.mrb[0].mxu0
        %1632 = vmatprep.mubr.f32.mxu0 0.0
        %1633 = vmatmul.mubr.f32.gmra.mrb[0].mxu0 %v1475
        %v1634 = vpop.f32.mrb[0].mxu0
        %v1635 = vadd.f32 0.0, %v1634
        %v1636 = vpop.f32.mrb[0].mxu0
        %1637 = vmatprep.mubr.f32.mxu0 0.0
        %1638 = vmatmul.mubr.f32.gmra.mrb[0].mxu0 %v1476
        %v1639 = vpop.f32.mrb[0].mxu0
        %v1640 = vadd.f32 0.0, %v1639
        %v1641 = vpop.f32.mrb[0].mxu0
        %1642 = vmatprep.mubr.f32.mxu0 0.0
        %1643 = vmatmul.mubr.f32.gmra.mrb[0].mxu0 %v1477
        %v1644 = vpop.f32.mrb[0].mxu0
        %v1645 = vadd.f32 0.0, %v1644
        %v1646 = vpop.f32.mrb[0].mxu0
        %1647 = vmatprep.mubr.f32.mxu0 0.0
        %1648 = vmatmul.mubr.f32.gmra.mrb[0].mxu0 %v1478
        %v1649 = vpop.f32.mrb[0].mxu0
        %v1650 = vadd.f32 0.0, %v1649
        %v1651 = vpop.f32.mrb[0].mxu0
        %1652 = vmatprep.mubr.f32.mxu0 0.0
        %1653 = vmatmul.mubr.f32.gmra.mrb[0].mxu0 %v1479
        %v1654 = vpop.f32.mrb[0].mxu0
        %v1655 = vadd.f32 0.0, %v1654
        %v1656 = vpop.f32.mrb[0].mxu0
        %1657 = vmatprep.mubr.f32.mxu0 0.0
        %1658 = vmatmul.mubr.f32.gmra.mrb[0].mxu0 %v1480
        %v1659 = vpop.f32.mrb[0].mxu0
        %v1660 = vadd.f32 0.0, %v1659
        %v1661 = vpop.f32.mrb[0].mxu0
        %1662 = vmatprep.mubr.f32.mxu0 0.0
        %1663 = vmatmul.mubr.f32.gmra.mrb[0].mxu0 %v1481
        %v1664 = vpop.f32.mrb[0].mxu0
        %v1665 = vadd.f32 0.0, %v1664
        %v1666 = vpop.f32.mrb[0].mxu0
        %1667 = vmatprep.mubr.f32.mxu0 0.0
        %1668 = vmatmul.mubr.f32.gmra.mrb[0].mxu0 %v1482
        %v1669 = vpop.f32.mrb[0].mxu0
        %v1670 = vadd.f32 0.0, %v1669
        %v1671 = vpop.f32.mrb[0].mxu0
        %1672 = vmatprep.mubr.f32.mxu0 0.0
        %1673 = vmatmul.mubr.f32.gmra.mrb[0].mxu0 %v1483
        %v1674 = vpop.f32.mrb[0].mxu0
        %v1675 = vadd.f32 0.0, %v1674
        %v1676 = vpop.f32.mrb[0].mxu0
        %1677 = vmatprep.mubr.f32.mxu0 0.0
        %1678 = vmatmul.mubr.f32.gmra.mrb[0].mxu0 %v1484
        %v1679 = vpop.f32.mrb[0].mxu0
        %v1680 = vadd.f32 0.0, %v1679
        %v1681 = vpop.f32.mrb[0].mxu0
        %1682 = vmatprep.mubr.f32.mxu0 0.0
        %1683 = vmatmul.mubr.f32.gmra.mrb[0].mxu0 %v1485
        %v1684 = vpop.f32.mrb[0].mxu0
        %v1685 = vadd.f32 0.0, %v1684
        %v1686 = vpop.f32.mrb[0].mxu0
        %1687 = vmatprep.mubr.f32.mxu0 0.0
        %1688 = vmatmul.mubr.f32.gmra.mrb[0].mxu0 %v1486
        %v1689 = vpop.f32.mrb[0].mxu0
        %v1690 = vadd.f32 0.0, %v1689
        %v1691 = vpop.f32.mrb[0].mxu0
        %1692 = vmatprep.mubr.f32.mxu0 0.0
        %1693 = vmatmul.mubr.f32.gmra.mrb[0].mxu0 %v1487
        %v1694 = vpop.f32.mrb[0].mxu0
        %v1695 = vadd.f32 0.0, %v1694
        %v1696 = vpop.f32.mrb[0].mxu0
        %1697 = vmatprep.mubr.f32.mxu0 0.0
        %1698 = vmatmul.mubr.f32.gmra.mrb[0].mxu0 %v1488
        %v1699 = vpop.f32.mrb[0].mxu0
        %v1700 = vadd.f32 0.0, %v1699
        %v1701 = vpop.f32.mrb[0].mxu0
        %1702 = vmatprep.mubr.f32.mxu0 0.0
        %1703 = vmatmul.mubr.f32.gmra.mrb[0].mxu0 %v1489
        %v1704 = vpop.f32.mrb[0].mxu0
        %v1705 = vadd.f32 0.0, %v1704
        %v1706 = vpop.f32.mrb[0].mxu0
        %1707 = vmatprep.mubr.f32.mxu0 0.0
        %1708 = vmatmul.mubr.f32.gmra.mrb[0].mxu0 %v1490
        %v1709 = vpop.f32.mrb[0].mxu0
        %v1710 = vadd.f32 0.0, %v1709
        %v1711 = vpop.f32.mrb[0].mxu0
        %1712 = vmatprep.mubr.f32.mxu0 0.0
        %1713 = vmatmul.mubr.f32.gmra.mrb[0].mxu0 %v1491
        %v1714 = vpop.f32.mrb[0].mxu0
        %v1715 = vadd.f32 0.0, %v1714
        %v1716 = vpop.f32.mrb[0].mxu0
        %1717 = vmatprep.mubr.f32.mxu0 0.0
        %1718 = vmatmul.mubr.f32.gmra.mrb[0].mxu0 %v1492
        %v1719 = vpop.f32.mrb[0].mxu0
        %v1720 = vadd.f32 0.0, %v1719
        %v1721 = vpop.f32.mrb[0].mxu0
        %1722 = vmatprep.mubr.f32.mxu0 0.0
        %1723 = vmatmul.mubr.f32.gmra.mrb[0].mxu0 %v1493
        %v1724 = vpop.f32.mrb[0].mxu0
        %v1725 = vadd.f32 0.0, %v1724
        %v1726 = vpop.f32.mrb[0].mxu0
        %1727 = vmatprep.mubr.f32.mxu0 0.0
        %1728 = vmatmul.mubr.f32.gmra.mrb[0].mxu0 %v1494
        %v1729 = vpop.f32.mrb[0].mxu0
        %v1730 = vadd.f32 0.0, %v1729
        %v1731 = vpop.f32.mrb[0].mxu0
        %1732 = vmatprep.mubr.f32.mxu0 0.0
        %1733 = vmatmul.mubr.f32.gmra.mrb[0].mxu0 %v1495
        %v1734 = vpop.f32.mrb[0].mxu0
        %v1735 = vadd.f32 0.0, %v1734
        %v1736 = vpop.f32.mrb[0].mxu0
        %1737 = vdwg.mxu0
        %v1738 = vadd.f32 %v1431, %v1580
        %v1739 = vadd.f32 %v1432, %v1585
        %v1740 = vadd.f32 %v1433, %v1590
        %v1741 = vadd.f32 %v1434, %v1595
        %v1742 = vadd.f32 %v1435, %v1600
        %v1743 = vadd.f32 %v1436, %v1605
        %v1744 = vadd.f32 %v1437, %v1610
        %v1745 = vadd.f32 %v1438, %v1615
        %v1746 = vadd.f32 %v1439, %v1620
        %v1747 = vadd.f32 %v1440, %v1625
        %v1748 = vadd.f32 %v1441, %v1630
        %v1749 = vadd.f32 %v1442, %v1635
        %v1750 = vadd.f32 %v1443, %v1640
        %v1751 = vadd.f32 %v1444, %v1645
        %v1752 = vadd.f32 %v1445, %v1650
        %v1753 = vadd.f32 %v1446, %v1655
        %v1754 = vadd.f32 %v1447, %v1660
        %v1755 = vadd.f32 %v1448, %v1665
        %v1756 = vadd.f32 %v1449, %v1670
        %v1757 = vadd.f32 %v1450, %v1675
        %v1758 = vadd.f32 %v1451, %v1680
        %v1759 = vadd.f32 %v1452, %v1685
        %v1760 = vadd.f32 %v1453, %v1690
        %v1761 = vadd.f32 %v1454, %v1695
        %v1762 = vadd.f32 %v1455, %v1700
        %v1763 = vadd.f32 %v1456, %v1705
        %v1764 = vadd.f32 %v1457, %v1710
        %v1765 = vadd.f32 %v1458, %v1715
        %v1766 = vadd.f32 %v1459, %v1720
        %v1767 = vadd.f32 %v1460, %v1725
        %v1768 = vadd.f32 %v1461, %v1730
        %v1769 = vadd.f32 %v1462, %v1735
        %v1770 = vld [vmem:[%s1463 + $0x8] sm:$0xff]
        %v1771 = vld [vmem:[%s1463 + $0x10] sm:$0xff]
        %v1772 = vld [vmem:[%s1463 + $0x28] sm:$0xff]
        %v1773 = vld [vmem:[%s1463 + $0x30] sm:$0xff]
        %v1774 = vld [vmem:[%s1463 + $0x48] sm:$0xff]
        %v1775 = vld [vmem:[%s1463 + $0x50] sm:$0xff]
        %v1776 = vld [vmem:[%s1463 + $0x68] sm:$0xff]
        %v1777 = vld [vmem:[%s1463 + $0x70] sm:$0xff]
        %v1778 = vld [vmem:[%s1463 + $0x88] sm:$0xff]
        %v1779 = vld [vmem:[%s1463 + $0x90] sm:$0xff]
        %v1780 = vld [vmem:[%s1463 + $0xa8] sm:$0xff]
        %v1781 = vld [vmem:[%s1463 + $0xb0] sm:$0xff]
        %v1782 = vld [vmem:[%s1463 + $0xc8] sm:$0xff]
        %v1783 = vld [vmem:[%s1463 + $0xd0] sm:$0xff]
        %v1784 = vld [vmem:[%s1463 + $0xe8] sm:$0xff]
        %v1785 = vld [vmem:[%s1463 + $0xf0] sm:$0xff]
        %v1786 = vld [vmem:[%s1463 + $0x108] sm:$0xff]
        %v1787 = vld [vmem:[%s1463 + $0x110] sm:$0xff]
        %v1788 = vld [vmem:[%s1463 + $0x128] sm:$0xff]
        %v1789 = vld [vmem:[%s1463 + $0x130] sm:$0xff]
        %v1790 = vld [vmem:[%s1463 + $0x148] sm:$0xff]
        %v1791 = vld [vmem:[%s1463 + $0x150] sm:$0xff]
        %v1792 = vld [vmem:[%s1463 + $0x168] sm:$0xff]
        %v1793 = vld [vmem:[%s1463 + $0x170] sm:$0xff]
        %v1794 = vld [vmem:[%s1463 + $0x188] sm:$0xff]
        %v1795 = vld [vmem:[%s1463 + $0x190] sm:$0xff]
        %v1796 = vld [vmem:[%s1463 + $0x1a8] sm:$0xff]
        %v1797 = vld [vmem:[%s1463 + $0x1b0] sm:$0xff]
        %v1798 = vld [vmem:[%s1463 + $0x1c8] sm:$0xff]
        %v1799 = vld [vmem:[%s1463 + $0x1d0] sm:$0xff]
        %v1800 = vld [vmem:[%s1463 + $0x1e8] sm:$0xff]
        %v1801 = vld [vmem:[%s1463 + $0x1f0] sm:$0xff]
        %s1802 = scalar_lea.vmem %s1, 512
        %v1803 = vld [vmem:[%s1802] sm:$0xff]
        %v1804 = vld [vmem:[%s1802 + $0x8] sm:$0xff]
        %v1805 = vld [vmem:[%s1802 + $0x10] sm:$0xff]
        %v1806 = vld [vmem:[%s1802 + $0x18] sm:$0xff]
        %v1807 = vld [vmem:[%s1802 + $0x20] sm:$0xff]
        %v1808 = vld [vmem:[%s1802 + $0x28] sm:$0xff]
        %v1809 = vld [vmem:[%s1802 + $0x30] sm:$0xff]
        %v1810 = vld [vmem:[%s1802 + $0x38] sm:$0xff]
        %v1811 = vld [vmem:[%s1802 + $0x40] sm:$0xff]
        %v1812 = vld [vmem:[%s1802 + $0x48] sm:$0xff]
        %v1813 = vld [vmem:[%s1802 + $0x50] sm:$0xff]
        %v1814 = vld [vmem:[%s1802 + $0x58] sm:$0xff]
        %v1815 = vld [vmem:[%s1802 + $0x60] sm:$0xff]
        %v1816 = vld [vmem:[%s1802 + $0x68] sm:$0xff]
        %v1817 = vld [vmem:[%s1802 + $0x70] sm:$0xff]
        %v1818 = vld [vmem:[%s1802 + $0x78] sm:$0xff]
        %1819 = vmatprep.subr.mxu0 0.0
        %1820 = vmatpush1.msra.mxu0 %v1803
        %1821 = vmatprep.subr.mxu0 0.0
        %1822 = vmatpush1.msra.mxu0 %v1804
        %1823 = vmatprep.subr.mxu0 0.0
        %1824 = vmatpush1.msra.mxu0 %v1805
        %1825 = vmatprep.subr.mxu0 0.0
        %1826 = vmatpush1.msra.mxu0 %v1806
        %1827 = vmatprep.subr.mxu0 0.0
        %1828 = vmatpush1.msra.mxu0 %v1807
        %1829 = vmatprep.subr.mxu0 0.0
        %1830 = vmatpush1.msra.mxu0 %v1808
        %1831 = vmatprep.subr.mxu0 0.0
        %1832 = vmatpush1.msra.mxu0 %v1809
        %1833 = vmatprep.subr.mxu0 0.0
        %1834 = vmatpush1.msra.mxu0 %v1810
        %1835 = vmatprep.subr.mxu0 0.0
        %1836 = vmatpush1.msra.mxu0 %v1811
        %1837 = vmatprep.subr.mxu0 0.0
        %1838 = vmatpush1.msra.mxu0 %v1812
        %1839 = vmatprep.subr.mxu0 0.0
        %1840 = vmatpush1.msra.mxu0 %v1813
        %1841 = vmatprep.subr.mxu0 0.0
        %1842 = vmatpush1.msra.mxu0 %v1814
        %1843 = vmatprep.subr.mxu0 0.0
        %1844 = vmatpush1.msra.mxu0 %v1815
        %1845 = vmatprep.subr.mxu0 0.0
        %1846 = vmatpush1.msra.mxu0 %v1816
        %1847 = vmatprep.subr.mxu0 0.0
        %1848 = vmatpush1.msra.mxu0 %v1817
        %1849 = vmatprep.subr.mxu0 0.0
        %1850 = vmatpush1.msra.mxu0 %v1818
        %1851 = vmatprep.subr.mxu0 0.0
        %1852 = vmatpush1.msra.mxu0 0.0
        %1853 = vmatprep.subr.mxu0 0.0
        %1854 = vmatpush1.msra.mxu0 0.0
        %1855 = vmatprep.subr.mxu0 0.0
        %1856 = vmatpush1.msra.mxu0 0.0
        %1857 = vmatprep.subr.mxu0 0.0
        %1858 = vmatpush1.msra.mxu0 0.0
        %1859 = vmatprep.subr.mxu0 0.0
        %1860 = vmatpush1.msra.mxu0 0.0
        %1861 = vmatprep.subr.mxu0 0.0
        %1862 = vmatpush1.msra.mxu0 0.0
        %1863 = vmatprep.subr.mxu0 0.0
        %1864 = vmatpush1.msra.mxu0 0.0
        %1865 = vmatprep.subr.mxu0 0.0
        %1866 = vmatpush1.msra.mxu0 0.0
        %1867 = vmatprep.subr.mxu0 0.0
        %1868 = vmatpush1.msra.mxu0 0.0
        %1869 = vmatprep.subr.mxu0 0.0
        %1870 = vmatpush1.msra.mxu0 0.0
        %1871 = vmatprep.subr.mxu0 0.0
        %1872 = vmatpush1.msra.mxu0 0.0
        %1873 = vmatprep.subr.mxu0 0.0
        %1874 = vmatpush1.msra.mxu0 0.0
        %1875 = vmatprep.subr.mxu0 0.0
        %1876 = vmatpush1.msra.mxu0 0.0
        %1877 = vmatprep.subr.mxu0 0.0
        %1878 = vmatpush1.msra.mxu0 0.0
        %1879 = vmatprep.subr.mxu0 0.0
        %1880 = vmatpush1.msra.mxu0 0.0
        %1881 = vmatprep.subr.mxu0 0.0
        %1882 = vmatpush1.msra.mxu0 0.0
        %1883 = vmatprep.mubr.f32.mxu0 0.0
        %1884 = vmatmul.mubr.f32.gmra.mrb[0].mxu0 %v1770
        %v1885 = vpop.f32.mrb[0].mxu0
        %v1886 = vadd.f32 0.0, %v1885
        %v1887 = vpop.f32.mrb[0].mxu0
        %1888 = vmatprep.mubr.f32.mxu0 0.0
        %1889 = vmatmul.mubr.f32.gmra.mrb[0].mxu0 %v1771
        %v1890 = vpop.f32.mrb[0].mxu0
        %v1891 = vadd.f32 0.0, %v1890
        %v1892 = vpop.f32.mrb[0].mxu0
        %1893 = vmatprep.mubr.f32.mxu0 0.0
        %1894 = vmatmul.mubr.f32.gmra.mrb[0].mxu0 %v1772
        %v1895 = vpop.f32.mrb[0].mxu0
        %v1896 = vadd.f32 0.0, %v1895
        %v1897 = vpop.f32.mrb[0].mxu0
        %1898 = vmatprep.mubr.f32.mxu0 0.0
        %1899 = vmatmul.mubr.f32.gmra.mrb[0].mxu0 %v1773
        %v1900 = vpop.f32.mrb[0].mxu0
        %v1901 = vadd.f32 0.0, %v1900
        %v1902 = vpop.f32.mrb[0].mxu0
        %1903 = vmatprep.mubr.f32.mxu0 0.0
        %1904 = vmatmul.mubr.f32.gmra.mrb[0].mxu0 %v1774
        %v1905 = vpop.f32.mrb[0].mxu0
        %v1906 = vadd.f32 0.0, %v1905
        %v1907 = vpop.f32.mrb[0].mxu0
        %1908 = vmatprep.mubr.f32.mxu0 0.0
        %1909 = vmatmul.mubr.f32.gmra.mrb[0].mxu0 %v1775
        %v1910 = vpop.f32.mrb[0].mxu0
        %v1911 = vadd.f32 0.0, %v1910
        %v1912 = vpop.f32.mrb[0].mxu0
        %1913 = vmatprep.mubr.f32.mxu0 0.0
        %1914 = vmatmul.mubr.f32.gmra.mrb[0].mxu0 %v1776
        %v1915 = vpop.f32.mrb[0].mxu0
        %v1916 = vadd.f32 0.0, %v1915
        %v1917 = vpop.f32.mrb[0].mxu0
        %1918 = vmatprep.mubr.f32.mxu0 0.0
        %1919 = vmatmul.mubr.f32.gmra.mrb[0].mxu0 %v1777
        %v1920 = vpop.f32.mrb[0].mxu0
        %v1921 = vadd.f32 0.0, %v1920
        %v1922 = vpop.f32.mrb[0].mxu0
        %1923 = vmatprep.mubr.f32.mxu0 0.0
        %1924 = vmatmul.mubr.f32.gmra.mrb[0].mxu0 %v1778
        %v1925 = vpop.f32.mrb[0].mxu0
        %v1926 = vadd.f32 0.0, %v1925
        %v1927 = vpop.f32.mrb[0].mxu0
        %1928 = vmatprep.mubr.f32.mxu0 0.0
        %1929 = vmatmul.mubr.f32.gmra.mrb[0].mxu0 %v1779
        %v1930 = vpop.f32.mrb[0].mxu0
        %v1931 = vadd.f32 0.0, %v1930
        %v1932 = vpop.f32.mrb[0].mxu0
        %1933 = vmatprep.mubr.f32.mxu0 0.0
        %1934 = vmatmul.mubr.f32.gmra.mrb[0].mxu0 %v1780
        %v1935 = vpop.f32.mrb[0].mxu0
        %v1936 = vadd.f32 0.0, %v1935
        %v1937 = vpop.f32.mrb[0].mxu0
        %1938 = vmatprep.mubr.f32.mxu0 0.0
        %1939 = vmatmul.mubr.f32.gmra.mrb[0].mxu0 %v1781
        %v1940 = vpop.f32.mrb[0].mxu0
        %v1941 = vadd.f32 0.0, %v1940
        %v1942 = vpop.f32.mrb[0].mxu0
        %1943 = vmatprep.mubr.f32.mxu0 0.0
        %1944 = vmatmul.mubr.f32.gmra.mrb[0].mxu0 %v1782
        %v1945 = vpop.f32.mrb[0].mxu0
        %v1946 = vadd.f32 0.0, %v1945
        %v1947 = vpop.f32.mrb[0].mxu0
        %1948 = vmatprep.mubr.f32.mxu0 0.0
        %1949 = vmatmul.mubr.f32.gmra.mrb[0].mxu0 %v1783
        %v1950 = vpop.f32.mrb[0].mxu0
        %v1951 = vadd.f32 0.0, %v1950
        %v1952 = vpop.f32.mrb[0].mxu0
        %1953 = vmatprep.mubr.f32.mxu0 0.0
        %1954 = vmatmul.mubr.f32.gmra.mrb[0].mxu0 %v1784
        %v1955 = vpop.f32.mrb[0].mxu0
        %v1956 = vadd.f32 0.0, %v1955
        %v1957 = vpop.f32.mrb[0].mxu0
        %1958 = vmatprep.mubr.f32.mxu0 0.0
        %1959 = vmatmul.mubr.f32.gmra.mrb[0].mxu0 %v1785
        %v1960 = vpop.f32.mrb[0].mxu0
        %v1961 = vadd.f32 0.0, %v1960
        %v1962 = vpop.f32.mrb[0].mxu0
        %1963 = vmatprep.mubr.f32.mxu0 0.0
        %1964 = vmatmul.mubr.f32.gmra.mrb[0].mxu0 %v1786
        %v1965 = vpop.f32.mrb[0].mxu0
        %v1966 = vadd.f32 0.0, %v1965
        %v1967 = vpop.f32.mrb[0].mxu0
        %1968 = vmatprep.mubr.f32.mxu0 0.0
        %1969 = vmatmul.mubr.f32.gmra.mrb[0].mxu0 %v1787
        %v1970 = vpop.f32.mrb[0].mxu0
        %v1971 = vadd.f32 0.0, %v1970
        %v1972 = vpop.f32.mrb[0].mxu0
        %1973 = vmatprep.mubr.f32.mxu0 0.0
        %1974 = vmatmul.mubr.f32.gmra.mrb[0].mxu0 %v1788
        %v1975 = vpop.f32.mrb[0].mxu0
        %v1976 = vadd.f32 0.0, %v1975
        %v1977 = vpop.f32.mrb[0].mxu0
        %1978 = vmatprep.mubr.f32.mxu0 0.0
        %1979 = vmatmul.mubr.f32.gmra.mrb[0].mxu0 %v1789
        %v1980 = vpop.f32.mrb[0].mxu0
        %v1981 = vadd.f32 0.0, %v1980
        %v1982 = vpop.f32.mrb[0].mxu0
        %1983 = vmatprep.mubr.f32.mxu0 0.0
        %1984 = vmatmul.mubr.f32.gmra.mrb[0].mxu0 %v1790
        %v1985 = vpop.f32.mrb[0].mxu0
        %v1986 = vadd.f32 0.0, %v1985
        %v1987 = vpop.f32.mrb[0].mxu0
        %1988 = vmatprep.mubr.f32.mxu0 0.0
        %1989 = vmatmul.mubr.f32.gmra.mrb[0].mxu0 %v1791
        %v1990 = vpop.f32.mrb[0].mxu0
        %v1991 = vadd.f32 0.0, %v1990
        %v1992 = vpop.f32.mrb[0].mxu0
        %1993 = vmatprep.mubr.f32.mxu0 0.0
        %1994 = vmatmul.mubr.f32.gmra.mrb[0].mxu0 %v1792
        %v1995 = vpop.f32.mrb[0].mxu0
        %v1996 = vadd.f32 0.0, %v1995
        %v1997 = vpop.f32.mrb[0].mxu0
        %1998 = vmatprep.mubr.f32.mxu0 0.0
        %1999 = vmatmul.mubr.f32.gmra.mrb[0].mxu0 %v1793
        %v2000 = vpop.f32.mrb[0].mxu0
        %v2001 = vadd.f32 0.0, %v2000
        %v2002 = vpop.f32.mrb[0].mxu0
        %2003 = vmatprep.mubr.f32.mxu0 0.0
        %2004 = vmatmul.mubr.f32.gmra.mrb[0].mxu0 %v1794
        %v2005 = vpop.f32.mrb[0].mxu0
        %v2006 = vadd.f32 0.0, %v2005
        %v2007 = vpop.f32.mrb[0].mxu0
        %2008 = vmatprep.mubr.f32.mxu0 0.0
        %2009 = vmatmul.mubr.f32.gmra.mrb[0].mxu0 %v1795
        %v2010 = vpop.f32.mrb[0].mxu0
        %v2011 = vadd.f32 0.0, %v2010
        %v2012 = vpop.f32.mrb[0].mxu0
        %2013 = vmatprep.mubr.f32.mxu0 0.0
        %2014 = vmatmul.mubr.f32.gmra.mrb[0].mxu0 %v1796
        %v2015 = vpop.f32.mrb[0].mxu0
        %v2016 = vadd.f32 0.0, %v2015
        %v2017 = vpop.f32.mrb[0].mxu0
        %2018 = vmatprep.mubr.f32.mxu0 0.0
        %2019 = vmatmul.mubr.f32.gmra.mrb[0].mxu0 %v1797
        %v2020 = vpop.f32.mrb[0].mxu0
        %v2021 = vadd.f32 0.0, %v2020
        %v2022 = vpop.f32.mrb[0].mxu0
        %2023 = vmatprep.mubr.f32.mxu0 0.0
        %2024 = vmatmul.mubr.f32.gmra.mrb[0].mxu0 %v1798
        %v2025 = vpop.f32.mrb[0].mxu0
        %v2026 = vadd.f32 0.0, %v2025
        %v2027 = vpop.f32.mrb[0].mxu0
        %2028 = vmatprep.mubr.f32.mxu0 0.0
        %2029 = vmatmul.mubr.f32.gmra.mrb[0].mxu0 %v1799
        %v2030 = vpop.f32.mrb[0].mxu0
        %v2031 = vadd.f32 0.0, %v2030
        %v2032 = vpop.f32.mrb[0].mxu0
        %2033 = vmatprep.mubr.f32.mxu0 0.0
        %2034 = vmatmul.mubr.f32.gmra.mrb[0].mxu0 %v1800
        %v2035 = vpop.f32.mrb[0].mxu0
        %v2036 = vadd.f32 0.0, %v2035
        %v2037 = vpop.f32.mrb[0].mxu0
        %2038 = vmatprep.mubr.f32.mxu0 0.0
        %2039 = vmatmul.mubr.f32.gmra.mrb[0].mxu0 %v1801
        %v2040 = vpop.f32.mrb[0].mxu0
        %v2041 = vadd.f32 0.0, %v2040
        %v2042 = vpop.f32.mrb[0].mxu0
        %2043 = vdwg.mxu0
        %v2044 = vadd.f32 %v1738, %v1886
        %v2045 = vadd.f32 %v1739, %v1891
        %v2046 = vadd.f32 %v1740, %v1896
        %v2047 = vadd.f32 %v1741, %v1901
        %v2048 = vadd.f32 %v1742, %v1906
        %v2049 = vadd.f32 %v1743, %v1911
        %v2050 = vadd.f32 %v1744, %v1916
        %v2051 = vadd.f32 %v1745, %v1921
        %v2052 = vadd.f32 %v1746, %v1926
        %v2053 = vadd.f32 %v1747, %v1931
        %v2054 = vadd.f32 %v1748, %v1936
        %v2055 = vadd.f32 %v1749, %v1941
        %v2056 = vadd.f32 %v1750, %v1946
        %v2057 = vadd.f32 %v1751, %v1951
        %v2058 = vadd.f32 %v1752, %v1956
        %v2059 = vadd.f32 %v1753, %v1961
        %v2060 = vadd.f32 %v1754, %v1966
        %v2061 = vadd.f32 %v1755, %v1971
        %v2062 = vadd.f32 %v1756, %v1976
        %v2063 = vadd.f32 %v1757, %v1981
        %v2064 = vadd.f32 %v1758, %v1986
        %v2065 = vadd.f32 %v1759, %v1991
        %v2066 = vadd.f32 %v1760, %v1996
        %v2067 = vadd.f32 %v1761, %v2001
        %v2068 = vadd.f32 %v1762, %v2006
        %v2069 = vadd.f32 %v1763, %v2011
        %v2070 = vadd.f32 %v1764, %v2016
        %v2071 = vadd.f32 %v1765, %v2021
        %v2072 = vadd.f32 %v1766, %v2026
        %v2073 = vadd.f32 %v1767, %v2031
        %v2074 = vadd.f32 %v1768, %v2036
        %v2075 = vadd.f32 %v1769, %v2041
        %v2076 = vld [vmem:[%s1463 + $0x9] sm:$0xff]
        %v2077 = vld [vmem:[%s1463 + $0x11] sm:$0xff]
        %v2078 = vld [vmem:[%s1463 + $0x29] sm:$0xff]
        %v2079 = vld [vmem:[%s1463 + $0x31] sm:$0xff]
        %v2080 = vld [vmem:[%s1463 + $0x49] sm:$0xff]
        %v2081 = vld [vmem:[%s1463 + $0x51] sm:$0xff]
        %v2082 = vld [vmem:[%s1463 + $0x69] sm:$0xff]
        %v2083 = vld [vmem:[%s1463 + $0x71] sm:$0xff]
        %v2084 = vld [vmem:[%s1463 + $0x89] sm:$0xff]
        %v2085 = vld [vmem:[%s1463 + $0x91] sm:$0xff]
        %v2086 = vld [vmem:[%s1463 + $0xa9] sm:$0xff]
        %v2087 = vld [vmem:[%s1463 + $0xb1] sm:$0xff]
        %v2088 = vld [vmem:[%s1463 + $0xc9] sm:$0xff]
        %v2089 = vld [vmem:[%s1463 + $0xd1] sm:$0xff]
        %v2090 = vld [vmem:[%s1463 + $0xe9] sm:$0xff]
        %v2091 = vld [vmem:[%s1463 + $0xf1] sm:$0xff]
        %v2092 = vld [vmem:[%s1463 + $0x109] sm:$0xff]
        %v2093 = vld [vmem:[%s1463 + $0x111] sm:$0xff]
        %v2094 = vld [vmem:[%s1463 + $0x129] sm:$0xff]
        %v2095 = vld [vmem:[%s1463 + $0x131] sm:$0xff]
        %v2096 = vld [vmem:[%s1463 + $0x149] sm:$0xff]
        %v2097 = vld [vmem:[%s1463 + $0x151] sm:$0xff]
        %v2098 = vld [vmem:[%s1463 + $0x169] sm:$0xff]
        %v2099 = vld [vmem:[%s1463 + $0x171] sm:$0xff]
        %v2100 = vld [vmem:[%s1463 + $0x189] sm:$0xff]
        %v2101 = vld [vmem:[%s1463 + $0x191] sm:$0xff]
        %v2102 = vld [vmem:[%s1463 + $0x1a9] sm:$0xff]
        %v2103 = vld [vmem:[%s1463 + $0x1b1] sm:$0xff]
        %v2104 = vld [vmem:[%s1463 + $0x1c9] sm:$0xff]
        %v2105 = vld [vmem:[%s1463 + $0x1d1] sm:$0xff]
        %v2106 = vld [vmem:[%s1463 + $0x1e9] sm:$0xff]
        %v2107 = vld [vmem:[%s1463 + $0x1f1] sm:$0xff]
        %s2108 = scalar_lea.vmem %s1, 640
        %v2109 = vld [vmem:[%s2108] sm:$0xff]
        %v2110 = vld [vmem:[%s2108 + $0x8] sm:$0xff]
        %v2111 = vld [vmem:[%s2108 + $0x10] sm:$0xff]
        %v2112 = vld [vmem:[%s2108 + $0x18] sm:$0xff]
        %v2113 = vld [vmem:[%s2108 + $0x20] sm:$0xff]
        %v2114 = vld [vmem:[%s2108 + $0x28] sm:$0xff]
        %v2115 = vld [vmem:[%s2108 + $0x30] sm:$0xff]
        %v2116 = vld [vmem:[%s2108 + $0x38] sm:$0xff]
        %v2117 = vld [vmem:[%s2108 + $0x40] sm:$0xff]
        %v2118 = vld [vmem:[%s2108 + $0x48] sm:$0xff]
        %v2119 = vld [vmem:[%s2108 + $0x50] sm:$0xff]
        %v2120 = vld [vmem:[%s2108 + $0x58] sm:$0xff]
        %v2121 = vld [vmem:[%s2108 + $0x60] sm:$0xff]
        %v2122 = vld [vmem:[%s2108 + $0x68] sm:$0xff]
        %v2123 = vld [vmem:[%s2108 + $0x70] sm:$0xff]
        %v2124 = vld [vmem:[%s2108 + $0x78] sm:$0xff]
        %2125 = vmatprep.subr.mxu0 0.0
        %2126 = vmatpush1.msra.mxu0 %v2109
        %2127 = vmatprep.subr.mxu0 0.0
        %2128 = vmatpush1.msra.mxu0 %v2110
        %2129 = vmatprep.subr.mxu0 0.0
        %2130 = vmatpush1.msra.mxu0 %v2111
        %2131 = vmatprep.subr.mxu0 0.0
        %2132 = vmatpush1.msra.mxu0 %v2112
        %2133 = vmatprep.subr.mxu0 0.0
        %2134 = vmatpush1.msra.mxu0 %v2113
        %2135 = vmatprep.subr.mxu0 0.0
        %2136 = vmatpush1.msra.mxu0 %v2114
        %2137 = vmatprep.subr.mxu0 0.0
        %2138 = vmatpush1.msra.mxu0 %v2115
        %2139 = vmatprep.subr.mxu0 0.0
        %2140 = vmatpush1.msra.mxu0 %v2116
        %2141 = vmatprep.subr.mxu0 0.0
        %2142 = vmatpush1.msra.mxu0 %v2117
        %2143 = vmatprep.subr.mxu0 0.0
        %2144 = vmatpush1.msra.mxu0 %v2118
        %2145 = vmatprep.subr.mxu0 0.0
        %2146 = vmatpush1.msra.mxu0 %v2119
        %2147 = vmatprep.subr.mxu0 0.0
        %2148 = vmatpush1.msra.mxu0 %v2120
        %2149 = vmatprep.subr.mxu0 0.0
        %2150 = vmatpush1.msra.mxu0 %v2121
        %2151 = vmatprep.subr.mxu0 0.0
        %2152 = vmatpush1.msra.mxu0 %v2122
        %2153 = vmatprep.subr.mxu0 0.0
        %2154 = vmatpush1.msra.mxu0 %v2123
        %2155 = vmatprep.subr.mxu0 0.0
        %2156 = vmatpush1.msra.mxu0 %v2124
        %2157 = vmatprep.subr.mxu0 0.0
        %2158 = vmatpush1.msra.mxu0 0.0
        %2159 = vmatprep.subr.mxu0 0.0
        %2160 = vmatpush1.msra.mxu0 0.0
        %2161 = vmatprep.subr.mxu0 0.0
        %2162 = vmatpush1.msra.mxu0 0.0
        %2163 = vmatprep.subr.mxu0 0.0
        %2164 = vmatpush1.msra.mxu0 0.0
        %2165 = vmatprep.subr.mxu0 0.0
        %2166 = vmatpush1.msra.mxu0 0.0
        %2167 = vmatprep.subr.mxu0 0.0
        %2168 = vmatpush1.msra.mxu0 0.0
        %2169 = vmatprep.subr.mxu0 0.0
        %2170 = vmatpush1.msra.mxu0 0.0
        %2171 = vmatprep.subr.mxu0 0.0
        %2172 = vmatpush1.msra.mxu0 0.0
        %2173 = vmatprep.subr.mxu0 0.0
        %2174 = vmatpush1.msra.mxu0 0.0
        %2175 = vmatprep.subr.mxu0 0.0
        %2176 = vmatpush1.msra.mxu0 0.0
        %2177 = vmatprep.subr.mxu0 0.0
        %2178 = vmatpush1.msra.mxu0 0.0
        %2179 = vmatprep.subr.mxu0 0.0
        %2180 = vmatpush1.msra.mxu0 0.0
        %2181 = vmatprep.subr.mxu0 0.0
        %2182 = vmatpush1.msra.mxu0 0.0
        %2183 = vmatprep.subr.mxu0 0.0
        %2184 = vmatpush1.msra.mxu0 0.0
        %2185 = vmatprep.subr.mxu0 0.0
        %2186 = vmatpush1.msra.mxu0 0.0
        %2187 = vmatprep.subr.mxu0 0.0
        %2188 = vmatpush1.msra.mxu0 0.0
        %2189 = vmatprep.mubr.f32.mxu0 0.0
        %2190 = vmatmul.mubr.f32.gmra.mrb[0].mxu0 %v2076
        %v2191 = vpop.f32.mrb[0].mxu0
        %v2192 = vadd.f32 0.0, %v2191
        %v2193 = vpop.f32.mrb[0].mxu0
        %2194 = vmatprep.mubr.f32.mxu0 0.0
        %2195 = vmatmul.mubr.f32.gmra.mrb[0].mxu0 %v2077
        %v2196 = vpop.f32.mrb[0].mxu0
        %v2197 = vadd.f32 0.0, %v2196
        %v2198 = vpop.f32.mrb[0].mxu0
        %2199 = vmatprep.mubr.f32.mxu0 0.0
        %2200 = vmatmul.mubr.f32.gmra.mrb[0].mxu0 %v2078
        %v2201 = vpop.f32.mrb[0].mxu0
        %v2202 = vadd.f32 0.0, %v2201
        %v2203 = vpop.f32.mrb[0].mxu0
        %2204 = vmatprep.mubr.f32.mxu0 0.0
        %2205 = vmatmul.mubr.f32.gmra.mrb[0].mxu0 %v2079
        %v2206 = vpop.f32.mrb[0].mxu0
        %v2207 = vadd.f32 0.0, %v2206
        %v2208 = vpop.f32.mrb[0].mxu0
        %2209 = vmatprep.mubr.f32.mxu0 0.0
        %2210 = vmatmul.mubr.f32.gmra.mrb[0].mxu0 %v2080
        %v2211 = vpop.f32.mrb[0].mxu0
        %v2212 = vadd.f32 0.0, %v2211
        %v2213 = vpop.f32.mrb[0].mxu0
        %2214 = vmatprep.mubr.f32.mxu0 0.0
        %2215 = vmatmul.mubr.f32.gmra.mrb[0].mxu0 %v2081
        %v2216 = vpop.f32.mrb[0].mxu0
        %v2217 = vadd.f32 0.0, %v2216
        %v2218 = vpop.f32.mrb[0].mxu0
        %2219 = vmatprep.mubr.f32.mxu0 0.0
        %2220 = vmatmul.mubr.f32.gmra.mrb[0].mxu0 %v2082
        %v2221 = vpop.f32.mrb[0].mxu0
        %v2222 = vadd.f32 0.0, %v2221
        %v2223 = vpop.f32.mrb[0].mxu0
        %2224 = vmatprep.mubr.f32.mxu0 0.0
        %2225 = vmatmul.mubr.f32.gmra.mrb[0].mxu0 %v2083
        %v2226 = vpop.f32.mrb[0].mxu0
        %v2227 = vadd.f32 0.0, %v2226
        %v2228 = vpop.f32.mrb[0].mxu0
        %2229 = vmatprep.mubr.f32.mxu0 0.0
        %2230 = vmatmul.mubr.f32.gmra.mrb[0].mxu0 %v2084
        %v2231 = vpop.f32.mrb[0].mxu0
        %v2232 = vadd.f32 0.0, %v2231
        %v2233 = vpop.f32.mrb[0].mxu0
        %2234 = vmatprep.mubr.f32.mxu0 0.0
        %2235 = vmatmul.mubr.f32.gmra.mrb[0].mxu0 %v2085
        %v2236 = vpop.f32.mrb[0].mxu0
        %v2237 = vadd.f32 0.0, %v2236
        %v2238 = vpop.f32.mrb[0].mxu0
        %2239 = vmatprep.mubr.f32.mxu0 0.0
        %2240 = vmatmul.mubr.f32.gmra.mrb[0].mxu0 %v2086
        %v2241 = vpop.f32.mrb[0].mxu0
        %v2242 = vadd.f32 0.0, %v2241
        %v2243 = vpop.f32.mrb[0].mxu0
        %2244 = vmatprep.mubr.f32.mxu0 0.0
        %2245 = vmatmul.mubr.f32.gmra.mrb[0].mxu0 %v2087
        %v2246 = vpop.f32.mrb[0].mxu0
        %v2247 = vadd.f32 0.0, %v2246
        %v2248 = vpop.f32.mrb[0].mxu0
        %2249 = vmatprep.mubr.f32.mxu0 0.0
        %2250 = vmatmul.mubr.f32.gmra.mrb[0].mxu0 %v2088
        %v2251 = vpop.f32.mrb[0].mxu0
        %v2252 = vadd.f32 0.0, %v2251
        %v2253 = vpop.f32.mrb[0].mxu0
        %2254 = vmatprep.mubr.f32.mxu0 0.0
        %2255 = vmatmul.mubr.f32.gmra.mrb[0].mxu0 %v2089
        %v2256 = vpop.f32.mrb[0].mxu0
        %v2257 = vadd.f32 0.0, %v2256
        %v2258 = vpop.f32.mrb[0].mxu0
        %2259 = vmatprep.mubr.f32.mxu0 0.0
        %2260 = vmatmul.mubr.f32.gmra.mrb[0].mxu0 %v2090
        %v2261 = vpop.f32.mrb[0].mxu0
        %v2262 = vadd.f32 0.0, %v2261
        %v2263 = vpop.f32.mrb[0].mxu0
        %2264 = vmatprep.mubr.f32.mxu0 0.0
        %2265 = vmatmul.mubr.f32.gmra.mrb[0].mxu0 %v2091
        %v2266 = vpop.f32.mrb[0].mxu0
        %v2267 = vadd.f32 0.0, %v2266
        %v2268 = vpop.f32.mrb[0].mxu0
        %2269 = vmatprep.mubr.f32.mxu0 0.0
        %2270 = vmatmul.mubr.f32.gmra.mrb[0].mxu0 %v2092
        %v2271 = vpop.f32.mrb[0].mxu0
        %v2272 = vadd.f32 0.0, %v2271
        %v2273 = vpop.f32.mrb[0].mxu0
        %2274 = vmatprep.mubr.f32.mxu0 0.0
        %2275 = vmatmul.mubr.f32.gmra.mrb[0].mxu0 %v2093
        %v2276 = vpop.f32.mrb[0].mxu0
        %v2277 = vadd.f32 0.0, %v2276
        %v2278 = vpop.f32.mrb[0].mxu0
        %2279 = vmatprep.mubr.f32.mxu0 0.0
        %2280 = vmatmul.mubr.f32.gmra.mrb[0].mxu0 %v2094
        %v2281 = vpop.f32.mrb[0].mxu0
        %v2282 = vadd.f32 0.0, %v2281
        %v2283 = vpop.f32.mrb[0].mxu0
        %2284 = vmatprep.mubr.f32.mxu0 0.0
        %2285 = vmatmul.mubr.f32.gmra.mrb[0].mxu0 %v2095
        %v2286 = vpop.f32.mrb[0].mxu0
        %v2287 = vadd.f32 0.0, %v2286
        %v2288 = vpop.f32.mrb[0].mxu0
        %2289 = vmatprep.mubr.f32.mxu0 0.0
        %2290 = vmatmul.mubr.f32.gmra.mrb[0].mxu0 %v2096
        %v2291 = vpop.f32.mrb[0].mxu0
        %v2292 = vadd.f32 0.0, %v2291
        %v2293 = vpop.f32.mrb[0].mxu0
        %2294 = vmatprep.mubr.f32.mxu0 0.0
        %2295 = vmatmul.mubr.f32.gmra.mrb[0].mxu0 %v2097
        %v2296 = vpop.f32.mrb[0].mxu0
        %v2297 = vadd.f32 0.0, %v2296
        %v2298 = vpop.f32.mrb[0].mxu0
        %2299 = vmatprep.mubr.f32.mxu0 0.0
        %2300 = vmatmul.mubr.f32.gmra.mrb[0].mxu0 %v2098
        %v2301 = vpop.f32.mrb[0].mxu0
        %v2302 = vadd.f32 0.0, %v2301
        %v2303 = vpop.f32.mrb[0].mxu0
        %2304 = vmatprep.mubr.f32.mxu0 0.0
        %2305 = vmatmul.mubr.f32.gmra.mrb[0].mxu0 %v2099
        %v2306 = vpop.f32.mrb[0].mxu0
        %v2307 = vadd.f32 0.0, %v2306
        %v2308 = vpop.f32.mrb[0].mxu0
        %2309 = vmatprep.mubr.f32.mxu0 0.0
        %2310 = vmatmul.mubr.f32.gmra.mrb[0].mxu0 %v2100
        %v2311 = vpop.f32.mrb[0].mxu0
        %v2312 = vadd.f32 0.0, %v2311
        %v2313 = vpop.f32.mrb[0].mxu0
        %2314 = vmatprep.mubr.f32.mxu0 0.0
        %2315 = vmatmul.mubr.f32.gmra.mrb[0].mxu0 %v2101
        %v2316 = vpop.f32.mrb[0].mxu0
        %v2317 = vadd.f32 0.0, %v2316
        %v2318 = vpop.f32.mrb[0].mxu0
        %2319 = vmatprep.mubr.f32.mxu0 0.0
        %2320 = vmatmul.mubr.f32.gmra.mrb[0].mxu0 %v2102
        %v2321 = vpop.f32.mrb[0].mxu0
        %v2322 = vadd.f32 0.0, %v2321
        %v2323 = vpop.f32.mrb[0].mxu0
        %2324 = vmatprep.mubr.f32.mxu0 0.0
        %2325 = vmatmul.mubr.f32.gmra.mrb[0].mxu0 %v2103
        %v2326 = vpop.f32.mrb[0].mxu0
        %v2327 = vadd.f32 0.0, %v2326
        %v2328 = vpop.f32.mrb[0].mxu0
        %2329 = vmatprep.mubr.f32.mxu0 0.0
        %2330 = vmatmul.mubr.f32.gmra.mrb[0].mxu0 %v2104
        %v2331 = vpop.f32.mrb[0].mxu0
        %v2332 = vadd.f32 0.0, %v2331
        %v2333 = vpop.f32.mrb[0].mxu0
        %2334 = vmatprep.mubr.f32.mxu0 0.0
        %2335 = vmatmul.mubr.f32.gmra.mrb[0].mxu0 %v2105
        %v2336 = vpop.f32.mrb[0].mxu0
        %v2337 = vadd.f32 0.0, %v2336
        %v2338 = vpop.f32.mrb[0].mxu0
        %2339 = vmatprep.mubr.f32.mxu0 0.0
        %2340 = vmatmul.mubr.f32.gmra.mrb[0].mxu0 %v2106
        %v2341 = vpop.f32.mrb[0].mxu0
        %v2342 = vadd.f32 0.0, %v2341
        %v2343 = vpop.f32.mrb[0].mxu0
        %2344 = vmatprep.mubr.f32.mxu0 0.0
        %2345 = vmatmul.mubr.f32.gmra.mrb[0].mxu0 %v2107
        %v2346 = vpop.f32.mrb[0].mxu0
        %v2347 = vadd.f32 0.0, %v2346
        %v2348 = vpop.f32.mrb[0].mxu0
        %2349 = vdwg.mxu0
        %v2350 = vadd.f32 %v2044, %v2192
        %v2351 = vadd.f32 %v2045, %v2197
        %v2352 = vadd.f32 %v2046, %v2202
        %v2353 = vadd.f32 %v2047, %v2207
        %v2354 = vadd.f32 %v2048, %v2212
        %v2355 = vadd.f32 %v2049, %v2217
        %v2356 = vadd.f32 %v2050, %v2222
        %v2357 = vadd.f32 %v2051, %v2227
        %v2358 = vadd.f32 %v2052, %v2232
        %v2359 = vadd.f32 %v2053, %v2237
        %v2360 = vadd.f32 %v2054, %v2242
        %v2361 = vadd.f32 %v2055, %v2247
        %v2362 = vadd.f32 %v2056, %v2252
        %v2363 = vadd.f32 %v2057, %v2257
        %v2364 = vadd.f32 %v2058, %v2262
        %v2365 = vadd.f32 %v2059, %v2267
        %v2366 = vadd.f32 %v2060, %v2272
        %v2367 = vadd.f32 %v2061, %v2277
        %v2368 = vadd.f32 %v2062, %v2282
        %v2369 = vadd.f32 %v2063, %v2287
        %v2370 = vadd.f32 %v2064, %v2292
        %v2371 = vadd.f32 %v2065, %v2297
        %v2372 = vadd.f32 %v2066, %v2302
        %v2373 = vadd.f32 %v2067, %v2307
        %v2374 = vadd.f32 %v2068, %v2312
        %v2375 = vadd.f32 %v2069, %v2317
        %v2376 = vadd.f32 %v2070, %v2322
        %v2377 = vadd.f32 %v2071, %v2327
        %v2378 = vadd.f32 %v2072, %v2332
        %v2379 = vadd.f32 %v2073, %v2337
        %v2380 = vadd.f32 %v2074, %v2342
        %v2381 = vadd.f32 %v2075, %v2347
        %s2382 = scalar_lea.vmem %s609, 64 [#allocation2]
        %v2383 = vld [vmem:[%s2382 + $0x7] sm:$0xff]
        %v2384 = vld [vmem:[%s2382 + $0xf] sm:$0xff]
        %v2385 = vld [vmem:[%s2382 + $0x27] sm:$0xff]
        %v2386 = vld [vmem:[%s2382 + $0x2f] sm:$0xff]
        %v2387 = vld [vmem:[%s2382 + $0x47] sm:$0xff]
        %v2388 = vld [vmem:[%s2382 + $0x4f] sm:$0xff]
        %v2389 = vld [vmem:[%s2382 + $0x67] sm:$0xff]
        %v2390 = vld [vmem:[%s2382 + $0x6f] sm:$0xff]
        %v2391 = vld [vmem:[%s2382 + $0x87] sm:$0xff]
        %v2392 = vld [vmem:[%s2382 + $0x8f] sm:$0xff]
        %v2393 = vld [vmem:[%s2382 + $0xa7] sm:$0xff]
        %v2394 = vld [vmem:[%s2382 + $0xaf] sm:$0xff]
        %v2395 = vld [vmem:[%s2382 + $0xc7] sm:$0xff]
        %v2396 = vld [vmem:[%s2382 + $0xcf] sm:$0xff]
        %v2397 = vld [vmem:[%s2382 + $0xe7] sm:$0xff]
        %v2398 = vld [vmem:[%s2382 + $0xef] sm:$0xff]
        %v2399 = vld [vmem:[%s2382 + $0x107] sm:$0xff]
        %v2400 = vld [vmem:[%s2382 + $0x10f] sm:$0xff]
        %v2401 = vld [vmem:[%s2382 + $0x127] sm:$0xff]
        %v2402 = vld [vmem:[%s2382 + $0x12f] sm:$0xff]
        %v2403 = vld [vmem:[%s2382 + $0x147] sm:$0xff]
        %v2404 = vld [vmem:[%s2382 + $0x14f] sm:$0xff]
        %v2405 = vld [vmem:[%s2382 + $0x167] sm:$0xff]
        %v2406 = vld [vmem:[%s2382 + $0x16f] sm:$0xff]
        %v2407 = vld [vmem:[%s2382 + $0x187] sm:$0xff]
        %v2408 = vld [vmem:[%s2382 + $0x18f] sm:$0xff]
        %v2409 = vld [vmem:[%s2382 + $0x1a7] sm:$0xff]
        %v2410 = vld [vmem:[%s2382 + $0x1af] sm:$0xff]
        %v2411 = vld [vmem:[%s2382 + $0x1c7] sm:$0xff]
        %v2412 = vld [vmem:[%s2382 + $0x1cf] sm:$0xff]
        %v2413 = vld [vmem:[%s2382 + $0x1e7] sm:$0xff]
        %v2414 = vld [vmem:[%s2382 + $0x1ef] sm:$0xff]
        %s2415 = scalar_lea.vmem %s1, 768
        %v2416 = vld [vmem:[%s2415] sm:$0xff]
        %v2417 = vld [vmem:[%s2415 + $0x8] sm:$0xff]
        %v2418 = vld [vmem:[%s2415 + $0x10] sm:$0xff]
        %v2419 = vld [vmem:[%s2415 + $0x18] sm:$0xff]
        %v2420 = vld [vmem:[%s2415 + $0x20] sm:$0xff]
        %v2421 = vld [vmem:[%s2415 + $0x28] sm:$0xff]
        %v2422 = vld [vmem:[%s2415 + $0x30] sm:$0xff]
        %v2423 = vld [vmem:[%s2415 + $0x38] sm:$0xff]
        %v2424 = vld [vmem:[%s2415 + $0x40] sm:$0xff]
        %v2425 = vld [vmem:[%s2415 + $0x48] sm:$0xff]
        %v2426 = vld [vmem:[%s2415 + $0x50] sm:$0xff]
        %v2427 = vld [vmem:[%s2415 + $0x58] sm:$0xff]
        %v2428 = vld [vmem:[%s2415 + $0x60] sm:$0xff]
        %v2429 = vld [vmem:[%s2415 + $0x68] sm:$0xff]
        %v2430 = vld [vmem:[%s2415 + $0x70] sm:$0xff]
        %v2431 = vld [vmem:[%s2415 + $0x78] sm:$0xff]
        %2432 = vmatprep.subr.mxu0 0.0
        %2433 = vmatpush1.msra.mxu0 %v2416
        %2434 = vmatprep.subr.mxu0 0.0
        %2435 = vmatpush1.msra.mxu0 %v2417
        %2436 = vmatprep.subr.mxu0 0.0
        %2437 = vmatpush1.msra.mxu0 %v2418
        %2438 = vmatprep.subr.mxu0 0.0
        %2439 = vmatpush1.msra.mxu0 %v2419
        %2440 = vmatprep.subr.mxu0 0.0
        %2441 = vmatpush1.msra.mxu0 %v2420
        %2442 = vmatprep.subr.mxu0 0.0
        %2443 = vmatpush1.msra.mxu0 %v2421
        %2444 = vmatprep.subr.mxu0 0.0
        %2445 = vmatpush1.msra.mxu0 %v2422
        %2446 = vmatprep.subr.mxu0 0.0
        %2447 = vmatpush1.msra.mxu0 %v2423
        %2448 = vmatprep.subr.mxu0 0.0
        %2449 = vmatpush1.msra.mxu0 %v2424
        %2450 = vmatprep.subr.mxu0 0.0
        %2451 = vmatpush1.msra.mxu0 %v2425
        %2452 = vmatprep.subr.mxu0 0.0
        %2453 = vmatpush1.msra.mxu0 %v2426
        %2454 = vmatprep.subr.mxu0 0.0
        %2455 = vmatpush1.msra.mxu0 %v2427
        %2456 = vmatprep.subr.mxu0 0.0
        %2457 = vmatpush1.msra.mxu0 %v2428
        %2458 = vmatprep.subr.mxu0 0.0
        %2459 = vmatpush1.msra.mxu0 %v2429
        %2460 = vmatprep.subr.mxu0 0.0
        %2461 = vmatpush1.msra.mxu0 %v2430
        %2462 = vmatprep.subr.mxu0 0.0
        %2463 = vmatpush1.msra.mxu0 %v2431
        %2464 = vmatprep.subr.mxu0 0.0
        %2465 = vmatpush1.msra.mxu0 0.0
        %2466 = vmatprep.subr.mxu0 0.0
        %2467 = vmatpush1.msra.mxu0 0.0
        %2468 = vmatprep.subr.mxu0 0.0
        %2469 = vmatpush1.msra.mxu0 0.0
        %2470 = vmatprep.subr.mxu0 0.0
        %2471 = vmatpush1.msra.mxu0 0.0
        %2472 = vmatprep.subr.mxu0 0.0
        %2473 = vmatpush1.msra.mxu0 0.0
        %2474 = vmatprep.subr.mxu0 0.0
        %2475 = vmatpush1.msra.mxu0 0.0
        %2476 = vmatprep.subr.mxu0 0.0
        %2477 = vmatpush1.msra.mxu0 0.0
        %2478 = vmatprep.subr.mxu0 0.0
        %2479 = vmatpush1.msra.mxu0 0.0
        %2480 = vmatprep.subr.mxu0 0.0
        %2481 = vmatpush1.msra.mxu0 0.0
        %2482 = vmatprep.subr.mxu0 0.0
        %2483 = vmatpush1.msra.mxu0 0.0
        %2484 = vmatprep.subr.mxu0 0.0
        %2485 = vmatpush1.msra.mxu0 0.0
        %2486 = vmatprep.subr.mxu0 0.0
        %2487 = vmatpush1.msra.mxu0 0.0
        %2488 = vmatprep.subr.mxu0 0.0
        %2489 = vmatpush1.msra.mxu0 0.0
        %2490 = vmatprep.subr.mxu0 0.0
        %2491 = vmatpush1.msra.mxu0 0.0
        %2492 = vmatprep.subr.mxu0 0.0
        %2493 = vmatpush1.msra.mxu0 0.0
        %2494 = vmatprep.subr.mxu0 0.0
        %2495 = vmatpush1.msra.mxu0 0.0
        %2496 = vmatprep.mubr.f32.mxu0 0.0
        %2497 = vmatmul.mubr.f32.gmra.mrb[0].mxu0 %v2383
        %v2498 = vpop.f32.mrb[0].mxu0
        %v2499 = vadd.f32 0.0, %v2498
        %v2500 = vpop.f32.mrb[0].mxu0
        %2501 = vmatprep.mubr.f32.mxu0 0.0
        %2502 = vmatmul.mubr.f32.gmra.mrb[0].mxu0 %v2384
        %v2503 = vpop.f32.mrb[0].mxu0
        %v2504 = vadd.f32 0.0, %v2503
        %v2505 = vpop.f32.mrb[0].mxu0
        %2506 = vmatprep.mubr.f32.mxu0 0.0
        %2507 = vmatmul.mubr.f32.gmra.mrb[0].mxu0 %v2385
        %v2508 = vpop.f32.mrb[0].mxu0
        %v2509 = vadd.f32 0.0, %v2508
        %v2510 = vpop.f32.mrb[0].mxu0
        %2511 = vmatprep.mubr.f32.mxu0 0.0
        %2512 = vmatmul.mubr.f32.gmra.mrb[0].mxu0 %v2386
        %v2513 = vpop.f32.mrb[0].mxu0
        %v2514 = vadd.f32 0.0, %v2513
        %v2515 = vpop.f32.mrb[0].mxu0
        %2516 = vmatprep.mubr.f32.mxu0 0.0
        %2517 = vmatmul.mubr.f32.gmra.mrb[0].mxu0 %v2387
        %v2518 = vpop.f32.mrb[0].mxu0
        %v2519 = vadd.f32 0.0, %v2518
        %v2520 = vpop.f32.mrb[0].mxu0
        %2521 = vmatprep.mubr.f32.mxu0 0.0
        %2522 = vmatmul.mubr.f32.gmra.mrb[0].mxu0 %v2388
        %v2523 = vpop.f32.mrb[0].mxu0
        %v2524 = vadd.f32 0.0, %v2523
        %v2525 = vpop.f32.mrb[0].mxu0
        %2526 = vmatprep.mubr.f32.mxu0 0.0
        %2527 = vmatmul.mubr.f32.gmra.mrb[0].mxu0 %v2389
        %v2528 = vpop.f32.mrb[0].mxu0
        %v2529 = vadd.f32 0.0, %v2528
        %v2530 = vpop.f32.mrb[0].mxu0
        %2531 = vmatprep.mubr.f32.mxu0 0.0
        %2532 = vmatmul.mubr.f32.gmra.mrb[0].mxu0 %v2390
        %v2533 = vpop.f32.mrb[0].mxu0
        %v2534 = vadd.f32 0.0, %v2533
        %v2535 = vpop.f32.mrb[0].mxu0
        %2536 = vmatprep.mubr.f32.mxu0 0.0
        %2537 = vmatmul.mubr.f32.gmra.mrb[0].mxu0 %v2391
        %v2538 = vpop.f32.mrb[0].mxu0
        %v2539 = vadd.f32 0.0, %v2538
        %v2540 = vpop.f32.mrb[0].mxu0
        %2541 = vmatprep.mubr.f32.mxu0 0.0
        %2542 = vmatmul.mubr.f32.gmra.mrb[0].mxu0 %v2392
        %v2543 = vpop.f32.mrb[0].mxu0
        %v2544 = vadd.f32 0.0, %v2543
        %v2545 = vpop.f32.mrb[0].mxu0
        %2546 = vmatprep.mubr.f32.mxu0 0.0
        %2547 = vmatmul.mubr.f32.gmra.mrb[0].mxu0 %v2393
        %v2548 = vpop.f32.mrb[0].mxu0
        %v2549 = vadd.f32 0.0, %v2548
        %v2550 = vpop.f32.mrb[0].mxu0
        %2551 = vmatprep.mubr.f32.mxu0 0.0
        %2552 = vmatmul.mubr.f32.gmra.mrb[0].mxu0 %v2394
        %v2553 = vpop.f32.mrb[0].mxu0
        %v2554 = vadd.f32 0.0, %v2553
        %v2555 = vpop.f32.mrb[0].mxu0
        %2556 = vmatprep.mubr.f32.mxu0 0.0
        %2557 = vmatmul.mubr.f32.gmra.mrb[0].mxu0 %v2395
        %v2558 = vpop.f32.mrb[0].mxu0
        %v2559 = vadd.f32 0.0, %v2558
        %v2560 = vpop.f32.mrb[0].mxu0
        %2561 = vmatprep.mubr.f32.mxu0 0.0
        %2562 = vmatmul.mubr.f32.gmra.mrb[0].mxu0 %v2396
        %v2563 = vpop.f32.mrb[0].mxu0
        %v2564 = vadd.f32 0.0, %v2563
        %v2565 = vpop.f32.mrb[0].mxu0
        %2566 = vmatprep.mubr.f32.mxu0 0.0
        %2567 = vmatmul.mubr.f32.gmra.mrb[0].mxu0 %v2397
        %v2568 = vpop.f32.mrb[0].mxu0
        %v2569 = vadd.f32 0.0, %v2568
        %v2570 = vpop.f32.mrb[0].mxu0
        %2571 = vmatprep.mubr.f32.mxu0 0.0
        %2572 = vmatmul.mubr.f32.gmra.mrb[0].mxu0 %v2398
        %v2573 = vpop.f32.mrb[0].mxu0
        %v2574 = vadd.f32 0.0, %v2573
        %v2575 = vpop.f32.mrb[0].mxu0
        %2576 = vmatprep.mubr.f32.mxu0 0.0
        %2577 = vmatmul.mubr.f32.gmra.mrb[0].mxu0 %v2399
        %v2578 = vpop.f32.mrb[0].mxu0
        %v2579 = vadd.f32 0.0, %v2578
        %v2580 = vpop.f32.mrb[0].mxu0
        %2581 = vmatprep.mubr.f32.mxu0 0.0
        %2582 = vmatmul.mubr.f32.gmra.mrb[0].mxu0 %v2400
        %v2583 = vpop.f32.mrb[0].mxu0
        %v2584 = vadd.f32 0.0, %v2583
        %v2585 = vpop.f32.mrb[0].mxu0
        %2586 = vmatprep.mubr.f32.mxu0 0.0
        %2587 = vmatmul.mubr.f32.gmra.mrb[0].mxu0 %v2401
        %v2588 = vpop.f32.mrb[0].mxu0
        %v2589 = vadd.f32 0.0, %v2588
        %v2590 = vpop.f32.mrb[0].mxu0
        %2591 = vmatprep.mubr.f32.mxu0 0.0
        %2592 = vmatmul.mubr.f32.gmra.mrb[0].mxu0 %v2402
        %v2593 = vpop.f32.mrb[0].mxu0
        %v2594 = vadd.f32 0.0, %v2593
        %v2595 = vpop.f32.mrb[0].mxu0
        %2596 = vmatprep.mubr.f32.mxu0 0.0
        %2597 = vmatmul.mubr.f32.gmra.mrb[0].mxu0 %v2403
        %v2598 = vpop.f32.mrb[0].mxu0
        %v2599 = vadd.f32 0.0, %v2598
        %v2600 = vpop.f32.mrb[0].mxu0
        %2601 = vmatprep.mubr.f32.mxu0 0.0
        %2602 = vmatmul.mubr.f32.gmra.mrb[0].mxu0 %v2404
        %v2603 = vpop.f32.mrb[0].mxu0
        %v2604 = vadd.f32 0.0, %v2603
        %v2605 = vpop.f32.mrb[0].mxu0
        %2606 = vmatprep.mubr.f32.mxu0 0.0
        %2607 = vmatmul.mubr.f32.gmra.mrb[0].mxu0 %v2405
        %v2608 = vpop.f32.mrb[0].mxu0
        %v2609 = vadd.f32 0.0, %v2608
        %v2610 = vpop.f32.mrb[0].mxu0
        %2611 = vmatprep.mubr.f32.mxu0 0.0
        %2612 = vmatmul.mubr.f32.gmra.mrb[0].mxu0 %v2406
        %v2613 = vpop.f32.mrb[0].mxu0
        %v2614 = vadd.f32 0.0, %v2613
        %v2615 = vpop.f32.mrb[0].mxu0
        %2616 = vmatprep.mubr.f32.mxu0 0.0
        %2617 = vmatmul.mubr.f32.gmra.mrb[0].mxu0 %v2407
        %v2618 = vpop.f32.mrb[0].mxu0
        %v2619 = vadd.f32 0.0, %v2618
        %v2620 = vpop.f32.mrb[0].mxu0
        %2621 = vmatprep.mubr.f32.mxu0 0.0
        %2622 = vmatmul.mubr.f32.gmra.mrb[0].mxu0 %v2408
        %v2623 = vpop.f32.mrb[0].mxu0
        %v2624 = vadd.f32 0.0, %v2623
        %v2625 = vpop.f32.mrb[0].mxu0
        %2626 = vmatprep.mubr.f32.mxu0 0.0
        %2627 = vmatmul.mubr.f32.gmra.mrb[0].mxu0 %v2409
        %v2628 = vpop.f32.mrb[0].mxu0
        %v2629 = vadd.f32 0.0, %v2628
        %v2630 = vpop.f32.mrb[0].mxu0
        %2631 = vmatprep.mubr.f32.mxu0 0.0
        %2632 = vmatmul.mubr.f32.gmra.mrb[0].mxu0 %v2410
        %v2633 = vpop.f32.mrb[0].mxu0
        %v2634 = vadd.f32 0.0, %v2633
        %v2635 = vpop.f32.mrb[0].mxu0
        %2636 = vmatprep.mubr.f32.mxu0 0.0
        %2637 = vmatmul.mubr.f32.gmra.mrb[0].mxu0 %v2411
        %v2638 = vpop.f32.mrb[0].mxu0
        %v2639 = vadd.f32 0.0, %v2638
        %v2640 = vpop.f32.mrb[0].mxu0
        %2641 = vmatprep.mubr.f32.mxu0 0.0
        %2642 = vmatmul.mubr.f32.gmra.mrb[0].mxu0 %v2412
        %v2643 = vpop.f32.mrb[0].mxu0
        %v2644 = vadd.f32 0.0, %v2643
        %v2645 = vpop.f32.mrb[0].mxu0
        %2646 = vmatprep.mubr.f32.mxu0 0.0
        %2647 = vmatmul.mubr.f32.gmra.mrb[0].mxu0 %v2413
        %v2648 = vpop.f32.mrb[0].mxu0
        %v2649 = vadd.f32 0.0, %v2648
        %v2650 = vpop.f32.mrb[0].mxu0
        %2651 = vmatprep.mubr.f32.mxu0 0.0
        %2652 = vmatmul.mubr.f32.gmra.mrb[0].mxu0 %v2414
        %v2653 = vpop.f32.mrb[0].mxu0
        %v2654 = vadd.f32 0.0, %v2653
        %v2655 = vpop.f32.mrb[0].mxu0
        %2656 = vdwg.mxu0
        %v2657 = vadd.f32 %v2350, %v2499
        %v2658 = vadd.f32 %v2351, %v2504
        %v2659 = vadd.f32 %v2352, %v2509
        %v2660 = vadd.f32 %v2353, %v2514
        %v2661 = vadd.f32 %v2354, %v2519
        %v2662 = vadd.f32 %v2355, %v2524
        %v2663 = vadd.f32 %v2356, %v2529
        %v2664 = vadd.f32 %v2357, %v2534
        %v2665 = vadd.f32 %v2358, %v2539
        %v2666 = vadd.f32 %v2359, %v2544
        %v2667 = vadd.f32 %v2360, %v2549
        %v2668 = vadd.f32 %v2361, %v2554
        %v2669 = vadd.f32 %v2362, %v2559
        %v2670 = vadd.f32 %v2363, %v2564
        %v2671 = vadd.f32 %v2364, %v2569
        %v2672 = vadd.f32 %v2365, %v2574
        %v2673 = vadd.f32 %v2366, %v2579
        %v2674 = vadd.f32 %v2367, %v2584
        %v2675 = vadd.f32 %v2368, %v2589
        %v2676 = vadd.f32 %v2369, %v2594
        %v2677 = vadd.f32 %v2370, %v2599
        %v2678 = vadd.f32 %v2371, %v2604
        %v2679 = vadd.f32 %v2372, %v2609
        %v2680 = vadd.f32 %v2373, %v2614
        %v2681 = vadd.f32 %v2374, %v2619
        %v2682 = vadd.f32 %v2375, %v2624
        %v2683 = vadd.f32 %v2376, %v2629
        %v2684 = vadd.f32 %v2377, %v2634
        %v2685 = vadd.f32 %v2378, %v2639
        %v2686 = vadd.f32 %v2379, %v2644
        %v2687 = vadd.f32 %v2380, %v2649
        %v2688 = vadd.f32 %v2381, %v2654
        %v2689 = vld [vmem:[%s2382 + $0x8] sm:$0xff]
        %v2690 = vld [vmem:[%s2382 + $0x10] sm:$0xff]
        %v2691 = vld [vmem:[%s2382 + $0x28] sm:$0xff]
        %v2692 = vld [vmem:[%s2382 + $0x30] sm:$0xff]
        %v2693 = vld [vmem:[%s2382 + $0x48] sm:$0xff]
        %v2694 = vld [vmem:[%s2382 + $0x50] sm:$0xff]
        %v2695 = vld [vmem:[%s2382 + $0x68] sm:$0xff]
        %v2696 = vld [vmem:[%s2382 + $0x70] sm:$0xff]
        %v2697 = vld [vmem:[%s2382 + $0x88] sm:$0xff]
        %v2698 = vld [vmem:[%s2382 + $0x90] sm:$0xff]
        %v2699 = vld [vmem:[%s2382 + $0xa8] sm:$0xff]
        %v2700 = vld [vmem:[%s2382 + $0xb0] sm:$0xff]
        %v2701 = vld [vmem:[%s2382 + $0xc8] sm:$0xff]
        %v2702 = vld [vmem:[%s2382 + $0xd0] sm:$0xff]
        %v2703 = vld [vmem:[%s2382 + $0xe8] sm:$0xff]
        %v2704 = vld [vmem:[%s2382 + $0xf0] sm:$0xff]
        %v2705 = vld [vmem:[%s2382 + $0x108] sm:$0xff]
        %v2706 = vld [vmem:[%s2382 + $0x110] sm:$0xff]
        %v2707 = vld [vmem:[%s2382 + $0x128] sm:$0xff]
        %v2708 = vld [vmem:[%s2382 + $0x130] sm:$0xff]
        %v2709 = vld [vmem:[%s2382 + $0x148] sm:$0xff]
        %v2710 = vld [vmem:[%s2382 + $0x150] sm:$0xff]
        %v2711 = vld [vmem:[%s2382 + $0x168] sm:$0xff]
        %v2712 = vld [vmem:[%s2382 + $0x170] sm:$0xff]
        %v2713 = vld [vmem:[%s2382 + $0x188] sm:$0xff]
        %v2714 = vld [vmem:[%s2382 + $0x190] sm:$0xff]
        %v2715 = vld [vmem:[%s2382 + $0x1a8] sm:$0xff]
        %v2716 = vld [vmem:[%s2382 + $0x1b0] sm:$0xff]
        %v2717 = vld [vmem:[%s2382 + $0x1c8] sm:$0xff]
        %v2718 = vld [vmem:[%s2382 + $0x1d0] sm:$0xff]
        %v2719 = vld [vmem:[%s2382 + $0x1e8] sm:$0xff]
        %v2720 = vld [vmem:[%s2382 + $0x1f0] sm:$0xff]
        %s2721 = scalar_lea.vmem %s1, 896
        %v2722 = vld [vmem:[%s2721] sm:$0xff]
        %v2723 = vld [vmem:[%s2721 + $0x8] sm:$0xff]
        %v2724 = vld [vmem:[%s2721 + $0x10] sm:$0xff]
        %v2725 = vld [vmem:[%s2721 + $0x18] sm:$0xff]
        %v2726 = vld [vmem:[%s2721 + $0x20] sm:$0xff]
        %v2727 = vld [vmem:[%s2721 + $0x28] sm:$0xff]
        %v2728 = vld [vmem:[%s2721 + $0x30] sm:$0xff]
        %v2729 = vld [vmem:[%s2721 + $0x38] sm:$0xff]
        %v2730 = vld [vmem:[%s2721 + $0x40] sm:$0xff]
        %v2731 = vld [vmem:[%s2721 + $0x48] sm:$0xff]
        %v2732 = vld [vmem:[%s2721 + $0x50] sm:$0xff]
        %v2733 = vld [vmem:[%s2721 + $0x58] sm:$0xff]
        %v2734 = vld [vmem:[%s2721 + $0x60] sm:$0xff]
        %v2735 = vld [vmem:[%s2721 + $0x68] sm:$0xff]
        %v2736 = vld [vmem:[%s2721 + $0x70] sm:$0xff]
        %v2737 = vld [vmem:[%s2721 + $0x78] sm:$0xff]
        %2738 = vmatprep.subr.mxu0 0.0
        %2739 = vmatpush1.msra.mxu0 %v2722
        %2740 = vmatprep.subr.mxu0 0.0
        %2741 = vmatpush1.msra.mxu0 %v2723
        %2742 = vmatprep.subr.mxu0 0.0
        %2743 = vmatpush1.msra.mxu0 %v2724
        %2744 = vmatprep.subr.mxu0 0.0
        %2745 = vmatpush1.msra.mxu0 %v2725
        %2746 = vmatprep.subr.mxu0 0.0
        %2747 = vmatpush1.msra.mxu0 %v2726
        %2748 = vmatprep.subr.mxu0 0.0
        %2749 = vmatpush1.msra.mxu0 %v2727
        %2750 = vmatprep.subr.mxu0 0.0
        %2751 = vmatpush1.msra.mxu0 %v2728
        %2752 = vmatprep.subr.mxu0 0.0
        %2753 = vmatpush1.msra.mxu0 %v2729
        %2754 = vmatprep.subr.mxu0 0.0
        %2755 = vmatpush1.msra.mxu0 %v2730
        %2756 = vmatprep.subr.mxu0 0.0
        %2757 = vmatpush1.msra.mxu0 %v2731
        %2758 = vmatprep.subr.mxu0 0.0
        %2759 = vmatpush1.msra.mxu0 %v2732
        %2760 = vmatprep.subr.mxu0 0.0
        %2761 = vmatpush1.msra.mxu0 %v2733
        %2762 = vmatprep.subr.mxu0 0.0
        %2763 = vmatpush1.msra.mxu0 %v2734
        %2764 = vmatprep.subr.mxu0 0.0
        %2765 = vmatpush1.msra.mxu0 %v2735
        %2766 = vmatprep.subr.mxu0 0.0
        %2767 = vmatpush1.msra.mxu0 %v2736
        %2768 = vmatprep.subr.mxu0 0.0
        %2769 = vmatpush1.msra.mxu0 %v2737
        %2770 = vmatprep.subr.mxu0 0.0
        %2771 = vmatpush1.msra.mxu0 0.0
        %2772 = vmatprep.subr.mxu0 0.0
        %2773 = vmatpush1.msra.mxu0 0.0
        %2774 = vmatprep.subr.mxu0 0.0
        %2775 = vmatpush1.msra.mxu0 0.0
        %2776 = vmatprep.subr.mxu0 0.0
        %2777 = vmatpush1.msra.mxu0 0.0
        %2778 = vmatprep.subr.mxu0 0.0
        %2779 = vmatpush1.msra.mxu0 0.0
        %2780 = vmatprep.subr.mxu0 0.0
        %2781 = vmatpush1.msra.mxu0 0.0
        %2782 = vmatprep.subr.mxu0 0.0
        %2783 = vmatpush1.msra.mxu0 0.0
        %2784 = vmatprep.subr.mxu0 0.0
        %2785 = vmatpush1.msra.mxu0 0.0
        %2786 = vmatprep.subr.mxu0 0.0
        %2787 = vmatpush1.msra.mxu0 0.0
        %2788 = vmatprep.subr.mxu0 0.0
        %2789 = vmatpush1.msra.mxu0 0.0
        %2790 = vmatprep.subr.mxu0 0.0
        %2791 = vmatpush1.msra.mxu0 0.0
        %2792 = vmatprep.subr.mxu0 0.0
        %2793 = vmatpush1.msra.mxu0 0.0
        %2794 = vmatprep.subr.mxu0 0.0
        %2795 = vmatpush1.msra.mxu0 0.0
        %2796 = vmatprep.subr.mxu0 0.0
        %2797 = vmatpush1.msra.mxu0 0.0
        %2798 = vmatprep.subr.mxu0 0.0
        %2799 = vmatpush1.msra.mxu0 0.0
        %2800 = vmatprep.subr.mxu0 0.0
        %2801 = vmatpush1.msra.mxu0 0.0
        %2802 = vmatprep.mubr.f32.mxu0 0.0
        %2803 = vmatmul.mubr.f32.gmra.mrb[0].mxu0 %v2689
        %v2804 = vpop.f32.mrb[0].mxu0
        %v2805 = vadd.f32 0.0, %v2804
        %v2806 = vpop.f32.mrb[0].mxu0
        %2807 = vmatprep.mubr.f32.mxu0 0.0
        %2808 = vmatmul.mubr.f32.gmra.mrb[0].mxu0 %v2690
        %v2809 = vpop.f32.mrb[0].mxu0
        %v2810 = vadd.f32 0.0, %v2809
        %v2811 = vpop.f32.mrb[0].mxu0
        %2812 = vmatprep.mubr.f32.mxu0 0.0
        %2813 = vmatmul.mubr.f32.gmra.mrb[0].mxu0 %v2691
        %v2814 = vpop.f32.mrb[0].mxu0
        %v2815 = vadd.f32 0.0, %v2814
        %v2816 = vpop.f32.mrb[0].mxu0
        %2817 = vmatprep.mubr.f32.mxu0 0.0
        %2818 = vmatmul.mubr.f32.gmra.mrb[0].mxu0 %v2692
        %v2819 = vpop.f32.mrb[0].mxu0
        %v2820 = vadd.f32 0.0, %v2819
        %v2821 = vpop.f32.mrb[0].mxu0
        %2822 = vmatprep.mubr.f32.mxu0 0.0
        %2823 = vmatmul.mubr.f32.gmra.mrb[0].mxu0 %v2693
        %v2824 = vpop.f32.mrb[0].mxu0
        %v2825 = vadd.f32 0.0, %v2824
        %v2826 = vpop.f32.mrb[0].mxu0
        %2827 = vmatprep.mubr.f32.mxu0 0.0
        %2828 = vmatmul.mubr.f32.gmra.mrb[0].mxu0 %v2694
        %v2829 = vpop.f32.mrb[0].mxu0
        %v2830 = vadd.f32 0.0, %v2829
        %v2831 = vpop.f32.mrb[0].mxu0
        %2832 = vmatprep.mubr.f32.mxu0 0.0
        %2833 = vmatmul.mubr.f32.gmra.mrb[0].mxu0 %v2695
        %v2834 = vpop.f32.mrb[0].mxu0
        %v2835 = vadd.f32 0.0, %v2834
        %v2836 = vpop.f32.mrb[0].mxu0
        %2837 = vmatprep.mubr.f32.mxu0 0.0
        %2838 = vmatmul.mubr.f32.gmra.mrb[0].mxu0 %v2696
        %v2839 = vpop.f32.mrb[0].mxu0
        %v2840 = vadd.f32 0.0, %v2839
        %v2841 = vpop.f32.mrb[0].mxu0
        %2842 = vmatprep.mubr.f32.mxu0 0.0
        %2843 = vmatmul.mubr.f32.gmra.mrb[0].mxu0 %v2697
        %v2844 = vpop.f32.mrb[0].mxu0
        %v2845 = vadd.f32 0.0, %v2844
        %v2846 = vpop.f32.mrb[0].mxu0
        %2847 = vmatprep.mubr.f32.mxu0 0.0
        %2848 = vmatmul.mubr.f32.gmra.mrb[0].mxu0 %v2698
        %v2849 = vpop.f32.mrb[0].mxu0
        %v2850 = vadd.f32 0.0, %v2849
        %v2851 = vpop.f32.mrb[0].mxu0
        %2852 = vmatprep.mubr.f32.mxu0 0.0
        %2853 = vmatmul.mubr.f32.gmra.mrb[0].mxu0 %v2699
        %v2854 = vpop.f32.mrb[0].mxu0
        %v2855 = vadd.f32 0.0, %v2854
        %v2856 = vpop.f32.mrb[0].mxu0
        %2857 = vmatprep.mubr.f32.mxu0 0.0
        %2858 = vmatmul.mubr.f32.gmra.mrb[0].mxu0 %v2700
        %v2859 = vpop.f32.mrb[0].mxu0
        %v2860 = vadd.f32 0.0, %v2859
        %v2861 = vpop.f32.mrb[0].mxu0
        %2862 = vmatprep.mubr.f32.mxu0 0.0
        %2863 = vmatmul.mubr.f32.gmra.mrb[0].mxu0 %v2701
        %v2864 = vpop.f32.mrb[0].mxu0
        %v2865 = vadd.f32 0.0, %v2864
        %v2866 = vpop.f32.mrb[0].mxu0
        %2867 = vmatprep.mubr.f32.mxu0 0.0
        %2868 = vmatmul.mubr.f32.gmra.mrb[0].mxu0 %v2702
        %v2869 = vpop.f32.mrb[0].mxu0
        %v2870 = vadd.f32 0.0, %v2869
        %v2871 = vpop.f32.mrb[0].mxu0
        %2872 = vmatprep.mubr.f32.mxu0 0.0
        %2873 = vmatmul.mubr.f32.gmra.mrb[0].mxu0 %v2703
        %v2874 = vpop.f32.mrb[0].mxu0
        %v2875 = vadd.f32 0.0, %v2874
        %v2876 = vpop.f32.mrb[0].mxu0
        %2877 = vmatprep.mubr.f32.mxu0 0.0
        %2878 = vmatmul.mubr.f32.gmra.mrb[0].mxu0 %v2704
        %v2879 = vpop.f32.mrb[0].mxu0
        %v2880 = vadd.f32 0.0, %v2879
        %v2881 = vpop.f32.mrb[0].mxu0
        %2882 = vmatprep.mubr.f32.mxu0 0.0
        %2883 = vmatmul.mubr.f32.gmra.mrb[0].mxu0 %v2705
        %v2884 = vpop.f32.mrb[0].mxu0
        %v2885 = vadd.f32 0.0, %v2884
        %v2886 = vpop.f32.mrb[0].mxu0
        %2887 = vmatprep.mubr.f32.mxu0 0.0
        %2888 = vmatmul.mubr.f32.gmra.mrb[0].mxu0 %v2706
        %v2889 = vpop.f32.mrb[0].mxu0
        %v2890 = vadd.f32 0.0, %v2889
        %v2891 = vpop.f32.mrb[0].mxu0
        %2892 = vmatprep.mubr.f32.mxu0 0.0
        %2893 = vmatmul.mubr.f32.gmra.mrb[0].mxu0 %v2707
        %v2894 = vpop.f32.mrb[0].mxu0
        %v2895 = vadd.f32 0.0, %v2894
        %v2896 = vpop.f32.mrb[0].mxu0
        %2897 = vmatprep.mubr.f32.mxu0 0.0
        %2898 = vmatmul.mubr.f32.gmra.mrb[0].mxu0 %v2708
        %v2899 = vpop.f32.mrb[0].mxu0
        %v2900 = vadd.f32 0.0, %v2899
        %v2901 = vpop.f32.mrb[0].mxu0
        %2902 = vmatprep.mubr.f32.mxu0 0.0
        %2903 = vmatmul.mubr.f32.gmra.mrb[0].mxu0 %v2709
        %v2904 = vpop.f32.mrb[0].mxu0
        %v2905 = vadd.f32 0.0, %v2904
        %v2906 = vpop.f32.mrb[0].mxu0
        %2907 = vmatprep.mubr.f32.mxu0 0.0
        %2908 = vmatmul.mubr.f32.gmra.mrb[0].mxu0 %v2710
        %v2909 = vpop.f32.mrb[0].mxu0
        %v2910 = vadd.f32 0.0, %v2909
        %v2911 = vpop.f32.mrb[0].mxu0
        %2912 = vmatprep.mubr.f32.mxu0 0.0
        %2913 = vmatmul.mubr.f32.gmra.mrb[0].mxu0 %v2711
        %v2914 = vpop.f32.mrb[0].mxu0
        %v2915 = vadd.f32 0.0, %v2914
        %v2916 = vpop.f32.mrb[0].mxu0
        %2917 = vmatprep.mubr.f32.mxu0 0.0
        %2918 = vmatmul.mubr.f32.gmra.mrb[0].mxu0 %v2712
        %v2919 = vpop.f32.mrb[0].mxu0
        %v2920 = vadd.f32 0.0, %v2919
        %v2921 = vpop.f32.mrb[0].mxu0
        %2922 = vmatprep.mubr.f32.mxu0 0.0
        %2923 = vmatmul.mubr.f32.gmra.mrb[0].mxu0 %v2713
        %v2924 = vpop.f32.mrb[0].mxu0
        %v2925 = vadd.f32 0.0, %v2924
        %v2926 = vpop.f32.mrb[0].mxu0
        %2927 = vmatprep.mubr.f32.mxu0 0.0
        %2928 = vmatmul.mubr.f32.gmra.mrb[0].mxu0 %v2714
        %v2929 = vpop.f32.mrb[0].mxu0
        %v2930 = vadd.f32 0.0, %v2929
        %v2931 = vpop.f32.mrb[0].mxu0
        %2932 = vmatprep.mubr.f32.mxu0 0.0
        %2933 = vmatmul.mubr.f32.gmra.mrb[0].mxu0 %v2715
        %v2934 = vpop.f32.mrb[0].mxu0
        %v2935 = vadd.f32 0.0, %v2934
        %v2936 = vpop.f32.mrb[0].mxu0
        %2937 = vmatprep.mubr.f32.mxu0 0.0
        %2938 = vmatmul.mubr.f32.gmra.mrb[0].mxu0 %v2716
        %v2939 = vpop.f32.mrb[0].mxu0
        %v2940 = vadd.f32 0.0, %v2939
        %v2941 = vpop.f32.mrb[0].mxu0
        %2942 = vmatprep.mubr.f32.mxu0 0.0
        %2943 = vmatmul.mubr.f32.gmra.mrb[0].mxu0 %v2717
        %v2944 = vpop.f32.mrb[0].mxu0
        %v2945 = vadd.f32 0.0, %v2944
        %v2946 = vpop.f32.mrb[0].mxu0
        %2947 = vmatprep.mubr.f32.mxu0 0.0
        %2948 = vmatmul.mubr.f32.gmra.mrb[0].mxu0 %v2718
        %v2949 = vpop.f32.mrb[0].mxu0
        %v2950 = vadd.f32 0.0, %v2949
        %v2951 = vpop.f32.mrb[0].mxu0
        %2952 = vmatprep.mubr.f32.mxu0 0.0
        %2953 = vmatmul.mubr.f32.gmra.mrb[0].mxu0 %v2719
        %v2954 = vpop.f32.mrb[0].mxu0
        %v2955 = vadd.f32 0.0, %v2954
        %v2956 = vpop.f32.mrb[0].mxu0
        %2957 = vmatprep.mubr.f32.mxu0 0.0
        %2958 = vmatmul.mubr.f32.gmra.mrb[0].mxu0 %v2720
        %v2959 = vpop.f32.mrb[0].mxu0
        %v2960 = vadd.f32 0.0, %v2959
        %v2961 = vpop.f32.mrb[0].mxu0
        %2962 = vdwg.mxu0
        %v2963 = vadd.f32 %v2657, %v2805
        %v2964 = vadd.f32 %v2658, %v2810
        %v2965 = vadd.f32 %v2659, %v2815
        %v2966 = vadd.f32 %v2660, %v2820
        %v2967 = vadd.f32 %v2661, %v2825
        %v2968 = vadd.f32 %v2662, %v2830
        %v2969 = vadd.f32 %v2663, %v2835
        %v2970 = vadd.f32 %v2664, %v2840
        %v2971 = vadd.f32 %v2665, %v2845
        %v2972 = vadd.f32 %v2666, %v2850
        %v2973 = vadd.f32 %v2667, %v2855
        %v2974 = vadd.f32 %v2668, %v2860
        %v2975 = vadd.f32 %v2669, %v2865
        %v2976 = vadd.f32 %v2670, %v2870
        %v2977 = vadd.f32 %v2671, %v2875
        %v2978 = vadd.f32 %v2672, %v2880
        %v2979 = vadd.f32 %v2673, %v2885
        %v2980 = vadd.f32 %v2674, %v2890
        %v2981 = vadd.f32 %v2675, %v2895
        %v2982 = vadd.f32 %v2676, %v2900
        %v2983 = vadd.f32 %v2677, %v2905
        %v2984 = vadd.f32 %v2678, %v2910
        %v2985 = vadd.f32 %v2679, %v2915
        %v2986 = vadd.f32 %v2680, %v2920
        %v2987 = vadd.f32 %v2681, %v2925
        %v2988 = vadd.f32 %v2682, %v2930
        %v2989 = vadd.f32 %v2683, %v2935
        %v2990 = vadd.f32 %v2684, %v2940
        %v2991 = vadd.f32 %v2685, %v2945
        %v2992 = vadd.f32 %v2686, %v2950
        %v2993 = vadd.f32 %v2687, %v2955
        %v2994 = vadd.f32 %v2688, %v2960
        %v2995 = vld [vmem:[%s2382 + $0x9] sm:$0xff]
        %v2996 = vld [vmem:[%s2382 + $0x11] sm:$0xff]
        %v2997 = vld [vmem:[%s2382 + $0x29] sm:$0xff]
        %v2998 = vld [vmem:[%s2382 + $0x31] sm:$0xff]
        %v2999 = vld [vmem:[%s2382 + $0x49] sm:$0xff]
        %v3000 = vld [vmem:[%s2382 + $0x51] sm:$0xff]
        %v3001 = vld [vmem:[%s2382 + $0x69] sm:$0xff]
        %v3002 = vld [vmem:[%s2382 + $0x71] sm:$0xff]
        %v3003 = vld [vmem:[%s2382 + $0x89] sm:$0xff]
        %v3004 = vld [vmem:[%s2382 + $0x91] sm:$0xff]
        %v3005 = vld [vmem:[%s2382 + $0xa9] sm:$0xff]
        %v3006 = vld [vmem:[%s2382 + $0xb1] sm:$0xff]
        %v3007 = vld [vmem:[%s2382 + $0xc9] sm:$0xff]
        %v3008 = vld [vmem:[%s2382 + $0xd1] sm:$0xff]
        %v3009 = vld [vmem:[%s2382 + $0xe9] sm:$0xff]
        %v3010 = vld [vmem:[%s2382 + $0xf1] sm:$0xff]
        %v3011 = vld [vmem:[%s2382 + $0x109] sm:$0xff]
        %v3012 = vld [vmem:[%s2382 + $0x111] sm:$0xff]
        %v3013 = vld [vmem:[%s2382 + $0x129] sm:$0xff]
        %v3014 = vld [vmem:[%s2382 + $0x131] sm:$0xff]
        %v3015 = vld [vmem:[%s2382 + $0x149] sm:$0xff]
        %v3016 = vld [vmem:[%s2382 + $0x151] sm:$0xff]
        %v3017 = vld [vmem:[%s2382 + $0x169] sm:$0xff]
        %v3018 = vld [vmem:[%s2382 + $0x171] sm:$0xff]
        %v3019 = vld [vmem:[%s2382 + $0x189] sm:$0xff]
        %v3020 = vld [vmem:[%s2382 + $0x191] sm:$0xff]
        %v3021 = vld [vmem:[%s2382 + $0x1a9] sm:$0xff]
        %v3022 = vld [vmem:[%s2382 + $0x1b1] sm:$0xff]
        %v3023 = vld [vmem:[%s2382 + $0x1c9] sm:$0xff]
        %v3024 = vld [vmem:[%s2382 + $0x1d1] sm:$0xff]
        %v3025 = vld [vmem:[%s2382 + $0x1e9] sm:$0xff]
        %v3026 = vld [vmem:[%s2382 + $0x1f1] sm:$0xff]
        %s3027 = scalar_lea.vmem %s1, 1024
        %v3028 = vld [vmem:[%s3027] sm:$0xff]
        %v3029 = vld [vmem:[%s3027 + $0x8] sm:$0xff]
        %v3030 = vld [vmem:[%s3027 + $0x10] sm:$0xff]
        %v3031 = vld [vmem:[%s3027 + $0x18] sm:$0xff]
        %v3032 = vld [vmem:[%s3027 + $0x20] sm:$0xff]
        %v3033 = vld [vmem:[%s3027 + $0x28] sm:$0xff]
        %v3034 = vld [vmem:[%s3027 + $0x30] sm:$0xff]
        %v3035 = vld [vmem:[%s3027 + $0x38] sm:$0xff]
        %v3036 = vld [vmem:[%s3027 + $0x40] sm:$0xff]
        %v3037 = vld [vmem:[%s3027 + $0x48] sm:$0xff]
        %v3038 = vld [vmem:[%s3027 + $0x50] sm:$0xff]
        %v3039 = vld [vmem:[%s3027 + $0x58] sm:$0xff]
        %v3040 = vld [vmem:[%s3027 + $0x60] sm:$0xff]
        %v3041 = vld [vmem:[%s3027 + $0x68] sm:$0xff]
        %v3042 = vld [vmem:[%s3027 + $0x70] sm:$0xff]
        %v3043 = vld [vmem:[%s3027 + $0x78] sm:$0xff]
        %3044 = vmatprep.subr.mxu0 0.0
        %3045 = vmatpush1.msra.mxu0 %v3028
        %3046 = vmatprep.subr.mxu0 0.0
        %3047 = vmatpush1.msra.mxu0 %v3029
        %3048 = vmatprep.subr.mxu0 0.0
        %3049 = vmatpush1.msra.mxu0 %v3030
        %3050 = vmatprep.subr.mxu0 0.0
        %3051 = vmatpush1.msra.mxu0 %v3031
        %3052 = vmatprep.subr.mxu0 0.0
        %3053 = vmatpush1.msra.mxu0 %v3032
        %3054 = vmatprep.subr.mxu0 0.0
        %3055 = vmatpush1.msra.mxu0 %v3033
        %3056 = vmatprep.subr.mxu0 0.0
        %3057 = vmatpush1.msra.mxu0 %v3034
        %3058 = vmatprep.subr.mxu0 0.0
        %3059 = vmatpush1.msra.mxu0 %v3035
        %3060 = vmatprep.subr.mxu0 0.0
        %3061 = vmatpush1.msra.mxu0 %v3036
        %3062 = vmatprep.subr.mxu0 0.0
        %3063 = vmatpush1.msra.mxu0 %v3037
        %3064 = vmatprep.subr.mxu0 0.0
        %3065 = vmatpush1.msra.mxu0 %v3038
        %3066 = vmatprep.subr.mxu0 0.0
        %3067 = vmatpush1.msra.mxu0 %v3039
        %3068 = vmatprep.subr.mxu0 0.0
        %3069 = vmatpush1.msra.mxu0 %v3040
        %3070 = vmatprep.subr.mxu0 0.0
        %3071 = vmatpush1.msra.mxu0 %v3041
        %3072 = vmatprep.subr.mxu0 0.0
        %3073 = vmatpush1.msra.mxu0 %v3042
        %3074 = vmatprep.subr.mxu0 0.0
        %3075 = vmatpush1.msra.mxu0 %v3043
        %3076 = vmatprep.subr.mxu0 0.0
        %3077 = vmatpush1.msra.mxu0 0.0
        %3078 = vmatprep.subr.mxu0 0.0
        %3079 = vmatpush1.msra.mxu0 0.0
        %3080 = vmatprep.subr.mxu0 0.0
        %3081 = vmatpush1.msra.mxu0 0.0
        %3082 = vmatprep.subr.mxu0 0.0
        %3083 = vmatpush1.msra.mxu0 0.0
        %3084 = vmatprep.subr.mxu0 0.0
        %3085 = vmatpush1.msra.mxu0 0.0
        %3086 = vmatprep.subr.mxu0 0.0
        %3087 = vmatpush1.msra.mxu0 0.0
        %3088 = vmatprep.subr.mxu0 0.0
        %3089 = vmatpush1.msra.mxu0 0.0
        %3090 = vmatprep.subr.mxu0 0.0
        %3091 = vmatpush1.msra.mxu0 0.0
        %3092 = vmatprep.subr.mxu0 0.0
        %3093 = vmatpush1.msra.mxu0 0.0
        %3094 = vmatprep.subr.mxu0 0.0
        %3095 = vmatpush1.msra.mxu0 0.0
        %3096 = vmatprep.subr.mxu0 0.0
        %3097 = vmatpush1.msra.mxu0 0.0
        %3098 = vmatprep.subr.mxu0 0.0
        %3099 = vmatpush1.msra.mxu0 0.0
        %3100 = vmatprep.subr.mxu0 0.0
        %3101 = vmatpush1.msra.mxu0 0.0
        %3102 = vmatprep.subr.mxu0 0.0
        %3103 = vmatpush1.msra.mxu0 0.0
        %3104 = vmatprep.subr.mxu0 0.0
        %3105 = vmatpush1.msra.mxu0 0.0
        %3106 = vmatprep.subr.mxu0 0.0
        %3107 = vmatpush1.msra.mxu0 0.0
        %3108 = vmatprep.mubr.f32.mxu0 0.0
        %3109 = vmatmul.mubr.f32.gmra.mrb[0].mxu0 %v2995
        %v3110 = vpop.f32.mrb[0].mxu0
        %v3111 = vadd.f32 0.0, %v3110
        %v3112 = vpop.f32.mrb[0].mxu0
        %3113 = vmatprep.mubr.f32.mxu0 0.0
        %3114 = vmatmul.mubr.f32.gmra.mrb[0].mxu0 %v2996
        %v3115 = vpop.f32.mrb[0].mxu0
        %v3116 = vadd.f32 0.0, %v3115
        %v3117 = vpop.f32.mrb[0].mxu0
        %3118 = vmatprep.mubr.f32.mxu0 0.0
        %3119 = vmatmul.mubr.f32.gmra.mrb[0].mxu0 %v2997
        %v3120 = vpop.f32.mrb[0].mxu0
        %v3121 = vadd.f32 0.0, %v3120
        %v3122 = vpop.f32.mrb[0].mxu0
        %3123 = vmatprep.mubr.f32.mxu0 0.0
        %3124 = vmatmul.mubr.f32.gmra.mrb[0].mxu0 %v2998
        %v3125 = vpop.f32.mrb[0].mxu0
        %v3126 = vadd.f32 0.0, %v3125
        %v3127 = vpop.f32.mrb[0].mxu0
        %3128 = vmatprep.mubr.f32.mxu0 0.0
        %3129 = vmatmul.mubr.f32.gmra.mrb[0].mxu0 %v2999
        %v3130 = vpop.f32.mrb[0].mxu0
        %v3131 = vadd.f32 0.0, %v3130
        %v3132 = vpop.f32.mrb[0].mxu0
        %3133 = vmatprep.mubr.f32.mxu0 0.0
        %3134 = vmatmul.mubr.f32.gmra.mrb[0].mxu0 %v3000
        %v3135 = vpop.f32.mrb[0].mxu0
        %v3136 = vadd.f32 0.0, %v3135
        %v3137 = vpop.f32.mrb[0].mxu0
        %3138 = vmatprep.mubr.f32.mxu0 0.0
        %3139 = vmatmul.mubr.f32.gmra.mrb[0].mxu0 %v3001
        %v3140 = vpop.f32.mrb[0].mxu0
        %v3141 = vadd.f32 0.0, %v3140
        %v3142 = vpop.f32.mrb[0].mxu0
        %3143 = vmatprep.mubr.f32.mxu0 0.0
        %3144 = vmatmul.mubr.f32.gmra.mrb[0].mxu0 %v3002
        %v3145 = vpop.f32.mrb[0].mxu0
        %v3146 = vadd.f32 0.0, %v3145
        %v3147 = vpop.f32.mrb[0].mxu0
        %3148 = vmatprep.mubr.f32.mxu0 0.0
        %3149 = vmatmul.mubr.f32.gmra.mrb[0].mxu0 %v3003
        %v3150 = vpop.f32.mrb[0].mxu0
        %v3151 = vadd.f32 0.0, %v3150
        %v3152 = vpop.f32.mrb[0].mxu0
        %3153 = vmatprep.mubr.f32.mxu0 0.0
        %3154 = vmatmul.mubr.f32.gmra.mrb[0].mxu0 %v3004
        %v3155 = vpop.f32.mrb[0].mxu0
        %v3156 = vadd.f32 0.0, %v3155
        %v3157 = vpop.f32.mrb[0].mxu0
        %3158 = vmatprep.mubr.f32.mxu0 0.0
        %3159 = vmatmul.mubr.f32.gmra.mrb[0].mxu0 %v3005
        %v3160 = vpop.f32.mrb[0].mxu0
        %v3161 = vadd.f32 0.0, %v3160
        %v3162 = vpop.f32.mrb[0].mxu0
        %3163 = vmatprep.mubr.f32.mxu0 0.0
        %3164 = vmatmul.mubr.f32.gmra.mrb[0].mxu0 %v3006
        %v3165 = vpop.f32.mrb[0].mxu0
        %v3166 = vadd.f32 0.0, %v3165
        %v3167 = vpop.f32.mrb[0].mxu0
        %3168 = vmatprep.mubr.f32.mxu0 0.0
        %3169 = vmatmul.mubr.f32.gmra.mrb[0].mxu0 %v3007
        %v3170 = vpop.f32.mrb[0].mxu0
        %v3171 = vadd.f32 0.0, %v3170
        %v3172 = vpop.f32.mrb[0].mxu0
        %3173 = vmatprep.mubr.f32.mxu0 0.0
        %3174 = vmatmul.mubr.f32.gmra.mrb[0].mxu0 %v3008
        %v3175 = vpop.f32.mrb[0].mxu0
        %v3176 = vadd.f32 0.0, %v3175
        %v3177 = vpop.f32.mrb[0].mxu0
        %3178 = vmatprep.mubr.f32.mxu0 0.0
        %3179 = vmatmul.mubr.f32.gmra.mrb[0].mxu0 %v3009
        %v3180 = vpop.f32.mrb[0].mxu0
        %v3181 = vadd.f32 0.0, %v3180
        %v3182 = vpop.f32.mrb[0].mxu0
        %3183 = vmatprep.mubr.f32.mxu0 0.0
        %3184 = vmatmul.mubr.f32.gmra.mrb[0].mxu0 %v3010
        %v3185 = vpop.f32.mrb[0].mxu0
        %v3186 = vadd.f32 0.0, %v3185
        %v3187 = vpop.f32.mrb[0].mxu0
        %3188 = vmatprep.mubr.f32.mxu0 0.0
        %3189 = vmatmul.mubr.f32.gmra.mrb[0].mxu0 %v3011
        %v3190 = vpop.f32.mrb[0].mxu0
        %v3191 = vadd.f32 0.0, %v3190
        %v3192 = vpop.f32.mrb[0].mxu0
        %3193 = vmatprep.mubr.f32.mxu0 0.0
        %3194 = vmatmul.mubr.f32.gmra.mrb[0].mxu0 %v3012
        %v3195 = vpop.f32.mrb[0].mxu0
        %v3196 = vadd.f32 0.0, %v3195
        %v3197 = vpop.f32.mrb[0].mxu0
        %3198 = vmatprep.mubr.f32.mxu0 0.0
        %3199 = vmatmul.mubr.f32.gmra.mrb[0].mxu0 %v3013
        %v3200 = vpop.f32.mrb[0].mxu0
        %v3201 = vadd.f32 0.0, %v3200
        %v3202 = vpop.f32.mrb[0].mxu0
        %3203 = vmatprep.mubr.f32.mxu0 0.0
        %3204 = vmatmul.mubr.f32.gmra.mrb[0].mxu0 %v3014
        %v3205 = vpop.f32.mrb[0].mxu0
        %v3206 = vadd.f32 0.0, %v3205
        %v3207 = vpop.f32.mrb[0].mxu0
        %3208 = vmatprep.mubr.f32.mxu0 0.0
        %3209 = vmatmul.mubr.f32.gmra.mrb[0].mxu0 %v3015
        %v3210 = vpop.f32.mrb[0].mxu0
        %v3211 = vadd.f32 0.0, %v3210
        %v3212 = vpop.f32.mrb[0].mxu0
        %3213 = vmatprep.mubr.f32.mxu0 0.0
        %3214 = vmatmul.mubr.f32.gmra.mrb[0].mxu0 %v3016
        %v3215 = vpop.f32.mrb[0].mxu0
        %v3216 = vadd.f32 0.0, %v3215
        %v3217 = vpop.f32.mrb[0].mxu0
        %3218 = vmatprep.mubr.f32.mxu0 0.0
        %3219 = vmatmul.mubr.f32.gmra.mrb[0].mxu0 %v3017
        %v3220 = vpop.f32.mrb[0].mxu0
        %v3221 = vadd.f32 0.0, %v3220
        %v3222 = vpop.f32.mrb[0].mxu0
        %3223 = vmatprep.mubr.f32.mxu0 0.0
        %3224 = vmatmul.mubr.f32.gmra.mrb[0].mxu0 %v3018
        %v3225 = vpop.f32.mrb[0].mxu0
        %v3226 = vadd.f32 0.0, %v3225
        %v3227 = vpop.f32.mrb[0].mxu0
        %3228 = vmatprep.mubr.f32.mxu0 0.0
        %3229 = vmatmul.mubr.f32.gmra.mrb[0].mxu0 %v3019
        %v3230 = vpop.f32.mrb[0].mxu0
        %v3231 = vadd.f32 0.0, %v3230
        %v3232 = vpop.f32.mrb[0].mxu0
        %3233 = vmatprep.mubr.f32.mxu0 0.0
        %3234 = vmatmul.mubr.f32.gmra.mrb[0].mxu0 %v3020
        %v3235 = vpop.f32.mrb[0].mxu0
        %v3236 = vadd.f32 0.0, %v3235
        %v3237 = vpop.f32.mrb[0].mxu0
        %3238 = vmatprep.mubr.f32.mxu0 0.0
        %3239 = vmatmul.mubr.f32.gmra.mrb[0].mxu0 %v3021
        %v3240 = vpop.f32.mrb[0].mxu0
        %v3241 = vadd.f32 0.0, %v3240
        %v3242 = vpop.f32.mrb[0].mxu0
        %3243 = vmatprep.mubr.f32.mxu0 0.0
        %3244 = vmatmul.mubr.f32.gmra.mrb[0].mxu0 %v3022
        %v3245 = vpop.f32.mrb[0].mxu0
        %v3246 = vadd.f32 0.0, %v3245
        %v3247 = vpop.f32.mrb[0].mxu0
        %3248 = vmatprep.mubr.f32.mxu0 0.0
        %3249 = vmatmul.mubr.f32.gmra.mrb[0].mxu0 %v3023
        %v3250 = vpop.f32.mrb[0].mxu0
        %v3251 = vadd.f32 0.0, %v3250
        %v3252 = vpop.f32.mrb[0].mxu0
        %3253 = vmatprep.mubr.f32.mxu0 0.0
        %3254 = vmatmul.mubr.f32.gmra.mrb[0].mxu0 %v3024
        %v3255 = vpop.f32.mrb[0].mxu0
        %v3256 = vadd.f32 0.0, %v3255
        %v3257 = vpop.f32.mrb[0].mxu0
        %3258 = vmatprep.mubr.f32.mxu0 0.0
        %3259 = vmatmul.mubr.f32.gmra.mrb[0].mxu0 %v3025
        %v3260 = vpop.f32.mrb[0].mxu0
        %v3261 = vadd.f32 0.0, %v3260
        %v3262 = vpop.f32.mrb[0].mxu0
        %3263 = vmatprep.mubr.f32.mxu0 0.0
        %3264 = vmatmul.mubr.f32.gmra.mrb[0].mxu0 %v3026
        %v3265 = vpop.f32.mrb[0].mxu0
        %v3266 = vadd.f32 0.0, %v3265
        %v3267 = vpop.f32.mrb[0].mxu0
        %3268 = vdwg.mxu0
        %v3269 = vadd.f32 %v2963, %v3111
        %v3270 = vadd.f32 %v2964, %v3116
        %v3271 = vadd.f32 %v2965, %v3121
        %v3272 = vadd.f32 %v2966, %v3126
        %v3273 = vadd.f32 %v2967, %v3131
        %v3274 = vadd.f32 %v2968, %v3136
        %v3275 = vadd.f32 %v2969, %v3141
        %v3276 = vadd.f32 %v2970, %v3146
        %v3277 = vadd.f32 %v2971, %v3151
        %v3278 = vadd.f32 %v2972, %v3156
        %v3279 = vadd.f32 %v2973, %v3161
        %v3280 = vadd.f32 %v2974, %v3166
        %v3281 = vadd.f32 %v2975, %v3171
        %v3282 = vadd.f32 %v2976, %v3176
        %v3283 = vadd.f32 %v2977, %v3181
        %v3284 = vadd.f32 %v2978, %v3186
        %v3285 = vadd.f32 %v2979, %v3191
        %v3286 = vadd.f32 %v2980, %v3196
        %v3287 = vadd.f32 %v2981, %v3201
        %v3288 = vadd.f32 %v2982, %v3206
        %v3289 = vadd.f32 %v2983, %v3211
        %v3290 = vadd.f32 %v2984, %v3216
        %v3291 = vadd.f32 %v2985, %v3221
        %v3292 = vadd.f32 %v2986, %v3226
        %v3293 = vadd.f32 %v2987, %v3231
        %v3294 = vadd.f32 %v2988, %v3236
        %v3295 = vadd.f32 %v2989, %v3241
        %v3296 = vadd.f32 %v2990, %v3246
        %v3297 = vadd.f32 %v2991, %v3251
        %v3298 = vadd.f32 %v2992, %v3256
        %v3299 = vadd.f32 %v2993, %v3261
        %v3300 = vadd.f32 %v2994, %v3266
        %v3302 = vlaneseq
        %v3303 = vshrl.u32 %v3302, 7
        %v3304 = vsub.s32 0, %v3303
        %v3305 = vrot.slane %v606, %v3304
        %v3307 = vadd.f32 %v3269, %v3305
        %v3308 = vadd.f32 %v3270, %v3305
        %v3309 = vadd.f32 %v3271, %v3305
        %v3310 = vadd.f32 %v3272, %v3305
        %v3311 = vadd.f32 %v3273, %v3305
        %v3312 = vadd.f32 %v3274, %v3305
        %v3313 = vadd.f32 %v3275, %v3305
        %v3314 = vadd.f32 %v3276, %v3305
        %v3315 = vadd.f32 %v3277, %v3305
        %v3316 = vadd.f32 %v3278, %v3305
        %v3317 = vadd.f32 %v3279, %v3305
        %v3318 = vadd.f32 %v3280, %v3305
        %v3319 = vadd.f32 %v3281, %v3305
        %v3320 = vadd.f32 %v3282, %v3305
        %v3321 = vadd.f32 %v3283, %v3305
        %v3322 = vadd.f32 %v3284, %v3305
        %v3323 = vadd.f32 %v3285, %v3305
        %v3324 = vadd.f32 %v3286, %v3305
        %v3325 = vadd.f32 %v3287, %v3305
        %v3326 = vadd.f32 %v3288, %v3305
        %v3327 = vadd.f32 %v3289, %v3305
        %v3328 = vadd.f32 %v3290, %v3305
        %v3329 = vadd.f32 %v3291, %v3305
        %v3330 = vadd.f32 %v3292, %v3305
        %v3331 = vadd.f32 %v3293, %v3305
        %v3332 = vadd.f32 %v3294, %v3305
        %v3333 = vadd.f32 %v3295, %v3305
        %v3334 = vadd.f32 %v3296, %v3305
        %v3335 = vadd.f32 %v3297, %v3305
        %v3336 = vadd.f32 %v3298, %v3305
        %v3337 = vadd.f32 %v3299, %v3305
        %v3338 = vadd.f32 %v3300, %v3305
        %v3339 = vmax.f32 %v3307, 0.0
        %v3340 = vmax.f32 %v3308, 0.0
        %v3341 = vmax.f32 %v3309, 0.0
        %v3342 = vmax.f32 %v3310, 0.0
        %v3343 = vmax.f32 %v3311, 0.0
        %v3344 = vmax.f32 %v3312, 0.0
        %v3345 = vmax.f32 %v3313, 0.0
        %v3346 = vmax.f32 %v3314, 0.0
        %v3347 = vmax.f32 %v3315, 0.0
        %v3348 = vmax.f32 %v3316, 0.0
        %v3349 = vmax.f32 %v3317, 0.0
        %v3350 = vmax.f32 %v3318, 0.0
        %v3351 = vmax.f32 %v3319, 0.0
        %v3352 = vmax.f32 %v3320, 0.0
        %v3353 = vmax.f32 %v3321, 0.0
        %v3354 = vmax.f32 %v3322, 0.0
        %v3355 = vmax.f32 %v3323, 0.0
        %v3356 = vmax.f32 %v3324, 0.0
        %v3357 = vmax.f32 %v3325, 0.0
        %v3358 = vmax.f32 %v3326, 0.0
        %v3359 = vmax.f32 %v3327, 0.0
        %v3360 = vmax.f32 %v3328, 0.0
        %v3361 = vmax.f32 %v3329, 0.0
        %v3362 = vmax.f32 %v3330, 0.0
        %v3363 = vmax.f32 %v3331, 0.0
        %v3364 = vmax.f32 %v3332, 0.0
        %v3365 = vmax.f32 %v3333, 0.0
        %v3366 = vmax.f32 %v3334, 0.0
        %v3367 = vmax.f32 %v3335, 0.0
        %v3368 = vmax.f32 %v3336, 0.0
        %v3369 = vmax.f32 %v3337, 0.0
        %v3370 = vmax.f32 %v3338, 0.0
        %s3371 = scalar_lea.vmem [#allocation3], 32
        %3372 = vst [vmem:[%s3371 + $0x8] sm:$0xff] %v3339
        %3373 = vst [vmem:[%s3371 + $0x10] sm:$0xff] %v3340
        %3374 = vst [vmem:[%s3371 + $0x28] sm:$0xff] %v3341
        %3375 = vst [vmem:[%s3371 + $0x30] sm:$0xff] %v3342
        %3376 = vst [vmem:[%s3371 + $0x48] sm:$0xff] %v3343
        %3377 = vst [vmem:[%s3371 + $0x50] sm:$0xff] %v3344
        %3378 = vst [vmem:[%s3371 + $0x68] sm:$0xff] %v3345
        %3379 = vst [vmem:[%s3371 + $0x70] sm:$0xff] %v3346
        %3380 = vst [vmem:[%s3371 + $0x88] sm:$0xff] %v3347
        %3381 = vst [vmem:[%s3371 + $0x90] sm:$0xff] %v3348
        %3382 = vst [vmem:[%s3371 + $0xa8] sm:$0xff] %v3349
        %3383 = vst [vmem:[%s3371 + $0xb0] sm:$0xff] %v3350
        %3384 = vst [vmem:[%s3371 + $0xc8] sm:$0xff] %v3351
        %3385 = vst [vmem:[%s3371 + $0xd0] sm:$0xff] %v3352
        %3386 = vst [vmem:[%s3371 + $0xe8] sm:$0xff] %v3353
        %3387 = vst [vmem:[%s3371 + $0xf0] sm:$0xff] %v3354
        %3388 = vst [vmem:[%s3371 + $0x108] sm:$0xff] %v3355
        %3389 = vst [vmem:[%s3371 + $0x110] sm:$0xff] %v3356
        %3390 = vst [vmem:[%s3371 + $0x128] sm:$0xff] %v3357
        %3391 = vst [vmem:[%s3371 + $0x130] sm:$0xff] %v3358
        %3392 = vst [vmem:[%s3371 + $0x148] sm:$0xff] %v3359
        %3393 = vst [vmem:[%s3371 + $0x150] sm:$0xff] %v3360
        %3394 = vst [vmem:[%s3371 + $0x168] sm:$0xff] %v3361
        %3395 = vst [vmem:[%s3371 + $0x170] sm:$0xff] %v3362
        %3396 = vst [vmem:[%s3371 + $0x188] sm:$0xff] %v3363
        %3397 = vst [vmem:[%s3371 + $0x190] sm:$0xff] %v3364
        %3398 = vst [vmem:[%s3371 + $0x1a8] sm:$0xff] %v3365
        %3399 = vst [vmem:[%s3371 + $0x1b0] sm:$0xff] %v3366
        %3400 = vst [vmem:[%s3371 + $0x1c8] sm:$0xff] %v3367
        %3401 = vst [vmem:[%s3371 + $0x1d0] sm:$0xff] %v3368
        %3402 = vst [vmem:[%s3371 + $0x1e8] sm:$0xff] %v3369
        %3403 = vst [vmem:[%s3371 + $0x1f0] sm:$0xff] %v3370
        %v3404 = vld [vmem:[#allocation3 + $0x7] sm:$0xff]
        %v3405 = vld [vmem:[#allocation3 + $0xf] sm:$0xff]
        %v3406 = vld [vmem:[#allocation3 + $0x27] sm:$0xff]
        %v3407 = vld [vmem:[#allocation3 + $0x2f] sm:$0xff]
        %v3408 = vld [vmem:[#allocation3 + $0x47] sm:$0xff]
        %v3409 = vld [vmem:[#allocation3 + $0x4f] sm:$0xff]
        %v3410 = vld [vmem:[#allocation3 + $0x67] sm:$0xff]
        %v3411 = vld [vmem:[#allocation3 + $0x6f] sm:$0xff]
        %v3412 = vld [vmem:[#allocation3 + $0x87] sm:$0xff]
        %v3413 = vld [vmem:[#allocation3 + $0x8f] sm:$0xff]
        %v3414 = vld [vmem:[#allocation3 + $0xa7] sm:$0xff]
        %v3415 = vld [vmem:[#allocation3 + $0xaf] sm:$0xff]
        %v3416 = vld [vmem:[#allocation3 + $0xc7] sm:$0xff]
        %v3417 = vld [vmem:[#allocation3 + $0xcf] sm:$0xff]
        %v3418 = vld [vmem:[#allocation3 + $0xe7] sm:$0xff]
        %v3419 = vld [vmem:[#allocation3 + $0xef] sm:$0xff]
        %v3420 = vld [vmem:[#allocation3 + $0x107] sm:$0xff]
        %v3421 = vld [vmem:[#allocation3 + $0x10f] sm:$0xff]
        %v3422 = vld [vmem:[#allocation3 + $0x127] sm:$0xff]
        %v3423 = vld [vmem:[#allocation3 + $0x12f] sm:$0xff]
        %v3424 = vld [vmem:[#allocation3 + $0x147] sm:$0xff]
        %v3425 = vld [vmem:[#allocation3 + $0x14f] sm:$0xff]
        %v3426 = vld [vmem:[#allocation3 + $0x167] sm:$0xff]
        %v3427 = vld [vmem:[#allocation3 + $0x16f] sm:$0xff]
        %v3428 = vld [vmem:[#allocation3 + $0x187] sm:$0xff]
        %v3429 = vld [vmem:[#allocation3 + $0x18f] sm:$0xff]
        %v3430 = vld [vmem:[#allocation3 + $0x1a7] sm:$0xff]
        %v3431 = vld [vmem:[#allocation3 + $0x1af] sm:$0xff]
        %v3432 = vld [vmem:[#allocation3 + $0x1c7] sm:$0xff]
        %v3433 = vld [vmem:[#allocation3 + $0x1cf] sm:$0xff]
        %v3434 = vld [vmem:[#allocation3 + $0x1e7] sm:$0xff]
        %v3435 = vld [vmem:[#allocation3 + $0x1ef] sm:$0xff]
        %v3436 = vld [vmem:[%s2] sm:$0xff]
        %v3437 = vld [vmem:[%s2 + $0x8] sm:$0xff]
        %v3438 = vld [vmem:[%s2 + $0x10] sm:$0xff]
        %v3439 = vld [vmem:[%s2 + $0x18] sm:$0xff]
        %v3440 = vld [vmem:[%s2 + $0x20] sm:$0xff]
        %v3441 = vld [vmem:[%s2 + $0x28] sm:$0xff]
        %v3442 = vld [vmem:[%s2 + $0x30] sm:$0xff]
        %v3443 = vld [vmem:[%s2 + $0x38] sm:$0xff]
        %v3444 = vld [vmem:[%s2 + $0x40] sm:$0xff]
        %v3445 = vld [vmem:[%s2 + $0x48] sm:$0xff]
        %v3446 = vld [vmem:[%s2 + $0x50] sm:$0xff]
        %v3447 = vld [vmem:[%s2 + $0x58] sm:$0xff]
        %v3448 = vld [vmem:[%s2 + $0x60] sm:$0xff]
        %v3449 = vld [vmem:[%s2 + $0x68] sm:$0xff]
        %v3450 = vld [vmem:[%s2 + $0x70] sm:$0xff]
        %v3451 = vld [vmem:[%s2 + $0x78] sm:$0xff]
        %v3452 = vld [vmem:[#allocation3 + $0x8] sm:$0xff]
        %v3453 = vld [vmem:[#allocation3 + $0x10] sm:$0xff]
        %v3454 = vld [vmem:[#allocation3 + $0x28] sm:$0xff]
        %v3455 = vld [vmem:[#allocation3 + $0x30] sm:$0xff]
        %v3456 = vld [vmem:[#allocation3 + $0x48] sm:$0xff]
        %v3457 = vld [vmem:[#allocation3 + $0x50] sm:$0xff]
        %v3458 = vld [vmem:[#allocation3 + $0x68] sm:$0xff]
        %v3459 = vld [vmem:[#allocation3 + $0x70] sm:$0xff]
        %v3460 = vld [vmem:[#allocation3 + $0x88] sm:$0xff]
        %v3461 = vld [vmem:[#allocation3 + $0x90] sm:$0xff]
        %v3462 = vld [vmem:[#allocation3 + $0xa8] sm:$0xff]
        %v3463 = vld [vmem:[#allocation3 + $0xb0] sm:$0xff]
        %v3464 = vld [vmem:[#allocation3 + $0xc8] sm:$0xff]
        %v3465 = vld [vmem:[#allocation3 + $0xd0] sm:$0xff]
        %v3466 = vld [vmem:[#allocation3 + $0xe8] sm:$0xff]
        %v3467 = vld [vmem:[#allocation3 + $0xf0] sm:$0xff]
        %v3468 = vld [vmem:[#allocation3 + $0x108] sm:$0xff]
        %v3469 = vld [vmem:[#allocation3 + $0x110] sm:$0xff]
        %v3470 = vld [vmem:[#allocation3 + $0x128] sm:$0xff]
        %v3471 = vld [vmem:[#allocation3 + $0x130] sm:$0xff]
        %v3472 = vld [vmem:[#allocation3 + $0x148] sm:$0xff]
        %v3473 = vld [vmem:[#allocation3 + $0x150] sm:$0xff]
        %v3474 = vld [vmem:[#allocation3 + $0x168] sm:$0xff]
        %v3475 = vld [vmem:[#allocation3 + $0x170] sm:$0xff]
        %v3476 = vld [vmem:[#allocation3 + $0x188] sm:$0xff]
        %v3477 = vld [vmem:[#allocation3 + $0x190] sm:$0xff]
        %v3478 = vld [vmem:[#allocation3 + $0x1a8] sm:$0xff]
        %v3479 = vld [vmem:[#allocation3 + $0x1b0] sm:$0xff]
        %v3480 = vld [vmem:[#allocation3 + $0x1c8] sm:$0xff]
        %v3481 = vld [vmem:[#allocation3 + $0x1d0] sm:$0xff]
        %v3482 = vld [vmem:[#allocation3 + $0x1e8] sm:$0xff]
        %v3483 = vld [vmem:[#allocation3 + $0x1f0] sm:$0xff]
        %s3484 = scalar_lea.vmem %s2, 128
        %v3485 = vld [vmem:[%s3484] sm:$0xff]
        %v3486 = vld [vmem:[%s3484 + $0x8] sm:$0xff]
        %v3487 = vld [vmem:[%s3484 + $0x10] sm:$0xff]
        %v3488 = vld [vmem:[%s3484 + $0x18] sm:$0xff]
        %v3489 = vld [vmem:[%s3484 + $0x20] sm:$0xff]
        %v3490 = vld [vmem:[%s3484 + $0x28] sm:$0xff]
        %v3491 = vld [vmem:[%s3484 + $0x30] sm:$0xff]
        %v3492 = vld [vmem:[%s3484 + $0x38] sm:$0xff]
        %v3493 = vld [vmem:[%s3484 + $0x40] sm:$0xff]
        %v3494 = vld [vmem:[%s3484 + $0x48] sm:$0xff]
        %v3495 = vld [vmem:[%s3484 + $0x50] sm:$0xff]
        %v3496 = vld [vmem:[%s3484 + $0x58] sm:$0xff]
        %v3497 = vld [vmem:[%s3484 + $0x60] sm:$0xff]
        %v3498 = vld [vmem:[%s3484 + $0x68] sm:$0xff]
        %v3499 = vld [vmem:[%s3484 + $0x70] sm:$0xff]
        %v3500 = vld [vmem:[%s3484 + $0x78] sm:$0xff]
        %3501 = vmatprep.subr.mxu0 0.0
        %3502 = vmatpush1.msra.mxu0 %v3485
        %3503 = vmatprep.subr.mxu0 0.0
        %3504 = vmatpush1.msra.mxu0 %v3486
        %3505 = vmatprep.subr.mxu0 0.0
        %3506 = vmatpush1.msra.mxu0 %v3487
        %3507 = vmatprep.subr.mxu0 0.0
        %3508 = vmatpush1.msra.mxu0 %v3488
        %3509 = vmatprep.subr.mxu0 0.0
        %3510 = vmatpush1.msra.mxu0 %v3489
        %3511 = vmatprep.subr.mxu0 0.0
        %3512 = vmatpush1.msra.mxu0 %v3490
        %3513 = vmatprep.subr.mxu0 0.0
        %3514 = vmatpush1.msra.mxu0 %v3491
        %3515 = vmatprep.subr.mxu0 0.0
        %3516 = vmatpush1.msra.mxu0 %v3492
        %3517 = vmatprep.subr.mxu0 0.0
        %3518 = vmatpush1.msra.mxu0 %v3493
        %3519 = vmatprep.subr.mxu0 0.0
        %3520 = vmatpush1.msra.mxu0 %v3494
        %3521 = vmatprep.subr.mxu0 0.0
        %3522 = vmatpush1.msra.mxu0 %v3495
        %3523 = vmatprep.subr.mxu0 0.0
        %3524 = vmatpush1.msra.mxu0 %v3496
        %3525 = vmatprep.subr.mxu0 0.0
        %3526 = vmatpush1.msra.mxu0 %v3497
        %3527 = vmatprep.subr.mxu0 0.0
        %3528 = vmatpush1.msra.mxu0 %v3498
        %3529 = vmatprep.subr.mxu0 0.0
        %3530 = vmatpush1.msra.mxu0 %v3499
        %3531 = vmatprep.subr.mxu0 0.0
        %3532 = vmatpush1.msra.mxu0 %v3500
        %3533 = vmatprep.subr.mxu0 0.0
        %3534 = vmatpush1.msra.mxu0 0.0
        %3535 = vmatprep.subr.mxu0 0.0
        %3536 = vmatpush1.msra.mxu0 0.0
        %3537 = vmatprep.subr.mxu0 0.0
        %3538 = vmatpush1.msra.mxu0 0.0
        %3539 = vmatprep.subr.mxu0 0.0
        %3540 = vmatpush1.msra.mxu0 0.0
        %3541 = vmatprep.subr.mxu0 0.0
        %3542 = vmatpush1.msra.mxu0 0.0
        %3543 = vmatprep.subr.mxu0 0.0
        %3544 = vmatpush1.msra.mxu0 0.0
        %3545 = vmatprep.subr.mxu0 0.0
        %3546 = vmatpush1.msra.mxu0 0.0
        %3547 = vmatprep.subr.mxu0 0.0
        %3548 = vmatpush1.msra.mxu0 0.0
        %3549 = vmatprep.subr.mxu0 0.0
        %3550 = vmatpush1.msra.mxu0 0.0
        %3551 = vmatprep.subr.mxu0 0.0
        %3552 = vmatpush1.msra.mxu0 0.0
        %3553 = vmatprep.subr.mxu0 0.0
        %3554 = vmatpush1.msra.mxu0 0.0
        %3555 = vmatprep.subr.mxu0 0.0
        %3556 = vmatpush1.msra.mxu0 0.0
        %3557 = vmatprep.subr.mxu0 0.0
        %3558 = vmatpush1.msra.mxu0 0.0
        %3559 = vmatprep.subr.mxu0 0.0
        %3560 = vmatpush1.msra.mxu0 0.0
        %3561 = vmatprep.subr.mxu0 0.0
        %3562 = vmatpush1.msra.mxu0 0.0
        %3563 = vmatprep.subr.mxu0 0.0
        %3564 = vmatpush1.msra.mxu0 0.0
        %3565 = vmatprep.mubr.f32.mxu0 0.0
        %3566 = vmatmul.mubr.f32.gmra.mrb[0].mxu0 %v3452
        %v3567 = vpop.f32.mrb[0].mxu0
        %v3568 = vadd.f32 0.0, %v3567
        %v3569 = vpop.f32.mrb[0].mxu0
        %3570 = vmatprep.mubr.f32.mxu0 0.0
        %3571 = vmatmul.mubr.f32.gmra.mrb[0].mxu0 %v3453
        %v3572 = vpop.f32.mrb[0].mxu0
        %v3573 = vadd.f32 0.0, %v3572
        %v3574 = vpop.f32.mrb[0].mxu0
        %3575 = vmatprep.mubr.f32.mxu0 0.0
        %3576 = vmatmul.mubr.f32.gmra.mrb[0].mxu0 %v3454
        %v3577 = vpop.f32.mrb[0].mxu0
        %v3578 = vadd.f32 0.0, %v3577
        %v3579 = vpop.f32.mrb[0].mxu0
        %3580 = vmatprep.mubr.f32.mxu0 0.0
        %3581 = vmatmul.mubr.f32.gmra.mrb[0].mxu0 %v3455
        %v3582 = vpop.f32.mrb[0].mxu0
        %v3583 = vadd.f32 0.0, %v3582
        %v3584 = vpop.f32.mrb[0].mxu0
        %3585 = vmatprep.mubr.f32.mxu0 0.0
        %3586 = vmatmul.mubr.f32.gmra.mrb[0].mxu0 %v3456
        %v3587 = vpop.f32.mrb[0].mxu0
        %v3588 = vadd.f32 0.0, %v3587
        %v3589 = vpop.f32.mrb[0].mxu0
        %3590 = vmatprep.mubr.f32.mxu0 0.0
        %3591 = vmatmul.mubr.f32.gmra.mrb[0].mxu0 %v3457
        %v3592 = vpop.f32.mrb[0].mxu0
        %v3593 = vadd.f32 0.0, %v3592
        %v3594 = vpop.f32.mrb[0].mxu0
        %3595 = vmatprep.mubr.f32.mxu0 0.0
        %3596 = vmatmul.mubr.f32.gmra.mrb[0].mxu0 %v3458
        %v3597 = vpop.f32.mrb[0].mxu0
        %v3598 = vadd.f32 0.0, %v3597
        %v3599 = vpop.f32.mrb[0].mxu0
        %3600 = vmatprep.mubr.f32.mxu0 0.0
        %3601 = vmatmul.mubr.f32.gmra.mrb[0].mxu0 %v3459
        %v3602 = vpop.f32.mrb[0].mxu0
        %v3603 = vadd.f32 0.0, %v3602
        %v3604 = vpop.f32.mrb[0].mxu0
        %3605 = vmatprep.mubr.f32.mxu0 0.0
        %3606 = vmatmul.mubr.f32.gmra.mrb[0].mxu0 %v3460
        %v3607 = vpop.f32.mrb[0].mxu0
        %v3608 = vadd.f32 0.0, %v3607
        %v3609 = vpop.f32.mrb[0].mxu0
        %3610 = vmatprep.mubr.f32.mxu0 0.0
        %3611 = vmatmul.mubr.f32.gmra.mrb[0].mxu0 %v3461
        %v3612 = vpop.f32.mrb[0].mxu0
        %v3613 = vadd.f32 0.0, %v3612
        %v3614 = vpop.f32.mrb[0].mxu0
        %3615 = vmatprep.mubr.f32.mxu0 0.0
        %3616 = vmatmul.mubr.f32.gmra.mrb[0].mxu0 %v3462
        %v3617 = vpop.f32.mrb[0].mxu0
        %v3618 = vadd.f32 0.0, %v3617
        %v3619 = vpop.f32.mrb[0].mxu0
        %3620 = vmatprep.mubr.f32.mxu0 0.0
        %3621 = vmatmul.mubr.f32.gmra.mrb[0].mxu0 %v3463
        %v3622 = vpop.f32.mrb[0].mxu0
        %v3623 = vadd.f32 0.0, %v3622
        %v3624 = vpop.f32.mrb[0].mxu0
        %3625 = vmatprep.mubr.f32.mxu0 0.0
        %3626 = vmatmul.mubr.f32.gmra.mrb[0].mxu0 %v3464
        %v3627 = vpop.f32.mrb[0].mxu0
        %v3628 = vadd.f32 0.0, %v3627
        %v3629 = vpop.f32.mrb[0].mxu0
        %3630 = vmatprep.mubr.f32.mxu0 0.0
        %3631 = vmatmul.mubr.f32.gmra.mrb[0].mxu0 %v3465
        %v3632 = vpop.f32.mrb[0].mxu0
        %v3633 = vadd.f32 0.0, %v3632
        %v3634 = vpop.f32.mrb[0].mxu0
        %3635 = vmatprep.mubr.f32.mxu0 0.0
        %3636 = vmatmul.mubr.f32.gmra.mrb[0].mxu0 %v3466
        %v3637 = vpop.f32.mrb[0].mxu0
        %v3638 = vadd.f32 0.0, %v3637
        %v3639 = vpop.f32.mrb[0].mxu0
        %3640 = vmatprep.mubr.f32.mxu0 0.0
        %3641 = vmatmul.mubr.f32.gmra.mrb[0].mxu0 %v3467
        %v3642 = vpop.f32.mrb[0].mxu0
        %v3643 = vadd.f32 0.0, %v3642
        %v3644 = vpop.f32.mrb[0].mxu0
        %3645 = vmatprep.mubr.f32.mxu0 0.0
        %3646 = vmatmul.mubr.f32.gmra.mrb[0].mxu0 %v3468
        %v3647 = vpop.f32.mrb[0].mxu0
        %v3648 = vadd.f32 0.0, %v3647
        %v3649 = vpop.f32.mrb[0].mxu0
        %3650 = vmatprep.mubr.f32.mxu0 0.0
        %3651 = vmatmul.mubr.f32.gmra.mrb[0].mxu0 %v3469
        %v3652 = vpop.f32.mrb[0].mxu0
        %v3653 = vadd.f32 0.0, %v3652
        %v3654 = vpop.f32.mrb[0].mxu0
        %3655 = vmatprep.mubr.f32.mxu0 0.0
        %3656 = vmatmul.mubr.f32.gmra.mrb[0].mxu0 %v3470
        %v3657 = vpop.f32.mrb[0].mxu0
        %v3658 = vadd.f32 0.0, %v3657
        %v3659 = vpop.f32.mrb[0].mxu0
        %3660 = vmatprep.mubr.f32.mxu0 0.0
        %3661 = vmatmul.mubr.f32.gmra.mrb[0].mxu0 %v3471
        %v3662 = vpop.f32.mrb[0].mxu0
        %v3663 = vadd.f32 0.0, %v3662
        %v3664 = vpop.f32.mrb[0].mxu0
        %3665 = vmatprep.mubr.f32.mxu0 0.0
        %3666 = vmatmul.mubr.f32.gmra.mrb[0].mxu0 %v3472
        %v3667 = vpop.f32.mrb[0].mxu0
        %v3668 = vadd.f32 0.0, %v3667
        %v3669 = vpop.f32.mrb[0].mxu0
        %3670 = vmatprep.mubr.f32.mxu0 0.0
        %3671 = vmatmul.mubr.f32.gmra.mrb[0].mxu0 %v3473
        %v3672 = vpop.f32.mrb[0].mxu0
        %v3673 = vadd.f32 0.0, %v3672
        %v3674 = vpop.f32.mrb[0].mxu0
        %3675 = vmatprep.mubr.f32.mxu0 0.0
        %3676 = vmatmul.mubr.f32.gmra.mrb[0].mxu0 %v3474
        %v3677 = vpop.f32.mrb[0].mxu0
        %v3678 = vadd.f32 0.0, %v3677
        %v3679 = vpop.f32.mrb[0].mxu0
        %3680 = vmatprep.mubr.f32.mxu0 0.0
        %3681 = vmatmul.mubr.f32.gmra.mrb[0].mxu0 %v3475
        %v3682 = vpop.f32.mrb[0].mxu0
        %v3683 = vadd.f32 0.0, %v3682
        %v3684 = vpop.f32.mrb[0].mxu0
        %3685 = vmatprep.mubr.f32.mxu0 0.0
        %3686 = vmatmul.mubr.f32.gmra.mrb[0].mxu0 %v3476
        %v3687 = vpop.f32.mrb[0].mxu0
        %v3688 = vadd.f32 0.0, %v3687
        %v3689 = vpop.f32.mrb[0].mxu0
        %3690 = vmatprep.mubr.f32.mxu0 0.0
        %3691 = vmatmul.mubr.f32.gmra.mrb[0].mxu0 %v3477
        %v3692 = vpop.f32.mrb[0].mxu0
        %v3693 = vadd.f32 0.0, %v3692
        %v3694 = vpop.f32.mrb[0].mxu0
        %3695 = vmatprep.mubr.f32.mxu0 0.0
        %3696 = vmatmul.mubr.f32.gmra.mrb[0].mxu0 %v3478
        %v3697 = vpop.f32.mrb[0].mxu0
        %v3698 = vadd.f32 0.0, %v3697
        %v3699 = vpop.f32.mrb[0].mxu0
        %3700 = vmatprep.mubr.f32.mxu0 0.0
        %3701 = vmatmul.mubr.f32.gmra.mrb[0].mxu0 %v3479
        %v3702 = vpop.f32.mrb[0].mxu0
        %v3703 = vadd.f32 0.0, %v3702
        %v3704 = vpop.f32.mrb[0].mxu0
        %3705 = vmatprep.mubr.f32.mxu0 0.0
        %3706 = vmatmul.mubr.f32.gmra.mrb[0].mxu0 %v3480
        %v3707 = vpop.f32.mrb[0].mxu0
        %v3708 = vadd.f32 0.0, %v3707
        %v3709 = vpop.f32.mrb[0].mxu0
        %3710 = vmatprep.mubr.f32.mxu0 0.0
        %3711 = vmatmul.mubr.f32.gmra.mrb[0].mxu0 %v3481
        %v3712 = vpop.f32.mrb[0].mxu0
        %v3713 = vadd.f32 0.0, %v3712
        %v3714 = vpop.f32.mrb[0].mxu0
        %3715 = vmatprep.mubr.f32.mxu0 0.0
        %3716 = vmatmul.mubr.f32.gmra.mrb[0].mxu0 %v3482
        %v3717 = vpop.f32.mrb[0].mxu0
        %v3718 = vadd.f32 0.0, %v3717
        %v3719 = vpop.f32.mrb[0].mxu0
        %3720 = vmatprep.mubr.f32.mxu0 0.0
        %3721 = vmatmul.mubr.f32.gmra.mrb[0].mxu0 %v3483
        %v3722 = vpop.f32.mrb[0].mxu0
        %v3723 = vadd.f32 0.0, %v3722
        %v3724 = vpop.f32.mrb[0].mxu0
        %3725 = vdwg.mxu0
        %3726 = vmatprep.subr.mxu0 0.0
        %3727 = vmatpush1.msra.mxu0 %v3436
        %3728 = vmatprep.subr.mxu0 0.0
        %3729 = vmatpush1.msra.mxu0 %v3437
        %3730 = vmatprep.subr.mxu0 0.0
        %3731 = vmatpush1.msra.mxu0 %v3438
        %3732 = vmatprep.subr.mxu0 0.0
        %3733 = vmatpush1.msra.mxu0 %v3439
        %3734 = vmatprep.subr.mxu0 0.0
        %3735 = vmatpush1.msra.mxu0 %v3440
        %3736 = vmatprep.subr.mxu0 0.0
        %3737 = vmatpush1.msra.mxu0 %v3441
        %3738 = vmatprep.subr.mxu0 0.0
        %3739 = vmatpush1.msra.mxu0 %v3442
        %3740 = vmatprep.subr.mxu0 0.0
        %3741 = vmatpush1.msra.mxu0 %v3443
        %3742 = vmatprep.subr.mxu0 0.0
        %3743 = vmatpush1.msra.mxu0 %v3444
        %3744 = vmatprep.subr.mxu0 0.0
        %3745 = vmatpush1.msra.mxu0 %v3445
        %3746 = vmatprep.subr.mxu0 0.0
        %3747 = vmatpush1.msra.mxu0 %v3446
        %3748 = vmatprep.subr.mxu0 0.0
        %3749 = vmatpush1.msra.mxu0 %v3447
        %3750 = vmatprep.subr.mxu0 0.0
        %3751 = vmatpush1.msra.mxu0 %v3448
        %3752 = vmatprep.subr.mxu0 0.0
        %3753 = vmatpush1.msra.mxu0 %v3449
        %3754 = vmatprep.subr.mxu0 0.0
        %3755 = vmatpush1.msra.mxu0 %v3450
        %3756 = vmatprep.subr.mxu0 0.0
        %3757 = vmatpush1.msra.mxu0 %v3451
        %3758 = vmatprep.subr.mxu0 0.0
        %3759 = vmatpush1.msra.mxu0 0.0
        %3760 = vmatprep.subr.mxu0 0.0
        %3761 = vmatpush1.msra.mxu0 0.0
        %3762 = vmatprep.subr.mxu0 0.0
        %3763 = vmatpush1.msra.mxu0 0.0
        %3764 = vmatprep.subr.mxu0 0.0
        %3765 = vmatpush1.msra.mxu0 0.0
        %3766 = vmatprep.subr.mxu0 0.0
        %3767 = vmatpush1.msra.mxu0 0.0
        %3768 = vmatprep.subr.mxu0 0.0
        %3769 = vmatpush1.msra.mxu0 0.0
        %3770 = vmatprep.subr.mxu0 0.0
        %3771 = vmatpush1.msra.mxu0 0.0
        %3772 = vmatprep.subr.mxu0 0.0
        %3773 = vmatpush1.msra.mxu0 0.0
        %3774 = vmatprep.subr.mxu0 0.0
        %3775 = vmatpush1.msra.mxu0 0.0
        %3776 = vmatprep.subr.mxu0 0.0
        %3777 = vmatpush1.msra.mxu0 0.0
        %3778 = vmatprep.subr.mxu0 0.0
        %3779 = vmatpush1.msra.mxu0 0.0
        %3780 = vmatprep.subr.mxu0 0.0
        %3781 = vmatpush1.msra.mxu0 0.0
        %3782 = vmatprep.subr.mxu0 0.0
        %3783 = vmatpush1.msra.mxu0 0.0
        %3784 = vmatprep.subr.mxu0 0.0
        %3785 = vmatpush1.msra.mxu0 0.0
        %3786 = vmatprep.subr.mxu0 0.0
        %3787 = vmatpush1.msra.mxu0 0.0
        %3788 = vmatprep.subr.mxu0 0.0
        %3789 = vmatpush1.msra.mxu0 0.0
        %3790 = vmatprep.mubr.f32.mxu0 0.0
        %3791 = vmatmul.mubr.f32.gmra.mrb[0].mxu0 %v3404
        %v3792 = vpop.f32.mrb[0].mxu0
        %v3793 = vadd.f32 %v3568, %v3792
        %v3794 = vpop.f32.mrb[0].mxu0
        %3795 = vmatprep.mubr.f32.mxu0 0.0
        %3796 = vmatmul.mubr.f32.gmra.mrb[0].mxu0 %v3405
        %v3797 = vpop.f32.mrb[0].mxu0
        %v3798 = vadd.f32 %v3573, %v3797
        %v3799 = vpop.f32.mrb[0].mxu0
        %3800 = vmatprep.mubr.f32.mxu0 0.0
        %3801 = vmatmul.mubr.f32.gmra.mrb[0].mxu0 %v3406
        %v3802 = vpop.f32.mrb[0].mxu0
        %v3803 = vadd.f32 %v3578, %v3802
        %v3804 = vpop.f32.mrb[0].mxu0
        %3805 = vmatprep.mubr.f32.mxu0 0.0
        %3806 = vmatmul.mubr.f32.gmra.mrb[0].mxu0 %v3407
        %v3807 = vpop.f32.mrb[0].mxu0
        %v3808 = vadd.f32 %v3583, %v3807
        %v3809 = vpop.f32.mrb[0].mxu0
        %3810 = vmatprep.mubr.f32.mxu0 0.0
        %3811 = vmatmul.mubr.f32.gmra.mrb[0].mxu0 %v3408
        %v3812 = vpop.f32.mrb[0].mxu0
        %v3813 = vadd.f32 %v3588, %v3812
        %v3814 = vpop.f32.mrb[0].mxu0
        %3815 = vmatprep.mubr.f32.mxu0 0.0
        %3816 = vmatmul.mubr.f32.gmra.mrb[0].mxu0 %v3409
        %v3817 = vpop.f32.mrb[0].mxu0
        %v3818 = vadd.f32 %v3593, %v3817
        %v3819 = vpop.f32.mrb[0].mxu0
        %3820 = vmatprep.mubr.f32.mxu0 0.0
        %3821 = vmatmul.mubr.f32.gmra.mrb[0].mxu0 %v3410
        %v3822 = vpop.f32.mrb[0].mxu0
        %v3823 = vadd.f32 %v3598, %v3822
        %v3824 = vpop.f32.mrb[0].mxu0
        %3825 = vmatprep.mubr.f32.mxu0 0.0
        %3826 = vmatmul.mubr.f32.gmra.mrb[0].mxu0 %v3411
        %v3827 = vpop.f32.mrb[0].mxu0
        %v3828 = vadd.f32 %v3603, %v3827
        %v3829 = vpop.f32.mrb[0].mxu0
        %3830 = vmatprep.mubr.f32.mxu0 0.0
        %3831 = vmatmul.mubr.f32.gmra.mrb[0].mxu0 %v3412
        %v3832 = vpop.f32.mrb[0].mxu0
        %v3833 = vadd.f32 %v3608, %v3832
        %v3834 = vpop.f32.mrb[0].mxu0
        %3835 = vmatprep.mubr.f32.mxu0 0.0
        %3836 = vmatmul.mubr.f32.gmra.mrb[0].mxu0 %v3413
        %v3837 = vpop.f32.mrb[0].mxu0
        %v3838 = vadd.f32 %v3613, %v3837
        %v3839 = vpop.f32.mrb[0].mxu0
        %3840 = vmatprep.mubr.f32.mxu0 0.0
        %3841 = vmatmul.mubr.f32.gmra.mrb[0].mxu0 %v3414
        %v3842 = vpop.f32.mrb[0].mxu0
        %v3843 = vadd.f32 %v3618, %v3842
        %v3844 = vpop.f32.mrb[0].mxu0
        %3845 = vmatprep.mubr.f32.mxu0 0.0
        %3846 = vmatmul.mubr.f32.gmra.mrb[0].mxu0 %v3415
        %v3847 = vpop.f32.mrb[0].mxu0
        %v3848 = vadd.f32 %v3623, %v3847
        %v3849 = vpop.f32.mrb[0].mxu0
        %3850 = vmatprep.mubr.f32.mxu0 0.0
        %3851 = vmatmul.mubr.f32.gmra.mrb[0].mxu0 %v3416
        %v3852 = vpop.f32.mrb[0].mxu0
        %v3853 = vadd.f32 %v3628, %v3852
        %v3854 = vpop.f32.mrb[0].mxu0
        %3855 = vmatprep.mubr.f32.mxu0 0.0
        %3856 = vmatmul.mubr.f32.gmra.mrb[0].mxu0 %v3417
        %v3857 = vpop.f32.mrb[0].mxu0
        %v3858 = vadd.f32 %v3633, %v3857
        %v3859 = vpop.f32.mrb[0].mxu0
        %3860 = vmatprep.mubr.f32.mxu0 0.0
        %3861 = vmatmul.mubr.f32.gmra.mrb[0].mxu0 %v3418
        %v3862 = vpop.f32.mrb[0].mxu0
        %v3863 = vadd.f32 %v3638, %v3862
        %v3864 = vpop.f32.mrb[0].mxu0
        %3865 = vmatprep.mubr.f32.mxu0 0.0
        %3866 = vmatmul.mubr.f32.gmra.mrb[0].mxu0 %v3419
        %v3867 = vpop.f32.mrb[0].mxu0
        %v3868 = vadd.f32 %v3643, %v3867
        %v3869 = vpop.f32.mrb[0].mxu0
        %3870 = vmatprep.mubr.f32.mxu0 0.0
        %3871 = vmatmul.mubr.f32.gmra.mrb[0].mxu0 %v3420
        %v3872 = vpop.f32.mrb[0].mxu0
        %v3873 = vadd.f32 %v3648, %v3872
        %v3874 = vpop.f32.mrb[0].mxu0
        %3875 = vmatprep.mubr.f32.mxu0 0.0
        %3876 = vmatmul.mubr.f32.gmra.mrb[0].mxu0 %v3421
        %v3877 = vpop.f32.mrb[0].mxu0
        %v3878 = vadd.f32 %v3653, %v3877
        %v3879 = vpop.f32.mrb[0].mxu0
        %3880 = vmatprep.mubr.f32.mxu0 0.0
        %3881 = vmatmul.mubr.f32.gmra.mrb[0].mxu0 %v3422
        %v3882 = vpop.f32.mrb[0].mxu0
        %v3883 = vadd.f32 %v3658, %v3882
        %v3884 = vpop.f32.mrb[0].mxu0
        %3885 = vmatprep.mubr.f32.mxu0 0.0
        %3886 = vmatmul.mubr.f32.gmra.mrb[0].mxu0 %v3423
        %v3887 = vpop.f32.mrb[0].mxu0
        %v3888 = vadd.f32 %v3663, %v3887
        %v3889 = vpop.f32.mrb[0].mxu0
        %3890 = vmatprep.mubr.f32.mxu0 0.0
        %3891 = vmatmul.mubr.f32.gmra.mrb[0].mxu0 %v3424
        %v3892 = vpop.f32.mrb[0].mxu0
        %v3893 = vadd.f32 %v3668, %v3892
        %v3894 = vpop.f32.mrb[0].mxu0
        %3895 = vmatprep.mubr.f32.mxu0 0.0
        %3896 = vmatmul.mubr.f32.gmra.mrb[0].mxu0 %v3425
        %v3897 = vpop.f32.mrb[0].mxu0
        %v3898 = vadd.f32 %v3673, %v3897
        %v3899 = vpop.f32.mrb[0].mxu0
        %3900 = vmatprep.mubr.f32.mxu0 0.0
        %3901 = vmatmul.mubr.f32.gmra.mrb[0].mxu0 %v3426
        %v3902 = vpop.f32.mrb[0].mxu0
        %v3903 = vadd.f32 %v3678, %v3902
        %v3904 = vpop.f32.mrb[0].mxu0
        %3905 = vmatprep.mubr.f32.mxu0 0.0
        %3906 = vmatmul.mubr.f32.gmra.mrb[0].mxu0 %v3427
        %v3907 = vpop.f32.mrb[0].mxu0
        %v3908 = vadd.f32 %v3683, %v3907
        %v3909 = vpop.f32.mrb[0].mxu0
        %3910 = vmatprep.mubr.f32.mxu0 0.0
        %3911 = vmatmul.mubr.f32.gmra.mrb[0].mxu0 %v3428
        %v3912 = vpop.f32.mrb[0].mxu0
        %v3913 = vadd.f32 %v3688, %v3912
        %v3914 = vpop.f32.mrb[0].mxu0
        %3915 = vmatprep.mubr.f32.mxu0 0.0
        %3916 = vmatmul.mubr.f32.gmra.mrb[0].mxu0 %v3429
        %v3917 = vpop.f32.mrb[0].mxu0
        %v3918 = vadd.f32 %v3693, %v3917
        %v3919 = vpop.f32.mrb[0].mxu0
        %3920 = vmatprep.mubr.f32.mxu0 0.0
        %3921 = vmatmul.mubr.f32.gmra.mrb[0].mxu0 %v3430
        %v3922 = vpop.f32.mrb[0].mxu0
        %v3923 = vadd.f32 %v3698, %v3922
        %v3924 = vpop.f32.mrb[0].mxu0
        %3925 = vmatprep.mubr.f32.mxu0 0.0
        %3926 = vmatmul.mubr.f32.gmra.mrb[0].mxu0 %v3431
        %v3927 = vpop.f32.mrb[0].mxu0
        %v3928 = vadd.f32 %v3703, %v3927
        %v3929 = vpop.f32.mrb[0].mxu0
        %3930 = vmatprep.mubr.f32.mxu0 0.0
        %3931 = vmatmul.mubr.f32.gmra.mrb[0].mxu0 %v3432
        %v3932 = vpop.f32.mrb[0].mxu0
        %v3933 = vadd.f32 %v3708, %v3932
        %v3934 = vpop.f32.mrb[0].mxu0
        %3935 = vmatprep.mubr.f32.mxu0 0.0
        %3936 = vmatmul.mubr.f32.gmra.mrb[0].mxu0 %v3433
        %v3937 = vpop.f32.mrb[0].mxu0
        %v3938 = vadd.f32 %v3713, %v3937
        %v3939 = vpop.f32.mrb[0].mxu0
        %3940 = vmatprep.mubr.f32.mxu0 0.0
        %3941 = vmatmul.mubr.f32.gmra.mrb[0].mxu0 %v3434
        %v3942 = vpop.f32.mrb[0].mxu0
        %v3943 = vadd.f32 %v3718, %v3942
        %v3944 = vpop.f32.mrb[0].mxu0
        %3945 = vmatprep.mubr.f32.mxu0 0.0
        %3946 = vmatmul.mubr.f32.gmra.mrb[0].mxu0 %v3435
        %v3947 = vpop.f32.mrb[0].mxu0
        %v3948 = vadd.f32 %v3723, %v3947
        %v3949 = vpop.f32.mrb[0].mxu0
        %3950 = vdwg.mxu0
        %v3951 = vld [vmem:[#allocation3 + $0x9] sm:$0xff]
        %v3952 = vld [vmem:[#allocation3 + $0x11] sm:$0xff]
        %v3953 = vld [vmem:[#allocation3 + $0x29] sm:$0xff]
        %v3954 = vld [vmem:[#allocation3 + $0x31] sm:$0xff]
        %v3955 = vld [vmem:[#allocation3 + $0x49] sm:$0xff]
        %v3956 = vld [vmem:[#allocation3 + $0x51] sm:$0xff]
        %v3957 = vld [vmem:[#allocation3 + $0x69] sm:$0xff]
        %v3958 = vld [vmem:[#allocation3 + $0x71] sm:$0xff]
        %v3959 = vld [vmem:[#allocation3 + $0x89] sm:$0xff]
        %v3960 = vld [vmem:[#allocation3 + $0x91] sm:$0xff]
        %v3961 = vld [vmem:[#allocation3 + $0xa9] sm:$0xff]
        %v3962 = vld [vmem:[#allocation3 + $0xb1] sm:$0xff]
        %v3963 = vld [vmem:[#allocation3 + $0xc9] sm:$0xff]
        %v3964 = vld [vmem:[#allocation3 + $0xd1] sm:$0xff]
        %v3965 = vld [vmem:[#allocation3 + $0xe9] sm:$0xff]
        %v3966 = vld [vmem:[#allocation3 + $0xf1] sm:$0xff]
        %v3967 = vld [vmem:[#allocation3 + $0x109] sm:$0xff]
        %v3968 = vld [vmem:[#allocation3 + $0x111] sm:$0xff]
        %v3969 = vld [vmem:[#allocation3 + $0x129] sm:$0xff]
        %v3970 = vld [vmem:[#allocation3 + $0x131] sm:$0xff]
        %v3971 = vld [vmem:[#allocation3 + $0x149] sm:$0xff]
        %v3972 = vld [vmem:[#allocation3 + $0x151] sm:$0xff]
        %v3973 = vld [vmem:[#allocation3 + $0x169] sm:$0xff]
        %v3974 = vld [vmem:[#allocation3 + $0x171] sm:$0xff]
        %v3975 = vld [vmem:[#allocation3 + $0x189] sm:$0xff]
        %v3976 = vld [vmem:[#allocation3 + $0x191] sm:$0xff]
        %v3977 = vld [vmem:[#allocation3 + $0x1a9] sm:$0xff]
        %v3978 = vld [vmem:[#allocation3 + $0x1b1] sm:$0xff]
        %v3979 = vld [vmem:[#allocation3 + $0x1c9] sm:$0xff]
        %v3980 = vld [vmem:[#allocation3 + $0x1d1] sm:$0xff]
        %v3981 = vld [vmem:[#allocation3 + $0x1e9] sm:$0xff]
        %v3982 = vld [vmem:[#allocation3 + $0x1f1] sm:$0xff]
        %s3983 = scalar_lea.vmem %s2, 256
        %v3984 = vld [vmem:[%s3983] sm:$0xff]
        %v3985 = vld [vmem:[%s3983 + $0x8] sm:$0xff]
        %v3986 = vld [vmem:[%s3983 + $0x10] sm:$0xff]
        %v3987 = vld [vmem:[%s3983 + $0x18] sm:$0xff]
        %v3988 = vld [vmem:[%s3983 + $0x20] sm:$0xff]
        %v3989 = vld [vmem:[%s3983 + $0x28] sm:$0xff]
        %v3990 = vld [vmem:[%s3983 + $0x30] sm:$0xff]
        %v3991 = vld [vmem:[%s3983 + $0x38] sm:$0xff]
        %v3992 = vld [vmem:[%s3983 + $0x40] sm:$0xff]
        %v3993 = vld [vmem:[%s3983 + $0x48] sm:$0xff]
        %v3994 = vld [vmem:[%s3983 + $0x50] sm:$0xff]
        %v3995 = vld [vmem:[%s3983 + $0x58] sm:$0xff]
        %v3996 = vld [vmem:[%s3983 + $0x60] sm:$0xff]
        %v3997 = vld [vmem:[%s3983 + $0x68] sm:$0xff]
        %v3998 = vld [vmem:[%s3983 + $0x70] sm:$0xff]
        %v3999 = vld [vmem:[%s3983 + $0x78] sm:$0xff]
        %4000 = vmatprep.subr.mxu0 0.0
        %4001 = vmatpush1.msra.mxu0 %v3984
        %4002 = vmatprep.subr.mxu0 0.0
        %4003 = vmatpush1.msra.mxu0 %v3985
        %4004 = vmatprep.subr.mxu0 0.0
        %4005 = vmatpush1.msra.mxu0 %v3986
        %4006 = vmatprep.subr.mxu0 0.0
        %4007 = vmatpush1.msra.mxu0 %v3987
        %4008 = vmatprep.subr.mxu0 0.0
        %4009 = vmatpush1.msra.mxu0 %v3988
        %4010 = vmatprep.subr.mxu0 0.0
        %4011 = vmatpush1.msra.mxu0 %v3989
        %4012 = vmatprep.subr.mxu0 0.0
        %4013 = vmatpush1.msra.mxu0 %v3990
        %4014 = vmatprep.subr.mxu0 0.0
        %4015 = vmatpush1.msra.mxu0 %v3991
        %4016 = vmatprep.subr.mxu0 0.0
        %4017 = vmatpush1.msra.mxu0 %v3992
        %4018 = vmatprep.subr.mxu0 0.0
        %4019 = vmatpush1.msra.mxu0 %v3993
        %4020 = vmatprep.subr.mxu0 0.0
        %4021 = vmatpush1.msra.mxu0 %v3994
        %4022 = vmatprep.subr.mxu0 0.0
        %4023 = vmatpush1.msra.mxu0 %v3995
        %4024 = vmatprep.subr.mxu0 0.0
        %4025 = vmatpush1.msra.mxu0 %v3996
        %4026 = vmatprep.subr.mxu0 0.0
        %4027 = vmatpush1.msra.mxu0 %v3997
        %4028 = vmatprep.subr.mxu0 0.0
        %4029 = vmatpush1.msra.mxu0 %v3998
        %4030 = vmatprep.subr.mxu0 0.0
        %4031 = vmatpush1.msra.mxu0 %v3999
        %4032 = vmatprep.subr.mxu0 0.0
        %4033 = vmatpush1.msra.mxu0 0.0
        %4034 = vmatprep.subr.mxu0 0.0
        %4035 = vmatpush1.msra.mxu0 0.0
        %4036 = vmatprep.subr.mxu0 0.0
        %4037 = vmatpush1.msra.mxu0 0.0
        %4038 = vmatprep.subr.mxu0 0.0
        %4039 = vmatpush1.msra.mxu0 0.0
        %4040 = vmatprep.subr.mxu0 0.0
        %4041 = vmatpush1.msra.mxu0 0.0
        %4042 = vmatprep.subr.mxu0 0.0
        %4043 = vmatpush1.msra.mxu0 0.0
        %4044 = vmatprep.subr.mxu0 0.0
        %4045 = vmatpush1.msra.mxu0 0.0
        %4046 = vmatprep.subr.mxu0 0.0
        %4047 = vmatpush1.msra.mxu0 0.0
        %4048 = vmatprep.subr.mxu0 0.0
        %4049 = vmatpush1.msra.mxu0 0.0
        %4050 = vmatprep.subr.mxu0 0.0
        %4051 = vmatpush1.msra.mxu0 0.0
        %4052 = vmatprep.subr.mxu0 0.0
        %4053 = vmatpush1.msra.mxu0 0.0
        %4054 = vmatprep.subr.mxu0 0.0
        %4055 = vmatpush1.msra.mxu0 0.0
        %4056 = vmatprep.subr.mxu0 0.0
        %4057 = vmatpush1.msra.mxu0 0.0
        %4058 = vmatprep.subr.mxu0 0.0
        %4059 = vmatpush1.msra.mxu0 0.0
        %4060 = vmatprep.subr.mxu0 0.0
        %4061 = vmatpush1.msra.mxu0 0.0
        %4062 = vmatprep.subr.mxu0 0.0
        %4063 = vmatpush1.msra.mxu0 0.0
        %4064 = vmatprep.mubr.f32.mxu0 0.0
        %4065 = vmatmul.mubr.f32.gmra.mrb[0].mxu0 %v3951
        %v4066 = vpop.f32.mrb[0].mxu0
        %v4067 = vadd.f32 0.0, %v4066
        %v4068 = vpop.f32.mrb[0].mxu0
        %4069 = vmatprep.mubr.f32.mxu0 0.0
        %4070 = vmatmul.mubr.f32.gmra.mrb[0].mxu0 %v3952
        %v4071 = vpop.f32.mrb[0].mxu0
        %v4072 = vadd.f32 0.0, %v4071
        %v4073 = vpop.f32.mrb[0].mxu0
        %4074 = vmatprep.mubr.f32.mxu0 0.0
        %4075 = vmatmul.mubr.f32.gmra.mrb[0].mxu0 %v3953
        %v4076 = vpop.f32.mrb[0].mxu0
        %v4077 = vadd.f32 0.0, %v4076
        %v4078 = vpop.f32.mrb[0].mxu0
        %4079 = vmatprep.mubr.f32.mxu0 0.0
        %4080 = vmatmul.mubr.f32.gmra.mrb[0].mxu0 %v3954
        %v4081 = vpop.f32.mrb[0].mxu0
        %v4082 = vadd.f32 0.0, %v4081
        %v4083 = vpop.f32.mrb[0].mxu0
        %4084 = vmatprep.mubr.f32.mxu0 0.0
        %4085 = vmatmul.mubr.f32.gmra.mrb[0].mxu0 %v3955
        %v4086 = vpop.f32.mrb[0].mxu0
        %v4087 = vadd.f32 0.0, %v4086
        %v4088 = vpop.f32.mrb[0].mxu0
        %4089 = vmatprep.mubr.f32.mxu0 0.0
        %4090 = vmatmul.mubr.f32.gmra.mrb[0].mxu0 %v3956
        %v4091 = vpop.f32.mrb[0].mxu0
        %v4092 = vadd.f32 0.0, %v4091
        %v4093 = vpop.f32.mrb[0].mxu0
        %4094 = vmatprep.mubr.f32.mxu0 0.0
        %4095 = vmatmul.mubr.f32.gmra.mrb[0].mxu0 %v3957
        %v4096 = vpop.f32.mrb[0].mxu0
        %v4097 = vadd.f32 0.0, %v4096
        %v4098 = vpop.f32.mrb[0].mxu0
        %4099 = vmatprep.mubr.f32.mxu0 0.0
        %4100 = vmatmul.mubr.f32.gmra.mrb[0].mxu0 %v3958
        %v4101 = vpop.f32.mrb[0].mxu0
        %v4102 = vadd.f32 0.0, %v4101
        %v4103 = vpop.f32.mrb[0].mxu0
        %4104 = vmatprep.mubr.f32.mxu0 0.0
        %4105 = vmatmul.mubr.f32.gmra.mrb[0].mxu0 %v3959
        %v4106 = vpop.f32.mrb[0].mxu0
        %v4107 = vadd.f32 0.0, %v4106
        %v4108 = vpop.f32.mrb[0].mxu0
        %4109 = vmatprep.mubr.f32.mxu0 0.0
        %4110 = vmatmul.mubr.f32.gmra.mrb[0].mxu0 %v3960
        %v4111 = vpop.f32.mrb[0].mxu0
        %v4112 = vadd.f32 0.0, %v4111
        %v4113 = vpop.f32.mrb[0].mxu0
        %4114 = vmatprep.mubr.f32.mxu0 0.0
        %4115 = vmatmul.mubr.f32.gmra.mrb[0].mxu0 %v3961
        %v4116 = vpop.f32.mrb[0].mxu0
        %v4117 = vadd.f32 0.0, %v4116
        %v4118 = vpop.f32.mrb[0].mxu0
        %4119 = vmatprep.mubr.f32.mxu0 0.0
        %4120 = vmatmul.mubr.f32.gmra.mrb[0].mxu0 %v3962
        %v4121 = vpop.f32.mrb[0].mxu0
        %v4122 = vadd.f32 0.0, %v4121
        %v4123 = vpop.f32.mrb[0].mxu0
        %4124 = vmatprep.mubr.f32.mxu0 0.0
        %4125 = vmatmul.mubr.f32.gmra.mrb[0].mxu0 %v3963
        %v4126 = vpop.f32.mrb[0].mxu0
        %v4127 = vadd.f32 0.0, %v4126
        %v4128 = vpop.f32.mrb[0].mxu0
        %4129 = vmatprep.mubr.f32.mxu0 0.0
        %4130 = vmatmul.mubr.f32.gmra.mrb[0].mxu0 %v3964
        %v4131 = vpop.f32.mrb[0].mxu0
        %v4132 = vadd.f32 0.0, %v4131
        %v4133 = vpop.f32.mrb[0].mxu0
        %4134 = vmatprep.mubr.f32.mxu0 0.0
        %4135 = vmatmul.mubr.f32.gmra.mrb[0].mxu0 %v3965
        %v4136 = vpop.f32.mrb[0].mxu0
        %v4137 = vadd.f32 0.0, %v4136
        %v4138 = vpop.f32.mrb[0].mxu0
        %4139 = vmatprep.mubr.f32.mxu0 0.0
        %4140 = vmatmul.mubr.f32.gmra.mrb[0].mxu0 %v3966
        %v4141 = vpop.f32.mrb[0].mxu0
        %v4142 = vadd.f32 0.0, %v4141
        %v4143 = vpop.f32.mrb[0].mxu0
        %4144 = vmatprep.mubr.f32.mxu0 0.0
        %4145 = vmatmul.mubr.f32.gmra.mrb[0].mxu0 %v3967
        %v4146 = vpop.f32.mrb[0].mxu0
        %v4147 = vadd.f32 0.0, %v4146
        %v4148 = vpop.f32.mrb[0].mxu0
        %4149 = vmatprep.mubr.f32.mxu0 0.0
        %4150 = vmatmul.mubr.f32.gmra.mrb[0].mxu0 %v3968
        %v4151 = vpop.f32.mrb[0].mxu0
        %v4152 = vadd.f32 0.0, %v4151
        %v4153 = vpop.f32.mrb[0].mxu0
        %4154 = vmatprep.mubr.f32.mxu0 0.0
        %4155 = vmatmul.mubr.f32.gmra.mrb[0].mxu0 %v3969
        %v4156 = vpop.f32.mrb[0].mxu0
        %v4157 = vadd.f32 0.0, %v4156
        %v4158 = vpop.f32.mrb[0].mxu0
        %4159 = vmatprep.mubr.f32.mxu0 0.0
        %4160 = vmatmul.mubr.f32.gmra.mrb[0].mxu0 %v3970
        %v4161 = vpop.f32.mrb[0].mxu0
        %v4162 = vadd.f32 0.0, %v4161
        %v4163 = vpop.f32.mrb[0].mxu0
        %4164 = vmatprep.mubr.f32.mxu0 0.0
        %4165 = vmatmul.mubr.f32.gmra.mrb[0].mxu0 %v3971
        %v4166 = vpop.f32.mrb[0].mxu0
        %v4167 = vadd.f32 0.0, %v4166
        %v4168 = vpop.f32.mrb[0].mxu0
        %4169 = vmatprep.mubr.f32.mxu0 0.0
        %4170 = vmatmul.mubr.f32.gmra.mrb[0].mxu0 %v3972
        %v4171 = vpop.f32.mrb[0].mxu0
        %v4172 = vadd.f32 0.0, %v4171
        %v4173 = vpop.f32.mrb[0].mxu0
        %4174 = vmatprep.mubr.f32.mxu0 0.0
        %4175 = vmatmul.mubr.f32.gmra.mrb[0].mxu0 %v3973
        %v4176 = vpop.f32.mrb[0].mxu0
        %v4177 = vadd.f32 0.0, %v4176
        %v4178 = vpop.f32.mrb[0].mxu0
        %4179 = vmatprep.mubr.f32.mxu0 0.0
        %4180 = vmatmul.mubr.f32.gmra.mrb[0].mxu0 %v3974
        %v4181 = vpop.f32.mrb[0].mxu0
        %v4182 = vadd.f32 0.0, %v4181
        %v4183 = vpop.f32.mrb[0].mxu0
        %4184 = vmatprep.mubr.f32.mxu0 0.0
        %4185 = vmatmul.mubr.f32.gmra.mrb[0].mxu0 %v3975
        %v4186 = vpop.f32.mrb[0].mxu0
        %v4187 = vadd.f32 0.0, %v4186
        %v4188 = vpop.f32.mrb[0].mxu0
        %4189 = vmatprep.mubr.f32.mxu0 0.0
        %4190 = vmatmul.mubr.f32.gmra.mrb[0].mxu0 %v3976
        %v4191 = vpop.f32.mrb[0].mxu0
        %v4192 = vadd.f32 0.0, %v4191
        %v4193 = vpop.f32.mrb[0].mxu0
        %4194 = vmatprep.mubr.f32.mxu0 0.0
        %4195 = vmatmul.mubr.f32.gmra.mrb[0].mxu0 %v3977
        %v4196 = vpop.f32.mrb[0].mxu0
        %v4197 = vadd.f32 0.0, %v4196
        %v4198 = vpop.f32.mrb[0].mxu0
        %4199 = vmatprep.mubr.f32.mxu0 0.0
        %4200 = vmatmul.mubr.f32.gmra.mrb[0].mxu0 %v3978
        %v4201 = vpop.f32.mrb[0].mxu0
        %v4202 = vadd.f32 0.0, %v4201
        %v4203 = vpop.f32.mrb[0].mxu0
        %4204 = vmatprep.mubr.f32.mxu0 0.0
        %4205 = vmatmul.mubr.f32.gmra.mrb[0].mxu0 %v3979
        %v4206 = vpop.f32.mrb[0].mxu0
        %v4207 = vadd.f32 0.0, %v4206
        %v4208 = vpop.f32.mrb[0].mxu0
        %4209 = vmatprep.mubr.f32.mxu0 0.0
        %4210 = vmatmul.mubr.f32.gmra.mrb[0].mxu0 %v3980
        %v4211 = vpop.f32.mrb[0].mxu0
        %v4212 = vadd.f32 0.0, %v4211
        %v4213 = vpop.f32.mrb[0].mxu0
        %4214 = vmatprep.mubr.f32.mxu0 0.0
        %4215 = vmatmul.mubr.f32.gmra.mrb[0].mxu0 %v3981
        %v4216 = vpop.f32.mrb[0].mxu0
        %v4217 = vadd.f32 0.0, %v4216
        %v4218 = vpop.f32.mrb[0].mxu0
        %4219 = vmatprep.mubr.f32.mxu0 0.0
        %4220 = vmatmul.mubr.f32.gmra.mrb[0].mxu0 %v3982
        %v4221 = vpop.f32.mrb[0].mxu0
        %v4222 = vadd.f32 0.0, %v4221
        %v4223 = vpop.f32.mrb[0].mxu0
        %4224 = vdwg.mxu0
        %v4225 = vadd.f32 %v3793, %v4067
        %v4226 = vadd.f32 %v3798, %v4072
        %v4227 = vadd.f32 %v3803, %v4077
        %v4228 = vadd.f32 %v3808, %v4082
        %v4229 = vadd.f32 %v3813, %v4087
        %v4230 = vadd.f32 %v3818, %v4092
        %v4231 = vadd.f32 %v3823, %v4097
        %v4232 = vadd.f32 %v3828, %v4102
        %v4233 = vadd.f32 %v3833, %v4107
        %v4234 = vadd.f32 %v3838, %v4112
        %v4235 = vadd.f32 %v3843, %v4117
        %v4236 = vadd.f32 %v3848, %v4122
        %v4237 = vadd.f32 %v3853, %v4127
        %v4238 = vadd.f32 %v3858, %v4132
        %v4239 = vadd.f32 %v3863, %v4137
        %v4240 = vadd.f32 %v3868, %v4142
        %v4241 = vadd.f32 %v3873, %v4147
        %v4242 = vadd.f32 %v3878, %v4152
        %v4243 = vadd.f32 %v3883, %v4157
        %v4244 = vadd.f32 %v3888, %v4162
        %v4245 = vadd.f32 %v3893, %v4167
        %v4246 = vadd.f32 %v3898, %v4172
        %v4247 = vadd.f32 %v3903, %v4177
        %v4248 = vadd.f32 %v3908, %v4182
        %v4249 = vadd.f32 %v3913, %v4187
        %v4250 = vadd.f32 %v3918, %v4192
        %v4251 = vadd.f32 %v3923, %v4197
        %v4252 = vadd.f32 %v3928, %v4202
        %v4253 = vadd.f32 %v3933, %v4207
        %v4254 = vadd.f32 %v3938, %v4212
        %v4255 = vadd.f32 %v3943, %v4217
        %v4256 = vadd.f32 %v3948, %v4222
        %v4257 = vld [vmem:[%s3371 + $0x7] sm:$0xff]
        %v4258 = vld [vmem:[%s3371 + $0xf] sm:$0xff]
        %v4259 = vld [vmem:[%s3371 + $0x27] sm:$0xff]
        %v4260 = vld [vmem:[%s3371 + $0x2f] sm:$0xff]
        %v4261 = vld [vmem:[%s3371 + $0x47] sm:$0xff]
        %v4262 = vld [vmem:[%s3371 + $0x4f] sm:$0xff]
        %v4263 = vld [vmem:[%s3371 + $0x67] sm:$0xff]
        %v4264 = vld [vmem:[%s3371 + $0x6f] sm:$0xff]
        %v4265 = vld [vmem:[%s3371 + $0x87] sm:$0xff]
        %v4266 = vld [vmem:[%s3371 + $0x8f] sm:$0xff]
        %v4267 = vld [vmem:[%s3371 + $0xa7] sm:$0xff]
        %v4268 = vld [vmem:[%s3371 + $0xaf] sm:$0xff]
        %v4269 = vld [vmem:[%s3371 + $0xc7] sm:$0xff]
        %v4270 = vld [vmem:[%s3371 + $0xcf] sm:$0xff]
        %v4271 = vld [vmem:[%s3371 + $0xe7] sm:$0xff]
        %v4272 = vld [vmem:[%s3371 + $0xef] sm:$0xff]
        %v4273 = vld [vmem:[%s3371 + $0x107] sm:$0xff]
        %v4274 = vld [vmem:[%s3371 + $0x10f] sm:$0xff]
        %v4275 = vld [vmem:[%s3371 + $0x127] sm:$0xff]
        %v4276 = vld [vmem:[%s3371 + $0x12f] sm:$0xff]
        %v4277 = vld [vmem:[%s3371 + $0x147] sm:$0xff]
        %v4278 = vld [vmem:[%s3371 + $0x14f] sm:$0xff]
        %v4279 = vld [vmem:[%s3371 + $0x167] sm:$0xff]
        %v4280 = vld [vmem:[%s3371 + $0x16f] sm:$0xff]
        %v4281 = vld [vmem:[%s3371 + $0x187] sm:$0xff]
        %v4282 = vld [vmem:[%s3371 + $0x18f] sm:$0xff]
        %v4283 = vld [vmem:[%s3371 + $0x1a7] sm:$0xff]
        %v4284 = vld [vmem:[%s3371 + $0x1af] sm:$0xff]
        %v4285 = vld [vmem:[%s3371 + $0x1c7] sm:$0xff]
        %v4286 = vld [vmem:[%s3371 + $0x1cf] sm:$0xff]
        %v4287 = vld [vmem:[%s3371 + $0x1e7] sm:$0xff]
        %v4288 = vld [vmem:[%s3371 + $0x1ef] sm:$0xff]
        %s4289 = scalar_lea.vmem %s2, 384
        %v4290 = vld [vmem:[%s4289] sm:$0xff]
        %v4291 = vld [vmem:[%s4289 + $0x8] sm:$0xff]
        %v4292 = vld [vmem:[%s4289 + $0x10] sm:$0xff]
        %v4293 = vld [vmem:[%s4289 + $0x18] sm:$0xff]
        %v4294 = vld [vmem:[%s4289 + $0x20] sm:$0xff]
        %v4295 = vld [vmem:[%s4289 + $0x28] sm:$0xff]
        %v4296 = vld [vmem:[%s4289 + $0x30] sm:$0xff]
        %v4297 = vld [vmem:[%s4289 + $0x38] sm:$0xff]
        %v4298 = vld [vmem:[%s4289 + $0x40] sm:$0xff]
        %v4299 = vld [vmem:[%s4289 + $0x48] sm:$0xff]
        %v4300 = vld [vmem:[%s4289 + $0x50] sm:$0xff]
        %v4301 = vld [vmem:[%s4289 + $0x58] sm:$0xff]
        %v4302 = vld [vmem:[%s4289 + $0x60] sm:$0xff]
        %v4303 = vld [vmem:[%s4289 + $0x68] sm:$0xff]
        %v4304 = vld [vmem:[%s4289 + $0x70] sm:$0xff]
        %v4305 = vld [vmem:[%s4289 + $0x78] sm:$0xff]
        %4306 = vmatprep.subr.mxu0 0.0
        %4307 = vmatpush1.msra.mxu0 %v4290
        %4308 = vmatprep.subr.mxu0 0.0
        %4309 = vmatpush1.msra.mxu0 %v4291
        %4310 = vmatprep.subr.mxu0 0.0
        %4311 = vmatpush1.msra.mxu0 %v4292
        %4312 = vmatprep.subr.mxu0 0.0
        %4313 = vmatpush1.msra.mxu0 %v4293
        %4314 = vmatprep.subr.mxu0 0.0
        %4315 = vmatpush1.msra.mxu0 %v4294
        %4316 = vmatprep.subr.mxu0 0.0
        %4317 = vmatpush1.msra.mxu0 %v4295
        %4318 = vmatprep.subr.mxu0 0.0
        %4319 = vmatpush1.msra.mxu0 %v4296
        %4320 = vmatprep.subr.mxu0 0.0
        %4321 = vmatpush1.msra.mxu0 %v4297
        %4322 = vmatprep.subr.mxu0 0.0
        %4323 = vmatpush1.msra.mxu0 %v4298
        %4324 = vmatprep.subr.mxu0 0.0
        %4325 = vmatpush1.msra.mxu0 %v4299
        %4326 = vmatprep.subr.mxu0 0.0
        %4327 = vmatpush1.msra.mxu0 %v4300
        %4328 = vmatprep.subr.mxu0 0.0
        %4329 = vmatpush1.msra.mxu0 %v4301
        %4330 = vmatprep.subr.mxu0 0.0
        %4331 = vmatpush1.msra.mxu0 %v4302
        %4332 = vmatprep.subr.mxu0 0.0
        %4333 = vmatpush1.msra.mxu0 %v4303
        %4334 = vmatprep.subr.mxu0 0.0
        %4335 = vmatpush1.msra.mxu0 %v4304
        %4336 = vmatprep.subr.mxu0 0.0
        %4337 = vmatpush1.msra.mxu0 %v4305
        %4338 = vmatprep.subr.mxu0 0.0
        %4339 = vmatpush1.msra.mxu0 0.0
        %4340 = vmatprep.subr.mxu0 0.0
        %4341 = vmatpush1.msra.mxu0 0.0
        %4342 = vmatprep.subr.mxu0 0.0
        %4343 = vmatpush1.msra.mxu0 0.0
        %4344 = vmatprep.subr.mxu0 0.0
        %4345 = vmatpush1.msra.mxu0 0.0
        %4346 = vmatprep.subr.mxu0 0.0
        %4347 = vmatpush1.msra.mxu0 0.0
        %4348 = vmatprep.subr.mxu0 0.0
        %4349 = vmatpush1.msra.mxu0 0.0
        %4350 = vmatprep.subr.mxu0 0.0
        %4351 = vmatpush1.msra.mxu0 0.0
        %4352 = vmatprep.subr.mxu0 0.0
        %4353 = vmatpush1.msra.mxu0 0.0
        %4354 = vmatprep.subr.mxu0 0.0
        %4355 = vmatpush1.msra.mxu0 0.0
        %4356 = vmatprep.subr.mxu0 0.0
        %4357 = vmatpush1.msra.mxu0 0.0
        %4358 = vmatprep.subr.mxu0 0.0
        %4359 = vmatpush1.msra.mxu0 0.0
        %4360 = vmatprep.subr.mxu0 0.0
        %4361 = vmatpush1.msra.mxu0 0.0
        %4362 = vmatprep.subr.mxu0 0.0
        %4363 = vmatpush1.msra.mxu0 0.0
        %4364 = vmatprep.subr.mxu0 0.0
        %4365 = vmatpush1.msra.mxu0 0.0
        %4366 = vmatprep.subr.mxu0 0.0
        %4367 = vmatpush1.msra.mxu0 0.0
        %4368 = vmatprep.subr.mxu0 0.0
        %4369 = vmatpush1.msra.mxu0 0.0
        %4370 = vmatprep.mubr.f32.mxu0 0.0
        %4371 = vmatmul.mubr.f32.gmra.mrb[0].mxu0 %v4257
        %v4372 = vpop.f32.mrb[0].mxu0
        %v4373 = vadd.f32 0.0, %v4372
        %v4374 = vpop.f32.mrb[0].mxu0
        %4375 = vmatprep.mubr.f32.mxu0 0.0
        %4376 = vmatmul.mubr.f32.gmra.mrb[0].mxu0 %v4258
        %v4377 = vpop.f32.mrb[0].mxu0
        %v4378 = vadd.f32 0.0, %v4377
        %v4379 = vpop.f32.mrb[0].mxu0
        %4380 = vmatprep.mubr.f32.mxu0 0.0
        %4381 = vmatmul.mubr.f32.gmra.mrb[0].mxu0 %v4259
        %v4382 = vpop.f32.mrb[0].mxu0
        %v4383 = vadd.f32 0.0, %v4382
        %v4384 = vpop.f32.mrb[0].mxu0
        %4385 = vmatprep.mubr.f32.mxu0 0.0
        %4386 = vmatmul.mubr.f32.gmra.mrb[0].mxu0 %v4260
        %v4387 = vpop.f32.mrb[0].mxu0
        %v4388 = vadd.f32 0.0, %v4387
        %v4389 = vpop.f32.mrb[0].mxu0
        %4390 = vmatprep.mubr.f32.mxu0 0.0
        %4391 = vmatmul.mubr.f32.gmra.mrb[0].mxu0 %v4261
        %v4392 = vpop.f32.mrb[0].mxu0
        %v4393 = vadd.f32 0.0, %v4392
        %v4394 = vpop.f32.mrb[0].mxu0
        %4395 = vmatprep.mubr.f32.mxu0 0.0
        %4396 = vmatmul.mubr.f32.gmra.mrb[0].mxu0 %v4262
        %v4397 = vpop.f32.mrb[0].mxu0
        %v4398 = vadd.f32 0.0, %v4397
        %v4399 = vpop.f32.mrb[0].mxu0
        %4400 = vmatprep.mubr.f32.mxu0 0.0
        %4401 = vmatmul.mubr.f32.gmra.mrb[0].mxu0 %v4263
        %v4402 = vpop.f32.mrb[0].mxu0
        %v4403 = vadd.f32 0.0, %v4402
        %v4404 = vpop.f32.mrb[0].mxu0
        %4405 = vmatprep.mubr.f32.mxu0 0.0
        %4406 = vmatmul.mubr.f32.gmra.mrb[0].mxu0 %v4264
        %v4407 = vpop.f32.mrb[0].mxu0
        %v4408 = vadd.f32 0.0, %v4407
        %v4409 = vpop.f32.mrb[0].mxu0
        %4410 = vmatprep.mubr.f32.mxu0 0.0
        %4411 = vmatmul.mubr.f32.gmra.mrb[0].mxu0 %v4265
        %v4412 = vpop.f32.mrb[0].mxu0
        %v4413 = vadd.f32 0.0, %v4412
        %v4414 = vpop.f32.mrb[0].mxu0
        %4415 = vmatprep.mubr.f32.mxu0 0.0
        %4416 = vmatmul.mubr.f32.gmra.mrb[0].mxu0 %v4266
        %v4417 = vpop.f32.mrb[0].mxu0
        %v4418 = vadd.f32 0.0, %v4417
        %v4419 = vpop.f32.mrb[0].mxu0
        %4420 = vmatprep.mubr.f32.mxu0 0.0
        %4421 = vmatmul.mubr.f32.gmra.mrb[0].mxu0 %v4267
        %v4422 = vpop.f32.mrb[0].mxu0
        %v4423 = vadd.f32 0.0, %v4422
        %v4424 = vpop.f32.mrb[0].mxu0
        %4425 = vmatprep.mubr.f32.mxu0 0.0
        %4426 = vmatmul.mubr.f32.gmra.mrb[0].mxu0 %v4268
        %v4427 = vpop.f32.mrb[0].mxu0
        %v4428 = vadd.f32 0.0, %v4427
        %v4429 = vpop.f32.mrb[0].mxu0
        %4430 = vmatprep.mubr.f32.mxu0 0.0
        %4431 = vmatmul.mubr.f32.gmra.mrb[0].mxu0 %v4269
        %v4432 = vpop.f32.mrb[0].mxu0
        %v4433 = vadd.f32 0.0, %v4432
        %v4434 = vpop.f32.mrb[0].mxu0
        %4435 = vmatprep.mubr.f32.mxu0 0.0
        %4436 = vmatmul.mubr.f32.gmra.mrb[0].mxu0 %v4270
        %v4437 = vpop.f32.mrb[0].mxu0
        %v4438 = vadd.f32 0.0, %v4437
        %v4439 = vpop.f32.mrb[0].mxu0
        %4440 = vmatprep.mubr.f32.mxu0 0.0
        %4441 = vmatmul.mubr.f32.gmra.mrb[0].mxu0 %v4271
        %v4442 = vpop.f32.mrb[0].mxu0
        %v4443 = vadd.f32 0.0, %v4442
        %v4444 = vpop.f32.mrb[0].mxu0
        %4445 = vmatprep.mubr.f32.mxu0 0.0
        %4446 = vmatmul.mubr.f32.gmra.mrb[0].mxu0 %v4272
        %v4447 = vpop.f32.mrb[0].mxu0
        %v4448 = vadd.f32 0.0, %v4447
        %v4449 = vpop.f32.mrb[0].mxu0
        %4450 = vmatprep.mubr.f32.mxu0 0.0
        %4451 = vmatmul.mubr.f32.gmra.mrb[0].mxu0 %v4273
        %v4452 = vpop.f32.mrb[0].mxu0
        %v4453 = vadd.f32 0.0, %v4452
        %v4454 = vpop.f32.mrb[0].mxu0
        %4455 = vmatprep.mubr.f32.mxu0 0.0
        %4456 = vmatmul.mubr.f32.gmra.mrb[0].mxu0 %v4274
        %v4457 = vpop.f32.mrb[0].mxu0
        %v4458 = vadd.f32 0.0, %v4457
        %v4459 = vpop.f32.mrb[0].mxu0
        %4460 = vmatprep.mubr.f32.mxu0 0.0
        %4461 = vmatmul.mubr.f32.gmra.mrb[0].mxu0 %v4275
        %v4462 = vpop.f32.mrb[0].mxu0
        %v4463 = vadd.f32 0.0, %v4462
        %v4464 = vpop.f32.mrb[0].mxu0
        %4465 = vmatprep.mubr.f32.mxu0 0.0
        %4466 = vmatmul.mubr.f32.gmra.mrb[0].mxu0 %v4276
        %v4467 = vpop.f32.mrb[0].mxu0
        %v4468 = vadd.f32 0.0, %v4467
        %v4469 = vpop.f32.mrb[0].mxu0
        %4470 = vmatprep.mubr.f32.mxu0 0.0
        %4471 = vmatmul.mubr.f32.gmra.mrb[0].mxu0 %v4277
        %v4472 = vpop.f32.mrb[0].mxu0
        %v4473 = vadd.f32 0.0, %v4472
        %v4474 = vpop.f32.mrb[0].mxu0
        %4475 = vmatprep.mubr.f32.mxu0 0.0
        %4476 = vmatmul.mubr.f32.gmra.mrb[0].mxu0 %v4278
        %v4477 = vpop.f32.mrb[0].mxu0
        %v4478 = vadd.f32 0.0, %v4477
        %v4479 = vpop.f32.mrb[0].mxu0
        %4480 = vmatprep.mubr.f32.mxu0 0.0
        %4481 = vmatmul.mubr.f32.gmra.mrb[0].mxu0 %v4279
        %v4482 = vpop.f32.mrb[0].mxu0
        %v4483 = vadd.f32 0.0, %v4482
        %v4484 = vpop.f32.mrb[0].mxu0
        %4485 = vmatprep.mubr.f32.mxu0 0.0
        %4486 = vmatmul.mubr.f32.gmra.mrb[0].mxu0 %v4280
        %v4487 = vpop.f32.mrb[0].mxu0
        %v4488 = vadd.f32 0.0, %v4487
        %v4489 = vpop.f32.mrb[0].mxu0
        %4490 = vmatprep.mubr.f32.mxu0 0.0
        %4491 = vmatmul.mubr.f32.gmra.mrb[0].mxu0 %v4281
        %v4492 = vpop.f32.mrb[0].mxu0
        %v4493 = vadd.f32 0.0, %v4492
        %v4494 = vpop.f32.mrb[0].mxu0
        %4495 = vmatprep.mubr.f32.mxu0 0.0
        %4496 = vmatmul.mubr.f32.gmra.mrb[0].mxu0 %v4282
        %v4497 = vpop.f32.mrb[0].mxu0
        %v4498 = vadd.f32 0.0, %v4497
        %v4499 = vpop.f32.mrb[0].mxu0
        %4500 = vmatprep.mubr.f32.mxu0 0.0
        %4501 = vmatmul.mubr.f32.gmra.mrb[0].mxu0 %v4283
        %v4502 = vpop.f32.mrb[0].mxu0
        %v4503 = vadd.f32 0.0, %v4502
        %v4504 = vpop.f32.mrb[0].mxu0
        %4505 = vmatprep.mubr.f32.mxu0 0.0
        %4506 = vmatmul.mubr.f32.gmra.mrb[0].mxu0 %v4284
        %v4507 = vpop.f32.mrb[0].mxu0
        %v4508 = vadd.f32 0.0, %v4507
        %v4509 = vpop.f32.mrb[0].mxu0
        %4510 = vmatprep.mubr.f32.mxu0 0.0
        %4511 = vmatmul.mubr.f32.gmra.mrb[0].mxu0 %v4285
        %v4512 = vpop.f32.mrb[0].mxu0
        %v4513 = vadd.f32 0.0, %v4512
        %v4514 = vpop.f32.mrb[0].mxu0
        %4515 = vmatprep.mubr.f32.mxu0 0.0
        %4516 = vmatmul.mubr.f32.gmra.mrb[0].mxu0 %v4286
        %v4517 = vpop.f32.mrb[0].mxu0
        %v4518 = vadd.f32 0.0, %v4517
        %v4519 = vpop.f32.mrb[0].mxu0
        %4520 = vmatprep.mubr.f32.mxu0 0.0
        %4521 = vmatmul.mubr.f32.gmra.mrb[0].mxu0 %v4287
        %v4522 = vpop.f32.mrb[0].mxu0
        %v4523 = vadd.f32 0.0, %v4522
        %v4524 = vpop.f32.mrb[0].mxu0
        %4525 = vmatprep.mubr.f32.mxu0 0.0
        %4526 = vmatmul.mubr.f32.gmra.mrb[0].mxu0 %v4288
        %v4527 = vpop.f32.mrb[0].mxu0
        %v4528 = vadd.f32 0.0, %v4527
        %v4529 = vpop.f32.mrb[0].mxu0
        %4530 = vdwg.mxu0
        %v4531 = vadd.f32 %v4225, %v4373
        %v4532 = vadd.f32 %v4226, %v4378
        %v4533 = vadd.f32 %v4227, %v4383
        %v4534 = vadd.f32 %v4228, %v4388
        %v4535 = vadd.f32 %v4229, %v4393
        %v4536 = vadd.f32 %v4230, %v4398
        %v4537 = vadd.f32 %v4231, %v4403
        %v4538 = vadd.f32 %v4232, %v4408
        %v4539 = vadd.f32 %v4233, %v4413
        %v4540 = vadd.f32 %v4234, %v4418
        %v4541 = vadd.f32 %v4235, %v4423
        %v4542 = vadd.f32 %v4236, %v4428
        %v4543 = vadd.f32 %v4237, %v4433
        %v4544 = vadd.f32 %v4238, %v4438
        %v4545 = vadd.f32 %v4239, %v4443
        %v4546 = vadd.f32 %v4240, %v4448
        %v4547 = vadd.f32 %v4241, %v4453
        %v4548 = vadd.f32 %v4242, %v4458
        %v4549 = vadd.f32 %v4243, %v4463
        %v4550 = vadd.f32 %v4244, %v4468
        %v4551 = vadd.f32 %v4245, %v4473
        %v4552 = vadd.f32 %v4246, %v4478
        %v4553 = vadd.f32 %v4247, %v4483
        %v4554 = vadd.f32 %v4248, %v4488
        %v4555 = vadd.f32 %v4249, %v4493
        %v4556 = vadd.f32 %v4250, %v4498
        %v4557 = vadd.f32 %v4251, %v4503
        %v4558 = vadd.f32 %v4252, %v4508
        %v4559 = vadd.f32 %v4253, %v4513
        %v4560 = vadd.f32 %v4254, %v4518
        %v4561 = vadd.f32 %v4255, %v4523
        %v4562 = vadd.f32 %v4256, %v4528
        %v4563 = vld [vmem:[%s3371 + $0x8] sm:$0xff]
        %v4564 = vld [vmem:[%s3371 + $0x10] sm:$0xff]
        %v4565 = vld [vmem:[%s3371 + $0x28] sm:$0xff]
        %v4566 = vld [vmem:[%s3371 + $0x30] sm:$0xff]
        %v4567 = vld [vmem:[%s3371 + $0x48] sm:$0xff]
        %v4568 = vld [vmem:[%s3371 + $0x50] sm:$0xff]
        %v4569 = vld [vmem:[%s3371 + $0x68] sm:$0xff]
        %v4570 = vld [vmem:[%s3371 + $0x70] sm:$0xff]
        %v4571 = vld [vmem:[%s3371 + $0x88] sm:$0xff]
        %v4572 = vld [vmem:[%s3371 + $0x90] sm:$0xff]
        %v4573 = vld [vmem:[%s3371 + $0xa8] sm:$0xff]
        %v4574 = vld [vmem:[%s3371 + $0xb0] sm:$0xff]
        %v4575 = vld [vmem:[%s3371 + $0xc8] sm:$0xff]
        %v4576 = vld [vmem:[%s3371 + $0xd0] sm:$0xff]
        %v4577 = vld [vmem:[%s3371 + $0xe8] sm:$0xff]
        %v4578 = vld [vmem:[%s3371 + $0xf0] sm:$0xff]
        %v4579 = vld [vmem:[%s3371 + $0x108] sm:$0xff]
        %v4580 = vld [vmem:[%s3371 + $0x110] sm:$0xff]
        %v4581 = vld [vmem:[%s3371 + $0x128] sm:$0xff]
        %v4582 = vld [vmem:[%s3371 + $0x130] sm:$0xff]
        %v4583 = vld [vmem:[%s3371 + $0x148] sm:$0xff]
        %v4584 = vld [vmem:[%s3371 + $0x150] sm:$0xff]
        %v4585 = vld [vmem:[%s3371 + $0x168] sm:$0xff]
        %v4586 = vld [vmem:[%s3371 + $0x170] sm:$0xff]
        %v4587 = vld [vmem:[%s3371 + $0x188] sm:$0xff]
        %v4588 = vld [vmem:[%s3371 + $0x190] sm:$0xff]
        %v4589 = vld [vmem:[%s3371 + $0x1a8] sm:$0xff]
        %v4590 = vld [vmem:[%s3371 + $0x1b0] sm:$0xff]
        %v4591 = vld [vmem:[%s3371 + $0x1c8] sm:$0xff]
        %v4592 = vld [vmem:[%s3371 + $0x1d0] sm:$0xff]
        %v4593 = vld [vmem:[%s3371 + $0x1e8] sm:$0xff]
        %v4594 = vld [vmem:[%s3371 + $0x1f0] sm:$0xff]
        %s4595 = scalar_lea.vmem %s2, 512
        %v4596 = vld [vmem:[%s4595] sm:$0xff]
        %v4597 = vld [vmem:[%s4595 + $0x8] sm:$0xff]
        %v4598 = vld [vmem:[%s4595 + $0x10] sm:$0xff]
        %v4599 = vld [vmem:[%s4595 + $0x18] sm:$0xff]
        %v4600 = vld [vmem:[%s4595 + $0x20] sm:$0xff]
        %v4601 = vld [vmem:[%s4595 + $0x28] sm:$0xff]
        %v4602 = vld [vmem:[%s4595 + $0x30] sm:$0xff]
        %v4603 = vld [vmem:[%s4595 + $0x38] sm:$0xff]
        %v4604 = vld [vmem:[%s4595 + $0x40] sm:$0xff]
        %v4605 = vld [vmem:[%s4595 + $0x48] sm:$0xff]
        %v4606 = vld [vmem:[%s4595 + $0x50] sm:$0xff]
        %v4607 = vld [vmem:[%s4595 + $0x58] sm:$0xff]
        %v4608 = vld [vmem:[%s4595 + $0x60] sm:$0xff]
        %v4609 = vld [vmem:[%s4595 + $0x68] sm:$0xff]
        %v4610 = vld [vmem:[%s4595 + $0x70] sm:$0xff]
        %v4611 = vld [vmem:[%s4595 + $0x78] sm:$0xff]
        %4612 = vmatprep.subr.mxu0 0.0
        %4613 = vmatpush1.msra.mxu0 %v4596
        %4614 = vmatprep.subr.mxu0 0.0
        %4615 = vmatpush1.msra.mxu0 %v4597
        %4616 = vmatprep.subr.mxu0 0.0
        %4617 = vmatpush1.msra.mxu0 %v4598
        %4618 = vmatprep.subr.mxu0 0.0
        %4619 = vmatpush1.msra.mxu0 %v4599
        %4620 = vmatprep.subr.mxu0 0.0
        %4621 = vmatpush1.msra.mxu0 %v4600
        %4622 = vmatprep.subr.mxu0 0.0
        %4623 = vmatpush1.msra.mxu0 %v4601
        %4624 = vmatprep.subr.mxu0 0.0
        %4625 = vmatpush1.msra.mxu0 %v4602
        %4626 = vmatprep.subr.mxu0 0.0
        %4627 = vmatpush1.msra.mxu0 %v4603
        %4628 = vmatprep.subr.mxu0 0.0
        %4629 = vmatpush1.msra.mxu0 %v4604
        %4630 = vmatprep.subr.mxu0 0.0
        %4631 = vmatpush1.msra.mxu0 %v4605
        %4632 = vmatprep.subr.mxu0 0.0
        %4633 = vmatpush1.msra.mxu0 %v4606
        %4634 = vmatprep.subr.mxu0 0.0
        %4635 = vmatpush1.msra.mxu0 %v4607
        %4636 = vmatprep.subr.mxu0 0.0
        %4637 = vmatpush1.msra.mxu0 %v4608
        %4638 = vmatprep.subr.mxu0 0.0
        %4639 = vmatpush1.msra.mxu0 %v4609
        %4640 = vmatprep.subr.mxu0 0.0
        %4641 = vmatpush1.msra.mxu0 %v4610
        %4642 = vmatprep.subr.mxu0 0.0
        %4643 = vmatpush1.msra.mxu0 %v4611
        %4644 = vmatprep.subr.mxu0 0.0
        %4645 = vmatpush1.msra.mxu0 0.0
        %4646 = vmatprep.subr.mxu0 0.0
        %4647 = vmatpush1.msra.mxu0 0.0
        %4648 = vmatprep.subr.mxu0 0.0
        %4649 = vmatpush1.msra.mxu0 0.0
        %4650 = vmatprep.subr.mxu0 0.0
        %4651 = vmatpush1.msra.mxu0 0.0
        %4652 = vmatprep.subr.mxu0 0.0
        %4653 = vmatpush1.msra.mxu0 0.0
        %4654 = vmatprep.subr.mxu0 0.0
        %4655 = vmatpush1.msra.mxu0 0.0
        %4656 = vmatprep.subr.mxu0 0.0
        %4657 = vmatpush1.msra.mxu0 0.0
        %4658 = vmatprep.subr.mxu0 0.0
        %4659 = vmatpush1.msra.mxu0 0.0
        %4660 = vmatprep.subr.mxu0 0.0
        %4661 = vmatpush1.msra.mxu0 0.0
        %4662 = vmatprep.subr.mxu0 0.0
        %4663 = vmatpush1.msra.mxu0 0.0
        %4664 = vmatprep.subr.mxu0 0.0
        %4665 = vmatpush1.msra.mxu0 0.0
        %4666 = vmatprep.subr.mxu0 0.0
        %4667 = vmatpush1.msra.mxu0 0.0
        %4668 = vmatprep.subr.mxu0 0.0
        %4669 = vmatpush1.msra.mxu0 0.0
        %4670 = vmatprep.subr.mxu0 0.0
        %4671 = vmatpush1.msra.mxu0 0.0
        %4672 = vmatprep.subr.mxu0 0.0
        %4673 = vmatpush1.msra.mxu0 0.0
        %4674 = vmatprep.subr.mxu0 0.0
        %4675 = vmatpush1.msra.mxu0 0.0
        %4676 = vmatprep.mubr.f32.mxu0 0.0
        %4677 = vmatmul.mubr.f32.gmra.mrb[0].mxu0 %v4563
        %v4678 = vpop.f32.mrb[0].mxu0
        %v4679 = vadd.f32 0.0, %v4678
        %v4680 = vpop.f32.mrb[0].mxu0
        %4681 = vmatprep.mubr.f32.mxu0 0.0
        %4682 = vmatmul.mubr.f32.gmra.mrb[0].mxu0 %v4564
        %v4683 = vpop.f32.mrb[0].mxu0
        %v4684 = vadd.f32 0.0, %v4683
        %v4685 = vpop.f32.mrb[0].mxu0
        %4686 = vmatprep.mubr.f32.mxu0 0.0
        %4687 = vmatmul.mubr.f32.gmra.mrb[0].mxu0 %v4565
        %v4688 = vpop.f32.mrb[0].mxu0
        %v4689 = vadd.f32 0.0, %v4688
        %v4690 = vpop.f32.mrb[0].mxu0
        %4691 = vmatprep.mubr.f32.mxu0 0.0
        %4692 = vmatmul.mubr.f32.gmra.mrb[0].mxu0 %v4566
        %v4693 = vpop.f32.mrb[0].mxu0
        %v4694 = vadd.f32 0.0, %v4693
        %v4695 = vpop.f32.mrb[0].mxu0
        %4696 = vmatprep.mubr.f32.mxu0 0.0
        %4697 = vmatmul.mubr.f32.gmra.mrb[0].mxu0 %v4567
        %v4698 = vpop.f32.mrb[0].mxu0
        %v4699 = vadd.f32 0.0, %v4698
        %v4700 = vpop.f32.mrb[0].mxu0
        %4701 = vmatprep.mubr.f32.mxu0 0.0
        %4702 = vmatmul.mubr.f32.gmra.mrb[0].mxu0 %v4568
        %v4703 = vpop.f32.mrb[0].mxu0
        %v4704 = vadd.f32 0.0, %v4703
        %v4705 = vpop.f32.mrb[0].mxu0
        %4706 = vmatprep.mubr.f32.mxu0 0.0
        %4707 = vmatmul.mubr.f32.gmra.mrb[0].mxu0 %v4569
        %v4708 = vpop.f32.mrb[0].mxu0
        %v4709 = vadd.f32 0.0, %v4708
        %v4710 = vpop.f32.mrb[0].mxu0
        %4711 = vmatprep.mubr.f32.mxu0 0.0
        %4712 = vmatmul.mubr.f32.gmra.mrb[0].mxu0 %v4570
        %v4713 = vpop.f32.mrb[0].mxu0
        %v4714 = vadd.f32 0.0, %v4713
        %v4715 = vpop.f32.mrb[0].mxu0
        %4716 = vmatprep.mubr.f32.mxu0 0.0
        %4717 = vmatmul.mubr.f32.gmra.mrb[0].mxu0 %v4571
        %v4718 = vpop.f32.mrb[0].mxu0
        %v4719 = vadd.f32 0.0, %v4718
        %v4720 = vpop.f32.mrb[0].mxu0
        %4721 = vmatprep.mubr.f32.mxu0 0.0
        %4722 = vmatmul.mubr.f32.gmra.mrb[0].mxu0 %v4572
        %v4723 = vpop.f32.mrb[0].mxu0
        %v4724 = vadd.f32 0.0, %v4723
        %v4725 = vpop.f32.mrb[0].mxu0
        %4726 = vmatprep.mubr.f32.mxu0 0.0
        %4727 = vmatmul.mubr.f32.gmra.mrb[0].mxu0 %v4573
        %v4728 = vpop.f32.mrb[0].mxu0
        %v4729 = vadd.f32 0.0, %v4728
        %v4730 = vpop.f32.mrb[0].mxu0
        %4731 = vmatprep.mubr.f32.mxu0 0.0
        %4732 = vmatmul.mubr.f32.gmra.mrb[0].mxu0 %v4574
        %v4733 = vpop.f32.mrb[0].mxu0
        %v4734 = vadd.f32 0.0, %v4733
        %v4735 = vpop.f32.mrb[0].mxu0
        %4736 = vmatprep.mubr.f32.mxu0 0.0
        %4737 = vmatmul.mubr.f32.gmra.mrb[0].mxu0 %v4575
        %v4738 = vpop.f32.mrb[0].mxu0
        %v4739 = vadd.f32 0.0, %v4738
        %v4740 = vpop.f32.mrb[0].mxu0
        %4741 = vmatprep.mubr.f32.mxu0 0.0
        %4742 = vmatmul.mubr.f32.gmra.mrb[0].mxu0 %v4576
        %v4743 = vpop.f32.mrb[0].mxu0
        %v4744 = vadd.f32 0.0, %v4743
        %v4745 = vpop.f32.mrb[0].mxu0
        %4746 = vmatprep.mubr.f32.mxu0 0.0
        %4747 = vmatmul.mubr.f32.gmra.mrb[0].mxu0 %v4577
        %v4748 = vpop.f32.mrb[0].mxu0
        %v4749 = vadd.f32 0.0, %v4748
        %v4750 = vpop.f32.mrb[0].mxu0
        %4751 = vmatprep.mubr.f32.mxu0 0.0
        %4752 = vmatmul.mubr.f32.gmra.mrb[0].mxu0 %v4578
        %v4753 = vpop.f32.mrb[0].mxu0
        %v4754 = vadd.f32 0.0, %v4753
        %v4755 = vpop.f32.mrb[0].mxu0
        %4756 = vmatprep.mubr.f32.mxu0 0.0
        %4757 = vmatmul.mubr.f32.gmra.mrb[0].mxu0 %v4579
        %v4758 = vpop.f32.mrb[0].mxu0
        %v4759 = vadd.f32 0.0, %v4758
        %v4760 = vpop.f32.mrb[0].mxu0
        %4761 = vmatprep.mubr.f32.mxu0 0.0
        %4762 = vmatmul.mubr.f32.gmra.mrb[0].mxu0 %v4580
        %v4763 = vpop.f32.mrb[0].mxu0
        %v4764 = vadd.f32 0.0, %v4763
        %v4765 = vpop.f32.mrb[0].mxu0
        %4766 = vmatprep.mubr.f32.mxu0 0.0
        %4767 = vmatmul.mubr.f32.gmra.mrb[0].mxu0 %v4581
        %v4768 = vpop.f32.mrb[0].mxu0
        %v4769 = vadd.f32 0.0, %v4768
        %v4770 = vpop.f32.mrb[0].mxu0
        %4771 = vmatprep.mubr.f32.mxu0 0.0
        %4772 = vmatmul.mubr.f32.gmra.mrb[0].mxu0 %v4582
        %v4773 = vpop.f32.mrb[0].mxu0
        %v4774 = vadd.f32 0.0, %v4773
        %v4775 = vpop.f32.mrb[0].mxu0
        %4776 = vmatprep.mubr.f32.mxu0 0.0
        %4777 = vmatmul.mubr.f32.gmra.mrb[0].mxu0 %v4583
        %v4778 = vpop.f32.mrb[0].mxu0
        %v4779 = vadd.f32 0.0, %v4778
        %v4780 = vpop.f32.mrb[0].mxu0
        %4781 = vmatprep.mubr.f32.mxu0 0.0
        %4782 = vmatmul.mubr.f32.gmra.mrb[0].mxu0 %v4584
        %v4783 = vpop.f32.mrb[0].mxu0
        %v4784 = vadd.f32 0.0, %v4783
        %v4785 = vpop.f32.mrb[0].mxu0
        %4786 = vmatprep.mubr.f32.mxu0 0.0
        %4787 = vmatmul.mubr.f32.gmra.mrb[0].mxu0 %v4585
        %v4788 = vpop.f32.mrb[0].mxu0
        %v4789 = vadd.f32 0.0, %v4788
        %v4790 = vpop.f32.mrb[0].mxu0
        %4791 = vmatprep.mubr.f32.mxu0 0.0
        %4792 = vmatmul.mubr.f32.gmra.mrb[0].mxu0 %v4586
        %v4793 = vpop.f32.mrb[0].mxu0
        %v4794 = vadd.f32 0.0, %v4793
        %v4795 = vpop.f32.mrb[0].mxu0
        %4796 = vmatprep.mubr.f32.mxu0 0.0
        %4797 = vmatmul.mubr.f32.gmra.mrb[0].mxu0 %v4587
        %v4798 = vpop.f32.mrb[0].mxu0
        %v4799 = vadd.f32 0.0, %v4798
        %v4800 = vpop.f32.mrb[0].mxu0
        %4801 = vmatprep.mubr.f32.mxu0 0.0
        %4802 = vmatmul.mubr.f32.gmra.mrb[0].mxu0 %v4588
        %v4803 = vpop.f32.mrb[0].mxu0
        %v4804 = vadd.f32 0.0, %v4803
        %v4805 = vpop.f32.mrb[0].mxu0
        %4806 = vmatprep.mubr.f32.mxu0 0.0
        %4807 = vmatmul.mubr.f32.gmra.mrb[0].mxu0 %v4589
        %v4808 = vpop.f32.mrb[0].mxu0
        %v4809 = vadd.f32 0.0, %v4808
        %v4810 = vpop.f32.mrb[0].mxu0
        %4811 = vmatprep.mubr.f32.mxu0 0.0
        %4812 = vmatmul.mubr.f32.gmra.mrb[0].mxu0 %v4590
        %v4813 = vpop.f32.mrb[0].mxu0
        %v4814 = vadd.f32 0.0, %v4813
        %v4815 = vpop.f32.mrb[0].mxu0
        %4816 = vmatprep.mubr.f32.mxu0 0.0
        %4817 = vmatmul.mubr.f32.gmra.mrb[0].mxu0 %v4591
        %v4818 = vpop.f32.mrb[0].mxu0
        %v4819 = vadd.f32 0.0, %v4818
        %v4820 = vpop.f32.mrb[0].mxu0
        %4821 = vmatprep.mubr.f32.mxu0 0.0
        %4822 = vmatmul.mubr.f32.gmra.mrb[0].mxu0 %v4592
        %v4823 = vpop.f32.mrb[0].mxu0
        %v4824 = vadd.f32 0.0, %v4823
        %v4825 = vpop.f32.mrb[0].mxu0
        %4826 = vmatprep.mubr.f32.mxu0 0.0
        %4827 = vmatmul.mubr.f32.gmra.mrb[0].mxu0 %v4593
        %v4828 = vpop.f32.mrb[0].mxu0
        %v4829 = vadd.f32 0.0, %v4828
        %v4830 = vpop.f32.mrb[0].mxu0
        %4831 = vmatprep.mubr.f32.mxu0 0.0
        %4832 = vmatmul.mubr.f32.gmra.mrb[0].mxu0 %v4594
        %v4833 = vpop.f32.mrb[0].mxu0
        %v4834 = vadd.f32 0.0, %v4833
        %v4835 = vpop.f32.mrb[0].mxu0
        %4836 = vdwg.mxu0
        %v4837 = vadd.f32 %v4531, %v4679
        %v4838 = vadd.f32 %v4532, %v4684
        %v4839 = vadd.f32 %v4533, %v4689
        %v4840 = vadd.f32 %v4534, %v4694
        %v4841 = vadd.f32 %v4535, %v4699
        %v4842 = vadd.f32 %v4536, %v4704
        %v4843 = vadd.f32 %v4537, %v4709
        %v4844 = vadd.f32 %v4538, %v4714
        %v4845 = vadd.f32 %v4539, %v4719
        %v4846 = vadd.f32 %v4540, %v4724
        %v4847 = vadd.f32 %v4541, %v4729
        %v4848 = vadd.f32 %v4542, %v4734
        %v4849 = vadd.f32 %v4543, %v4739
        %v4850 = vadd.f32 %v4544, %v4744
        %v4851 = vadd.f32 %v4545, %v4749
        %v4852 = vadd.f32 %v4546, %v4754
        %v4853 = vadd.f32 %v4547, %v4759
        %v4854 = vadd.f32 %v4548, %v4764
        %v4855 = vadd.f32 %v4549, %v4769
        %v4856 = vadd.f32 %v4550, %v4774
        %v4857 = vadd.f32 %v4551, %v4779
        %v4858 = vadd.f32 %v4552, %v4784
        %v4859 = vadd.f32 %v4553, %v4789
        %v4860 = vadd.f32 %v4554, %v4794
        %v4861 = vadd.f32 %v4555, %v4799
        %v4862 = vadd.f32 %v4556, %v4804
        %v4863 = vadd.f32 %v4557, %v4809
        %v4864 = vadd.f32 %v4558, %v4814
        %v4865 = vadd.f32 %v4559, %v4819
        %v4866 = vadd.f32 %v4560, %v4824
        %v4867 = vadd.f32 %v4561, %v4829
        %v4868 = vadd.f32 %v4562, %v4834
        %v4869 = vld [vmem:[%s3371 + $0x9] sm:$0xff]
        %v4870 = vld [vmem:[%s3371 + $0x11] sm:$0xff]
        %v4871 = vld [vmem:[%s3371 + $0x29] sm:$0xff]
        %v4872 = vld [vmem:[%s3371 + $0x31] sm:$0xff]
        %v4873 = vld [vmem:[%s3371 + $0x49] sm:$0xff]
        %v4874 = vld [vmem:[%s3371 + $0x51] sm:$0xff]
        %v4875 = vld [vmem:[%s3371 + $0x69] sm:$0xff]
        %v4876 = vld [vmem:[%s3371 + $0x71] sm:$0xff]
        %v4877 = vld [vmem:[%s3371 + $0x89] sm:$0xff]
        %v4878 = vld [vmem:[%s3371 + $0x91] sm:$0xff]
        %v4879 = vld [vmem:[%s3371 + $0xa9] sm:$0xff]
        %v4880 = vld [vmem:[%s3371 + $0xb1] sm:$0xff]
        %v4881 = vld [vmem:[%s3371 + $0xc9] sm:$0xff]
        %v4882 = vld [vmem:[%s3371 + $0xd1] sm:$0xff]
        %v4883 = vld [vmem:[%s3371 + $0xe9] sm:$0xff]
        %v4884 = vld [vmem:[%s3371 + $0xf1] sm:$0xff]
        %v4885 = vld [vmem:[%s3371 + $0x109] sm:$0xff]
        %v4886 = vld [vmem:[%s3371 + $0x111] sm:$0xff]
        %v4887 = vld [vmem:[%s3371 + $0x129] sm:$0xff]
        %v4888 = vld [vmem:[%s3371 + $0x131] sm:$0xff]
        %v4889 = vld [vmem:[%s3371 + $0x149] sm:$0xff]
        %v4890 = vld [vmem:[%s3371 + $0x151] sm:$0xff]
        %v4891 = vld [vmem:[%s3371 + $0x169] sm:$0xff]
        %v4892 = vld [vmem:[%s3371 + $0x171] sm:$0xff]
        %v4893 = vld [vmem:[%s3371 + $0x189] sm:$0xff]
        %v4894 = vld [vmem:[%s3371 + $0x191] sm:$0xff]
        %v4895 = vld [vmem:[%s3371 + $0x1a9] sm:$0xff]
        %v4896 = vld [vmem:[%s3371 + $0x1b1] sm:$0xff]
        %v4897 = vld [vmem:[%s3371 + $0x1c9] sm:$0xff]
        %v4898 = vld [vmem:[%s3371 + $0x1d1] sm:$0xff]
        %v4899 = vld [vmem:[%s3371 + $0x1e9] sm:$0xff]
        %v4900 = vld [vmem:[%s3371 + $0x1f1] sm:$0xff]
        %s4901 = scalar_lea.vmem %s2, 640
        %v4902 = vld [vmem:[%s4901] sm:$0xff]
        %v4903 = vld [vmem:[%s4901 + $0x8] sm:$0xff]
        %v4904 = vld [vmem:[%s4901 + $0x10] sm:$0xff]
        %v4905 = vld [vmem:[%s4901 + $0x18] sm:$0xff]
        %v4906 = vld [vmem:[%s4901 + $0x20] sm:$0xff]
        %v4907 = vld [vmem:[%s4901 + $0x28] sm:$0xff]
        %v4908 = vld [vmem:[%s4901 + $0x30] sm:$0xff]
        %v4909 = vld [vmem:[%s4901 + $0x38] sm:$0xff]
        %v4910 = vld [vmem:[%s4901 + $0x40] sm:$0xff]
        %v4911 = vld [vmem:[%s4901 + $0x48] sm:$0xff]
        %v4912 = vld [vmem:[%s4901 + $0x50] sm:$0xff]
        %v4913 = vld [vmem:[%s4901 + $0x58] sm:$0xff]
        %v4914 = vld [vmem:[%s4901 + $0x60] sm:$0xff]
        %v4915 = vld [vmem:[%s4901 + $0x68] sm:$0xff]
        %v4916 = vld [vmem:[%s4901 + $0x70] sm:$0xff]
        %v4917 = vld [vmem:[%s4901 + $0x78] sm:$0xff]
        %4918 = vmatprep.subr.mxu0 0.0
        %4919 = vmatpush1.msra.mxu0 %v4902
        %4920 = vmatprep.subr.mxu0 0.0
        %4921 = vmatpush1.msra.mxu0 %v4903
        %4922 = vmatprep.subr.mxu0 0.0
        %4923 = vmatpush1.msra.mxu0 %v4904
        %4924 = vmatprep.subr.mxu0 0.0
        %4925 = vmatpush1.msra.mxu0 %v4905
        %4926 = vmatprep.subr.mxu0 0.0
        %4927 = vmatpush1.msra.mxu0 %v4906
        %4928 = vmatprep.subr.mxu0 0.0
        %4929 = vmatpush1.msra.mxu0 %v4907
        %4930 = vmatprep.subr.mxu0 0.0
        %4931 = vmatpush1.msra.mxu0 %v4908
        %4932 = vmatprep.subr.mxu0 0.0
        %4933 = vmatpush1.msra.mxu0 %v4909
        %4934 = vmatprep.subr.mxu0 0.0
        %4935 = vmatpush1.msra.mxu0 %v4910
        %4936 = vmatprep.subr.mxu0 0.0
        %4937 = vmatpush1.msra.mxu0 %v4911
        %4938 = vmatprep.subr.mxu0 0.0
        %4939 = vmatpush1.msra.mxu0 %v4912
        %4940 = vmatprep.subr.mxu0 0.0
        %4941 = vmatpush1.msra.mxu0 %v4913
        %4942 = vmatprep.subr.mxu0 0.0
        %4943 = vmatpush1.msra.mxu0 %v4914
        %4944 = vmatprep.subr.mxu0 0.0
        %4945 = vmatpush1.msra.mxu0 %v4915
        %4946 = vmatprep.subr.mxu0 0.0
        %4947 = vmatpush1.msra.mxu0 %v4916
        %4948 = vmatprep.subr.mxu0 0.0
        %4949 = vmatpush1.msra.mxu0 %v4917
        %4950 = vmatprep.subr.mxu0 0.0
        %4951 = vmatpush1.msra.mxu0 0.0
        %4952 = vmatprep.subr.mxu0 0.0
        %4953 = vmatpush1.msra.mxu0 0.0
        %4954 = vmatprep.subr.mxu0 0.0
        %4955 = vmatpush1.msra.mxu0 0.0
        %4956 = vmatprep.subr.mxu0 0.0
        %4957 = vmatpush1.msra.mxu0 0.0
        %4958 = vmatprep.subr.mxu0 0.0
        %4959 = vmatpush1.msra.mxu0 0.0
        %4960 = vmatprep.subr.mxu0 0.0
        %4961 = vmatpush1.msra.mxu0 0.0
        %4962 = vmatprep.subr.mxu0 0.0
        %4963 = vmatpush1.msra.mxu0 0.0
        %4964 = vmatprep.subr.mxu0 0.0
        %4965 = vmatpush1.msra.mxu0 0.0
        %4966 = vmatprep.subr.mxu0 0.0
        %4967 = vmatpush1.msra.mxu0 0.0
        %4968 = vmatprep.subr.mxu0 0.0
        %4969 = vmatpush1.msra.mxu0 0.0
        %4970 = vmatprep.subr.mxu0 0.0
        %4971 = vmatpush1.msra.mxu0 0.0
        %4972 = vmatprep.subr.mxu0 0.0
        %4973 = vmatpush1.msra.mxu0 0.0
        %4974 = vmatprep.subr.mxu0 0.0
        %4975 = vmatpush1.msra.mxu0 0.0
        %4976 = vmatprep.subr.mxu0 0.0
        %4977 = vmatpush1.msra.mxu0 0.0
        %4978 = vmatprep.subr.mxu0 0.0
        %4979 = vmatpush1.msra.mxu0 0.0
        %4980 = vmatprep.subr.mxu0 0.0
        %4981 = vmatpush1.msra.mxu0 0.0
        %4982 = vmatprep.mubr.f32.mxu0 0.0
        %4983 = vmatmul.mubr.f32.gmra.mrb[0].mxu0 %v4869
        %v4984 = vpop.f32.mrb[0].mxu0
        %v4985 = vadd.f32 0.0, %v4984
        %v4986 = vpop.f32.mrb[0].mxu0
        %4987 = vmatprep.mubr.f32.mxu0 0.0
        %4988 = vmatmul.mubr.f32.gmra.mrb[0].mxu0 %v4870
        %v4989 = vpop.f32.mrb[0].mxu0
        %v4990 = vadd.f32 0.0, %v4989
        %v4991 = vpop.f32.mrb[0].mxu0
        %4992 = vmatprep.mubr.f32.mxu0 0.0
        %4993 = vmatmul.mubr.f32.gmra.mrb[0].mxu0 %v4871
        %v4994 = vpop.f32.mrb[0].mxu0
        %v4995 = vadd.f32 0.0, %v4994
        %v4996 = vpop.f32.mrb[0].mxu0
        %4997 = vmatprep.mubr.f32.mxu0 0.0
        %4998 = vmatmul.mubr.f32.gmra.mrb[0].mxu0 %v4872
        %v4999 = vpop.f32.mrb[0].mxu0
        %v5000 = vadd.f32 0.0, %v4999
        %v5001 = vpop.f32.mrb[0].mxu0
        %5002 = vmatprep.mubr.f32.mxu0 0.0
        %5003 = vmatmul.mubr.f32.gmra.mrb[0].mxu0 %v4873
        %v5004 = vpop.f32.mrb[0].mxu0
        %v5005 = vadd.f32 0.0, %v5004
        %v5006 = vpop.f32.mrb[0].mxu0
        %5007 = vmatprep.mubr.f32.mxu0 0.0
        %5008 = vmatmul.mubr.f32.gmra.mrb[0].mxu0 %v4874
        %v5009 = vpop.f32.mrb[0].mxu0
        %v5010 = vadd.f32 0.0, %v5009
        %v5011 = vpop.f32.mrb[0].mxu0
        %5012 = vmatprep.mubr.f32.mxu0 0.0
        %5013 = vmatmul.mubr.f32.gmra.mrb[0].mxu0 %v4875
        %v5014 = vpop.f32.mrb[0].mxu0
        %v5015 = vadd.f32 0.0, %v5014
        %v5016 = vpop.f32.mrb[0].mxu0
        %5017 = vmatprep.mubr.f32.mxu0 0.0
        %5018 = vmatmul.mubr.f32.gmra.mrb[0].mxu0 %v4876
        %v5019 = vpop.f32.mrb[0].mxu0
        %v5020 = vadd.f32 0.0, %v5019
        %v5021 = vpop.f32.mrb[0].mxu0
        %5022 = vmatprep.mubr.f32.mxu0 0.0
        %5023 = vmatmul.mubr.f32.gmra.mrb[0].mxu0 %v4877
        %v5024 = vpop.f32.mrb[0].mxu0
        %v5025 = vadd.f32 0.0, %v5024
        %v5026 = vpop.f32.mrb[0].mxu0
        %5027 = vmatprep.mubr.f32.mxu0 0.0
        %5028 = vmatmul.mubr.f32.gmra.mrb[0].mxu0 %v4878
        %v5029 = vpop.f32.mrb[0].mxu0
        %v5030 = vadd.f32 0.0, %v5029
        %v5031 = vpop.f32.mrb[0].mxu0
        %5032 = vmatprep.mubr.f32.mxu0 0.0
        %5033 = vmatmul.mubr.f32.gmra.mrb[0].mxu0 %v4879
        %v5034 = vpop.f32.mrb[0].mxu0
        %v5035 = vadd.f32 0.0, %v5034
        %v5036 = vpop.f32.mrb[0].mxu0
        %5037 = vmatprep.mubr.f32.mxu0 0.0
        %5038 = vmatmul.mubr.f32.gmra.mrb[0].mxu0 %v4880
        %v5039 = vpop.f32.mrb[0].mxu0
        %v5040 = vadd.f32 0.0, %v5039
        %v5041 = vpop.f32.mrb[0].mxu0
        %5042 = vmatprep.mubr.f32.mxu0 0.0
        %5043 = vmatmul.mubr.f32.gmra.mrb[0].mxu0 %v4881
        %v5044 = vpop.f32.mrb[0].mxu0
        %v5045 = vadd.f32 0.0, %v5044
        %v5046 = vpop.f32.mrb[0].mxu0
        %5047 = vmatprep.mubr.f32.mxu0 0.0
        %5048 = vmatmul.mubr.f32.gmra.mrb[0].mxu0 %v4882
        %v5049 = vpop.f32.mrb[0].mxu0
        %v5050 = vadd.f32 0.0, %v5049
        %v5051 = vpop.f32.mrb[0].mxu0
        %5052 = vmatprep.mubr.f32.mxu0 0.0
        %5053 = vmatmul.mubr.f32.gmra.mrb[0].mxu0 %v4883
        %v5054 = vpop.f32.mrb[0].mxu0
        %v5055 = vadd.f32 0.0, %v5054
        %v5056 = vpop.f32.mrb[0].mxu0
        %5057 = vmatprep.mubr.f32.mxu0 0.0
        %5058 = vmatmul.mubr.f32.gmra.mrb[0].mxu0 %v4884
        %v5059 = vpop.f32.mrb[0].mxu0
        %v5060 = vadd.f32 0.0, %v5059
        %v5061 = vpop.f32.mrb[0].mxu0
        %5062 = vmatprep.mubr.f32.mxu0 0.0
        %5063 = vmatmul.mubr.f32.gmra.mrb[0].mxu0 %v4885
        %v5064 = vpop.f32.mrb[0].mxu0
        %v5065 = vadd.f32 0.0, %v5064
        %v5066 = vpop.f32.mrb[0].mxu0
        %5067 = vmatprep.mubr.f32.mxu0 0.0
        %5068 = vmatmul.mubr.f32.gmra.mrb[0].mxu0 %v4886
        %v5069 = vpop.f32.mrb[0].mxu0
        %v5070 = vadd.f32 0.0, %v5069
        %v5071 = vpop.f32.mrb[0].mxu0
        %5072 = vmatprep.mubr.f32.mxu0 0.0
        %5073 = vmatmul.mubr.f32.gmra.mrb[0].mxu0 %v4887
        %v5074 = vpop.f32.mrb[0].mxu0
        %v5075 = vadd.f32 0.0, %v5074
        %v5076 = vpop.f32.mrb[0].mxu0
        %5077 = vmatprep.mubr.f32.mxu0 0.0
        %5078 = vmatmul.mubr.f32.gmra.mrb[0].mxu0 %v4888
        %v5079 = vpop.f32.mrb[0].mxu0
        %v5080 = vadd.f32 0.0, %v5079
        %v5081 = vpop.f32.mrb[0].mxu0
        %5082 = vmatprep.mubr.f32.mxu0 0.0
        %5083 = vmatmul.mubr.f32.gmra.mrb[0].mxu0 %v4889
        %v5084 = vpop.f32.mrb[0].mxu0
        %v5085 = vadd.f32 0.0, %v5084
        %v5086 = vpop.f32.mrb[0].mxu0
        %5087 = vmatprep.mubr.f32.mxu0 0.0
        %5088 = vmatmul.mubr.f32.gmra.mrb[0].mxu0 %v4890
        %v5089 = vpop.f32.mrb[0].mxu0
        %v5090 = vadd.f32 0.0, %v5089
        %v5091 = vpop.f32.mrb[0].mxu0
        %5092 = vmatprep.mubr.f32.mxu0 0.0
        %5093 = vmatmul.mubr.f32.gmra.mrb[0].mxu0 %v4891
        %v5094 = vpop.f32.mrb[0].mxu0
        %v5095 = vadd.f32 0.0, %v5094
        %v5096 = vpop.f32.mrb[0].mxu0
        %5097 = vmatprep.mubr.f32.mxu0 0.0
        %5098 = vmatmul.mubr.f32.gmra.mrb[0].mxu0 %v4892
        %v5099 = vpop.f32.mrb[0].mxu0
        %v5100 = vadd.f32 0.0, %v5099
        %v5101 = vpop.f32.mrb[0].mxu0
        %5102 = vmatprep.mubr.f32.mxu0 0.0
        %5103 = vmatmul.mubr.f32.gmra.mrb[0].mxu0 %v4893
        %v5104 = vpop.f32.mrb[0].mxu0
        %v5105 = vadd.f32 0.0, %v5104
        %v5106 = vpop.f32.mrb[0].mxu0
        %5107 = vmatprep.mubr.f32.mxu0 0.0
        %5108 = vmatmul.mubr.f32.gmra.mrb[0].mxu0 %v4894
        %v5109 = vpop.f32.mrb[0].mxu0
        %v5110 = vadd.f32 0.0, %v5109
        %v5111 = vpop.f32.mrb[0].mxu0
        %5112 = vmatprep.mubr.f32.mxu0 0.0
        %5113 = vmatmul.mubr.f32.gmra.mrb[0].mxu0 %v4895
        %v5114 = vpop.f32.mrb[0].mxu0
        %v5115 = vadd.f32 0.0, %v5114
        %v5116 = vpop.f32.mrb[0].mxu0
        %5117 = vmatprep.mubr.f32.mxu0 0.0
        %5118 = vmatmul.mubr.f32.gmra.mrb[0].mxu0 %v4896
        %v5119 = vpop.f32.mrb[0].mxu0
        %v5120 = vadd.f32 0.0, %v5119
        %v5121 = vpop.f32.mrb[0].mxu0
        %5122 = vmatprep.mubr.f32.mxu0 0.0
        %5123 = vmatmul.mubr.f32.gmra.mrb[0].mxu0 %v4897
        %v5124 = vpop.f32.mrb[0].mxu0
        %v5125 = vadd.f32 0.0, %v5124
        %v5126 = vpop.f32.mrb[0].mxu0
        %5127 = vmatprep.mubr.f32.mxu0 0.0
        %5128 = vmatmul.mubr.f32.gmra.mrb[0].mxu0 %v4898
        %v5129 = vpop.f32.mrb[0].mxu0
        %v5130 = vadd.f32 0.0, %v5129
        %v5131 = vpop.f32.mrb[0].mxu0
        %5132 = vmatprep.mubr.f32.mxu0 0.0
        %5133 = vmatmul.mubr.f32.gmra.mrb[0].mxu0 %v4899
        %v5134 = vpop.f32.mrb[0].mxu0
        %v5135 = vadd.f32 0.0, %v5134
        %v5136 = vpop.f32.mrb[0].mxu0
        %5137 = vmatprep.mubr.f32.mxu0 0.0
        %5138 = vmatmul.mubr.f32.gmra.mrb[0].mxu0 %v4900
        %v5139 = vpop.f32.mrb[0].mxu0
        %v5140 = vadd.f32 0.0, %v5139
        %v5141 = vpop.f32.mrb[0].mxu0
        %5142 = vdwg.mxu0
        %v5143 = vadd.f32 %v4837, %v4985
        %v5144 = vadd.f32 %v4838, %v4990
        %v5145 = vadd.f32 %v4839, %v4995
        %v5146 = vadd.f32 %v4840, %v5000
        %v5147 = vadd.f32 %v4841, %v5005
        %v5148 = vadd.f32 %v4842, %v5010
        %v5149 = vadd.f32 %v4843, %v5015
        %v5150 = vadd.f32 %v4844, %v5020
        %v5151 = vadd.f32 %v4845, %v5025
        %v5152 = vadd.f32 %v4846, %v5030
        %v5153 = vadd.f32 %v4847, %v5035
        %v5154 = vadd.f32 %v4848, %v5040
        %v5155 = vadd.f32 %v4849, %v5045
        %v5156 = vadd.f32 %v4850, %v5050
        %v5157 = vadd.f32 %v4851, %v5055
        %v5158 = vadd.f32 %v4852, %v5060
        %v5159 = vadd.f32 %v4853, %v5065
        %v5160 = vadd.f32 %v4854, %v5070
        %v5161 = vadd.f32 %v4855, %v5075
        %v5162 = vadd.f32 %v4856, %v5080
        %v5163 = vadd.f32 %v4857, %v5085
        %v5164 = vadd.f32 %v4858, %v5090
        %v5165 = vadd.f32 %v4859, %v5095
        %v5166 = vadd.f32 %v4860, %v5100
        %v5167 = vadd.f32 %v4861, %v5105
        %v5168 = vadd.f32 %v4862, %v5110
        %v5169 = vadd.f32 %v4863, %v5115
        %v5170 = vadd.f32 %v4864, %v5120
        %v5171 = vadd.f32 %v4865, %v5125
        %v5172 = vadd.f32 %v4866, %v5130
        %v5173 = vadd.f32 %v4867, %v5135
        %v5174 = vadd.f32 %v4868, %v5140
        %s5175 = scalar_lea.vmem [#allocation3], 64
        %v5176 = vld [vmem:[%s5175 + $0x7] sm:$0xff]
        %v5177 = vld [vmem:[%s5175 + $0xf] sm:$0xff]
        %v5178 = vld [vmem:[%s5175 + $0x27] sm:$0xff]
        %v5179 = vld [vmem:[%s5175 + $0x2f] sm:$0xff]
        %v5180 = vld [vmem:[%s5175 + $0x47] sm:$0xff]
        %v5181 = vld [vmem:[%s5175 + $0x4f] sm:$0xff]
        %v5182 = vld [vmem:[%s5175 + $0x67] sm:$0xff]
        %v5183 = vld [vmem:[%s5175 + $0x6f] sm:$0xff]
        %v5184 = vld [vmem:[%s5175 + $0x87] sm:$0xff]
        %v5185 = vld [vmem:[%s5175 + $0x8f] sm:$0xff]
        %v5186 = vld [vmem:[%s5175 + $0xa7] sm:$0xff]
        %v5187 = vld [vmem:[%s5175 + $0xaf] sm:$0xff]
        %v5188 = vld [vmem:[%s5175 + $0xc7] sm:$0xff]
        %v5189 = vld [vmem:[%s5175 + $0xcf] sm:$0xff]
        %v5190 = vld [vmem:[%s5175 + $0xe7] sm:$0xff]
        %v5191 = vld [vmem:[%s5175 + $0xef] sm:$0xff]
        %v5192 = vld [vmem:[%s5175 + $0x107] sm:$0xff]
        %v5193 = vld [vmem:[%s5175 + $0x10f] sm:$0xff]
        %v5194 = vld [vmem:[%s5175 + $0x127] sm:$0xff]
        %v5195 = vld [vmem:[%s5175 + $0x12f] sm:$0xff]
        %v5196 = vld [vmem:[%s5175 + $0x147] sm:$0xff]
        %v5197 = vld [vmem:[%s5175 + $0x14f] sm:$0xff]
        %v5198 = vld [vmem:[%s5175 + $0x167] sm:$0xff]
        %v5199 = vld [vmem:[%s5175 + $0x16f] sm:$0xff]
        %v5200 = vld [vmem:[%s5175 + $0x187] sm:$0xff]
        %v5201 = vld [vmem:[%s5175 + $0x18f] sm:$0xff]
        %v5202 = vld [vmem:[%s5175 + $0x1a7] sm:$0xff]
        %v5203 = vld [vmem:[%s5175 + $0x1af] sm:$0xff]
        %v5204 = vld [vmem:[%s5175 + $0x1c7] sm:$0xff]
        %v5205 = vld [vmem:[%s5175 + $0x1cf] sm:$0xff]
        %v5206 = vld [vmem:[%s5175 + $0x1e7] sm:$0xff]
        %v5207 = vld [vmem:[%s5175 + $0x1ef] sm:$0xff]
        %s5208 = scalar_lea.vmem %s2, 768
        %v5209 = vld [vmem:[%s5208] sm:$0xff]
        %v5210 = vld [vmem:[%s5208 + $0x8] sm:$0xff]
        %v5211 = vld [vmem:[%s5208 + $0x10] sm:$0xff]
        %v5212 = vld [vmem:[%s5208 + $0x18] sm:$0xff]
        %v5213 = vld [vmem:[%s5208 + $0x20] sm:$0xff]
        %v5214 = vld [vmem:[%s5208 + $0x28] sm:$0xff]
        %v5215 = vld [vmem:[%s5208 + $0x30] sm:$0xff]
        %v5216 = vld [vmem:[%s5208 + $0x38] sm:$0xff]
        %v5217 = vld [vmem:[%s5208 + $0x40] sm:$0xff]
        %v5218 = vld [vmem:[%s5208 + $0x48] sm:$0xff]
        %v5219 = vld [vmem:[%s5208 + $0x50] sm:$0xff]
        %v5220 = vld [vmem:[%s5208 + $0x58] sm:$0xff]
        %v5221 = vld [vmem:[%s5208 + $0x60] sm:$0xff]
        %v5222 = vld [vmem:[%s5208 + $0x68] sm:$0xff]
        %v5223 = vld [vmem:[%s5208 + $0x70] sm:$0xff]
        %v5224 = vld [vmem:[%s5208 + $0x78] sm:$0xff]
        %5225 = vmatprep.subr.mxu0 0.0
        %5226 = vmatpush1.msra.mxu0 %v5209
        %5227 = vmatprep.subr.mxu0 0.0
        %5228 = vmatpush1.msra.mxu0 %v5210
        %5229 = vmatprep.subr.mxu0 0.0
        %5230 = vmatpush1.msra.mxu0 %v5211
        %5231 = vmatprep.subr.mxu0 0.0
        %5232 = vmatpush1.msra.mxu0 %v5212
        %5233 = vmatprep.subr.mxu0 0.0
        %5234 = vmatpush1.msra.mxu0 %v5213
        %5235 = vmatprep.subr.mxu0 0.0
        %5236 = vmatpush1.msra.mxu0 %v5214
        %5237 = vmatprep.subr.mxu0 0.0
        %5238 = vmatpush1.msra.mxu0 %v5215
        %5239 = vmatprep.subr.mxu0 0.0
        %5240 = vmatpush1.msra.mxu0 %v5216
        %5241 = vmatprep.subr.mxu0 0.0
        %5242 = vmatpush1.msra.mxu0 %v5217
        %5243 = vmatprep.subr.mxu0 0.0
        %5244 = vmatpush1.msra.mxu0 %v5218
        %5245 = vmatprep.subr.mxu0 0.0
        %5246 = vmatpush1.msra.mxu0 %v5219
        %5247 = vmatprep.subr.mxu0 0.0
        %5248 = vmatpush1.msra.mxu0 %v5220
        %5249 = vmatprep.subr.mxu0 0.0
        %5250 = vmatpush1.msra.mxu0 %v5221
        %5251 = vmatprep.subr.mxu0 0.0
        %5252 = vmatpush1.msra.mxu0 %v5222
        %5253 = vmatprep.subr.mxu0 0.0
        %5254 = vmatpush1.msra.mxu0 %v5223
        %5255 = vmatprep.subr.mxu0 0.0
        %5256 = vmatpush1.msra.mxu0 %v5224
        %5257 = vmatprep.subr.mxu0 0.0
        %5258 = vmatpush1.msra.mxu0 0.0
        %5259 = vmatprep.subr.mxu0 0.0
        %5260 = vmatpush1.msra.mxu0 0.0
        %5261 = vmatprep.subr.mxu0 0.0
        %5262 = vmatpush1.msra.mxu0 0.0
        %5263 = vmatprep.subr.mxu0 0.0
        %5264 = vmatpush1.msra.mxu0 0.0
        %5265 = vmatprep.subr.mxu0 0.0
        %5266 = vmatpush1.msra.mxu0 0.0
        %5267 = vmatprep.subr.mxu0 0.0
        %5268 = vmatpush1.msra.mxu0 0.0
        %5269 = vmatprep.subr.mxu0 0.0
        %5270 = vmatpush1.msra.mxu0 0.0
        %5271 = vmatprep.subr.mxu0 0.0
        %5272 = vmatpush1.msra.mxu0 0.0
        %5273 = vmatprep.subr.mxu0 0.0
        %5274 = vmatpush1.msra.mxu0 0.0
        %5275 = vmatprep.subr.mxu0 0.0
        %5276 = vmatpush1.msra.mxu0 0.0
        %5277 = vmatprep.subr.mxu0 0.0
        %5278 = vmatpush1.msra.mxu0 0.0
        %5279 = vmatprep.subr.mxu0 0.0
        %5280 = vmatpush1.msra.mxu0 0.0
        %5281 = vmatprep.subr.mxu0 0.0
        %5282 = vmatpush1.msra.mxu0 0.0
        %5283 = vmatprep.subr.mxu0 0.0
        %5284 = vmatpush1.msra.mxu0 0.0
        %5285 = vmatprep.subr.mxu0 0.0
        %5286 = vmatpush1.msra.mxu0 0.0
        %5287 = vmatprep.subr.mxu0 0.0
        %5288 = vmatpush1.msra.mxu0 0.0
        %5289 = vmatprep.mubr.f32.mxu0 0.0
        %5290 = vmatmul.mubr.f32.gmra.mrb[0].mxu0 %v5176
        %v5291 = vpop.f32.mrb[0].mxu0
        %v5292 = vadd.f32 0.0, %v5291
        %v5293 = vpop.f32.mrb[0].mxu0
        %5294 = vmatprep.mubr.f32.mxu0 0.0
        %5295 = vmatmul.mubr.f32.gmra.mrb[0].mxu0 %v5177
        %v5296 = vpop.f32.mrb[0].mxu0
        %v5297 = vadd.f32 0.0, %v5296
        %v5298 = vpop.f32.mrb[0].mxu0
        %5299 = vmatprep.mubr.f32.mxu0 0.0
        %5300 = vmatmul.mubr.f32.gmra.mrb[0].mxu0 %v5178
        %v5301 = vpop.f32.mrb[0].mxu0
        %v5302 = vadd.f32 0.0, %v5301
        %v5303 = vpop.f32.mrb[0].mxu0
        %5304 = vmatprep.mubr.f32.mxu0 0.0
        %5305 = vmatmul.mubr.f32.gmra.mrb[0].mxu0 %v5179
        %v5306 = vpop.f32.mrb[0].mxu0
        %v5307 = vadd.f32 0.0, %v5306
        %v5308 = vpop.f32.mrb[0].mxu0
        %5309 = vmatprep.mubr.f32.mxu0 0.0
        %5310 = vmatmul.mubr.f32.gmra.mrb[0].mxu0 %v5180
        %v5311 = vpop.f32.mrb[0].mxu0
        %v5312 = vadd.f32 0.0, %v5311
        %v5313 = vpop.f32.mrb[0].mxu0
        %5314 = vmatprep.mubr.f32.mxu0 0.0
        %5315 = vmatmul.mubr.f32.gmra.mrb[0].mxu0 %v5181
        %v5316 = vpop.f32.mrb[0].mxu0
        %v5317 = vadd.f32 0.0, %v5316
        %v5318 = vpop.f32.mrb[0].mxu0
        %5319 = vmatprep.mubr.f32.mxu0 0.0
        %5320 = vmatmul.mubr.f32.gmra.mrb[0].mxu0 %v5182
        %v5321 = vpop.f32.mrb[0].mxu0
        %v5322 = vadd.f32 0.0, %v5321
        %v5323 = vpop.f32.mrb[0].mxu0
        %5324 = vmatprep.mubr.f32.mxu0 0.0
        %5325 = vmatmul.mubr.f32.gmra.mrb[0].mxu0 %v5183
        %v5326 = vpop.f32.mrb[0].mxu0
        %v5327 = vadd.f32 0.0, %v5326
        %v5328 = vpop.f32.mrb[0].mxu0
        %5329 = vmatprep.mubr.f32.mxu0 0.0
        %5330 = vmatmul.mubr.f32.gmra.mrb[0].mxu0 %v5184
        %v5331 = vpop.f32.mrb[0].mxu0
        %v5332 = vadd.f32 0.0, %v5331
        %v5333 = vpop.f32.mrb[0].mxu0
        %5334 = vmatprep.mubr.f32.mxu0 0.0
        %5335 = vmatmul.mubr.f32.gmra.mrb[0].mxu0 %v5185
        %v5336 = vpop.f32.mrb[0].mxu0
        %v5337 = vadd.f32 0.0, %v5336
        %v5338 = vpop.f32.mrb[0].mxu0
        %5339 = vmatprep.mubr.f32.mxu0 0.0
        %5340 = vmatmul.mubr.f32.gmra.mrb[0].mxu0 %v5186
        %v5341 = vpop.f32.mrb[0].mxu0
        %v5342 = vadd.f32 0.0, %v5341
        %v5343 = vpop.f32.mrb[0].mxu0
        %5344 = vmatprep.mubr.f32.mxu0 0.0
        %5345 = vmatmul.mubr.f32.gmra.mrb[0].mxu0 %v5187
        %v5346 = vpop.f32.mrb[0].mxu0
        %v5347 = vadd.f32 0.0, %v5346
        %v5348 = vpop.f32.mrb[0].mxu0
        %5349 = vmatprep.mubr.f32.mxu0 0.0
        %5350 = vmatmul.mubr.f32.gmra.mrb[0].mxu0 %v5188
        %v5351 = vpop.f32.mrb[0].mxu0
        %v5352 = vadd.f32 0.0, %v5351
        %v5353 = vpop.f32.mrb[0].mxu0
        %5354 = vmatprep.mubr.f32.mxu0 0.0
        %5355 = vmatmul.mubr.f32.gmra.mrb[0].mxu0 %v5189
        %v5356 = vpop.f32.mrb[0].mxu0
        %v5357 = vadd.f32 0.0, %v5356
        %v5358 = vpop.f32.mrb[0].mxu0
        %5359 = vmatprep.mubr.f32.mxu0 0.0
        %5360 = vmatmul.mubr.f32.gmra.mrb[0].mxu0 %v5190
        %v5361 = vpop.f32.mrb[0].mxu0
        %v5362 = vadd.f32 0.0, %v5361
        %v5363 = vpop.f32.mrb[0].mxu0
        %5364 = vmatprep.mubr.f32.mxu0 0.0
        %5365 = vmatmul.mubr.f32.gmra.mrb[0].mxu0 %v5191
        %v5366 = vpop.f32.mrb[0].mxu0
        %v5367 = vadd.f32 0.0, %v5366
        %v5368 = vpop.f32.mrb[0].mxu0
        %5369 = vmatprep.mubr.f32.mxu0 0.0
        %5370 = vmatmul.mubr.f32.gmra.mrb[0].mxu0 %v5192
        %v5371 = vpop.f32.mrb[0].mxu0
        %v5372 = vadd.f32 0.0, %v5371
        %v5373 = vpop.f32.mrb[0].mxu0
        %5374 = vmatprep.mubr.f32.mxu0 0.0
        %5375 = vmatmul.mubr.f32.gmra.mrb[0].mxu0 %v5193
        %v5376 = vpop.f32.mrb[0].mxu0
        %v5377 = vadd.f32 0.0, %v5376
        %v5378 = vpop.f32.mrb[0].mxu0
        %5379 = vmatprep.mubr.f32.mxu0 0.0
        %5380 = vmatmul.mubr.f32.gmra.mrb[0].mxu0 %v5194
        %v5381 = vpop.f32.mrb[0].mxu0
        %v5382 = vadd.f32 0.0, %v5381
        %v5383 = vpop.f32.mrb[0].mxu0
        %5384 = vmatprep.mubr.f32.mxu0 0.0
        %5385 = vmatmul.mubr.f32.gmra.mrb[0].mxu0 %v5195
        %v5386 = vpop.f32.mrb[0].mxu0
        %v5387 = vadd.f32 0.0, %v5386
        %v5388 = vpop.f32.mrb[0].mxu0
        %5389 = vmatprep.mubr.f32.mxu0 0.0
        %5390 = vmatmul.mubr.f32.gmra.mrb[0].mxu0 %v5196
        %v5391 = vpop.f32.mrb[0].mxu0
        %v5392 = vadd.f32 0.0, %v5391
        %v5393 = vpop.f32.mrb[0].mxu0
        %5394 = vmatprep.mubr.f32.mxu0 0.0
        %5395 = vmatmul.mubr.f32.gmra.mrb[0].mxu0 %v5197
        %v5396 = vpop.f32.mrb[0].mxu0
        %v5397 = vadd.f32 0.0, %v5396
        %v5398 = vpop.f32.mrb[0].mxu0
        %5399 = vmatprep.mubr.f32.mxu0 0.0
        %5400 = vmatmul.mubr.f32.gmra.mrb[0].mxu0 %v5198
        %v5401 = vpop.f32.mrb[0].mxu0
        %v5402 = vadd.f32 0.0, %v5401
        %v5403 = vpop.f32.mrb[0].mxu0
        %5404 = vmatprep.mubr.f32.mxu0 0.0
        %5405 = vmatmul.mubr.f32.gmra.mrb[0].mxu0 %v5199
        %v5406 = vpop.f32.mrb[0].mxu0
        %v5407 = vadd.f32 0.0, %v5406
        %v5408 = vpop.f32.mrb[0].mxu0
        %5409 = vmatprep.mubr.f32.mxu0 0.0
        %5410 = vmatmul.mubr.f32.gmra.mrb[0].mxu0 %v5200
        %v5411 = vpop.f32.mrb[0].mxu0
        %v5412 = vadd.f32 0.0, %v5411
        %v5413 = vpop.f32.mrb[0].mxu0
        %5414 = vmatprep.mubr.f32.mxu0 0.0
        %5415 = vmatmul.mubr.f32.gmra.mrb[0].mxu0 %v5201
        %v5416 = vpop.f32.mrb[0].mxu0
        %v5417 = vadd.f32 0.0, %v5416
        %v5418 = vpop.f32.mrb[0].mxu0
        %5419 = vmatprep.mubr.f32.mxu0 0.0
        %5420 = vmatmul.mubr.f32.gmra.mrb[0].mxu0 %v5202
        %v5421 = vpop.f32.mrb[0].mxu0
        %v5422 = vadd.f32 0.0, %v5421
        %v5423 = vpop.f32.mrb[0].mxu0
        %5424 = vmatprep.mubr.f32.mxu0 0.0
        %5425 = vmatmul.mubr.f32.gmra.mrb[0].mxu0 %v5203
        %v5426 = vpop.f32.mrb[0].mxu0
        %v5427 = vadd.f32 0.0, %v5426
        %v5428 = vpop.f32.mrb[0].mxu0
        %5429 = vmatprep.mubr.f32.mxu0 0.0
        %5430 = vmatmul.mubr.f32.gmra.mrb[0].mxu0 %v5204
        %v5431 = vpop.f32.mrb[0].mxu0
        %v5432 = vadd.f32 0.0, %v5431
        %v5433 = vpop.f32.mrb[0].mxu0
        %5434 = vmatprep.mubr.f32.mxu0 0.0
        %5435 = vmatmul.mubr.f32.gmra.mrb[0].mxu0 %v5205
        %v5436 = vpop.f32.mrb[0].mxu0
        %v5437 = vadd.f32 0.0, %v5436
        %v5438 = vpop.f32.mrb[0].mxu0
        %5439 = vmatprep.mubr.f32.mxu0 0.0
        %5440 = vmatmul.mubr.f32.gmra.mrb[0].mxu0 %v5206
        %v5441 = vpop.f32.mrb[0].mxu0
        %v5442 = vadd.f32 0.0, %v5441
        %v5443 = vpop.f32.mrb[0].mxu0
        %5444 = vmatprep.mubr.f32.mxu0 0.0
        %5445 = vmatmul.mubr.f32.gmra.mrb[0].mxu0 %v5207
        %v5446 = vpop.f32.mrb[0].mxu0
        %v5447 = vadd.f32 0.0, %v5446
        %v5448 = vpop.f32.mrb[0].mxu0
        %5449 = vdwg.mxu0
        %v5450 = vadd.f32 %v5143, %v5292
        %v5451 = vadd.f32 %v5144, %v5297
        %v5452 = vadd.f32 %v5145, %v5302
        %v5453 = vadd.f32 %v5146, %v5307
        %v5454 = vadd.f32 %v5147, %v5312
        %v5455 = vadd.f32 %v5148, %v5317
        %v5456 = vadd.f32 %v5149, %v5322
        %v5457 = vadd.f32 %v5150, %v5327
        %v5458 = vadd.f32 %v5151, %v5332
        %v5459 = vadd.f32 %v5152, %v5337
        %v5460 = vadd.f32 %v5153, %v5342
        %v5461 = vadd.f32 %v5154, %v5347
        %v5462 = vadd.f32 %v5155, %v5352
        %v5463 = vadd.f32 %v5156, %v5357
        %v5464 = vadd.f32 %v5157, %v5362
        %v5465 = vadd.f32 %v5158, %v5367
        %v5466 = vadd.f32 %v5159, %v5372
        %v5467 = vadd.f32 %v5160, %v5377
        %v5468 = vadd.f32 %v5161, %v5382
        %v5469 = vadd.f32 %v5162, %v5387
        %v5470 = vadd.f32 %v5163, %v5392
        %v5471 = vadd.f32 %v5164, %v5397
        %v5472 = vadd.f32 %v5165, %v5402
        %v5473 = vadd.f32 %v5166, %v5407
        %v5474 = vadd.f32 %v5167, %v5412
        %v5475 = vadd.f32 %v5168, %v5417
        %v5476 = vadd.f32 %v5169, %v5422
        %v5477 = vadd.f32 %v5170, %v5427
        %v5478 = vadd.f32 %v5171, %v5432
        %v5479 = vadd.f32 %v5172, %v5437
        %v5480 = vadd.f32 %v5173, %v5442
        %v5481 = vadd.f32 %v5174, %v5447
        %v5482 = vld [vmem:[%s5175 + $0x8] sm:$0xff]
        %v5483 = vld [vmem:[%s5175 + $0x10] sm:$0xff]
        %v5484 = vld [vmem:[%s5175 + $0x28] sm:$0xff]
        %v5485 = vld [vmem:[%s5175 + $0x30] sm:$0xff]
        %v5486 = vld [vmem:[%s5175 + $0x48] sm:$0xff]
        %v5487 = vld [vmem:[%s5175 + $0x50] sm:$0xff]
        %v5488 = vld [vmem:[%s5175 + $0x68] sm:$0xff]
        %v5489 = vld [vmem:[%s5175 + $0x70] sm:$0xff]
        %v5490 = vld [vmem:[%s5175 + $0x88] sm:$0xff]
        %v5491 = vld [vmem:[%s5175 + $0x90] sm:$0xff]
        %v5492 = vld [vmem:[%s5175 + $0xa8] sm:$0xff]
        %v5493 = vld [vmem:[%s5175 + $0xb0] sm:$0xff]
        %v5494 = vld [vmem:[%s5175 + $0xc8] sm:$0xff]
        %v5495 = vld [vmem:[%s5175 + $0xd0] sm:$0xff]
        %v5496 = vld [vmem:[%s5175 + $0xe8] sm:$0xff]
        %v5497 = vld [vmem:[%s5175 + $0xf0] sm:$0xff]
        %v5498 = vld [vmem:[%s5175 + $0x108] sm:$0xff]
        %v5499 = vld [vmem:[%s5175 + $0x110] sm:$0xff]
        %v5500 = vld [vmem:[%s5175 + $0x128] sm:$0xff]
        %v5501 = vld [vmem:[%s5175 + $0x130] sm:$0xff]
        %v5502 = vld [vmem:[%s5175 + $0x148] sm:$0xff]
        %v5503 = vld [vmem:[%s5175 + $0x150] sm:$0xff]
        %v5504 = vld [vmem:[%s5175 + $0x168] sm:$0xff]
        %v5505 = vld [vmem:[%s5175 + $0x170] sm:$0xff]
        %v5506 = vld [vmem:[%s5175 + $0x188] sm:$0xff]
        %v5507 = vld [vmem:[%s5175 + $0x190] sm:$0xff]
        %v5508 = vld [vmem:[%s5175 + $0x1a8] sm:$0xff]
        %v5509 = vld [vmem:[%s5175 + $0x1b0] sm:$0xff]
        %v5510 = vld [vmem:[%s5175 + $0x1c8] sm:$0xff]
        %v5511 = vld [vmem:[%s5175 + $0x1d0] sm:$0xff]
        %v5512 = vld [vmem:[%s5175 + $0x1e8] sm:$0xff]
        %v5513 = vld [vmem:[%s5175 + $0x1f0] sm:$0xff]
        %s5514 = scalar_lea.vmem %s2, 896
        %v5515 = vld [vmem:[%s5514] sm:$0xff]
        %v5516 = vld [vmem:[%s5514 + $0x8] sm:$0xff]
        %v5517 = vld [vmem:[%s5514 + $0x10] sm:$0xff]
        %v5518 = vld [vmem:[%s5514 + $0x18] sm:$0xff]
        %v5519 = vld [vmem:[%s5514 + $0x20] sm:$0xff]
        %v5520 = vld [vmem:[%s5514 + $0x28] sm:$0xff]
        %v5521 = vld [vmem:[%s5514 + $0x30] sm:$0xff]
        %v5522 = vld [vmem:[%s5514 + $0x38] sm:$0xff]
        %v5523 = vld [vmem:[%s5514 + $0x40] sm:$0xff]
        %v5524 = vld [vmem:[%s5514 + $0x48] sm:$0xff]
        %v5525 = vld [vmem:[%s5514 + $0x50] sm:$0xff]
        %v5526 = vld [vmem:[%s5514 + $0x58] sm:$0xff]
        %v5527 = vld [vmem:[%s5514 + $0x60] sm:$0xff]
        %v5528 = vld [vmem:[%s5514 + $0x68] sm:$0xff]
        %v5529 = vld [vmem:[%s5514 + $0x70] sm:$0xff]
        %v5530 = vld [vmem:[%s5514 + $0x78] sm:$0xff]
        %5531 = vmatprep.subr.mxu0 0.0
        %5532 = vmatpush1.msra.mxu0 %v5515
        %5533 = vmatprep.subr.mxu0 0.0
        %5534 = vmatpush1.msra.mxu0 %v5516
        %5535 = vmatprep.subr.mxu0 0.0
        %5536 = vmatpush1.msra.mxu0 %v5517
        %5537 = vmatprep.subr.mxu0 0.0
        %5538 = vmatpush1.msra.mxu0 %v5518
        %5539 = vmatprep.subr.mxu0 0.0
        %5540 = vmatpush1.msra.mxu0 %v5519
        %5541 = vmatprep.subr.mxu0 0.0
        %5542 = vmatpush1.msra.mxu0 %v5520
        %5543 = vmatprep.subr.mxu0 0.0
        %5544 = vmatpush1.msra.mxu0 %v5521
        %5545 = vmatprep.subr.mxu0 0.0
        %5546 = vmatpush1.msra.mxu0 %v5522
        %5547 = vmatprep.subr.mxu0 0.0
        %5548 = vmatpush1.msra.mxu0 %v5523
        %5549 = vmatprep.subr.mxu0 0.0
        %5550 = vmatpush1.msra.mxu0 %v5524
        %5551 = vmatprep.subr.mxu0 0.0
        %5552 = vmatpush1.msra.mxu0 %v5525
        %5553 = vmatprep.subr.mxu0 0.0
        %5554 = vmatpush1.msra.mxu0 %v5526
        %5555 = vmatprep.subr.mxu0 0.0
        %5556 = vmatpush1.msra.mxu0 %v5527
        %5557 = vmatprep.subr.mxu0 0.0
        %5558 = vmatpush1.msra.mxu0 %v5528
        %5559 = vmatprep.subr.mxu0 0.0
        %5560 = vmatpush1.msra.mxu0 %v5529
        %5561 = vmatprep.subr.mxu0 0.0
        %5562 = vmatpush1.msra.mxu0 %v5530
        %5563 = vmatprep.subr.mxu0 0.0
        %5564 = vmatpush1.msra.mxu0 0.0
        %5565 = vmatprep.subr.mxu0 0.0
        %5566 = vmatpush1.msra.mxu0 0.0
        %5567 = vmatprep.subr.mxu0 0.0
        %5568 = vmatpush1.msra.mxu0 0.0
        %5569 = vmatprep.subr.mxu0 0.0
        %5570 = vmatpush1.msra.mxu0 0.0
        %5571 = vmatprep.subr.mxu0 0.0
        %5572 = vmatpush1.msra.mxu0 0.0
        %5573 = vmatprep.subr.mxu0 0.0
        %5574 = vmatpush1.msra.mxu0 0.0
        %5575 = vmatprep.subr.mxu0 0.0
        %5576 = vmatpush1.msra.mxu0 0.0
        %5577 = vmatprep.subr.mxu0 0.0
        %5578 = vmatpush1.msra.mxu0 0.0
        %5579 = vmatprep.subr.mxu0 0.0
        %5580 = vmatpush1.msra.mxu0 0.0
        %5581 = vmatprep.subr.mxu0 0.0
        %5582 = vmatpush1.msra.mxu0 0.0
        %5583 = vmatprep.subr.mxu0 0.0
        %5584 = vmatpush1.msra.mxu0 0.0
        %5585 = vmatprep.subr.mxu0 0.0
        %5586 = vmatpush1.msra.mxu0 0.0
        %5587 = vmatprep.subr.mxu0 0.0
        %5588 = vmatpush1.msra.mxu0 0.0
        %5589 = vmatprep.subr.mxu0 0.0
        %5590 = vmatpush1.msra.mxu0 0.0
        %5591 = vmatprep.subr.mxu0 0.0
        %5592 = vmatpush1.msra.mxu0 0.0
        %5593 = vmatprep.subr.mxu0 0.0
        %5594 = vmatpush1.msra.mxu0 0.0
        %5595 = vmatprep.mubr.f32.mxu0 0.0
        %5596 = vmatmul.mubr.f32.gmra.mrb[0].mxu0 %v5482
        %v5597 = vpop.f32.mrb[0].mxu0
        %v5598 = vadd.f32 0.0, %v5597
        %v5599 = vpop.f32.mrb[0].mxu0
        %5600 = vmatprep.mubr.f32.mxu0 0.0
        %5601 = vmatmul.mubr.f32.gmra.mrb[0].mxu0 %v5483
        %v5602 = vpop.f32.mrb[0].mxu0
        %v5603 = vadd.f32 0.0, %v5602
        %v5604 = vpop.f32.mrb[0].mxu0
        %5605 = vmatprep.mubr.f32.mxu0 0.0
        %5606 = vmatmul.mubr.f32.gmra.mrb[0].mxu0 %v5484
        %v5607 = vpop.f32.mrb[0].mxu0
        %v5608 = vadd.f32 0.0, %v5607
        %v5609 = vpop.f32.mrb[0].mxu0
        %5610 = vmatprep.mubr.f32.mxu0 0.0
        %5611 = vmatmul.mubr.f32.gmra.mrb[0].mxu0 %v5485
        %v5612 = vpop.f32.mrb[0].mxu0
        %v5613 = vadd.f32 0.0, %v5612
        %v5614 = vpop.f32.mrb[0].mxu0
        %5615 = vmatprep.mubr.f32.mxu0 0.0
        %5616 = vmatmul.mubr.f32.gmra.mrb[0].mxu0 %v5486
        %v5617 = vpop.f32.mrb[0].mxu0
        %v5618 = vadd.f32 0.0, %v5617
        %v5619 = vpop.f32.mrb[0].mxu0
        %5620 = vmatprep.mubr.f32.mxu0 0.0
        %5621 = vmatmul.mubr.f32.gmra.mrb[0].mxu0 %v5487
        %v5622 = vpop.f32.mrb[0].mxu0
        %v5623 = vadd.f32 0.0, %v5622
        %v5624 = vpop.f32.mrb[0].mxu0
        %5625 = vmatprep.mubr.f32.mxu0 0.0
        %5626 = vmatmul.mubr.f32.gmra.mrb[0].mxu0 %v5488
        %v5627 = vpop.f32.mrb[0].mxu0
        %v5628 = vadd.f32 0.0, %v5627
        %v5629 = vpop.f32.mrb[0].mxu0
        %5630 = vmatprep.mubr.f32.mxu0 0.0
        %5631 = vmatmul.mubr.f32.gmra.mrb[0].mxu0 %v5489
        %v5632 = vpop.f32.mrb[0].mxu0
        %v5633 = vadd.f32 0.0, %v5632
        %v5634 = vpop.f32.mrb[0].mxu0
        %5635 = vmatprep.mubr.f32.mxu0 0.0
        %5636 = vmatmul.mubr.f32.gmra.mrb[0].mxu0 %v5490
        %v5637 = vpop.f32.mrb[0].mxu0
        %v5638 = vadd.f32 0.0, %v5637
        %v5639 = vpop.f32.mrb[0].mxu0
        %5640 = vmatprep.mubr.f32.mxu0 0.0
        %5641 = vmatmul.mubr.f32.gmra.mrb[0].mxu0 %v5491
        %v5642 = vpop.f32.mrb[0].mxu0
        %v5643 = vadd.f32 0.0, %v5642
        %v5644 = vpop.f32.mrb[0].mxu0
        %5645 = vmatprep.mubr.f32.mxu0 0.0
        %5646 = vmatmul.mubr.f32.gmra.mrb[0].mxu0 %v5492
        %v5647 = vpop.f32.mrb[0].mxu0
        %v5648 = vadd.f32 0.0, %v5647
        %v5649 = vpop.f32.mrb[0].mxu0
        %5650 = vmatprep.mubr.f32.mxu0 0.0
        %5651 = vmatmul.mubr.f32.gmra.mrb[0].mxu0 %v5493
        %v5652 = vpop.f32.mrb[0].mxu0
        %v5653 = vadd.f32 0.0, %v5652
        %v5654 = vpop.f32.mrb[0].mxu0
        %5655 = vmatprep.mubr.f32.mxu0 0.0
        %5656 = vmatmul.mubr.f32.gmra.mrb[0].mxu0 %v5494
        %v5657 = vpop.f32.mrb[0].mxu0
        %v5658 = vadd.f32 0.0, %v5657
        %v5659 = vpop.f32.mrb[0].mxu0
        %5660 = vmatprep.mubr.f32.mxu0 0.0
        %5661 = vmatmul.mubr.f32.gmra.mrb[0].mxu0 %v5495
        %v5662 = vpop.f32.mrb[0].mxu0
        %v5663 = vadd.f32 0.0, %v5662
        %v5664 = vpop.f32.mrb[0].mxu0
        %5665 = vmatprep.mubr.f32.mxu0 0.0
        %5666 = vmatmul.mubr.f32.gmra.mrb[0].mxu0 %v5496
        %v5667 = vpop.f32.mrb[0].mxu0
        %v5668 = vadd.f32 0.0, %v5667
        %v5669 = vpop.f32.mrb[0].mxu0
        %5670 = vmatprep.mubr.f32.mxu0 0.0
        %5671 = vmatmul.mubr.f32.gmra.mrb[0].mxu0 %v5497
        %v5672 = vpop.f32.mrb[0].mxu0
        %v5673 = vadd.f32 0.0, %v5672
        %v5674 = vpop.f32.mrb[0].mxu0
        %5675 = vmatprep.mubr.f32.mxu0 0.0
        %5676 = vmatmul.mubr.f32.gmra.mrb[0].mxu0 %v5498
        %v5677 = vpop.f32.mrb[0].mxu0
        %v5678 = vadd.f32 0.0, %v5677
        %v5679 = vpop.f32.mrb[0].mxu0
        %5680 = vmatprep.mubr.f32.mxu0 0.0
        %5681 = vmatmul.mubr.f32.gmra.mrb[0].mxu0 %v5499
        %v5682 = vpop.f32.mrb[0].mxu0
        %v5683 = vadd.f32 0.0, %v5682
        %v5684 = vpop.f32.mrb[0].mxu0
        %5685 = vmatprep.mubr.f32.mxu0 0.0
        %5686 = vmatmul.mubr.f32.gmra.mrb[0].mxu0 %v5500
        %v5687 = vpop.f32.mrb[0].mxu0
        %v5688 = vadd.f32 0.0, %v5687
        %v5689 = vpop.f32.mrb[0].mxu0
        %5690 = vmatprep.mubr.f32.mxu0 0.0
        %5691 = vmatmul.mubr.f32.gmra.mrb[0].mxu0 %v5501
        %v5692 = vpop.f32.mrb[0].mxu0
        %v5693 = vadd.f32 0.0, %v5692
        %v5694 = vpop.f32.mrb[0].mxu0
        %5695 = vmatprep.mubr.f32.mxu0 0.0
        %5696 = vmatmul.mubr.f32.gmra.mrb[0].mxu0 %v5502
        %v5697 = vpop.f32.mrb[0].mxu0
        %v5698 = vadd.f32 0.0, %v5697
        %v5699 = vpop.f32.mrb[0].mxu0
        %5700 = vmatprep.mubr.f32.mxu0 0.0
        %5701 = vmatmul.mubr.f32.gmra.mrb[0].mxu0 %v5503
        %v5702 = vpop.f32.mrb[0].mxu0
        %v5703 = vadd.f32 0.0, %v5702
        %v5704 = vpop.f32.mrb[0].mxu0
        %5705 = vmatprep.mubr.f32.mxu0 0.0
        %5706 = vmatmul.mubr.f32.gmra.mrb[0].mxu0 %v5504
        %v5707 = vpop.f32.mrb[0].mxu0
        %v5708 = vadd.f32 0.0, %v5707
        %v5709 = vpop.f32.mrb[0].mxu0
        %5710 = vmatprep.mubr.f32.mxu0 0.0
        %5711 = vmatmul.mubr.f32.gmra.mrb[0].mxu0 %v5505
        %v5712 = vpop.f32.mrb[0].mxu0
        %v5713 = vadd.f32 0.0, %v5712
        %v5714 = vpop.f32.mrb[0].mxu0
        %5715 = vmatprep.mubr.f32.mxu0 0.0
        %5716 = vmatmul.mubr.f32.gmra.mrb[0].mxu0 %v5506
        %v5717 = vpop.f32.mrb[0].mxu0
        %v5718 = vadd.f32 0.0, %v5717
        %v5719 = vpop.f32.mrb[0].mxu0
        %5720 = vmatprep.mubr.f32.mxu0 0.0
        %5721 = vmatmul.mubr.f32.gmra.mrb[0].mxu0 %v5507
        %v5722 = vpop.f32.mrb[0].mxu0
        %v5723 = vadd.f32 0.0, %v5722
        %v5724 = vpop.f32.mrb[0].mxu0
        %5725 = vmatprep.mubr.f32.mxu0 0.0
        %5726 = vmatmul.mubr.f32.gmra.mrb[0].mxu0 %v5508
        %v5727 = vpop.f32.mrb[0].mxu0
        %v5728 = vadd.f32 0.0, %v5727
        %v5729 = vpop.f32.mrb[0].mxu0
        %5730 = vmatprep.mubr.f32.mxu0 0.0
        %5731 = vmatmul.mubr.f32.gmra.mrb[0].mxu0 %v5509
        %v5732 = vpop.f32.mrb[0].mxu0
        %v5733 = vadd.f32 0.0, %v5732
        %v5734 = vpop.f32.mrb[0].mxu0
        %5735 = vmatprep.mubr.f32.mxu0 0.0
        %5736 = vmatmul.mubr.f32.gmra.mrb[0].mxu0 %v5510
        %v5737 = vpop.f32.mrb[0].mxu0
        %v5738 = vadd.f32 0.0, %v5737
        %v5739 = vpop.f32.mrb[0].mxu0
        %5740 = vmatprep.mubr.f32.mxu0 0.0
        %5741 = vmatmul.mubr.f32.gmra.mrb[0].mxu0 %v5511
        %v5742 = vpop.f32.mrb[0].mxu0
        %v5743 = vadd.f32 0.0, %v5742
        %v5744 = vpop.f32.mrb[0].mxu0
        %5745 = vmatprep.mubr.f32.mxu0 0.0
        %5746 = vmatmul.mubr.f32.gmra.mrb[0].mxu0 %v5512
        %v5747 = vpop.f32.mrb[0].mxu0
        %v5748 = vadd.f32 0.0, %v5747
        %v5749 = vpop.f32.mrb[0].mxu0
        %5750 = vmatprep.mubr.f32.mxu0 0.0
        %5751 = vmatmul.mubr.f32.gmra.mrb[0].mxu0 %v5513
        %v5752 = vpop.f32.mrb[0].mxu0
        %v5753 = vadd.f32 0.0, %v5752
        %v5754 = vpop.f32.mrb[0].mxu0
        %5755 = vdwg.mxu0
        %v5756 = vadd.f32 %v5450, %v5598
        %v5757 = vadd.f32 %v5451, %v5603
        %v5758 = vadd.f32 %v5452, %v5608
        %v5759 = vadd.f32 %v5453, %v5613
        %v5760 = vadd.f32 %v5454, %v5618
        %v5761 = vadd.f32 %v5455, %v5623
        %v5762 = vadd.f32 %v5456, %v5628
        %v5763 = vadd.f32 %v5457, %v5633
        %v5764 = vadd.f32 %v5458, %v5638
        %v5765 = vadd.f32 %v5459, %v5643
        %v5766 = vadd.f32 %v5460, %v5648
        %v5767 = vadd.f32 %v5461, %v5653
        %v5768 = vadd.f32 %v5462, %v5658
        %v5769 = vadd.f32 %v5463, %v5663
        %v5770 = vadd.f32 %v5464, %v5668
        %v5771 = vadd.f32 %v5465, %v5673
        %v5772 = vadd.f32 %v5466, %v5678
        %v5773 = vadd.f32 %v5467, %v5683
        %v5774 = vadd.f32 %v5468, %v5688
        %v5775 = vadd.f32 %v5469, %v5693
        %v5776 = vadd.f32 %v5470, %v5698
        %v5777 = vadd.f32 %v5471, %v5703
        %v5778 = vadd.f32 %v5472, %v5708
        %v5779 = vadd.f32 %v5473, %v5713
        %v5780 = vadd.f32 %v5474, %v5718
        %v5781 = vadd.f32 %v5475, %v5723
        %v5782 = vadd.f32 %v5476, %v5728
        %v5783 = vadd.f32 %v5477, %v5733
        %v5784 = vadd.f32 %v5478, %v5738
        %v5785 = vadd.f32 %v5479, %v5743
        %v5786 = vadd.f32 %v5480, %v5748
        %v5787 = vadd.f32 %v5481, %v5753
        %v5788 = vld [vmem:[%s5175 + $0x9] sm:$0xff]
        %v5789 = vld [vmem:[%s5175 + $0x11] sm:$0xff]
        %v5790 = vld [vmem:[%s5175 + $0x29] sm:$0xff]
        %v5791 = vld [vmem:[%s5175 + $0x31] sm:$0xff]
        %v5792 = vld [vmem:[%s5175 + $0x49] sm:$0xff]
        %v5793 = vld [vmem:[%s5175 + $0x51] sm:$0xff]
        %v5794 = vld [vmem:[%s5175 + $0x69] sm:$0xff]
        %v5795 = vld [vmem:[%s5175 + $0x71] sm:$0xff]
        %v5796 = vld [vmem:[%s5175 + $0x89] sm:$0xff]
        %v5797 = vld [vmem:[%s5175 + $0x91] sm:$0xff]
        %v5798 = vld [vmem:[%s5175 + $0xa9] sm:$0xff]
        %v5799 = vld [vmem:[%s5175 + $0xb1] sm:$0xff]
        %v5800 = vld [vmem:[%s5175 + $0xc9] sm:$0xff]
        %v5801 = vld [vmem:[%s5175 + $0xd1] sm:$0xff]
        %v5802 = vld [vmem:[%s5175 + $0xe9] sm:$0xff]
        %v5803 = vld [vmem:[%s5175 + $0xf1] sm:$0xff]
        %v5804 = vld [vmem:[%s5175 + $0x109] sm:$0xff]
        %v5805 = vld [vmem:[%s5175 + $0x111] sm:$0xff]
        %v5806 = vld [vmem:[%s5175 + $0x129] sm:$0xff]
        %v5807 = vld [vmem:[%s5175 + $0x131] sm:$0xff]
        %v5808 = vld [vmem:[%s5175 + $0x149] sm:$0xff]
        %v5809 = vld [vmem:[%s5175 + $0x151] sm:$0xff]
        %v5810 = vld [vmem:[%s5175 + $0x169] sm:$0xff]
        %v5811 = vld [vmem:[%s5175 + $0x171] sm:$0xff]
        %v5812 = vld [vmem:[%s5175 + $0x189] sm:$0xff]
        %v5813 = vld [vmem:[%s5175 + $0x191] sm:$0xff]
        %v5814 = vld [vmem:[%s5175 + $0x1a9] sm:$0xff]
        %v5815 = vld [vmem:[%s5175 + $0x1b1] sm:$0xff]
        %v5816 = vld [vmem:[%s5175 + $0x1c9] sm:$0xff]
        %v5817 = vld [vmem:[%s5175 + $0x1d1] sm:$0xff]
        %v5818 = vld [vmem:[%s5175 + $0x1e9] sm:$0xff]
        %v5819 = vld [vmem:[%s5175 + $0x1f1] sm:$0xff]
        %s5820 = scalar_lea.vmem %s2, 1024
        %v5821 = vld [vmem:[%s5820] sm:$0xff]
        %v5822 = vld [vmem:[%s5820 + $0x8] sm:$0xff]
        %v5823 = vld [vmem:[%s5820 + $0x10] sm:$0xff]
        %v5824 = vld [vmem:[%s5820 + $0x18] sm:$0xff]
        %v5825 = vld [vmem:[%s5820 + $0x20] sm:$0xff]
        %v5826 = vld [vmem:[%s5820 + $0x28] sm:$0xff]
        %v5827 = vld [vmem:[%s5820 + $0x30] sm:$0xff]
        %v5828 = vld [vmem:[%s5820 + $0x38] sm:$0xff]
        %v5829 = vld [vmem:[%s5820 + $0x40] sm:$0xff]
        %v5830 = vld [vmem:[%s5820 + $0x48] sm:$0xff]
        %v5831 = vld [vmem:[%s5820 + $0x50] sm:$0xff]
        %v5832 = vld [vmem:[%s5820 + $0x58] sm:$0xff]
        %v5833 = vld [vmem:[%s5820 + $0x60] sm:$0xff]
        %v5834 = vld [vmem:[%s5820 + $0x68] sm:$0xff]
        %v5835 = vld [vmem:[%s5820 + $0x70] sm:$0xff]
        %v5836 = vld [vmem:[%s5820 + $0x78] sm:$0xff]
        %5837 = vmatprep.subr.mxu0 0.0
        %5838 = vmatpush1.msra.mxu0 %v5821
        %5839 = vmatprep.subr.mxu0 0.0
        %5840 = vmatpush1.msra.mxu0 %v5822
        %5841 = vmatprep.subr.mxu0 0.0
        %5842 = vmatpush1.msra.mxu0 %v5823
        %5843 = vmatprep.subr.mxu0 0.0
        %5844 = vmatpush1.msra.mxu0 %v5824
        %5845 = vmatprep.subr.mxu0 0.0
        %5846 = vmatpush1.msra.mxu0 %v5825
        %5847 = vmatprep.subr.mxu0 0.0
        %5848 = vmatpush1.msra.mxu0 %v5826
        %5849 = vmatprep.subr.mxu0 0.0
        %5850 = vmatpush1.msra.mxu0 %v5827
        %5851 = vmatprep.subr.mxu0 0.0
        %5852 = vmatpush1.msra.mxu0 %v5828
        %5853 = vmatprep.subr.mxu0 0.0
        %5854 = vmatpush1.msra.mxu0 %v5829
        %5855 = vmatprep.subr.mxu0 0.0
        %5856 = vmatpush1.msra.mxu0 %v5830
        %5857 = vmatprep.subr.mxu0 0.0
        %5858 = vmatpush1.msra.mxu0 %v5831
        %5859 = vmatprep.subr.mxu0 0.0
        %5860 = vmatpush1.msra.mxu0 %v5832
        %5861 = vmatprep.subr.mxu0 0.0
        %5862 = vmatpush1.msra.mxu0 %v5833
        %5863 = vmatprep.subr.mxu0 0.0
        %5864 = vmatpush1.msra.mxu0 %v5834
        %5865 = vmatprep.subr.mxu0 0.0
        %5866 = vmatpush1.msra.mxu0 %v5835
        %5867 = vmatprep.subr.mxu0 0.0
        %5868 = vmatpush1.msra.mxu0 %v5836
        %5869 = vmatprep.subr.mxu0 0.0
        %5870 = vmatpush1.msra.mxu0 0.0
        %5871 = vmatprep.subr.mxu0 0.0
        %5872 = vmatpush1.msra.mxu0 0.0
        %5873 = vmatprep.subr.mxu0 0.0
        %5874 = vmatpush1.msra.mxu0 0.0
        %5875 = vmatprep.subr.mxu0 0.0
        %5876 = vmatpush1.msra.mxu0 0.0
        %5877 = vmatprep.subr.mxu0 0.0
        %5878 = vmatpush1.msra.mxu0 0.0
        %5879 = vmatprep.subr.mxu0 0.0
        %5880 = vmatpush1.msra.mxu0 0.0
        %5881 = vmatprep.subr.mxu0 0.0
        %5882 = vmatpush1.msra.mxu0 0.0
        %5883 = vmatprep.subr.mxu0 0.0
        %5884 = vmatpush1.msra.mxu0 0.0
        %5885 = vmatprep.subr.mxu0 0.0
        %5886 = vmatpush1.msra.mxu0 0.0
        %5887 = vmatprep.subr.mxu0 0.0
        %5888 = vmatpush1.msra.mxu0 0.0
        %5889 = vmatprep.subr.mxu0 0.0
        %5890 = vmatpush1.msra.mxu0 0.0
        %5891 = vmatprep.subr.mxu0 0.0
        %5892 = vmatpush1.msra.mxu0 0.0
        %5893 = vmatprep.subr.mxu0 0.0
        %5894 = vmatpush1.msra.mxu0 0.0
        %5895 = vmatprep.subr.mxu0 0.0
        %5896 = vmatpush1.msra.mxu0 0.0
        %5897 = vmatprep.subr.mxu0 0.0
        %5898 = vmatpush1.msra.mxu0 0.0
        %5899 = vmatprep.subr.mxu0 0.0
        %5900 = vmatpush1.msra.mxu0 0.0
        %5901 = vmatprep.mubr.f32.mxu0 0.0
        %5902 = vmatmul.mubr.f32.gmra.mrb[0].mxu0 %v5788
        %v5903 = vpop.f32.mrb[0].mxu0
        %v5904 = vadd.f32 0.0, %v5903
        %v5905 = vpop.f32.mrb[0].mxu0
        %5906 = vmatprep.mubr.f32.mxu0 0.0
        %5907 = vmatmul.mubr.f32.gmra.mrb[0].mxu0 %v5789
        %v5908 = vpop.f32.mrb[0].mxu0
        %v5909 = vadd.f32 0.0, %v5908
        %v5910 = vpop.f32.mrb[0].mxu0
        %5911 = vmatprep.mubr.f32.mxu0 0.0
        %5912 = vmatmul.mubr.f32.gmra.mrb[0].mxu0 %v5790
        %v5913 = vpop.f32.mrb[0].mxu0
        %v5914 = vadd.f32 0.0, %v5913
        %v5915 = vpop.f32.mrb[0].mxu0
        %5916 = vmatprep.mubr.f32.mxu0 0.0
        %5917 = vmatmul.mubr.f32.gmra.mrb[0].mxu0 %v5791
        %v5918 = vpop.f32.mrb[0].mxu0
        %v5919 = vadd.f32 0.0, %v5918
        %v5920 = vpop.f32.mrb[0].mxu0
        %5921 = vmatprep.mubr.f32.mxu0 0.0
        %5922 = vmatmul.mubr.f32.gmra.mrb[0].mxu0 %v5792
        %v5923 = vpop.f32.mrb[0].mxu0
        %v5924 = vadd.f32 0.0, %v5923
        %v5925 = vpop.f32.mrb[0].mxu0
        %5926 = vmatprep.mubr.f32.mxu0 0.0
        %5927 = vmatmul.mubr.f32.gmra.mrb[0].mxu0 %v5793
        %v5928 = vpop.f32.mrb[0].mxu0
        %v5929 = vadd.f32 0.0, %v5928
        %v5930 = vpop.f32.mrb[0].mxu0
        %5931 = vmatprep.mubr.f32.mxu0 0.0
        %5932 = vmatmul.mubr.f32.gmra.mrb[0].mxu0 %v5794
        %v5933 = vpop.f32.mrb[0].mxu0
        %v5934 = vadd.f32 0.0, %v5933
        %v5935 = vpop.f32.mrb[0].mxu0
        %5936 = vmatprep.mubr.f32.mxu0 0.0
        %5937 = vmatmul.mubr.f32.gmra.mrb[0].mxu0 %v5795
        %v5938 = vpop.f32.mrb[0].mxu0
        %v5939 = vadd.f32 0.0, %v5938
        %v5940 = vpop.f32.mrb[0].mxu0
        %5941 = vmatprep.mubr.f32.mxu0 0.0
        %5942 = vmatmul.mubr.f32.gmra.mrb[0].mxu0 %v5796
        %v5943 = vpop.f32.mrb[0].mxu0
        %v5944 = vadd.f32 0.0, %v5943
        %v5945 = vpop.f32.mrb[0].mxu0
        %5946 = vmatprep.mubr.f32.mxu0 0.0
        %5947 = vmatmul.mubr.f32.gmra.mrb[0].mxu0 %v5797
        %v5948 = vpop.f32.mrb[0].mxu0
        %v5949 = vadd.f32 0.0, %v5948
        %v5950 = vpop.f32.mrb[0].mxu0
        %5951 = vmatprep.mubr.f32.mxu0 0.0
        %5952 = vmatmul.mubr.f32.gmra.mrb[0].mxu0 %v5798
        %v5953 = vpop.f32.mrb[0].mxu0
        %v5954 = vadd.f32 0.0, %v5953
        %v5955 = vpop.f32.mrb[0].mxu0
        %5956 = vmatprep.mubr.f32.mxu0 0.0
        %5957 = vmatmul.mubr.f32.gmra.mrb[0].mxu0 %v5799
        %v5958 = vpop.f32.mrb[0].mxu0
        %v5959 = vadd.f32 0.0, %v5958
        %v5960 = vpop.f32.mrb[0].mxu0
        %5961 = vmatprep.mubr.f32.mxu0 0.0
        %5962 = vmatmul.mubr.f32.gmra.mrb[0].mxu0 %v5800
        %v5963 = vpop.f32.mrb[0].mxu0
        %v5964 = vadd.f32 0.0, %v5963
        %v5965 = vpop.f32.mrb[0].mxu0
        %5966 = vmatprep.mubr.f32.mxu0 0.0
        %5967 = vmatmul.mubr.f32.gmra.mrb[0].mxu0 %v5801
        %v5968 = vpop.f32.mrb[0].mxu0
        %v5969 = vadd.f32 0.0, %v5968
        %v5970 = vpop.f32.mrb[0].mxu0
        %5971 = vmatprep.mubr.f32.mxu0 0.0
        %5972 = vmatmul.mubr.f32.gmra.mrb[0].mxu0 %v5802
        %v5973 = vpop.f32.mrb[0].mxu0
        %v5974 = vadd.f32 0.0, %v5973
        %v5975 = vpop.f32.mrb[0].mxu0
        %5976 = vmatprep.mubr.f32.mxu0 0.0
        %5977 = vmatmul.mubr.f32.gmra.mrb[0].mxu0 %v5803
        %v5978 = vpop.f32.mrb[0].mxu0
        %v5979 = vadd.f32 0.0, %v5978
        %v5980 = vpop.f32.mrb[0].mxu0
        %5981 = vmatprep.mubr.f32.mxu0 0.0
        %5982 = vmatmul.mubr.f32.gmra.mrb[0].mxu0 %v5804
        %v5983 = vpop.f32.mrb[0].mxu0
        %v5984 = vadd.f32 0.0, %v5983
        %v5985 = vpop.f32.mrb[0].mxu0
        %5986 = vmatprep.mubr.f32.mxu0 0.0
        %5987 = vmatmul.mubr.f32.gmra.mrb[0].mxu0 %v5805
        %v5988 = vpop.f32.mrb[0].mxu0
        %v5989 = vadd.f32 0.0, %v5988
        %v5990 = vpop.f32.mrb[0].mxu0
        %5991 = vmatprep.mubr.f32.mxu0 0.0
        %5992 = vmatmul.mubr.f32.gmra.mrb[0].mxu0 %v5806
        %v5993 = vpop.f32.mrb[0].mxu0
        %v5994 = vadd.f32 0.0, %v5993
        %v5995 = vpop.f32.mrb[0].mxu0
        %5996 = vmatprep.mubr.f32.mxu0 0.0
        %5997 = vmatmul.mubr.f32.gmra.mrb[0].mxu0 %v5807
        %v5998 = vpop.f32.mrb[0].mxu0
        %v5999 = vadd.f32 0.0, %v5998
        %v6000 = vpop.f32.mrb[0].mxu0
        %6001 = vmatprep.mubr.f32.mxu0 0.0
        %6002 = vmatmul.mubr.f32.gmra.mrb[0].mxu0 %v5808
        %v6003 = vpop.f32.mrb[0].mxu0
        %v6004 = vadd.f32 0.0, %v6003
        %v6005 = vpop.f32.mrb[0].mxu0
        %6006 = vmatprep.mubr.f32.mxu0 0.0
        %6007 = vmatmul.mubr.f32.gmra.mrb[0].mxu0 %v5809
        %v6008 = vpop.f32.mrb[0].mxu0
        %v6009 = vadd.f32 0.0, %v6008
        %v6010 = vpop.f32.mrb[0].mxu0
        %6011 = vmatprep.mubr.f32.mxu0 0.0
        %6012 = vmatmul.mubr.f32.gmra.mrb[0].mxu0 %v5810
        %v6013 = vpop.f32.mrb[0].mxu0
        %v6014 = vadd.f32 0.0, %v6013
        %v6015 = vpop.f32.mrb[0].mxu0
        %6016 = vmatprep.mubr.f32.mxu0 0.0
        %6017 = vmatmul.mubr.f32.gmra.mrb[0].mxu0 %v5811
        %v6018 = vpop.f32.mrb[0].mxu0
        %v6019 = vadd.f32 0.0, %v6018
        %v6020 = vpop.f32.mrb[0].mxu0
        %6021 = vmatprep.mubr.f32.mxu0 0.0
        %6022 = vmatmul.mubr.f32.gmra.mrb[0].mxu0 %v5812
        %v6023 = vpop.f32.mrb[0].mxu0
        %v6024 = vadd.f32 0.0, %v6023
        %v6025 = vpop.f32.mrb[0].mxu0
        %6026 = vmatprep.mubr.f32.mxu0 0.0
        %6027 = vmatmul.mubr.f32.gmra.mrb[0].mxu0 %v5813
        %v6028 = vpop.f32.mrb[0].mxu0
        %v6029 = vadd.f32 0.0, %v6028
        %v6030 = vpop.f32.mrb[0].mxu0
        %6031 = vmatprep.mubr.f32.mxu0 0.0
        %6032 = vmatmul.mubr.f32.gmra.mrb[0].mxu0 %v5814
        %v6033 = vpop.f32.mrb[0].mxu0
        %v6034 = vadd.f32 0.0, %v6033
        %v6035 = vpop.f32.mrb[0].mxu0
        %6036 = vmatprep.mubr.f32.mxu0 0.0
        %6037 = vmatmul.mubr.f32.gmra.mrb[0].mxu0 %v5815
        %v6038 = vpop.f32.mrb[0].mxu0
        %v6039 = vadd.f32 0.0, %v6038
        %v6040 = vpop.f32.mrb[0].mxu0
        %6041 = vmatprep.mubr.f32.mxu0 0.0
        %6042 = vmatmul.mubr.f32.gmra.mrb[0].mxu0 %v5816
        %v6043 = vpop.f32.mrb[0].mxu0
        %v6044 = vadd.f32 0.0, %v6043
        %v6045 = vpop.f32.mrb[0].mxu0
        %6046 = vmatprep.mubr.f32.mxu0 0.0
        %6047 = vmatmul.mubr.f32.gmra.mrb[0].mxu0 %v5817
        %v6048 = vpop.f32.mrb[0].mxu0
        %v6049 = vadd.f32 0.0, %v6048
        %v6050 = vpop.f32.mrb[0].mxu0
        %6051 = vmatprep.mubr.f32.mxu0 0.0
        %6052 = vmatmul.mubr.f32.gmra.mrb[0].mxu0 %v5818
        %v6053 = vpop.f32.mrb[0].mxu0
        %v6054 = vadd.f32 0.0, %v6053
        %v6055 = vpop.f32.mrb[0].mxu0
        %6056 = vmatprep.mubr.f32.mxu0 0.0
        %6057 = vmatmul.mubr.f32.gmra.mrb[0].mxu0 %v5819
        %v6058 = vpop.f32.mrb[0].mxu0
        %v6059 = vadd.f32 0.0, %v6058
        %v6060 = vpop.f32.mrb[0].mxu0
        %6061 = vdwg.mxu0
        %v6062 = vadd.f32 %v5756, %v5904
        %v6063 = vadd.f32 %v5757, %v5909
        %v6064 = vadd.f32 %v5758, %v5914
        %v6065 = vadd.f32 %v5759, %v5919
        %v6066 = vadd.f32 %v5760, %v5924
        %v6067 = vadd.f32 %v5761, %v5929
        %v6068 = vadd.f32 %v5762, %v5934
        %v6069 = vadd.f32 %v5763, %v5939
        %v6070 = vadd.f32 %v5764, %v5944
        %v6071 = vadd.f32 %v5765, %v5949
        %v6072 = vadd.f32 %v5766, %v5954
        %v6073 = vadd.f32 %v5767, %v5959
        %v6074 = vadd.f32 %v5768, %v5964
        %v6075 = vadd.f32 %v5769, %v5969
        %v6076 = vadd.f32 %v5770, %v5974
        %v6077 = vadd.f32 %v5771, %v5979
        %v6078 = vadd.f32 %v5772, %v5984
        %v6079 = vadd.f32 %v5773, %v5989
        %v6080 = vadd.f32 %v5774, %v5994
        %v6081 = vadd.f32 %v5775, %v5999
        %v6082 = vadd.f32 %v5776, %v6004
        %v6083 = vadd.f32 %v5777, %v6009
        %v6084 = vadd.f32 %v5778, %v6014
        %v6085 = vadd.f32 %v5779, %v6019
        %v6086 = vadd.f32 %v5780, %v6024
        %v6087 = vadd.f32 %v5781, %v6029
        %v6088 = vadd.f32 %v5782, %v6034
        %v6089 = vadd.f32 %v5783, %v6039
        %v6090 = vadd.f32 %v5784, %v6044
        %v6091 = vadd.f32 %v5785, %v6049
        %v6092 = vadd.f32 %v5786, %v6054
        %v6093 = vadd.f32 %v5787, %v6059
        %v6094 = vld [vmem:[%s1463 + $0x8] sm:$0xff]
        %v6095 = vld [vmem:[%s1463 + $0x10] sm:$0xff]
        %v6096 = vld [vmem:[%s1463 + $0x28] sm:$0xff]
        %v6097 = vld [vmem:[%s1463 + $0x30] sm:$0xff]
        %v6098 = vld [vmem:[%s1463 + $0x48] sm:$0xff]
        %v6099 = vld [vmem:[%s1463 + $0x50] sm:$0xff]
        %v6100 = vld [vmem:[%s1463 + $0x68] sm:$0xff]
        %v6101 = vld [vmem:[%s1463 + $0x70] sm:$0xff]
        %v6102 = vld [vmem:[%s1463 + $0x88] sm:$0xff]
        %v6103 = vld [vmem:[%s1463 + $0x90] sm:$0xff]
        %v6104 = vld [vmem:[%s1463 + $0xa8] sm:$0xff]
        %v6105 = vld [vmem:[%s1463 + $0xb0] sm:$0xff]
        %v6106 = vld [vmem:[%s1463 + $0xc8] sm:$0xff]
        %v6107 = vld [vmem:[%s1463 + $0xd0] sm:$0xff]
        %v6108 = vld [vmem:[%s1463 + $0xe8] sm:$0xff]
        %v6109 = vld [vmem:[%s1463 + $0xf0] sm:$0xff]
        %v6110 = vld [vmem:[%s1463 + $0x108] sm:$0xff]
        %v6111 = vld [vmem:[%s1463 + $0x110] sm:$0xff]
        %v6112 = vld [vmem:[%s1463 + $0x128] sm:$0xff]
        %v6113 = vld [vmem:[%s1463 + $0x130] sm:$0xff]
        %v6114 = vld [vmem:[%s1463 + $0x148] sm:$0xff]
        %v6115 = vld [vmem:[%s1463 + $0x150] sm:$0xff]
        %v6116 = vld [vmem:[%s1463 + $0x168] sm:$0xff]
        %v6117 = vld [vmem:[%s1463 + $0x170] sm:$0xff]
        %v6118 = vld [vmem:[%s1463 + $0x188] sm:$0xff]
        %v6119 = vld [vmem:[%s1463 + $0x190] sm:$0xff]
        %v6120 = vld [vmem:[%s1463 + $0x1a8] sm:$0xff]
        %v6121 = vld [vmem:[%s1463 + $0x1b0] sm:$0xff]
        %v6122 = vld [vmem:[%s1463 + $0x1c8] sm:$0xff]
        %v6123 = vld [vmem:[%s1463 + $0x1d0] sm:$0xff]
        %v6124 = vld [vmem:[%s1463 + $0x1e8] sm:$0xff]
        %v6125 = vld [vmem:[%s1463 + $0x1f0] sm:$0xff]
        %v6127 = vlaneseq
        %v6128 = vshrl.u32 %v6127, 7
        %v6129 = vsub.s32 0, %v6128
        %v6130 = vrot.slane %v607, %v6129
        %v6132 = vadd.f32 %v6062, %v6130
        %v6133 = vadd.f32 %v6063, %v6130
        %v6134 = vadd.f32 %v6064, %v6130
        %v6135 = vadd.f32 %v6065, %v6130
        %v6136 = vadd.f32 %v6066, %v6130
        %v6137 = vadd.f32 %v6067, %v6130
        %v6138 = vadd.f32 %v6068, %v6130
        %v6139 = vadd.f32 %v6069, %v6130
        %v6140 = vadd.f32 %v6070, %v6130
        %v6141 = vadd.f32 %v6071, %v6130
        %v6142 = vadd.f32 %v6072, %v6130
        %v6143 = vadd.f32 %v6073, %v6130
        %v6144 = vadd.f32 %v6074, %v6130
        %v6145 = vadd.f32 %v6075, %v6130
        %v6146 = vadd.f32 %v6076, %v6130
        %v6147 = vadd.f32 %v6077, %v6130
        %v6148 = vadd.f32 %v6078, %v6130
        %v6149 = vadd.f32 %v6079, %v6130
        %v6150 = vadd.f32 %v6080, %v6130
        %v6151 = vadd.f32 %v6081, %v6130
        %v6152 = vadd.f32 %v6082, %v6130
        %v6153 = vadd.f32 %v6083, %v6130
        %v6154 = vadd.f32 %v6084, %v6130
        %v6155 = vadd.f32 %v6085, %v6130
        %v6156 = vadd.f32 %v6086, %v6130
        %v6157 = vadd.f32 %v6087, %v6130
        %v6158 = vadd.f32 %v6088, %v6130
        %v6159 = vadd.f32 %v6089, %v6130
        %v6160 = vadd.f32 %v6090, %v6130
        %v6161 = vadd.f32 %v6091, %v6130
        %v6162 = vadd.f32 %v6092, %v6130
        %v6163 = vadd.f32 %v6093, %v6130
        %v6164 = vadd.f32 %v6132, %v6094
        %v6165 = vadd.f32 %v6133, %v6095
        %v6166 = vadd.f32 %v6134, %v6096
        %v6167 = vadd.f32 %v6135, %v6097
        %v6168 = vadd.f32 %v6136, %v6098
        %v6169 = vadd.f32 %v6137, %v6099
        %v6170 = vadd.f32 %v6138, %v6100
        %v6171 = vadd.f32 %v6139, %v6101
        %v6172 = vadd.f32 %v6140, %v6102
        %v6173 = vadd.f32 %v6141, %v6103
        %v6174 = vadd.f32 %v6142, %v6104
        %v6175 = vadd.f32 %v6143, %v6105
        %v6176 = vadd.f32 %v6144, %v6106
        %v6177 = vadd.f32 %v6145, %v6107
        %v6178 = vadd.f32 %v6146, %v6108
        %v6179 = vadd.f32 %v6147, %v6109
        %v6180 = vadd.f32 %v6148, %v6110
        %v6181 = vadd.f32 %v6149, %v6111
        %v6182 = vadd.f32 %v6150, %v6112
        %v6183 = vadd.f32 %v6151, %v6113
        %v6184 = vadd.f32 %v6152, %v6114
        %v6185 = vadd.f32 %v6153, %v6115
        %v6186 = vadd.f32 %v6154, %v6116
        %v6187 = vadd.f32 %v6155, %v6117
        %v6188 = vadd.f32 %v6156, %v6118
        %v6189 = vadd.f32 %v6157, %v6119
        %v6190 = vadd.f32 %v6158, %v6120
        %v6191 = vadd.f32 %v6159, %v6121
        %v6192 = vadd.f32 %v6160, %v6122
        %v6193 = vadd.f32 %v6161, %v6123
        %v6194 = vadd.f32 %v6162, %v6124
        %v6195 = vadd.f32 %v6163, %v6125
        %v6196 = vmax.f32 %v6164, 0.0
        %v6197 = vmax.f32 %v6165, 0.0
        %v6198 = vmax.f32 %v6166, 0.0
        %v6199 = vmax.f32 %v6167, 0.0
        %v6200 = vmax.f32 %v6168, 0.0
        %v6201 = vmax.f32 %v6169, 0.0
        %v6202 = vmax.f32 %v6170, 0.0
        %v6203 = vmax.f32 %v6171, 0.0
        %v6204 = vmax.f32 %v6172, 0.0
        %v6205 = vmax.f32 %v6173, 0.0
        %v6206 = vmax.f32 %v6174, 0.0
        %v6207 = vmax.f32 %v6175, 0.0
        %v6208 = vmax.f32 %v6176, 0.0
        %v6209 = vmax.f32 %v6177, 0.0
        %v6210 = vmax.f32 %v6178, 0.0
        %v6211 = vmax.f32 %v6179, 0.0
        %v6212 = vmax.f32 %v6180, 0.0
        %v6213 = vmax.f32 %v6181, 0.0
        %v6214 = vmax.f32 %v6182, 0.0
        %v6215 = vmax.f32 %v6183, 0.0
        %v6216 = vmax.f32 %v6184, 0.0
        %v6217 = vmax.f32 %v6185, 0.0
        %v6218 = vmax.f32 %v6186, 0.0
        %v6219 = vmax.f32 %v6187, 0.0
        %v6220 = vmax.f32 %v6188, 0.0
        %v6221 = vmax.f32 %v6189, 0.0
        %v6222 = vmax.f32 %v6190, 0.0
        %v6223 = vmax.f32 %v6191, 0.0
        %v6224 = vmax.f32 %v6192, 0.0
        %v6225 = vmax.f32 %v6193, 0.0
        %v6226 = vmax.f32 %v6194, 0.0
        %v6227 = vmax.f32 %v6195, 0.0
        %6228 = vst [vmem:[%s176] sm:$0xff] %v6196
        %6229 = vst [vmem:[%s176 + $0x8] sm:$0xff] %v6197
        %6230 = vst [vmem:[%s176 + $0x10] sm:$0xff] %v6198
        %6231 = vst [vmem:[%s176 + $0x18] sm:$0xff] %v6199
        %6232 = vst [vmem:[%s176 + $0x20] sm:$0xff] %v6200
        %6233 = vst [vmem:[%s176 + $0x28] sm:$0xff] %v6201
        %6234 = vst [vmem:[%s176 + $0x30] sm:$0xff] %v6202
        %6235 = vst [vmem:[%s176 + $0x38] sm:$0xff] %v6203
        %6236 = vst [vmem:[%s176 + $0x40] sm:$0xff] %v6204
        %6237 = vst [vmem:[%s176 + $0x48] sm:$0xff] %v6205
        %6238 = vst [vmem:[%s176 + $0x50] sm:$0xff] %v6206
        %6239 = vst [vmem:[%s176 + $0x58] sm:$0xff] %v6207
        %6240 = vst [vmem:[%s176 + $0x60] sm:$0xff] %v6208
        %6241 = vst [vmem:[%s176 + $0x68] sm:$0xff] %v6209
        %6242 = vst [vmem:[%s176 + $0x70] sm:$0xff] %v6210
        %6243 = vst [vmem:[%s176 + $0x78] sm:$0xff] %v6211
        %6244 = vst [vmem:[%s176 + $0x80] sm:$0xff] %v6212
        %6245 = vst [vmem:[%s176 + $0x88] sm:$0xff] %v6213
        %6246 = vst [vmem:[%s176 + $0x90] sm:$0xff] %v6214
        %6247 = vst [vmem:[%s176 + $0x98] sm:$0xff] %v6215
        %6248 = vst [vmem:[%s176 + $0xa0] sm:$0xff] %v6216
        %6249 = vst [vmem:[%s176 + $0xa8] sm:$0xff] %v6217
        %6250 = vst [vmem:[%s176 + $0xb0] sm:$0xff] %v6218
        %6251 = vst [vmem:[%s176 + $0xb8] sm:$0xff] %v6219
        %6252 = vst [vmem:[%s176 + $0xc0] sm:$0xff] %v6220
        %6253 = vst [vmem:[%s176 + $0xc8] sm:$0xff] %v6221
        %6254 = vst [vmem:[%s176 + $0xd0] sm:$0xff] %v6222
        %6255 = vst [vmem:[%s176 + $0xd8] sm:$0xff] %v6223
        %6256 = vst [vmem:[%s176 + $0xe0] sm:$0xff] %v6224
        %6257 = vst [vmem:[%s176 + $0xe8] sm:$0xff] %v6225
        %6258 = vst [vmem:[%s176 + $0xf0] sm:$0xff] %v6226
        %6259 = vst [vmem:[%s176 + $0xf8] sm:$0xff] %v6227
        %s6260 = sand.u32 %s111, 1
        %s6261 = scalar_lea.sflag [#allocation6], %s6260
        %s6262 = sand.u32 %s111, 1
        %s6263 = smul.addr %s6262, 256
        %s6264 = scalar_lea.vmem [#allocation5], %s6263
        // Predicated region
        $region113: #{basic_block_forward.1} parent=35 // pred_check
          %p6265 = pneg %p121
        $region114: #{basic_block_forward.1} parent=35 // pred_check_branch
          %6267 = sbr.rel (%p6265) target = $region116
        $region115: #{basic_block_forward.1} parent=35 // pred_region
          %s6269 = ssub.s32 4096, 4096
          %6270 = vsyncadd %s6261, %s6269
          %s6271 = smul.addr %s19, 32
          %s6272 = smul.addr %s6271, 128
          %s6273 = scalar_lea.hbm %s5, %s6272
          %s6274 = sshll.u32 %s6264, 4
          %s6275 = int_to_ptr.vmem [resolvable:$true] %s6274
          %6280 = dma.vmem_to_hbm [thread:$0]  %s6275, 4096, %s6273, %s6261, 128, 128, 8
        $region116: #{basic_block_forward.1} parent=35 // pred_fallthru
          _
      $region36: #{basic_block_forward.1} parent=5 // pred_fallthru
        _
      %p6281 = scmp.le.s32.totalorder 2, %s14
      // Predicated region
      $region117: #{basic_block_forward.1} parent=5 // pred_check
        %p6282 = pneg %p6281
      $region118: #{basic_block_forward.1} parent=5 // pred_check_branch
        %6284 = sbr.rel (%p6282) target = $region120
      $region119: #{basic_block_forward.1} parent=5 // pred_region
        %s6285 = ssub.s32 %s14, 2
        // Predicated region
        $region121: #{basic_block_forward.1} parent=119 // pred_check
          %p6286 = pneg %p127
        $region122: #{basic_block_forward.1} parent=119 // pred_check_branch
          %6288 = sbr.rel (%p6286) target = $region124
        $region123: #{basic_block_forward.1} parent=119 // pred_region
          %s6289 = sand.u32 %s112, 1
          %s6290 = scalar_lea.sflag [#allocation6], %s6289
          %s6291 = sand.u32 %s112, 1
          %s6292 = smul.addr %s6291, 256
          %s6293 = scalar_lea.vmem [#allocation5], %s6292
          %6294 = dma.done %s6290, 4096
        $region124: #{basic_block_forward.1} parent=119 // pred_fallthru
          _
      $region120: #{basic_block_forward.1} parent=5 // pred_fallthru
        _
    $region6: #{basic_block_forward.1} parent=1 // loop_footer
      %s18 = sadd.s32 1, %s14
    $region7: #{basic_block_forward.1} parent=1 // loop_footer_branch
      %13 = sbr.rel target = $region3
    $region8: #{basic_block_forward.1} parent=1 // loop_exit
      _
    %6295 = vsyncpa [#allocation6], 1
    %s6296 = scalar_lea.sflag [#allocation6], 1
    %6297 = vsyncpa %s6296, 1
  %6298 = vsyncmov [#allocation4]
  %s6299 = vpop.sfrf %6298
  %p6300 = scmp.eq.s32.totalorder %s6299, 0
  %p6301 = pneg %p6300
  %6303 = shalt.err (%p6301)
  %s6304 = scalar_lea.sflag [#allocation4], 1
  %6305 = vsyncmov %s6304
  %s6306 = vpop.sfrf %6305
  %p6307 = scmp.eq.s32.totalorder %s6306, 0
  %p6308 = pneg %p6307
  %6310 = shalt.err (%p6308)

</llo_original>
